<compile_context>
chip_gen: v7x
topology: tpu7x:2x2x1
jax: 0.10.0
libtpu: 0.0.40
codegen_flags: <defaults>
</compile_context>

<pallas_src>
import functools

import numpy as np
import jax
import jax.numpy as jnp
from jax.experimental import pallas as pl
from jax.experimental.pallas import tpu as pltpu


# ----------------------------------------------------------------------------
# Host-side constant matrices (exact, computed once per shape)
# ----------------------------------------------------------------------------

def _haar_lowpass_matrix(H, W, levels):
    """(Ho*Wo, H*W): yl_flat = S @ x_flat == db1 J-level low-pass (mode='zero')."""
    win = 2 ** levels
    Ho, Wo = H // win, W // win
    fac = 0.5 ** levels                     # (1/sqrt(2))^(2*levels)
    S = np.zeros((Ho * Wo, H * W), np.float32)
    for i in range(Ho):
        for j in range(Wo):
            for a in range(win):
                for b in range(win):
                    S[i * Wo + j, (i * win + a) * W + (j * win + b)] = fac
    return jnp.asarray(S)


def _bilinear_matrix_1d(n_in, n_out):
    """PyTorch bilinear (align_corners=False) interpolation matrix (n_out, n_in)."""
    d = np.arange(n_out, dtype=np.float64)
    src = (d + 0.5) * (n_in / n_out) - 0.5
    src = np.maximum(src, 0.0)
    i0 = np.minimum(np.floor(src).astype(np.int64), n_in - 1)
    lam = src - i0
    i1 = np.minimum(i0 + 1, n_in - 1)
    M = np.zeros((n_out, n_in), np.float64)
    np.add.at(M, (np.arange(n_out), i0), 1.0 - lam)
    np.add.at(M, (np.arange(n_out), i1), lam)
    return M


def _bilinear_upsample_matrix(hin, win, Hout, Wout):
    """(Hout*Wout, hin*win): up_flat = U @ low_flat."""
    Mh = _bilinear_matrix_1d(hin, Hout)
    Mw = _bilinear_matrix_1d(win, Wout)
    return jnp.asarray(np.kron(Mh, Mw).astype(np.float32))


def _dw_shift_matrices(h, w):
    """(9, h*w, h*w) 0/1 matrices: P[t] @ x_flat == x spatially shifted by tap t
    (3x3 neighborhood, zero padding)."""
    n = h * w
    P = np.zeros((9, n, n), np.float32)
    t = 0
    for dh in range(3):
        for dj in range(3):
            for i in range(h):
                for j in range(w):
                    si, sj = i + dh - 1, j + dj - 1
                    if 0 <= si < h and 0 <= sj < w:
                        P[t, i * w + j, si * w + sj] = 1.0
            t += 1
    return jnp.asarray(P)


# ----------------------------------------------------------------------------
# Fused kernel (one grid step == one batch element)
# ----------------------------------------------------------------------------

def _fused_kernel(x_ref, dwt_ref, up_ref, lfsh_ref, *rest, slope, has_res):
    n_w = 38 if has_res else 35
    wts = rest[:n_w]
    o_ref = rest[n_w]
    pad1, pad2, pad3 = rest[n_w + 1:n_w + 4]

    (c1dw, c1pw, c1sc, c1sh,
     c2dw, c2pw, c2sc, c2sh,
     c3dw, c3pw, c3sc, c3sh,
     cse1, cse2,
     l1w, l1b, l1sc, l1sh,
     l2dw, l2pw, l2sc, l2sh,
     l3w, l3b, l3sc, l3sh,
     lse1, lse2,
     fwc, fwu, fb, fsc, fsh,
     fse1, fse2) = wts[:35]

    x = x_ref[0].astype(jnp.float32)                       # (H, W, Cin)
    H, W, Cin = x.shape
    HW = H * W

    def f32(r):
        return r[...].astype(jnp.float32)

    def lrelu(v):
        return jnp.where(v >= 0.0, v, slope * v)

    def sepconv_bn_act(xin3d, pad_ref, dw_ref, pw_ref, sc_ref, sh_ref):
        """Depthwise 3x3 (zero pad 1, no bias) + pointwise 1x1 + folded BN +
        LeakyReLU.  xin3d: (h, w, c) f32 value -> returns (h*w, cout) f32."""
        h, wd, c = xin3d.shape
        # in-kernel zero padding into VMEM scratch (no jnp.pad / HBM copy)
        pad_ref[...] = jnp.zeros_like(pad_ref)
        pad_ref[1:h + 1, 1:wd + 1, :] = xin3d
        acc = jnp.zeros((h, wd, c), jnp.float32)
        for dh in range(3):
            for dj in range(3):
                tap = dw_ref[dh, dj, :].astype(jnp.float32)            # (c,)
                acc = acc + pad_ref[dh:dh + h, dj:dj + wd, :] * tap    # ref-sliced tap
        y = jnp.dot(acc.reshape(h * wd, c), f32(pw_ref),
                    preferred_element_type=jnp.float32)
        return lrelu(y * f32(sc_ref) + f32(sh_ref))

    def sepconv_small_bn_act(y2d, dw_ref, pw_ref, sc_ref, sh_ref):
        """Same op for the tiny low-freq spatial grid; the 9 spatial shifts are
        precomputed 0/1 matrices so everything stays 2-D (no tiny reshapes)."""
        n, c = y2d.shape
        acc = jnp.zeros((n, c), jnp.float32)
        t = 0
        for dh in range(3):
            for dj in range(3):
                tap = dw_ref[dh, dj, :].astype(jnp.float32)
                shifted = jnp.dot(lfsh_ref[t], y2d,
                                  preferred_element_type=jnp.float32)
                acc = acc + shifted * tap
                t += 1
        y = jnp.dot(acc, f32(pw_ref), preferred_element_type=jnp.float32)
        return lrelu(y * f32(sc_ref) + f32(sh_ref))

    def se(y2d, w1_ref, w2_ref):
        pooled = jnp.mean(y2d, axis=0, keepdims=True)                  # (1, c)
        hid = jnp.maximum(
            jnp.dot(pooled, f32(w1_ref), preferred_element_type=jnp.float32), 0.0)
        gate = jax.nn.sigmoid(
            jnp.dot(hid, f32(w2_ref), preferred_element_type=jnp.float32))
        return y2d * gate

    # ---- CNN branch: 3x (SeparableConv + BN + LeakyReLU) + SE ----
    h1 = sepconv_bn_act(x, pad1, c1dw, c1pw, c1sc, c1sh)                      # (HW, 32)
    h2 = sepconv_bn_act(h1.reshape(H, W, -1), pad2, c2dw, c2pw, c2sc, c2sh)   # (HW, 64)
    h3 = sepconv_bn_act(h2.reshape(H, W, -1), pad3, c3dw, c3pw, c3sc, c3sh)   # (HW, Cout)
    cnn_out = se(h3, cse1, cse2)                                              # (HW, Cout)

    # ---- DWT low-pass (db1, J levels, mode='zero') as one MXU matmul ----
    x2d = x.reshape(HW, Cin)
    yl = jnp.dot(dwt_ref[...], x2d, preferred_element_type=jnp.float32)       # (HoWo, Cin)

    # ---- low-frequency branch ----
    g = jnp.dot(yl, f32(l1w), preferred_element_type=jnp.float32) + f32(l1b)
    g = lrelu(g * f32(l1sc) + f32(l1sh))                                      # (HoWo, 32)
    g = sepconv_small_bn_act(g, l2dw, l2pw, l2sc, l2sh)                       # (HoWo, 32)
    g = jnp.dot(g, f32(l3w), preferred_element_type=jnp.float32) + f32(l3b)
    g = lrelu(g * f32(l3sc) + f32(l3sh))                                      # (HoWo, Cin)
    low = se(g, lse1, lse2)                                                   # (HoWo, Cin)

    # ---- bilinear upsample (one MXU matmul) + fusion without concat ----
    up = jnp.dot(up_ref[...], low, preferred_element_type=jnp.float32)        # (HW, Cin)
    f = (jnp.dot(cnn_out, f32(fwc), preferred_element_type=jnp.float32)
         + jnp.dot(up, f32(fwu), preferred_element_type=jnp.float32)
         + f32(fb))
    f = lrelu(f * f32(fsc) + f32(fsh))
    f = se(f, fse1, fse2)                                                     # (HW, Cout)

    # ---- residual adjust (1x1 conv, bias-free, + BN) and final add ----
    if has_res:
        rw, rsc, rsh = wts[35:38]
        res = jnp.dot(x2d, f32(rw), preferred_element_type=jnp.float32)
        res = res * f32(rsc) + f32(rsh)
    else:
        res = x2d

    o_ref[0] = (f + res).astype(o_ref.dtype)


# ----------------------------------------------------------------------------
# Wrapper
# ----------------------------------------------------------------------------

_W_ORDER = ("cnn1_dw", "cnn1_pw", "cnn1_scale", "cnn1_shift",
            "cnn2_dw", "cnn2_pw", "cnn2_scale", "cnn2_shift",
            "cnn3_dw", "cnn3_pw", "cnn3_scale", "cnn3_shift",
            "cnn_se_w1", "cnn_se_w2",
            "lf1_w", "lf1_b", "lf1_scale", "lf1_shift",
            "lf2_dw", "lf2_pw", "lf2_scale", "lf2_shift",
            "lf3_w", "lf3_b", "lf3_scale", "lf3_shift",
            "lf_se_w1", "lf_se_w2")


def wavelet_cnn_block(x_nchw, p, levels=3, slope=0.2,
                      vmem_limit_bytes=32 * 1024 * 1024):
    B, Cin, H, W = x_nchw.shape
    win = 2 ** levels
    assert H % win == 0 and W % win == 0, "spatial dims must be divisible by 2^levels"
    Ho, Wo = H // win, W // win
    Cout = p["cnn3_pw"].shape[1]
    c1 = p["cnn1_pw"].shape[1]
    c2 = p["cnn2_pw"].shape[1]
    has_res = "res_w" in p

    x = jnp.transpose(x_nchw, (0, 2, 3, 1))           # NCHW -> NHWC (glue)

    S_dwt = _haar_lowpass_matrix(H, W, levels)        # (Ho*Wo, H*W)
    S_up = _bilinear_upsample_matrix(Ho, Wo, H, W)    # (H*W, Ho*Wo)
    P_sh = _dw_shift_matrices(Ho, Wo)                 # (9, Ho*Wo, Ho*Wo)

    # split fusion weight so concat([cnn_out, up]) is never materialized
    fus_w = p["fus_w"]
    wlist = [p[k] for k in _W_ORDER]
    wlist += [fus_w[:Cout], fus_w[Cout:], p["fus_b"], p["fus_scale"], p["fus_shift"],
              p["fus_se_w1"], p["fus_se_w2"]]
    if has_res:
        wlist += [p["res_w"], p["res_scale"], p["res_shift"]]

    def bcast_spec(a):
        zeros = (0,) * a.ndim
        return pl.BlockSpec(a.shape, lambda b, _z=zeros: _z)

    in_specs = ([pl.BlockSpec((1, H, W, Cin), lambda b: (b, 0, 0, 0)),
                 bcast_spec(S_dwt), bcast_spec(S_up), bcast_spec(P_sh)]
                + [bcast_spec(a) for a in wlist])

    kernel = functools.partial(_fused_kernel, slope=slope, has_res=has_res)

    out = pl.pallas_call(
        kernel,
        out_shape=jax.ShapeDtypeStruct((B, H * W, Cout), x.dtype),
        grid=(B,),
        in_specs=in_specs,
        out_specs=pl.BlockSpec((1, H * W, Cout), lambda b: (b, 0, 0)),
        scratch_shapes=[
            pltpu.VMEM((H + 2, W + 2, Cin), jnp.float32),
            pltpu.VMEM((H + 2, W + 2, c1), jnp.float32),
            pltpu.VMEM((H + 2, W + 2, c2), jnp.float32),
        ],
        compiler_params=pltpu.CompilerParams(
            dimension_semantics=("parallel",),
            vmem_limit_bytes=vmem_limit_bytes,
        ),
    )(x, S_dwt, S_up, P_sh, *wlist)

    out = out.reshape(B, H, W, Cout)
    return jnp.transpose(out, (0, 3, 1, 2))           # NHWC -> NCHW


# ----------------------------------------------------------------------------
# Parameters (deterministic synthetic init)
# ----------------------------------------------------------------------------

def init_params(key, cin, cout, dtype=jnp.float32):
    assert cin >= 16 and cout >= 16, "SEBlock(reduction=16) requires channels >= 16"
    keys = iter(jax.random.split(key, 64))

    def nrm(shape, scale=0.1):
        return (scale * jax.random.normal(next(keys), shape)).astype(dtype)

    def bn(c):
        gamma = 1.0 + 0.1 * jax.random.normal(next(keys), (c,))
        beta = 0.1 * jax.random.normal(next(keys), (c,))
        mean = 0.1 * jax.random.normal(next(keys), (c,))
        var = 1.0 + 0.1 * jnp.abs(jax.random.normal(next(keys), (c,)))
        scale = gamma / jnp.sqrt(var + 1e-5)
        shift = beta - mean * scale
        return scale.reshape(1, c).astype(dtype), shift.reshape(1, c).astype(dtype)

    p = {}
    c1, c2 = 32, 64
    # cnn_branch
    p["cnn1_dw"], p["cnn1_pw"] = nrm((3, 3, cin)), nrm((cin, c1))
    p["cnn1_scale"], p["cnn1_shift"] = bn(c1)
    p["cnn2_dw"], p["cnn2_pw"] = nrm((3, 3, c1)), nrm((c1, c2))
    p["cnn2_scale"], p["cnn2_shift"] = bn(c2)
    p["cnn3_dw"], p["cnn3_pw"] = nrm((3, 3, c2)), nrm((c2, cout))
    p["cnn3_scale"], p["cnn3_shift"] = bn(cout)
    p["cnn_se_w1"], p["cnn_se_w2"] = nrm((cout, cout // 16)), nrm((cout // 16, cout))
    # low_freq_branch
    p["lf1_w"], p["lf1_b"] = nrm((cin, 32)), nrm((1, 32))
    p["lf1_scale"], p["lf1_shift"] = bn(32)
    p["lf2_dw"], p["lf2_pw"] = nrm((3, 3, 32)), nrm((32, 32))
    p["lf2_scale"], p["lf2_shift"] = bn(32)
    p["lf3_w"], p["lf3_b"] = nrm((32, cin)), nrm((1, cin))
    p["lf3_scale"], p["lf3_shift"] = bn(cin)
    p["lf_se_w1"], p["lf_se_w2"] = nrm((cin, cin // 16)), nrm((cin // 16, cin))
    # fusion
    p["fus_w"], p["fus_b"] = nrm((cout + cin, cout)), nrm((1, cout))
    p["fus_scale"], p["fus_shift"] = bn(cout)
    p["fus_se_w1"], p["fus_se_w2"] = nrm((cout, cout // 16)), nrm((cout // 16, cout))
    # residual_adjust (only when in_channels != out_channels; conv is bias-free)
    if cin != cout:
        p["res_w"] = nrm((cin, cout))
        p["res_scale"], p["res_shift"] = bn(cout)
    return p


# ----------------------------------------------------------------------------
# Main
# ----------------------------------------------------------------------------

if __name__ == "__main__":
    key = jax.random.PRNGKey(0)
    kx, kp = jax.random.split(key)

    B, Cin, H, W = 2, 16, 16, 16
    Cout = 32
    LEVELS = 3

    x = jax.random.normal(kx, (B, Cin, H, W), jnp.float32)
    params = init_params(kp, Cin, Cout)

    fwd = jax.jit(lambda xx, pp: wavelet_cnn_block(xx, pp, levels=LEVELS))
    out = jax.block_until_ready(fwd(x, params))

    assert out.shape == (B, Cout, H, W), out.shape
    assert bool(jnp.all(jnp.isfinite(out)))
    print("KERNEL_OK")
</pallas_src>

<mosaic_0001>
module attributes {stable_mosaic.version = 11 : i64} {
  func.func @_fused_kernel(%arg0: i32, %arg1: memref<1x16x16x16xf32, #tpu.memory_space<vmem>>, %arg2: memref<4x256xf32, #tpu.memory_space<vmem>>, %arg3: memref<256x4xf32, #tpu.memory_space<vmem>>, %arg4: memref<9x4x4xf32, #tpu.memory_space<vmem>>, %arg5: memref<3x3x16xf32, #tpu.memory_space<vmem>>, %arg6: memref<16x32xf32, #tpu.memory_space<vmem>>, %arg7: memref<1x32xf32, #tpu.memory_space<vmem>>, %arg8: memref<1x32xf32, #tpu.memory_space<vmem>>, %arg9: memref<3x3x32xf32, #tpu.memory_space<vmem>>, %arg10: memref<32x64xf32, #tpu.memory_space<vmem>>, %arg11: memref<1x64xf32, #tpu.memory_space<vmem>>, %arg12: memref<1x64xf32, #tpu.memory_space<vmem>>, %arg13: memref<3x3x64xf32, #tpu.memory_space<vmem>>, %arg14: memref<64x32xf32, #tpu.memory_space<vmem>>, %arg15: memref<1x32xf32, #tpu.memory_space<vmem>>, %arg16: memref<1x32xf32, #tpu.memory_space<vmem>>, %arg17: memref<32x2xf32, #tpu.memory_space<vmem>>, %arg18: memref<2x32xf32, #tpu.memory_space<vmem>>, %arg19: memref<16x32xf32, #tpu.memory_space<vmem>>, %arg20: memref<1x32xf32, #tpu.memory_space<vmem>>, %arg21: memref<1x32xf32, #tpu.memory_space<vmem>>, %arg22: memref<1x32xf32, #tpu.memory_space<vmem>>, %arg23: memref<3x3x32xf32, #tpu.memory_space<vmem>>, %arg24: memref<32x32xf32, #tpu.memory_space<vmem>>, %arg25: memref<1x32xf32, #tpu.memory_space<vmem>>, %arg26: memref<1x32xf32, #tpu.memory_space<vmem>>, %arg27: memref<32x16xf32, #tpu.memory_space<vmem>>, %arg28: memref<1x16xf32, #tpu.memory_space<vmem>>, %arg29: memref<1x16xf32, #tpu.memory_space<vmem>>, %arg30: memref<1x16xf32, #tpu.memory_space<vmem>>, %arg31: memref<16x1xf32, #tpu.memory_space<vmem>>, %arg32: memref<1x16xf32, #tpu.memory_space<vmem>>, %arg33: memref<32x32xf32, #tpu.memory_space<vmem>>, %arg34: memref<16x32xf32, #tpu.memory_space<vmem>>, %arg35: memref<1x32xf32, #tpu.memory_space<vmem>>, %arg36: memref<1x32xf32, #tpu.memory_space<vmem>>, %arg37: memref<1x32xf32, #tpu.memory_space<vmem>>, %arg38: memref<32x2xf32, #tpu.memory_space<vmem>>, %arg39: memref<2x32xf32, #tpu.memory_space<vmem>>, %arg40: memref<16x32xf32, #tpu.memory_space<vmem>>, %arg41: memref<1x32xf32, #tpu.memory_space<vmem>>, %arg42: memref<1x32xf32, #tpu.memory_space<vmem>>, %arg43: memref<1x256x32xf32, #tpu.memory_space<vmem>>, %arg44: memref<18x18x16xf32, #tpu.memory_space<vmem>>, %arg45: memref<18x18x32xf32, #tpu.memory_space<vmem>>, %arg46: memref<18x18x64xf32, #tpu.memory_space<vmem>>) attributes {dimension_semantics = [#tpu.dimension_semantics<parallel>], iteration_bounds = array<i64: 2>, scalar_prefetch = 0 : i64, scratch_operands = 3 : i64, tpu.core_type = #tpu.core_type<tc>, window_params = [{transform_indices = @transform_0, window_bounds = array<i64: 1, 16, 16, 16>}, {pipeline_mode = #tpu.pipeline_mode<synchronous>, transform_indices = @transform_1, window_bounds = array<i64: 4, 256>}, {pipeline_mode = #tpu.pipeline_mode<synchronous>, transform_indices = @transform_2, window_bounds = array<i64: 256, 4>}, {pipeline_mode = #tpu.pipeline_mode<synchronous>, transform_indices = @transform_3, window_bounds = array<i64: 9, 4, 4>}, {pipeline_mode = #tpu.pipeline_mode<synchronous>, transform_indices = @transform_4, window_bounds = array<i64: 3, 3, 16>}, {pipeline_mode = #tpu.pipeline_mode<synchronous>, transform_indices = @transform_5, window_bounds = array<i64: 16, 32>}, {pipeline_mode = #tpu.pipeline_mode<synchronous>, transform_indices = @transform_6, window_bounds = array<i64: 1, 32>}, {pipeline_mode = #tpu.pipeline_mode<synchronous>, transform_indices = @transform_7, window_bounds = array<i64: 1, 32>}, {pipeline_mode = #tpu.pipeline_mode<synchronous>, transform_indices = @transform_8, window_bounds = array<i64: 3, 3, 32>}, {pipeline_mode = #tpu.pipeline_mode<synchronous>, transform_indices = @transform_9, window_bounds = array<i64: 32, 64>}, {pipeline_mode = #tpu.pipeline_mode<synchronous>, transform_indices = @transform_10, window_bounds = array<i64: 1, 64>}, {pipeline_mode = #tpu.pipeline_mode<synchronous>, transform_indices = @transform_11, window_bounds = array<i64: 1, 64>}, {pipeline_mode = #tpu.pipeline_mode<synchronous>, transform_indices = @transform_12, window_bounds = array<i64: 3, 3, 64>}, {pipeline_mode = #tpu.pipeline_mode<synchronous>, transform_indices = @transform_13, window_bounds = array<i64: 64, 32>}, {pipeline_mode = #tpu.pipeline_mode<synchronous>, transform_indices = @transform_14, window_bounds = array<i64: 1, 32>}, {pipeline_mode = #tpu.pipeline_mode<synchronous>, transform_indices = @transform_15, window_bounds = array<i64: 1, 32>}, {pipeline_mode = #tpu.pipeline_mode<synchronous>, transform_indices = @transform_16, window_bounds = array<i64: 32, 2>}, {pipeline_mode = #tpu.pipeline_mode<synchronous>, transform_indices = @transform_17, window_bounds = array<i64: 2, 32>}, {pipeline_mode = #tpu.pipeline_mode<synchronous>, transform_indices = @transform_18, window_bounds = array<i64: 16, 32>}, {pipeline_mode = #tpu.pipeline_mode<synchronous>, transform_indices = @transform_19, window_bounds = array<i64: 1, 32>}, {pipeline_mode = #tpu.pipeline_mode<synchronous>, transform_indices = @transform_20, window_bounds = array<i64: 1, 32>}, {pipeline_mode = #tpu.pipeline_mode<synchronous>, transform_indices = @transform_21, window_bounds = array<i64: 1, 32>}, {pipeline_mode = #tpu.pipeline_mode<synchronous>, transform_indices = @transform_22, window_bounds = array<i64: 3, 3, 32>}, {pipeline_mode = #tpu.pipeline_mode<synchronous>, transform_indices = @transform_23, window_bounds = array<i64: 32, 32>}, {pipeline_mode = #tpu.pipeline_mode<synchronous>, transform_indices = @transform_24, window_bounds = array<i64: 1, 32>}, {pipeline_mode = #tpu.pipeline_mode<synchronous>, transform_indices = @transform_25, window_bounds = array<i64: 1, 32>}, {pipeline_mode = #tpu.pipeline_mode<synchronous>, transform_indices = @transform_26, window_bounds = array<i64: 32, 16>}, {pipeline_mode = #tpu.pipeline_mode<synchronous>, transform_indices = @transform_27, window_bounds = array<i64: 1, 16>}, {pipeline_mode = #tpu.pipeline_mode<synchronous>, transform_indices = @transform_28, window_bounds = array<i64: 1, 16>}, {pipeline_mode = #tpu.pipeline_mode<synchronous>, transform_indices = @transform_29, window_bounds = array<i64: 1, 16>}, {pipeline_mode = #tpu.pipeline_mode<synchronous>, transform_indices = @transform_30, window_bounds = array<i64: 16, 1>}, {pipeline_mode = #tpu.pipeline_mode<synchronous>, transform_indices = @transform_31, window_bounds = array<i64: 1, 16>}, {pipeline_mode = #tpu.pipeline_mode<synchronous>, transform_indices = @transform_32, window_bounds = array<i64: 32, 32>}, {pipeline_mode = #tpu.pipeline_mode<synchronous>, transform_indices = @transform_33, window_bounds = array<i64: 16, 32>}, {pipeline_mode = #tpu.pipeline_mode<synchronous>, transform_indices = @transform_34, window_bounds = array<i64: 1, 32>}, {pipeline_mode = #tpu.pipeline_mode<synchronous>, transform_indices = @transform_35, window_bounds = array<i64: 1, 32>}, {pipeline_mode = #tpu.pipeline_mode<synchronous>, transform_indices = @transform_36, window_bounds = array<i64: 1, 32>}, {pipeline_mode = #tpu.pipeline_mode<synchronous>, transform_indices = @transform_37, window_bounds = array<i64: 32, 2>}, {pipeline_mode = #tpu.pipeline_mode<synchronous>, transform_indices = @transform_38, window_bounds = array<i64: 2, 32>}, {pipeline_mode = #tpu.pipeline_mode<synchronous>, transform_indices = @transform_39, window_bounds = array<i64: 16, 32>}, {pipeline_mode = #tpu.pipeline_mode<synchronous>, transform_indices = @transform_40, window_bounds = array<i64: 1, 32>}, {pipeline_mode = #tpu.pipeline_mode<synchronous>, transform_indices = @transform_41, window_bounds = array<i64: 1, 32>}, {transform_indices = @transform_42, window_bounds = array<i64: 1, 256, 32>}]} {
    %c0 = arith.constant 0 : index
    %c0_0 = arith.constant 0 : index
    %c0_1 = arith.constant 0 : index
    %c0_2 = arith.constant 0 : index
    %0 = vector.load %arg1[%c0, %c0_0, %c0_1, %c0_2] : memref<1x16x16x16xf32, #tpu.memory_space<vmem>>, vector<1x16x16x16xf32>
    %1 = vector.shape_cast %0 : vector<1x16x16x16xf32> to vector<16x16x16xf32>
    %cst = arith.constant 0.000000e+00 : f32
    %2 = vector.broadcast %cst : f32 to vector<18x18x16xf32>
    %c0_3 = arith.constant 0 : index
    %c0_4 = arith.constant 0 : index
    %c0_5 = arith.constant 0 : index
    %3 = vector.load %arg44[%c0_3, %c0_4, %c0_5] : memref<18x18x16xf32, #tpu.memory_space<vmem>>, vector<18x18x16xf32>
    tpu.vector_store %arg44[%c0_3, %c0_4, %c0_5], %2 {strides = array<i32>} : memref<18x18x16xf32, #tpu.memory_space<vmem>>, vector<18x18x16xf32>,
    %c1 = arith.constant 1 : index
    %c1_6 = arith.constant 1 : index
    %c0_7 = arith.constant 0 : index
    %4 = vector.load %arg44[%c1, %c1_6, %c0_7] : memref<18x18x16xf32, #tpu.memory_space<vmem>>, vector<16x16x16xf32>
    tpu.vector_store %arg44[%c1, %c1_6, %c0_7], %1 {strides = array<i32>} : memref<18x18x16xf32, #tpu.memory_space<vmem>>, vector<16x16x16xf32>,
    %cst_8 = arith.constant 0.000000e+00 : f32
    %5 = vector.broadcast %cst_8 : f32 to vector<16x16x16xf32>
    %c0_9 = arith.constant 0 : index
    %c0_10 = arith.constant 0 : index
    %c0_11 = arith.constant 0 : index
    %6 = vector.load %arg5[%c0_9, %c0_10, %c0_11] : memref<3x3x16xf32, #tpu.memory_space<vmem>>, vector<1x1x16xf32>
    %7 = vector.shape_cast %6 : vector<1x1x16xf32> to vector<16xf32>
    %c0_12 = arith.constant 0 : index
    %c0_13 = arith.constant 0 : index
    %c0_14 = arith.constant 0 : index
    %8 = vector.load %arg44[%c0_12, %c0_13, %c0_14] : memref<18x18x16xf32, #tpu.memory_space<vmem>>, vector<16x16x16xf32>
    %9 = vector.shape_cast %7 : vector<16xf32> to vector<1x1x16xf32>
    %10 = vector.broadcast %9 : vector<1x1x16xf32> to vector<16x16x16xf32>
    %11 = arith.mulf %8, %10 : vector<16x16x16xf32>
    %12 = arith.addf %5, %11 : vector<16x16x16xf32>
    %c0_15 = arith.constant 0 : index
    %c1_16 = arith.constant 1 : index
    %c0_17 = arith.constant 0 : index
    %13 = vector.load %arg5[%c0_15, %c1_16, %c0_17] : memref<3x3x16xf32, #tpu.memory_space<vmem>>, vector<1x1x16xf32>
    %14 = vector.shape_cast %13 : vector<1x1x16xf32> to vector<16xf32>
    %c0_18 = arith.constant 0 : index
    %c1_19 = arith.constant 1 : index
    %c0_20 = arith.constant 0 : index
    %15 = vector.load %arg44[%c0_18, %c1_19, %c0_20] : memref<18x18x16xf32, #tpu.memory_space<vmem>>, vector<16x16x16xf32>
    %16 = vector.shape_cast %14 : vector<16xf32> to vector<1x1x16xf32>
    %17 = vector.broadcast %16 : vector<1x1x16xf32> to vector<16x16x16xf32>
    %18 = arith.mulf %15, %17 : vector<16x16x16xf32>
    %19 = arith.addf %12, %18 : vector<16x16x16xf32>
    %c0_21 = arith.constant 0 : index
    %c2 = arith.constant 2 : index
    %c0_22 = arith.constant 0 : index
    %20 = vector.load %arg5[%c0_21, %c2, %c0_22] : memref<3x3x16xf32, #tpu.memory_space<vmem>>, vector<1x1x16xf32>
    %21 = vector.shape_cast %20 : vector<1x1x16xf32> to vector<16xf32>
    %c0_23 = arith.constant 0 : index
    %c2_24 = arith.constant 2 : index
    %c0_25 = arith.constant 0 : index
    %22 = vector.load %arg44[%c0_23, %c2_24, %c0_25] : memref<18x18x16xf32, #tpu.memory_space<vmem>>, vector<16x16x16xf32>
    %23 = vector.shape_cast %21 : vector<16xf32> to vector<1x1x16xf32>
    %24 = vector.broadcast %23 : vector<1x1x16xf32> to vector<16x16x16xf32>
    %25 = arith.mulf %22, %24 : vector<16x16x16xf32>
    %26 = arith.addf %19, %25 : vector<16x16x16xf32>
    %c1_26 = arith.constant 1 : index
    %c0_27 = arith.constant 0 : index
    %c0_28 = arith.constant 0 : index
    %27 = vector.load %arg5[%c1_26, %c0_27, %c0_28] : memref<3x3x16xf32, #tpu.memory_space<vmem>>, vector<1x1x16xf32>
    %28 = vector.shape_cast %27 : vector<1x1x16xf32> to vector<16xf32>
    %c1_29 = arith.constant 1 : index
    %c0_30 = arith.constant 0 : index
    %c0_31 = arith.constant 0 : index
    %29 = vector.load %arg44[%c1_29, %c0_30, %c0_31] : memref<18x18x16xf32, #tpu.memory_space<vmem>>, vector<16x16x16xf32>
    %30 = vector.shape_cast %28 : vector<16xf32> to vector<1x1x16xf32>
    %31 = vector.broadcast %30 : vector<1x1x16xf32> to vector<16x16x16xf32>
    %32 = arith.mulf %29, %31 : vector<16x16x16xf32>
    %33 = arith.addf %26, %32 : vector<16x16x16xf32>
    %c1_32 = arith.constant 1 : index
    %c1_33 = arith.constant 1 : index
    %c0_34 = arith.constant 0 : index
    %34 = vector.load %arg5[%c1_32, %c1_33, %c0_34] : memref<3x3x16xf32, #tpu.memory_space<vmem>>, vector<1x1x16xf32>
    %35 = vector.shape_cast %34 : vector<1x1x16xf32> to vector<16xf32>
    %c1_35 = arith.constant 1 : index
    %c1_36 = arith.constant 1 : index
    %c0_37 = arith.constant 0 : index
    %36 = vector.load %arg44[%c1_35, %c1_36, %c0_37] : memref<18x18x16xf32, #tpu.memory_space<vmem>>, vector<16x16x16xf32>
    %37 = vector.shape_cast %35 : vector<16xf32> to vector<1x1x16xf32>
    %38 = vector.broadcast %37 : vector<1x1x16xf32> to vector<16x16x16xf32>
    %39 = arith.mulf %36, %38 : vector<16x16x16xf32>
    %40 = arith.addf %33, %39 : vector<16x16x16xf32>
    %c1_38 = arith.constant 1 : index
    %c2_39 = arith.constant 2 : index
    %c0_40 = arith.constant 0 : index
    %41 = vector.load %arg5[%c1_38, %c2_39, %c0_40] : memref<3x3x16xf32, #tpu.memory_space<vmem>>, vector<1x1x16xf32>
    %42 = vector.shape_cast %41 : vector<1x1x16xf32> to vector<16xf32>
    %c1_41 = arith.constant 1 : index
    %c2_42 = arith.constant 2 : index
    %c0_43 = arith.constant 0 : index
    %43 = vector.load %arg44[%c1_41, %c2_42, %c0_43] : memref<18x18x16xf32, #tpu.memory_space<vmem>>, vector<16x16x16xf32>
    %44 = vector.shape_cast %42 : vector<16xf32> to vector<1x1x16xf32>
    %45 = vector.broadcast %44 : vector<1x1x16xf32> to vector<16x16x16xf32>
    %46 = arith.mulf %43, %45 : vector<16x16x16xf32>
    %47 = arith.addf %40, %46 : vector<16x16x16xf32>
    %c2_44 = arith.constant 2 : index
    %c0_45 = arith.constant 0 : index
    %c0_46 = arith.constant 0 : index
    %48 = vector.load %arg5[%c2_44, %c0_45, %c0_46] : memref<3x3x16xf32, #tpu.memory_space<vmem>>, vector<1x1x16xf32>
    %49 = vector.shape_cast %48 : vector<1x1x16xf32> to vector<16xf32>
    %c2_47 = arith.constant 2 : index
    %c0_48 = arith.constant 0 : index
    %c0_49 = arith.constant 0 : index
    %50 = vector.load %arg44[%c2_47, %c0_48, %c0_49] : memref<18x18x16xf32, #tpu.memory_space<vmem>>, vector<16x16x16xf32>
    %51 = vector.shape_cast %49 : vector<16xf32> to vector<1x1x16xf32>
    %52 = vector.broadcast %51 : vector<1x1x16xf32> to vector<16x16x16xf32>
    %53 = arith.mulf %50, %52 : vector<16x16x16xf32>
    %54 = arith.addf %47, %53 : vector<16x16x16xf32>
    %c2_50 = arith.constant 2 : index
    %c1_51 = arith.constant 1 : index
    %c0_52 = arith.constant 0 : index
    %55 = vector.load %arg5[%c2_50, %c1_51, %c0_52] : memref<3x3x16xf32, #tpu.memory_space<vmem>>, vector<1x1x16xf32>
    %56 = vector.shape_cast %55 : vector<1x1x16xf32> to vector<16xf32>
    %c2_53 = arith.constant 2 : index
    %c1_54 = arith.constant 1 : index
    %c0_55 = arith.constant 0 : index
    %57 = vector.load %arg44[%c2_53, %c1_54, %c0_55] : memref<18x18x16xf32, #tpu.memory_space<vmem>>, vector<16x16x16xf32>
    %58 = vector.shape_cast %56 : vector<16xf32> to vector<1x1x16xf32>
    %59 = vector.broadcast %58 : vector<1x1x16xf32> to vector<16x16x16xf32>
    %60 = arith.mulf %57, %59 : vector<16x16x16xf32>
    %61 = arith.addf %54, %60 : vector<16x16x16xf32>
    %c2_56 = arith.constant 2 : index
    %c2_57 = arith.constant 2 : index
    %c0_58 = arith.constant 0 : index
    %62 = vector.load %arg5[%c2_56, %c2_57, %c0_58] : memref<3x3x16xf32, #tpu.memory_space<vmem>>, vector<1x1x16xf32>
    %63 = vector.shape_cast %62 : vector<1x1x16xf32> to vector<16xf32>
    %c2_59 = arith.constant 2 : index
    %c2_60 = arith.constant 2 : index
    %c0_61 = arith.constant 0 : index
    %64 = vector.load %arg44[%c2_59, %c2_60, %c0_61] : memref<18x18x16xf32, #tpu.memory_space<vmem>>, vector<16x16x16xf32>
    %65 = vector.shape_cast %63 : vector<16xf32> to vector<1x1x16xf32>
    %66 = vector.broadcast %65 : vector<1x1x16xf32> to vector<16x16x16xf32>
    %67 = arith.mulf %64, %66 : vector<16x16x16xf32>
    %68 = arith.addf %61, %67 : vector<16x16x16xf32>
    %69 = vector.shape_cast %68 : vector<16x16x16xf32> to vector<256x16xf32>
    %c0_62 = arith.constant 0 : index
    %c0_63 = arith.constant 0 : index
    %70 = vector.load %arg6[%c0_62, %c0_63] : memref<16x32xf32, #tpu.memory_space<vmem>>, vector<16x32xf32>
    %cst_64 = arith.constant dense<0.000000e+00> : vector<256x32xf32>
    %71 = tpu.matmul %69, %70, %cst_64 {dimension_numbers = #tpu.dot_dimension_numbers<[1], [0], [0], [1], [0, 0, 1, 1], [], []>} : vector<256x16xf32>, vector<16x32xf32>, vector<256x32xf32> -> vector<256x32xf32>
    %c0_65 = arith.constant 0 : index
    %c0_66 = arith.constant 0 : index
    %72 = vector.load %arg7[%c0_65, %c0_66] : memref<1x32xf32, #tpu.memory_space<vmem>>, vector<1x32xf32>
    %73 = vector.broadcast %72 : vector<1x32xf32> to vector<256x32xf32>
    %74 = arith.mulf %71, %73 : vector<256x32xf32>
    %c0_67 = arith.constant 0 : index
    %c0_68 = arith.constant 0 : index
    %75 = vector.load %arg8[%c0_67, %c0_68] : memref<1x32xf32, #tpu.memory_space<vmem>>, vector<1x32xf32>
    %76 = vector.broadcast %75 : vector<1x32xf32> to vector<256x32xf32>
    %77 = arith.addf %74, %76 : vector<256x32xf32>
    %cst_69 = arith.constant 0.000000e+00 : f32
    %78 = vector.broadcast %cst_69 : f32 to vector<256x32xf32>
    %79 = arith.cmpf oge, %77, %78 : vector<256x32xf32>
    %cst_70 = arith.constant 2.000000e-01 : f32
    %80 = vector.broadcast %cst_70 : f32 to vector<256x32xf32>
    %81 = arith.mulf %80, %77 : vector<256x32xf32>
    %82 = arith.select %79, %77, %81 : vector<256x32xi1>, vector<256x32xf32>
    %83 = vector.shape_cast %82 : vector<256x32xf32> to vector<16x16x32xf32>
    %cst_71 = arith.constant 0.000000e+00 : f32
    %84 = vector.broadcast %cst_71 : f32 to vector<18x18x32xf32>
    %c0_72 = arith.constant 0 : index
    %c0_73 = arith.constant 0 : index
    %c0_74 = arith.constant 0 : index
    %85 = vector.load %arg45[%c0_72, %c0_73, %c0_74] : memref<18x18x32xf32, #tpu.memory_space<vmem>>, vector<18x18x32xf32>
    tpu.vector_store %arg45[%c0_72, %c0_73, %c0_74], %84 {strides = array<i32>} : memref<18x18x32xf32, #tpu.memory_space<vmem>>, vector<18x18x32xf32>,
    %c1_75 = arith.constant 1 : index
    %c1_76 = arith.constant 1 : index
    %c0_77 = arith.constant 0 : index
    %86 = vector.load %arg45[%c1_75, %c1_76, %c0_77] : memref<18x18x32xf32, #tpu.memory_space<vmem>>, vector<16x16x32xf32>
    tpu.vector_store %arg45[%c1_75, %c1_76, %c0_77], %83 {strides = array<i32>} : memref<18x18x32xf32, #tpu.memory_space<vmem>>, vector<16x16x32xf32>,
    %cst_78 = arith.constant 0.000000e+00 : f32
    %87 = vector.broadcast %cst_78 : f32 to vector<16x16x32xf32>
    %c0_79 = arith.constant 0 : index
    %c0_80 = arith.constant 0 : index
    %c0_81 = arith.constant 0 : index
    %88 = vector.load %arg9[%c0_79, %c0_80, %c0_81] : memref<3x3x32xf32, #tpu.memory_space<vmem>>, vector<1x1x32xf32>
    %89 = vector.shape_cast %88 : vector<1x1x32xf32> to vector<32xf32>
    %c0_82 = arith.constant 0 : index
    %c0_83 = arith.constant 0 : index
    %c0_84 = arith.constant 0 : index
    %90 = vector.load %arg45[%c0_82, %c0_83, %c0_84] : memref<18x18x32xf32, #tpu.memory_space<vmem>>, vector<16x16x32xf32>
    %91 = vector.shape_cast %89 : vector<32xf32> to vector<1x1x32xf32>
    %92 = vector.broadcast %91 : vector<1x1x32xf32> to vector<16x16x32xf32>
    %93 = arith.mulf %90, %92 : vector<16x16x32xf32>
    %94 = arith.addf %87, %93 : vector<16x16x32xf32>
    %c0_85 = arith.constant 0 : index
    %c1_86 = arith.constant 1 : index
    %c0_87 = arith.constant 0 : index
    %95 = vector.load %arg9[%c0_85, %c1_86, %c0_87] : memref<3x3x32xf32, #tpu.memory_space<vmem>>, vector<1x1x32xf32>
    %96 = vector.shape_cast %95 : vector<1x1x32xf32> to vector<32xf32>
    %c0_88 = arith.constant 0 : index
    %c1_89 = arith.constant 1 : index
    %c0_90 = arith.constant 0 : index
    %97 = vector.load %arg45[%c0_88, %c1_89, %c0_90] : memref<18x18x32xf32, #tpu.memory_space<vmem>>, vector<16x16x32xf32>
    %98 = vector.shape_cast %96 : vector<32xf32> to vector<1x1x32xf32>
    %99 = vector.broadcast %98 : vector<1x1x32xf32> to vector<16x16x32xf32>
    %100 = arith.mulf %97, %99 : vector<16x16x32xf32>
    %101 = arith.addf %94, %100 : vector<16x16x32xf32>
    %c0_91 = arith.constant 0 : index
    %c2_92 = arith.constant 2 : index
    %c0_93 = arith.constant 0 : index
    %102 = vector.load %arg9[%c0_91, %c2_92, %c0_93] : memref<3x3x32xf32, #tpu.memory_space<vmem>>, vector<1x1x32xf32>
    %103 = vector.shape_cast %102 : vector<1x1x32xf32> to vector<32xf32>
    %c0_94 = arith.constant 0 : index
    %c2_95 = arith.constant 2 : index
    %c0_96 = arith.constant 0 : index
    %104 = vector.load %arg45[%c0_94, %c2_95, %c0_96] : memref<18x18x32xf32, #tpu.memory_space<vmem>>, vector<16x16x32xf32>
    %105 = vector.shape_cast %103 : vector<32xf32> to vector<1x1x32xf32>
    %106 = vector.broadcast %105 : vector<1x1x32xf32> to vector<16x16x32xf32>
    %107 = arith.mulf %104, %106 : vector<16x16x32xf32>
    %108 = arith.addf %101, %107 : vector<16x16x32xf32>
    %c1_97 = arith.constant 1 : index
    %c0_98 = arith.constant 0 : index
    %c0_99 = arith.constant 0 : index
    %109 = vector.load %arg9[%c1_97, %c0_98, %c0_99] : memref<3x3x32xf32, #tpu.memory_space<vmem>>, vector<1x1x32xf32>
    %110 = vector.shape_cast %109 : vector<1x1x32xf32> to vector<32xf32>
    %c1_100 = arith.constant 1 : index
    %c0_101 = arith.constant 0 : index
    %c0_102 = arith.constant 0 : index
    %111 = vector.load %arg45[%c1_100, %c0_101, %c0_102] : memref<18x18x32xf32, #tpu.memory_space<vmem>>, vector<16x16x32xf32>
    %112 = vector.shape_cast %110 : vector<32xf32> to vector<1x1x32xf32>
    %113 = vector.broadcast %112 : vector<1x1x32xf32> to vector<16x16x32xf32>
    %114 = arith.mulf %111, %113 : vector<16x16x32xf32>
    %115 = arith.addf %108, %114 : vector<16x16x32xf32>
    %c1_103 = arith.constant 1 : index
    %c1_104 = arith.constant 1 : index
    %c0_105 = arith.constant 0 : index
    %116 = vector.load %arg9[%c1_103, %c1_104, %c0_105] : memref<3x3x32xf32, #tpu.memory_space<vmem>>, vector<1x1x32xf32>
    %117 = vector.shape_cast %116 : vector<1x1x32xf32> to vector<32xf32>
    %c1_106 = arith.constant 1 : index
    %c1_107 = arith.constant 1 : index
    %c0_108 = arith.constant 0 : index
    %118 = vector.load %arg45[%c1_106, %c1_107, %c0_108] : memref<18x18x32xf32, #tpu.memory_space<vmem>>, vector<16x16x32xf32>
    %119 = vector.shape_cast %117 : vector<32xf32> to vector<1x1x32xf32>
    %120 = vector.broadcast %119 : vector<1x1x32xf32> to vector<16x16x32xf32>
    %121 = arith.mulf %118, %120 : vector<16x16x32xf32>
    %122 = arith.addf %115, %121 : vector<16x16x32xf32>
    %c1_109 = arith.constant 1 : index
    %c2_110 = arith.constant 2 : index
    %c0_111 = arith.constant 0 : index
    %123 = vector.load %arg9[%c1_109, %c2_110, %c0_111] : memref<3x3x32xf32, #tpu.memory_space<vmem>>, vector<1x1x32xf32>
    %124 = vector.shape_cast %123 : vector<1x1x32xf32> to vector<32xf32>
    %c1_112 = arith.constant 1 : index
    %c2_113 = arith.constant 2 : index
    %c0_114 = arith.constant 0 : index
    %125 = vector.load %arg45[%c1_112, %c2_113, %c0_114] : memref<18x18x32xf32, #tpu.memory_space<vmem>>, vector<16x16x32xf32>
    %126 = vector.shape_cast %124 : vector<32xf32> to vector<1x1x32xf32>
    %127 = vector.broadcast %126 : vector<1x1x32xf32> to vector<16x16x32xf32>
    %128 = arith.mulf %125, %127 : vector<16x16x32xf32>
    %129 = arith.addf %122, %128 : vector<16x16x32xf32>
    %c2_115 = arith.constant 2 : index
    %c0_116 = arith.constant 0 : index
    %c0_117 = arith.constant 0 : index
    %130 = vector.load %arg9[%c2_115, %c0_116, %c0_117] : memref<3x3x32xf32, #tpu.memory_space<vmem>>, vector<1x1x32xf32>
    %131 = vector.shape_cast %130 : vector<1x1x32xf32> to vector<32xf32>
    %c2_118 = arith.constant 2 : index
    %c0_119 = arith.constant 0 : index
    %c0_120 = arith.constant 0 : index
    %132 = vector.load %arg45[%c2_118, %c0_119, %c0_120] : memref<18x18x32xf32, #tpu.memory_space<vmem>>, vector<16x16x32xf32>
    %133 = vector.shape_cast %131 : vector<32xf32> to vector<1x1x32xf32>
    %134 = vector.broadcast %133 : vector<1x1x32xf32> to vector<16x16x32xf32>
    %135 = arith.mulf %132, %134 : vector<16x16x32xf32>
    %136 = arith.addf %129, %135 : vector<16x16x32xf32>
    %c2_121 = arith.constant 2 : index
    %c1_122 = arith.constant 1 : index
    %c0_123 = arith.constant 0 : index
    %137 = vector.load %arg9[%c2_121, %c1_122, %c0_123] : memref<3x3x32xf32, #tpu.memory_space<vmem>>, vector<1x1x32xf32>
    %138 = vector.shape_cast %137 : vector<1x1x32xf32> to vector<32xf32>
    %c2_124 = arith.constant 2 : index
    %c1_125 = arith.constant 1 : index
    %c0_126 = arith.constant 0 : index
    %139 = vector.load %arg45[%c2_124, %c1_125, %c0_126] : memref<18x18x32xf32, #tpu.memory_space<vmem>>, vector<16x16x32xf32>
    %140 = vector.shape_cast %138 : vector<32xf32> to vector<1x1x32xf32>
    %141 = vector.broadcast %140 : vector<1x1x32xf32> to vector<16x16x32xf32>
    %142 = arith.mulf %139, %141 : vector<16x16x32xf32>
    %143 = arith.addf %136, %142 : vector<16x16x32xf32>
    %c2_127 = arith.constant 2 : index
    %c2_128 = arith.constant 2 : index
    %c0_129 = arith.constant 0 : index
    %144 = vector.load %arg9[%c2_127, %c2_128, %c0_129] : memref<3x3x32xf32, #tpu.memory_space<vmem>>, vector<1x1x32xf32>
    %145 = vector.shape_cast %144 : vector<1x1x32xf32> to vector<32xf32>
    %c2_130 = arith.constant 2 : index
    %c2_131 = arith.constant 2 : index
    %c0_132 = arith.constant 0 : index
    %146 = vector.load %arg45[%c2_130, %c2_131, %c0_132] : memref<18x18x32xf32, #tpu.memory_space<vmem>>, vector<16x16x32xf32>
    %147 = vector.shape_cast %145 : vector<32xf32> to vector<1x1x32xf32>
    %148 = vector.broadcast %147 : vector<1x1x32xf32> to vector<16x16x32xf32>
    %149 = arith.mulf %146, %148 : vector<16x16x32xf32>
    %150 = arith.addf %143, %149 : vector<16x16x32xf32>
    %151 = vector.shape_cast %150 : vector<16x16x32xf32> to vector<256x32xf32>
    %c0_133 = arith.constant 0 : index
    %c0_134 = arith.constant 0 : index
    %152 = vector.load %arg10[%c0_133, %c0_134] : memref<32x64xf32, #tpu.memory_space<vmem>>, vector<32x64xf32>
    %cst_135 = arith.constant dense<0.000000e+00> : vector<256x64xf32>
    %153 = tpu.matmul %151, %152, %cst_135 {dimension_numbers = #tpu.dot_dimension_numbers<[1], [0], [0], [1], [0, 0, 1, 1], [], []>} : vector<256x32xf32>, vector<32x64xf32>, vector<256x64xf32> -> vector<256x64xf32>
    %c0_136 = arith.constant 0 : index
    %c0_137 = arith.constant 0 : index
    %154 = vector.load %arg11[%c0_136, %c0_137] : memref<1x64xf32, #tpu.memory_space<vmem>>, vector<1x64xf32>
    %155 = vector.broadcast %154 : vector<1x64xf32> to vector<256x64xf32>
    %156 = arith.mulf %153, %155 : vector<256x64xf32>
    %c0_138 = arith.constant 0 : index
    %c0_139 = arith.constant 0 : index
    %157 = vector.load %arg12[%c0_138, %c0_139] : memref<1x64xf32, #tpu.memory_space<vmem>>, vector<1x64xf32>
    %158 = vector.broadcast %157 : vector<1x64xf32> to vector<256x64xf32>
    %159 = arith.addf %156, %158 : vector<256x64xf32>
    %cst_140 = arith.constant 0.000000e+00 : f32
    %160 = vector.broadcast %cst_140 : f32 to vector<256x64xf32>
    %161 = arith.cmpf oge, %159, %160 : vector<256x64xf32>
    %cst_141 = arith.constant 2.000000e-01 : f32
    %162 = vector.broadcast %cst_141 : f32 to vector<256x64xf32>
    %163 = arith.mulf %162, %159 : vector<256x64xf32>
    %164 = arith.select %161, %159, %163 : vector<256x64xi1>, vector<256x64xf32>
    %165 = vector.shape_cast %164 : vector<256x64xf32> to vector<16x16x64xf32>
    %cst_142 = arith.constant 0.000000e+00 : f32
    %166 = vector.broadcast %cst_142 : f32 to vector<18x18x64xf32>
    %c0_143 = arith.constant 0 : index
    %c0_144 = arith.constant 0 : index
    %c0_145 = arith.constant 0 : index
    %167 = vector.load %arg46[%c0_143, %c0_144, %c0_145] : memref<18x18x64xf32, #tpu.memory_space<vmem>>, vector<18x18x64xf32>
    tpu.vector_store %arg46[%c0_143, %c0_144, %c0_145], %166 {strides = array<i32>} : memref<18x18x64xf32, #tpu.memory_space<vmem>>, vector<18x18x64xf32>,
    %c1_146 = arith.constant 1 : index
    %c1_147 = arith.constant 1 : index
    %c0_148 = arith.constant 0 : index
    %168 = vector.load %arg46[%c1_146, %c1_147, %c0_148] : memref<18x18x64xf32, #tpu.memory_space<vmem>>, vector<16x16x64xf32>
    tpu.vector_store %arg46[%c1_146, %c1_147, %c0_148], %165 {strides = array<i32>} : memref<18x18x64xf32, #tpu.memory_space<vmem>>, vector<16x16x64xf32>,
    %cst_149 = arith.constant 0.000000e+00 : f32
    %169 = vector.broadcast %cst_149 : f32 to vector<16x16x64xf32>
    %c0_150 = arith.constant 0 : index
    %c0_151 = arith.constant 0 : index
    %c0_152 = arith.constant 0 : index
    %170 = vector.load %arg13[%c0_150, %c0_151, %c0_152] : memref<3x3x64xf32, #tpu.memory_space<vmem>>, vector<1x1x64xf32>
    %171 = vector.shape_cast %170 : vector<1x1x64xf32> to vector<64xf32>
    %c0_153 = arith.constant 0 : index
    %c0_154 = arith.constant 0 : index
    %c0_155 = arith.constant 0 : index
    %172 = vector.load %arg46[%c0_153, %c0_154, %c0_155] : memref<18x18x64xf32, #tpu.memory_space<vmem>>, vector<16x16x64xf32>
    %173 = vector.shape_cast %171 : vector<64xf32> to vector<1x1x64xf32>
    %174 = vector.broadcast %173 : vector<1x1x64xf32> to vector<16x16x64xf32>
    %175 = arith.mulf %172, %174 : vector<16x16x64xf32>
    %176 = arith.addf %169, %175 : vector<16x16x64xf32>
    %c0_156 = arith.constant 0 : index
    %c1_157 = arith.constant 1 : index
    %c0_158 = arith.constant 0 : index
    %177 = vector.load %arg13[%c0_156, %c1_157, %c0_158] : memref<3x3x64xf32, #tpu.memory_space<vmem>>, vector<1x1x64xf32>
    %178 = vector.shape_cast %177 : vector<1x1x64xf32> to vector<64xf32>
    %c0_159 = arith.constant 0 : index
    %c1_160 = arith.constant 1 : index
    %c0_161 = arith.constant 0 : index
    %179 = vector.load %arg46[%c0_159, %c1_160, %c0_161] : memref<18x18x64xf32, #tpu.memory_space<vmem>>, vector<16x16x64xf32>
    %180 = vector.shape_cast %178 : vector<64xf32> to vector<1x1x64xf32>
    %181 = vector.broadcast %180 : vector<1x1x64xf32> to vector<16x16x64xf32>
    %182 = arith.mulf %179, %181 : vector<16x16x64xf32>
    %183 = arith.addf %176, %182 : vector<16x16x64xf32>
    %c0_162 = arith.constant 0 : index
    %c2_163 = arith.constant 2 : index
    %c0_164 = arith.constant 0 : index
    %184 = vector.load %arg13[%c0_162, %c2_163, %c0_164] : memref<3x3x64xf32, #tpu.memory_space<vmem>>, vector<1x1x64xf32>
    %185 = vector.shape_cast %184 : vector<1x1x64xf32> to vector<64xf32>
    %c0_165 = arith.constant 0 : index
    %c2_166 = arith.constant 2 : index
    %c0_167 = arith.constant 0 : index
    %186 = vector.load %arg46[%c0_165, %c2_166, %c0_167] : memref<18x18x64xf32, #tpu.memory_space<vmem>>, vector<16x16x64xf32>
    %187 = vector.shape_cast %185 : vector<64xf32> to vector<1x1x64xf32>
    %188 = vector.broadcast %187 : vector<1x1x64xf32> to vector<16x16x64xf32>
    %189 = arith.mulf %186, %188 : vector<16x16x64xf32>
    %190 = arith.addf %183, %189 : vector<16x16x64xf32>
    %c1_168 = arith.constant 1 : index
    %c0_169 = arith.constant 0 : index
    %c0_170 = arith.constant 0 : index
    %191 = vector.load %arg13[%c1_168, %c0_169, %c0_170] : memref<3x3x64xf32, #tpu.memory_space<vmem>>, vector<1x1x64xf32>
    %192 = vector.shape_cast %191 : vector<1x1x64xf32> to vector<64xf32>
    %c1_171 = arith.constant 1 : index
    %c0_172 = arith.constant 0 : index
    %c0_173 = arith.constant 0 : index
    %193 = vector.load %arg46[%c1_171, %c0_172, %c0_173] : memref<18x18x64xf32, #tpu.memory_space<vmem>>, vector<16x16x64xf32>
    %194 = vector.shape_cast %192 : vector<64xf32> to vector<1x1x64xf32>
    %195 = vector.broadcast %194 : vector<1x1x64xf32> to vector<16x16x64xf32>
    %196 = arith.mulf %193, %195 : vector<16x16x64xf32>
    %197 = arith.addf %190, %196 : vector<16x16x64xf32>
    %c1_174 = arith.constant 1 : index
    %c1_175 = arith.constant 1 : index
    %c0_176 = arith.constant 0 : index
    %198 = vector.load %arg13[%c1_174, %c1_175, %c0_176] : memref<3x3x64xf32, #tpu.memory_space<vmem>>, vector<1x1x64xf32>
    %199 = vector.shape_cast %198 : vector<1x1x64xf32> to vector<64xf32>
    %c1_177 = arith.constant 1 : index
    %c1_178 = arith.constant 1 : index
    %c0_179 = arith.constant 0 : index
    %200 = vector.load %arg46[%c1_177, %c1_178, %c0_179] : memref<18x18x64xf32, #tpu.memory_space<vmem>>, vector<16x16x64xf32>
    %201 = vector.shape_cast %199 : vector<64xf32> to vector<1x1x64xf32>
    %202 = vector.broadcast %201 : vector<1x1x64xf32> to vector<16x16x64xf32>
    %203 = arith.mulf %200, %202 : vector<16x16x64xf32>
    %204 = arith.addf %197, %203 : vector<16x16x64xf32>
    %c1_180 = arith.constant 1 : index
    %c2_181 = arith.constant 2 : index
    %c0_182 = arith.constant 0 : index
    %205 = vector.load %arg13[%c1_180, %c2_181, %c0_182] : memref<3x3x64xf32, #tpu.memory_space<vmem>>, vector<1x1x64xf32>
    %206 = vector.shape_cast %205 : vector<1x1x64xf32> to vector<64xf32>
    %c1_183 = arith.constant 1 : index
    %c2_184 = arith.constant 2 : index
    %c0_185 = arith.constant 0 : index
    %207 = vector.load %arg46[%c1_183, %c2_184, %c0_185] : memref<18x18x64xf32, #tpu.memory_space<vmem>>, vector<16x16x64xf32>
    %208 = vector.shape_cast %206 : vector<64xf32> to vector<1x1x64xf32>
    %209 = vector.broadcast %208 : vector<1x1x64xf32> to vector<16x16x64xf32>
    %210 = arith.mulf %207, %209 : vector<16x16x64xf32>
    %211 = arith.addf %204, %210 : vector<16x16x64xf32>
    %c2_186 = arith.constant 2 : index
    %c0_187 = arith.constant 0 : index
    %c0_188 = arith.constant 0 : index
    %212 = vector.load %arg13[%c2_186, %c0_187, %c0_188] : memref<3x3x64xf32, #tpu.memory_space<vmem>>, vector<1x1x64xf32>
    %213 = vector.shape_cast %212 : vector<1x1x64xf32> to vector<64xf32>
    %c2_189 = arith.constant 2 : index
    %c0_190 = arith.constant 0 : index
    %c0_191 = arith.constant 0 : index
    %214 = vector.load %arg46[%c2_189, %c0_190, %c0_191] : memref<18x18x64xf32, #tpu.memory_space<vmem>>, vector<16x16x64xf32>
    %215 = vector.shape_cast %213 : vector<64xf32> to vector<1x1x64xf32>
    %216 = vector.broadcast %215 : vector<1x1x64xf32> to vector<16x16x64xf32>
    %217 = arith.mulf %214, %216 : vector<16x16x64xf32>
    %218 = arith.addf %211, %217 : vector<16x16x64xf32>
    %c2_192 = arith.constant 2 : index
    %c1_193 = arith.constant 1 : index
    %c0_194 = arith.constant 0 : index
    %219 = vector.load %arg13[%c2_192, %c1_193, %c0_194] : memref<3x3x64xf32, #tpu.memory_space<vmem>>, vector<1x1x64xf32>
    %220 = vector.shape_cast %219 : vector<1x1x64xf32> to vector<64xf32>
    %c2_195 = arith.constant 2 : index
    %c1_196 = arith.constant 1 : index
    %c0_197 = arith.constant 0 : index
    %221 = vector.load %arg46[%c2_195, %c1_196, %c0_197] : memref<18x18x64xf32, #tpu.memory_space<vmem>>, vector<16x16x64xf32>
    %222 = vector.shape_cast %220 : vector<64xf32> to vector<1x1x64xf32>
    %223 = vector.broadcast %222 : vector<1x1x64xf32> to vector<16x16x64xf32>
    %224 = arith.mulf %221, %223 : vector<16x16x64xf32>
    %225 = arith.addf %218, %224 : vector<16x16x64xf32>
    %c2_198 = arith.constant 2 : index
    %c2_199 = arith.constant 2 : index
    %c0_200 = arith.constant 0 : index
    %226 = vector.load %arg13[%c2_198, %c2_199, %c0_200] : memref<3x3x64xf32, #tpu.memory_space<vmem>>, vector<1x1x64xf32>
    %227 = vector.shape_cast %226 : vector<1x1x64xf32> to vector<64xf32>
    %c2_201 = arith.constant 2 : index
    %c2_202 = arith.constant 2 : index
    %c0_203 = arith.constant 0 : index
    %228 = vector.load %arg46[%c2_201, %c2_202, %c0_203] : memref<18x18x64xf32, #tpu.memory_space<vmem>>, vector<16x16x64xf32>
    %229 = vector.shape_cast %227 : vector<64xf32> to vector<1x1x64xf32>
    %230 = vector.broadcast %229 : vector<1x1x64xf32> to vector<16x16x64xf32>
    %231 = arith.mulf %228, %230 : vector<16x16x64xf32>
    %232 = arith.addf %225, %231 : vector<16x16x64xf32>
    %233 = vector.shape_cast %232 : vector<16x16x64xf32> to vector<256x64xf32>
    %c0_204 = arith.constant 0 : index
    %c0_205 = arith.constant 0 : index
    %234 = vector.load %arg14[%c0_204, %c0_205] : memref<64x32xf32, #tpu.memory_space<vmem>>, vector<64x32xf32>
    %cst_206 = arith.constant dense<0.000000e+00> : vector<256x32xf32>
    %235 = tpu.matmul %233, %234, %cst_206 {dimension_numbers = #tpu.dot_dimension_numbers<[1], [0], [0], [1], [0, 0, 1, 1], [], []>} : vector<256x64xf32>, vector<64x32xf32>, vector<256x32xf32> -> vector<256x32xf32>
    %c0_207 = arith.constant 0 : index
    %c0_208 = arith.constant 0 : index
    %236 = vector.load %arg15[%c0_207, %c0_208] : memref<1x32xf32, #tpu.memory_space<vmem>>, vector<1x32xf32>
    %237 = vector.broadcast %236 : vector<1x32xf32> to vector<256x32xf32>
    %238 = arith.mulf %235, %237 : vector<256x32xf32>
    %c0_209 = arith.constant 0 : index
    %c0_210 = arith.constant 0 : index
    %239 = vector.load %arg16[%c0_209, %c0_210] : memref<1x32xf32, #tpu.memory_space<vmem>>, vector<1x32xf32>
    %240 = vector.broadcast %239 : vector<1x32xf32> to vector<256x32xf32>
    %241 = arith.addf %238, %240 : vector<256x32xf32>
    %cst_211 = arith.constant 0.000000e+00 : f32
    %242 = vector.broadcast %cst_211 : f32 to vector<256x32xf32>
    %243 = arith.cmpf oge, %241, %242 : vector<256x32xf32>
    %cst_212 = arith.constant 2.000000e-01 : f32
    %244 = vector.broadcast %cst_212 : f32 to vector<256x32xf32>
    %245 = arith.mulf %244, %241 : vector<256x32xf32>
    %246 = arith.select %243, %241, %245 : vector<256x32xi1>, vector<256x32xf32>
    %cst_213 = arith.constant dense<0.000000e+00> : vector<32xf32>
    %247 = vector.multi_reduction <add>, %246, %cst_213 [0] : vector<256x32xf32> to vector<32xf32>
    %248 = vector.shape_cast %247 : vector<32xf32> to vector<1x32xf32>
    %cst_214 = arith.constant 2.560000e+02 : f32
    %249 = vector.broadcast %cst_214 : f32 to vector<1x32xf32>
    %250 = arith.divf %248, %249 : vector<1x32xf32>
    %c0_215 = arith.constant 0 : index
    %c0_216 = arith.constant 0 : index
    %251 = vector.load %arg17[%c0_215, %c0_216] : memref<32x2xf32, #tpu.memory_space<vmem>>, vector<32x2xf32>
    %cst_217 = arith.constant dense<0.000000e+00> : vector<1x2xf32>
    %252 = tpu.matmul %250, %251, %cst_217 {dimension_numbers = #tpu.dot_dimension_numbers<[1], [0], [0], [1], [0, 0, 1, 1], [], []>} : vector<1x32xf32>, vector<32x2xf32>, vector<1x2xf32> -> vector<1x2xf32>
    %cst_218 = arith.constant 0.000000e+00 : f32
    %253 = vector.broadcast %cst_218 : f32 to vector<1x2xf32>
    %254 = arith.maximumf %252, %253 : vector<1x2xf32>
    %c0_219 = arith.constant 0 : index
    %c0_220 = arith.constant 0 : index
    %255 = vector.load %arg18[%c0_219, %c0_220] : memref<2x32xf32, #tpu.memory_space<vmem>>, vector<2x32xf32>
    %cst_221 = arith.constant dense<0.000000e+00> : vector<1x32xf32>
    %256 = tpu.matmul %254, %255, %cst_221 {dimension_numbers = #tpu.dot_dimension_numbers<[1], [0], [0], [1], [0, 0, 1, 1], [], []>} : vector<1x2xf32>, vector<2x32xf32>, vector<1x32xf32> -> vector<1x32xf32>
    %257 = arith.negf %256 : vector<1x32xf32>
    %258 = math.exp %257 : vector<1x32xf32>
    %cst_222 = arith.constant 1.000000e+00 : f32
    %259 = vector.broadcast %cst_222 : f32 to vector<1x32xf32>
    %260 = arith.addf %259, %258 : vector<1x32xf32>
    %261 = arith.divf %259, %260 : vector<1x32xf32>
    %262 = vector.broadcast %261 : vector<1x32xf32> to vector<256x32xf32>
    %263 = arith.mulf %246, %262 : vector<256x32xf32>
    %264 = vector.shape_cast %1 : vector<16x16x16xf32> to vector<256x16xf32>
    %c0_223 = arith.constant 0 : index
    %c0_224 = arith.constant 0 : index
    %265 = vector.load %arg2[%c0_223, %c0_224] : memref<4x256xf32, #tpu.memory_space<vmem>>, vector<4x256xf32>
    %cst_225 = arith.constant dense<0.000000e+00> : vector<4x16xf32>
    %266 = tpu.matmul %265, %264, %cst_225 {dimension_numbers = #tpu.dot_dimension_numbers<[1], [0], [0], [1], [0, 0, 1, 1], [], []>} : vector<4x256xf32>, vector<256x16xf32>, vector<4x16xf32> -> vector<4x16xf32>
    %c0_226 = arith.constant 0 : index
    %c0_227 = arith.constant 0 : index
    %267 = vector.load %arg19[%c0_226, %c0_227] : memref<16x32xf32, #tpu.memory_space<vmem>>, vector<16x32xf32>
    %cst_228 = arith.constant dense<0.000000e+00> : vector<4x32xf32>
    %268 = tpu.matmul %266, %267, %cst_228 {dimension_numbers = #tpu.dot_dimension_numbers<[1], [0], [0], [1], [0, 0, 1, 1], [], []>} : vector<4x16xf32>, vector<16x32xf32>, vector<4x32xf32> -> vector<4x32xf32>
    %c0_229 = arith.constant 0 : index
    %c0_230 = arith.constant 0 : index
    %269 = vector.load %arg20[%c0_229, %c0_230] : memref<1x32xf32, #tpu.memory_space<vmem>>, vector<1x32xf32>
    %270 = vector.broadcast %269 : vector<1x32xf32> to vector<4x32xf32>
    %271 = arith.addf %268, %270 : vector<4x32xf32>
    %c0_231 = arith.constant 0 : index
    %c0_232 = arith.constant 0 : index
    %272 = vector.load %arg21[%c0_231, %c0_232] : memref<1x32xf32, #tpu.memory_space<vmem>>, vector<1x32xf32>
    %273 = vector.broadcast %272 : vector<1x32xf32> to vector<4x32xf32>
    %274 = arith.mulf %271, %273 : vector<4x32xf32>
    %c0_233 = arith.constant 0 : index
    %c0_234 = arith.constant 0 : index
    %275 = vector.load %arg22[%c0_233, %c0_234] : memref<1x32xf32, #tpu.memory_space<vmem>>, vector<1x32xf32>
    %276 = vector.broadcast %275 : vector<1x32xf32> to vector<4x32xf32>
    %277 = arith.addf %274, %276 : vector<4x32xf32>
    %cst_235 = arith.constant 0.000000e+00 : f32
    %278 = vector.broadcast %cst_235 : f32 to vector<4x32xf32>
    %279 = arith.cmpf oge, %277, %278 : vector<4x32xf32>
    %cst_236 = arith.constant 2.000000e-01 : f32
    %280 = vector.broadcast %cst_236 : f32 to vector<4x32xf32>
    %281 = arith.mulf %280, %277 : vector<4x32xf32>
    %282 = arith.select %279, %277, %281 : vector<4x32xi1>, vector<4x32xf32>
    %cst_237 = arith.constant 0.000000e+00 : f32
    %283 = vector.broadcast %cst_237 : f32 to vector<4x32xf32>
    %c0_238 = arith.constant 0 : index
    %c0_239 = arith.constant 0 : index
    %c0_240 = arith.constant 0 : index
    %284 = vector.load %arg23[%c0_238, %c0_239, %c0_240] : memref<3x3x32xf32, #tpu.memory_space<vmem>>, vector<1x1x32xf32>
    %285 = vector.shape_cast %284 : vector<1x1x32xf32> to vector<32xf32>
    %c0_241 = arith.constant 0 : index
    %c0_242 = arith.constant 0 : index
    %c0_243 = arith.constant 0 : index
    %286 = vector.load %arg4[%c0_241, %c0_242, %c0_243] : memref<9x4x4xf32, #tpu.memory_space<vmem>>, vector<1x4x4xf32>
    %287 = vector.shape_cast %286 : vector<1x4x4xf32> to vector<4x4xf32>
    %cst_244 = arith.constant dense<0.000000e+00> : vector<4x32xf32>
    %288 = tpu.matmul %287, %282, %cst_244 {dimension_numbers = #tpu.dot_dimension_numbers<[1], [0], [0], [1], [0, 0, 1, 1], [], []>} : vector<4x4xf32>, vector<4x32xf32>, vector<4x32xf32> -> vector<4x32xf32>
    %289 = vector.shape_cast %285 : vector<32xf32> to vector<1x32xf32>
    %290 = vector.broadcast %289 : vector<1x32xf32> to vector<4x32xf32>
    %291 = arith.mulf %288, %290 : vector<4x32xf32>
    %292 = arith.addf %283, %291 : vector<4x32xf32>
    %c0_245 = arith.constant 0 : index
    %c1_246 = arith.constant 1 : index
    %c0_247 = arith.constant 0 : index
    %293 = vector.load %arg23[%c0_245, %c1_246, %c0_247] : memref<3x3x32xf32, #tpu.memory_space<vmem>>, vector<1x1x32xf32>
    %294 = vector.shape_cast %293 : vector<1x1x32xf32> to vector<32xf32>
    %c1_248 = arith.constant 1 : index
    %c0_249 = arith.constant 0 : index
    %c0_250 = arith.constant 0 : index
    %295 = vector.load %arg4[%c1_248, %c0_249, %c0_250] : memref<9x4x4xf32, #tpu.memory_space<vmem>>, vector<1x4x4xf32>
    %296 = vector.shape_cast %295 : vector<1x4x4xf32> to vector<4x4xf32>
    %cst_251 = arith.constant dense<0.000000e+00> : vector<4x32xf32>
    %297 = tpu.matmul %296, %282, %cst_251 {dimension_numbers = #tpu.dot_dimension_numbers<[1], [0], [0], [1], [0, 0, 1, 1], [], []>} : vector<4x4xf32>, vector<4x32xf32>, vector<4x32xf32> -> vector<4x32xf32>
    %298 = vector.shape_cast %294 : vector<32xf32> to vector<1x32xf32>
    %299 = vector.broadcast %298 : vector<1x32xf32> to vector<4x32xf32>
    %300 = arith.mulf %297, %299 : vector<4x32xf32>
    %301 = arith.addf %292, %300 : vector<4x32xf32>
    %c0_252 = arith.constant 0 : index
    %c2_253 = arith.constant 2 : index
    %c0_254 = arith.constant 0 : index
    %302 = vector.load %arg23[%c0_252, %c2_253, %c0_254] : memref<3x3x32xf32, #tpu.memory_space<vmem>>, vector<1x1x32xf32>
    %303 = vector.shape_cast %302 : vector<1x1x32xf32> to vector<32xf32>
    %c2_255 = arith.constant 2 : index
    %c0_256 = arith.constant 0 : index
    %c0_257 = arith.constant 0 : index
    %304 = vector.load %arg4[%c2_255, %c0_256, %c0_257] : memref<9x4x4xf32, #tpu.memory_space<vmem>>, vector<1x4x4xf32>
    %305 = vector.shape_cast %304 : vector<1x4x4xf32> to vector<4x4xf32>
    %cst_258 = arith.constant dense<0.000000e+00> : vector<4x32xf32>
    %306 = tpu.matmul %305, %282, %cst_258 {dimension_numbers = #tpu.dot_dimension_numbers<[1], [0], [0], [1], [0, 0, 1, 1], [], []>} : vector<4x4xf32>, vector<4x32xf32>, vector<4x32xf32> -> vector<4x32xf32>
    %307 = vector.shape_cast %303 : vector<32xf32> to vector<1x32xf32>
    %308 = vector.broadcast %307 : vector<1x32xf32> to vector<4x32xf32>
    %309 = arith.mulf %306, %308 : vector<4x32xf32>
    %310 = arith.addf %301, %309 : vector<4x32xf32>
    %c1_259 = arith.constant 1 : index
    %c0_260 = arith.constant 0 : index
    %c0_261 = arith.constant 0 : index
    %311 = vector.load %arg23[%c1_259, %c0_260, %c0_261] : memref<3x3x32xf32, #tpu.memory_space<vmem>>, vector<1x1x32xf32>
    %312 = vector.shape_cast %311 : vector<1x1x32xf32> to vector<32xf32>
    %c3 = arith.constant 3 : index
    %c0_262 = arith.constant 0 : index
    %c0_263 = arith.constant 0 : index
    %313 = vector.load %arg4[%c3, %c0_262, %c0_263] : memref<9x4x4xf32, #tpu.memory_space<vmem>>, vector<1x4x4xf32>
    %314 = vector.shape_cast %313 : vector<1x4x4xf32> to vector<4x4xf32>
    %cst_264 = arith.constant dense<0.000000e+00> : vector<4x32xf32>
    %315 = tpu.matmul %314, %282, %cst_264 {dimension_numbers = #tpu.dot_dimension_numbers<[1], [0], [0], [1], [0, 0, 1, 1], [], []>} : vector<4x4xf32>, vector<4x32xf32>, vector<4x32xf32> -> vector<4x32xf32>
    %316 = vector.shape_cast %312 : vector<32xf32> to vector<1x32xf32>
    %317 = vector.broadcast %316 : vector<1x32xf32> to vector<4x32xf32>
    %318 = arith.mulf %315, %317 : vector<4x32xf32>
    %319 = arith.addf %310, %318 : vector<4x32xf32>
    %c1_265 = arith.constant 1 : index
    %c1_266 = arith.constant 1 : index
    %c0_267 = arith.constant 0 : index
    %320 = vector.load %arg23[%c1_265, %c1_266, %c0_267] : memref<3x3x32xf32, #tpu.memory_space<vmem>>, vector<1x1x32xf32>
    %321 = vector.shape_cast %320 : vector<1x1x32xf32> to vector<32xf32>
    %c4 = arith.constant 4 : index
    %c0_268 = arith.constant 0 : index
    %c0_269 = arith.constant 0 : index
    %322 = vector.load %arg4[%c4, %c0_268, %c0_269] : memref<9x4x4xf32, #tpu.memory_space<vmem>>, vector<1x4x4xf32>
    %323 = vector.shape_cast %322 : vector<1x4x4xf32> to vector<4x4xf32>
    %cst_270 = arith.constant dense<0.000000e+00> : vector<4x32xf32>
    %324 = tpu.matmul %323, %282, %cst_270 {dimension_numbers = #tpu.dot_dimension_numbers<[1], [0], [0], [1], [0, 0, 1, 1], [], []>} : vector<4x4xf32>, vector<4x32xf32>, vector<4x32xf32> -> vector<4x32xf32>
    %325 = vector.shape_cast %321 : vector<32xf32> to vector<1x32xf32>
    %326 = vector.broadcast %325 : vector<1x32xf32> to vector<4x32xf32>
    %327 = arith.mulf %324, %326 : vector<4x32xf32>
    %328 = arith.addf %319, %327 : vector<4x32xf32>
    %c1_271 = arith.constant 1 : index
    %c2_272 = arith.constant 2 : index
    %c0_273 = arith.constant 0 : index
    %329 = vector.load %arg23[%c1_271, %c2_272, %c0_273] : memref<3x3x32xf32, #tpu.memory_space<vmem>>, vector<1x1x32xf32>
    %330 = vector.shape_cast %329 : vector<1x1x32xf32> to vector<32xf32>
    %c5 = arith.constant 5 : index
    %c0_274 = arith.constant 0 : index
    %c0_275 = arith.constant 0 : index
    %331 = vector.load %arg4[%c5, %c0_274, %c0_275] : memref<9x4x4xf32, #tpu.memory_space<vmem>>, vector<1x4x4xf32>
    %332 = vector.shape_cast %331 : vector<1x4x4xf32> to vector<4x4xf32>
    %cst_276 = arith.constant dense<0.000000e+00> : vector<4x32xf32>
    %333 = tpu.matmul %332, %282, %cst_276 {dimension_numbers = #tpu.dot_dimension_numbers<[1], [0], [0], [1], [0, 0, 1, 1], [], []>} : vector<4x4xf32>, vector<4x32xf32>, vector<4x32xf32> -> vector<4x32xf32>
    %334 = vector.shape_cast %330 : vector<32xf32> to vector<1x32xf32>
    %335 = vector.broadcast %334 : vector<1x32xf32> to vector<4x32xf32>
    %336 = arith.mulf %333, %335 : vector<4x32xf32>
    %337 = arith.addf %328, %336 : vector<4x32xf32>
    %c2_277 = arith.constant 2 : index
    %c0_278 = arith.constant 0 : index
    %c0_279 = arith.constant 0 : index
    %338 = vector.load %arg23[%c2_277, %c0_278, %c0_279] : memref<3x3x32xf32, #tpu.memory_space<vmem>>, vector<1x1x32xf32>
    %339 = vector.shape_cast %338 : vector<1x1x32xf32> to vector<32xf32>
    %c6 = arith.constant 6 : index
    %c0_280 = arith.constant 0 : index
    %c0_281 = arith.constant 0 : index
    %340 = vector.load %arg4[%c6, %c0_280, %c0_281] : memref<9x4x4xf32, #tpu.memory_space<vmem>>, vector<1x4x4xf32>
    %341 = vector.shape_cast %340 : vector<1x4x4xf32> to vector<4x4xf32>
    %cst_282 = arith.constant dense<0.000000e+00> : vector<4x32xf32>
    %342 = tpu.matmul %341, %282, %cst_282 {dimension_numbers = #tpu.dot_dimension_numbers<[1], [0], [0], [1], [0, 0, 1, 1], [], []>} : vector<4x4xf32>, vector<4x32xf32>, vector<4x32xf32> -> vector<4x32xf32>
    %343 = vector.shape_cast %339 : vector<32xf32> to vector<1x32xf32>
    %344 = vector.broadcast %343 : vector<1x32xf32> to vector<4x32xf32>
    %345 = arith.mulf %342, %344 : vector<4x32xf32>
    %346 = arith.addf %337, %345 : vector<4x32xf32>
    %c2_283 = arith.constant 2 : index
    %c1_284 = arith.constant 1 : index
    %c0_285 = arith.constant 0 : index
    %347 = vector.load %arg23[%c2_283, %c1_284, %c0_285] : memref<3x3x32xf32, #tpu.memory_space<vmem>>, vector<1x1x32xf32>
    %348 = vector.shape_cast %347 : vector<1x1x32xf32> to vector<32xf32>
    %c7 = arith.constant 7 : index
    %c0_286 = arith.constant 0 : index
    %c0_287 = arith.constant 0 : index
    %349 = vector.load %arg4[%c7, %c0_286, %c0_287] : memref<9x4x4xf32, #tpu.memory_space<vmem>>, vector<1x4x4xf32>
    %350 = vector.shape_cast %349 : vector<1x4x4xf32> to vector<4x4xf32>
    %cst_288 = arith.constant dense<0.000000e+00> : vector<4x32xf32>
    %351 = tpu.matmul %350, %282, %cst_288 {dimension_numbers = #tpu.dot_dimension_numbers<[1], [0], [0], [1], [0, 0, 1, 1], [], []>} : vector<4x4xf32>, vector<4x32xf32>, vector<4x32xf32> -> vector<4x32xf32>
    %352 = vector.shape_cast %348 : vector<32xf32> to vector<1x32xf32>
    %353 = vector.broadcast %352 : vector<1x32xf32> to vector<4x32xf32>
    %354 = arith.mulf %351, %353 : vector<4x32xf32>
    %355 = arith.addf %346, %354 : vector<4x32xf32>
    %c2_289 = arith.constant 2 : index
    %c2_290 = arith.constant 2 : index
    %c0_291 = arith.constant 0 : index
    %356 = vector.load %arg23[%c2_289, %c2_290, %c0_291] : memref<3x3x32xf32, #tpu.memory_space<vmem>>, vector<1x1x32xf32>
    %357 = vector.shape_cast %356 : vector<1x1x32xf32> to vector<32xf32>
    %c8 = arith.constant 8 : index
    %c0_292 = arith.constant 0 : index
    %c0_293 = arith.constant 0 : index
    %358 = vector.load %arg4[%c8, %c0_292, %c0_293] : memref<9x4x4xf32, #tpu.memory_space<vmem>>, vector<1x4x4xf32>
    %359 = vector.shape_cast %358 : vector<1x4x4xf32> to vector<4x4xf32>
    %cst_294 = arith.constant dense<0.000000e+00> : vector<4x32xf32>
    %360 = tpu.matmul %359, %282, %cst_294 {dimension_numbers = #tpu.dot_dimension_numbers<[1], [0], [0], [1], [0, 0, 1, 1], [], []>} : vector<4x4xf32>, vector<4x32xf32>, vector<4x32xf32> -> vector<4x32xf32>
    %361 = vector.shape_cast %357 : vector<32xf32> to vector<1x32xf32>
    %362 = vector.broadcast %361 : vector<1x32xf32> to vector<4x32xf32>
    %363 = arith.mulf %360, %362 : vector<4x32xf32>
    %364 = arith.addf %355, %363 : vector<4x32xf32>
    %c0_295 = arith.constant 0 : index
    %c0_296 = arith.constant 0 : index
    %365 = vector.load %arg24[%c0_295, %c0_296] : memref<32x32xf32, #tpu.memory_space<vmem>>, vector<32x32xf32>
    %cst_297 = arith.constant dense<0.000000e+00> : vector<4x32xf32>
    %366 = tpu.matmul %364, %365, %cst_297 {dimension_numbers = #tpu.dot_dimension_numbers<[1], [0], [0], [1], [0, 0, 1, 1], [], []>} : vector<4x32xf32>, vector<32x32xf32>, vector<4x32xf32> -> vector<4x32xf32>
    %c0_298 = arith.constant 0 : index
    %c0_299 = arith.constant 0 : index
    %367 = vector.load %arg25[%c0_298, %c0_299] : memref<1x32xf32, #tpu.memory_space<vmem>>, vector<1x32xf32>
    %368 = vector.broadcast %367 : vector<1x32xf32> to vector<4x32xf32>
    %369 = arith.mulf %366, %368 : vector<4x32xf32>
    %c0_300 = arith.constant 0 : index
    %c0_301 = arith.constant 0 : index
    %370 = vector.load %arg26[%c0_300, %c0_301] : memref<1x32xf32, #tpu.memory_space<vmem>>, vector<1x32xf32>
    %371 = vector.broadcast %370 : vector<1x32xf32> to vector<4x32xf32>
    %372 = arith.addf %369, %371 : vector<4x32xf32>
    %cst_302 = arith.constant 0.000000e+00 : f32
    %373 = vector.broadcast %cst_302 : f32 to vector<4x32xf32>
    %374 = arith.cmpf oge, %372, %373 : vector<4x32xf32>
    %cst_303 = arith.constant 2.000000e-01 : f32
    %375 = vector.broadcast %cst_303 : f32 to vector<4x32xf32>
    %376 = arith.mulf %375, %372 : vector<4x32xf32>
    %377 = arith.select %374, %372, %376 : vector<4x32xi1>, vector<4x32xf32>
    %c0_304 = arith.constant 0 : index
    %c0_305 = arith.constant 0 : index
    %378 = vector.load %arg27[%c0_304, %c0_305] : memref<32x16xf32, #tpu.memory_space<vmem>>, vector<32x16xf32>
    %cst_306 = arith.constant dense<0.000000e+00> : vector<4x16xf32>
    %379 = tpu.matmul %377, %378, %cst_306 {dimension_numbers = #tpu.dot_dimension_numbers<[1], [0], [0], [1], [0, 0, 1, 1], [], []>} : vector<4x32xf32>, vector<32x16xf32>, vector<4x16xf32> -> vector<4x16xf32>
    %c0_307 = arith.constant 0 : index
    %c0_308 = arith.constant 0 : index
    %380 = vector.load %arg28[%c0_307, %c0_308] : memref<1x16xf32, #tpu.memory_space<vmem>>, vector<1x16xf32>
    %381 = vector.broadcast %380 : vector<1x16xf32> to vector<4x16xf32>
    %382 = arith.addf %379, %381 : vector<4x16xf32>
    %c0_309 = arith.constant 0 : index
    %c0_310 = arith.constant 0 : index
    %383 = vector.load %arg29[%c0_309, %c0_310] : memref<1x16xf32, #tpu.memory_space<vmem>>, vector<1x16xf32>
    %384 = vector.broadcast %383 : vector<1x16xf32> to vector<4x16xf32>
    %385 = arith.mulf %382, %384 : vector<4x16xf32>
    %c0_311 = arith.constant 0 : index
    %c0_312 = arith.constant 0 : index
    %386 = vector.load %arg30[%c0_311, %c0_312] : memref<1x16xf32, #tpu.memory_space<vmem>>, vector<1x16xf32>
    %387 = vector.broadcast %386 : vector<1x16xf32> to vector<4x16xf32>
    %388 = arith.addf %385, %387 : vector<4x16xf32>
    %cst_313 = arith.constant 0.000000e+00 : f32
    %389 = vector.broadcast %cst_313 : f32 to vector<4x16xf32>
    %390 = arith.cmpf oge, %388, %389 : vector<4x16xf32>
    %cst_314 = arith.constant 2.000000e-01 : f32
    %391 = vector.broadcast %cst_314 : f32 to vector<4x16xf32>
    %392 = arith.mulf %391, %388 : vector<4x16xf32>
    %393 = arith.select %390, %388, %392 : vector<4x16xi1>, vector<4x16xf32>
    %cst_315 = arith.constant dense<0.000000e+00> : vector<16xf32>
    %394 = vector.multi_reduction <add>, %393, %cst_315 [0] : vector<4x16xf32> to vector<16xf32>
    %395 = vector.shape_cast %394 : vector<16xf32> to vector<1x16xf32>
    %cst_316 = arith.constant 4.000000e+00 : f32
    %396 = vector.broadcast %cst_316 : f32 to vector<1x16xf32>
    %397 = arith.divf %395, %396 : vector<1x16xf32>
    %c0_317 = arith.constant 0 : index
    %c0_318 = arith.constant 0 : index
    %398 = vector.load %arg31[%c0_317, %c0_318] : memref<16x1xf32, #tpu.memory_space<vmem>>, vector<16x1xf32>
    %cst_319 = arith.constant dense<0.000000e+00> : vector<1x1xf32>
    %399 = tpu.matmul %397, %398, %cst_319 {dimension_numbers = #tpu.dot_dimension_numbers<[1], [0], [0], [1], [0, 0, 1, 1], [], []>} : vector<1x16xf32>, vector<16x1xf32>, vector<1x1xf32> -> vector<1x1xf32>
    %cst_320 = arith.constant 0.000000e+00 : f32
    %400 = vector.broadcast %cst_320 : f32 to vector<1x1xf32>
    %401 = arith.maximumf %399, %400 : vector<1x1xf32>
    %c0_321 = arith.constant 0 : index
    %c0_322 = arith.constant 0 : index
    %402 = vector.load %arg32[%c0_321, %c0_322] : memref<1x16xf32, #tpu.memory_space<vmem>>, vector<1x16xf32>
    %cst_323 = arith.constant dense<0.000000e+00> : vector<1x16xf32>
    %403 = tpu.matmul %401, %402, %cst_323 {dimension_numbers = #tpu.dot_dimension_numbers<[1], [0], [0], [1], [0, 0, 1, 1], [], []>} : vector<1x1xf32>, vector<1x16xf32>, vector<1x16xf32> -> vector<1x16xf32>
    %404 = arith.negf %403 : vector<1x16xf32>
    %405 = math.exp %404 : vector<1x16xf32>
    %cst_324 = arith.constant 1.000000e+00 : f32
    %406 = vector.broadcast %cst_324 : f32 to vector<1x16xf32>
    %407 = arith.addf %406, %405 : vector<1x16xf32>
    %408 = arith.divf %406, %407 : vector<1x16xf32>
    %409 = vector.broadcast %408 : vector<1x16xf32> to vector<4x16xf32>
    %410 = arith.mulf %393, %409 : vector<4x16xf32>
    %c0_325 = arith.constant 0 : index
    %c0_326 = arith.constant 0 : index
    %411 = vector.load %arg3[%c0_325, %c0_326] : memref<256x4xf32, #tpu.memory_space<vmem>>, vector<256x4xf32>
    %cst_327 = arith.constant dense<0.000000e+00> : vector<256x16xf32>
    %412 = tpu.matmul %411, %410, %cst_327 {dimension_numbers = #tpu.dot_dimension_numbers<[1], [0], [0], [1], [0, 0, 1, 1], [], []>} : vector<256x4xf32>, vector<4x16xf32>, vector<256x16xf32> -> vector<256x16xf32>
    %c0_328 = arith.constant 0 : index
    %c0_329 = arith.constant 0 : index
    %413 = vector.load %arg33[%c0_328, %c0_329] : memref<32x32xf32, #tpu.memory_space<vmem>>, vector<32x32xf32>
    %cst_330 = arith.constant dense<0.000000e+00> : vector<256x32xf32>
    %414 = tpu.matmul %263, %413, %cst_330 {dimension_numbers = #tpu.dot_dimension_numbers<[1], [0], [0], [1], [0, 0, 1, 1], [], []>} : vector<256x32xf32>, vector<32x32xf32>, vector<256x32xf32> -> vector<256x32xf32>
    %c0_331 = arith.constant 0 : index
    %c0_332 = arith.constant 0 : index
    %415 = vector.load %arg34[%c0_331, %c0_332] : memref<16x32xf32, #tpu.memory_space<vmem>>, vector<16x32xf32>
    %cst_333 = arith.constant dense<0.000000e+00> : vector<256x32xf32>
    %416 = tpu.matmul %412, %415, %cst_333 {dimension_numbers = #tpu.dot_dimension_numbers<[1], [0], [0], [1], [0, 0, 1, 1], [], []>} : vector<256x16xf32>, vector<16x32xf32>, vector<256x32xf32> -> vector<256x32xf32>
    %417 = arith.addf %414, %416 : vector<256x32xf32>
    %c0_334 = arith.constant 0 : index
    %c0_335 = arith.constant 0 : index
    %418 = vector.load %arg35[%c0_334, %c0_335] : memref<1x32xf32, #tpu.memory_space<vmem>>, vector<1x32xf32>
    %419 = vector.broadcast %418 : vector<1x32xf32> to vector<256x32xf32>
    %420 = arith.addf %417, %419 : vector<256x32xf32>
    %c0_336 = arith.constant 0 : index
    %c0_337 = arith.constant 0 : index
    %421 = vector.load %arg36[%c0_336, %c0_337] : memref<1x32xf32, #tpu.memory_space<vmem>>, vector<1x32xf32>
    %422 = vector.broadcast %421 : vector<1x32xf32> to vector<256x32xf32>
    %423 = arith.mulf %420, %422 : vector<256x32xf32>
    %c0_338 = arith.constant 0 : index
    %c0_339 = arith.constant 0 : index
    %424 = vector.load %arg37[%c0_338, %c0_339] : memref<1x32xf32, #tpu.memory_space<vmem>>, vector<1x32xf32>
    %425 = vector.broadcast %424 : vector<1x32xf32> to vector<256x32xf32>
    %426 = arith.addf %423, %425 : vector<256x32xf32>
    %cst_340 = arith.constant 0.000000e+00 : f32
    %427 = vector.broadcast %cst_340 : f32 to vector<256x32xf32>
    %428 = arith.cmpf oge, %426, %427 : vector<256x32xf32>
    %cst_341 = arith.constant 2.000000e-01 : f32
    %429 = vector.broadcast %cst_341 : f32 to vector<256x32xf32>
    %430 = arith.mulf %429, %426 : vector<256x32xf32>
    %431 = arith.select %428, %426, %430 : vector<256x32xi1>, vector<256x32xf32>
    %cst_342 = arith.constant dense<0.000000e+00> : vector<32xf32>
    %432 = vector.multi_reduction <add>, %431, %cst_342 [0] : vector<256x32xf32> to vector<32xf32>
    %433 = vector.shape_cast %432 : vector<32xf32> to vector<1x32xf32>
    %cst_343 = arith.constant 2.560000e+02 : f32
    %434 = vector.broadcast %cst_343 : f32 to vector<1x32xf32>
    %435 = arith.divf %433, %434 : vector<1x32xf32>
    %c0_344 = arith.constant 0 : index
    %c0_345 = arith.constant 0 : index
    %436 = vector.load %arg38[%c0_344, %c0_345] : memref<32x2xf32, #tpu.memory_space<vmem>>, vector<32x2xf32>
    %cst_346 = arith.constant dense<0.000000e+00> : vector<1x2xf32>
    %437 = tpu.matmul %435, %436, %cst_346 {dimension_numbers = #tpu.dot_dimension_numbers<[1], [0], [0], [1], [0, 0, 1, 1], [], []>} : vector<1x32xf32>, vector<32x2xf32>, vector<1x2xf32> -> vector<1x2xf32>
    %cst_347 = arith.constant 0.000000e+00 : f32
    %438 = vector.broadcast %cst_347 : f32 to vector<1x2xf32>
    %439 = arith.maximumf %437, %438 : vector<1x2xf32>
    %c0_348 = arith.constant 0 : index
    %c0_349 = arith.constant 0 : index
    %440 = vector.load %arg39[%c0_348, %c0_349] : memref<2x32xf32, #tpu.memory_space<vmem>>, vector<2x32xf32>
    %cst_350 = arith.constant dense<0.000000e+00> : vector<1x32xf32>
    %441 = tpu.matmul %439, %440, %cst_350 {dimension_numbers = #tpu.dot_dimension_numbers<[1], [0], [0], [1], [0, 0, 1, 1], [], []>} : vector<1x2xf32>, vector<2x32xf32>, vector<1x32xf32> -> vector<1x32xf32>
    %442 = arith.negf %441 : vector<1x32xf32>
    %443 = math.exp %442 : vector<1x32xf32>
    %cst_351 = arith.constant 1.000000e+00 : f32
    %444 = vector.broadcast %cst_351 : f32 to vector<1x32xf32>
    %445 = arith.addf %444, %443 : vector<1x32xf32>
    %446 = arith.divf %444, %445 : vector<1x32xf32>
    %447 = vector.broadcast %446 : vector<1x32xf32> to vector<256x32xf32>
    %448 = arith.mulf %431, %447 : vector<256x32xf32>
    %c0_352 = arith.constant 0 : index
    %c0_353 = arith.constant 0 : index
    %449 = vector.load %arg40[%c0_352, %c0_353] : memref<16x32xf32, #tpu.memory_space<vmem>>, vector<16x32xf32>
    %cst_354 = arith.constant dense<0.000000e+00> : vector<256x32xf32>
    %450 = tpu.matmul %264, %449, %cst_354 {dimension_numbers = #tpu.dot_dimension_numbers<[1], [0], [0], [1], [0, 0, 1, 1], [], []>} : vector<256x16xf32>, vector<16x32xf32>, vector<256x32xf32> -> vector<256x32xf32>
    %c0_355 = arith.constant 0 : index
    %c0_356 = arith.constant 0 : index
    %451 = vector.load %arg41[%c0_355, %c0_356] : memref<1x32xf32, #tpu.memory_space<vmem>>, vector<1x32xf32>
    %452 = vector.broadcast %451 : vector<1x32xf32> to vector<256x32xf32>
    %453 = arith.mulf %450, %452 : vector<256x32xf32>
    %c0_357 = arith.constant 0 : index
    %c0_358 = arith.constant 0 : index
    %454 = vector.load %arg42[%c0_357, %c0_358] : memref<1x32xf32, #tpu.memory_space<vmem>>, vector<1x32xf32>
    %455 = vector.broadcast %454 : vector<1x32xf32> to vector<256x32xf32>
    %456 = arith.addf %453, %455 : vector<256x32xf32>
    %457 = arith.addf %448, %456 : vector<256x32xf32>
    %c0_359 = arith.constant 0 : index
    %c0_360 = arith.constant 0 : index
    %c0_361 = arith.constant 0 : index
    %458 = vector.load %arg43[%c0_359, %c0_360, %c0_361] : memref<1x256x32xf32, #tpu.memory_space<vmem>>, vector<1x256x32xf32>
    %459 = vector.shape_cast %458 : vector<1x256x32xf32> to vector<256x32xf32>
    %460 = vector.shape_cast %457 : vector<256x32xf32> to vector<1x256x32xf32>
    tpu.vector_store %arg43[%c0_359, %c0_360, %c0_361], %460 {strides = array<i32>} : memref<1x256x32xf32, #tpu.memory_space<vmem>>, vector<1x256x32xf32>,
    return
  }
  func.func @transform_0(%arg0: i32) -> (i32, i32, i32, i32) {
    %c0_i32 = arith.constant 0 : i32
    %c0_i32_0 = arith.constant 0 : i32
    %c0_i32_1 = arith.constant 0 : i32
    %c0_i32_2 = arith.constant 0 : i32
    return %arg0, %c0_i32, %c0_i32_0, %c0_i32_1 : i32, i32, i32, i32
  }
  func.func @transform_1(%arg0: i32) -> (i32, i32) {
    %c0_i32 = arith.constant 0 : i32
    %c0_i32_0 = arith.constant 0 : i32
    %c0_i32_1 = arith.constant 0 : i32
    return %c0_i32, %c0_i32_0 : i32, i32
  }
  func.func @transform_2(%arg0: i32) -> (i32, i32) {
    %c0_i32 = arith.constant 0 : i32
    %c0_i32_0 = arith.constant 0 : i32
    %c0_i32_1 = arith.constant 0 : i32
    return %c0_i32, %c0_i32_0 : i32, i32
  }
  func.func @transform_3(%arg0: i32) -> (i32, i32, i32) {
    %c0_i32 = arith.constant 0 : i32
    %c0_i32_0 = arith.constant 0 : i32
    %c0_i32_1 = arith.constant 0 : i32
    %c0_i32_2 = arith.constant 0 : i32
    return %c0_i32, %c0_i32_0, %c0_i32_1 : i32, i32, i32
  }
  func.func @transform_4(%arg0: i32) -> (i32, i32, i32) {
    %c0_i32 = arith.constant 0 : i32
    %c0_i32_0 = arith.constant 0 : i32
    %c0_i32_1 = arith.constant 0 : i32
    %c0_i32_2 = arith.constant 0 : i32
    return %c0_i32, %c0_i32_0, %c0_i32_1 : i32, i32, i32
  }
  func.func @transform_5(%arg0: i32) -> (i32, i32) {
    %c0_i32 = arith.constant 0 : i32
    %c0_i32_0 = arith.constant 0 : i32
    %c0_i32_1 = arith.constant 0 : i32
    return %c0_i32, %c0_i32_0 : i32, i32
  }
  func.func @transform_6(%arg0: i32) -> (i32, i32) {
    %c0_i32 = arith.constant 0 : i32
    %c0_i32_0 = arith.constant 0 : i32
    %c0_i32_1 = arith.constant 0 : i32
    return %c0_i32, %c0_i32_0 : i32, i32
  }
  func.func @transform_7(%arg0: i32) -> (i32, i32) {
    %c0_i32 = arith.constant 0 : i32
    %c0_i32_0 = arith.constant 0 : i32
    %c0_i32_1 = arith.constant 0 : i32
    return %c0_i32, %c0_i32_0 : i32, i32
  }
  func.func @transform_8(%arg0: i32) -> (i32, i32, i32) {
    %c0_i32 = arith.constant 0 : i32
    %c0_i32_0 = arith.constant 0 : i32
    %c0_i32_1 = arith.constant 0 : i32
    %c0_i32_2 = arith.constant 0 : i32
    return %c0_i32, %c0_i32_0, %c0_i32_1 : i32, i32, i32
  }
  func.func @transform_9(%arg0: i32) -> (i32, i32) {
    %c0_i32 = arith.constant 0 : i32
    %c0_i32_0 = arith.constant 0 : i32
    %c0_i32_1 = arith.constant 0 : i32
    return %c0_i32, %c0_i32_0 : i32, i32
  }
  func.func @transform_10(%arg0: i32) -> (i32, i32) {
    %c0_i32 = arith.constant 0 : i32
    %c0_i32_0 = arith.constant 0 : i32
    %c0_i32_1 = arith.constant 0 : i32
    return %c0_i32, %c0_i32_0 : i32, i32
  }
  func.func @transform_11(%arg0: i32) -> (i32, i32) {
    %c0_i32 = arith.constant 0 : i32
    %c0_i32_0 = arith.constant 0 : i32
    %c0_i32_1 = arith.constant 0 : i32
    return %c0_i32, %c0_i32_0 : i32, i32
  }
  func.func @transform_12(%arg0: i32) -> (i32, i32, i32) {
    %c0_i32 = arith.constant 0 : i32
    %c0_i32_0 = arith.constant 0 : i32
    %c0_i32_1 = arith.constant 0 : i32
    %c0_i32_2 = arith.constant 0 : i32
    return %c0_i32, %c0_i32_0, %c0_i32_1 : i32, i32, i32
  }
  func.func @transform_13(%arg0: i32) -> (i32, i32) {
    %c0_i32 = arith.constant 0 : i32
    %c0_i32_0 = arith.constant 0 : i32
    %c0_i32_1 = arith.constant 0 : i32
    return %c0_i32, %c0_i32_0 : i32, i32
  }
  func.func @transform_14(%arg0: i32) -> (i32, i32) {
    %c0_i32 = arith.constant 0 : i32
    %c0_i32_0 = arith.constant 0 : i32
    %c0_i32_1 = arith.constant 0 : i32
    return %c0_i32, %c0_i32_0 : i32, i32
  }
  func.func @transform_15(%arg0: i32) -> (i32, i32) {
    %c0_i32 = arith.constant 0 : i32
    %c0_i32_0 = arith.constant 0 : i32
    %c0_i32_1 = arith.constant 0 : i32
    return %c0_i32, %c0_i32_0 : i32, i32
  }
  func.func @transform_16(%arg0: i32) -> (i32, i32) {
    %c0_i32 = arith.constant 0 : i32
    %c0_i32_0 = arith.constant 0 : i32
    %c0_i32_1 = arith.constant 0 : i32
    return %c0_i32, %c0_i32_0 : i32, i32
  }
  func.func @transform_17(%arg0: i32) -> (i32, i32) {
    %c0_i32 = arith.constant 0 : i32
    %c0_i32_0 = arith.constant 0 : i32
    %c0_i32_1 = arith.constant 0 : i32
    return %c0_i32, %c0_i32_0 : i32, i32
  }
  func.func @transform_18(%arg0: i32) -> (i32, i32) {
    %c0_i32 = arith.constant 0 : i32
    %c0_i32_0 = arith.constant 0 : i32
    %c0_i32_1 = arith.constant 0 : i32
    return %c0_i32, %c0_i32_0 : i32, i32
  }
  func.func @transform_19(%arg0: i32) -> (i32, i32) {
    %c0_i32 = arith.constant 0 : i32
    %c0_i32_0 = arith.constant 0 : i32
    %c0_i32_1 = arith.constant 0 : i32
    return %c0_i32, %c0_i32_0 : i32, i32
  }
  func.func @transform_20(%arg0: i32) -> (i32, i32) {
    %c0_i32 = arith.constant 0 : i32
    %c0_i32_0 = arith.constant 0 : i32
    %c0_i32_1 = arith.constant 0 : i32
    return %c0_i32, %c0_i32_0 : i32, i32
  }
  func.func @transform_21(%arg0: i32) -> (i32, i32) {
    %c0_i32 = arith.constant 0 : i32
    %c0_i32_0 = arith.constant 0 : i32
    %c0_i32_1 = arith.constant 0 : i32
    return %c0_i32, %c0_i32_0 : i32, i32
  }
  func.func @transform_22(%arg0: i32) -> (i32, i32, i32) {
    %c0_i32 = arith.constant 0 : i32
    %c0_i32_0 = arith.constant 0 : i32
    %c0_i32_1 = arith.constant 0 : i32
    %c0_i32_2 = arith.constant 0 : i32
    return %c0_i32, %c0_i32_0, %c0_i32_1 : i32, i32, i32
  }
  func.func @transform_23(%arg0: i32) -> (i32, i32) {
    %c0_i32 = arith.constant 0 : i32
    %c0_i32_0 = arith.constant 0 : i32
    %c0_i32_1 = arith.constant 0 : i32
    return %c0_i32, %c0_i32_0 : i32, i32
  }
  func.func @transform_24(%arg0: i32) -> (i32, i32) {
    %c0_i32 = arith.constant 0 : i32
    %c0_i32_0 = arith.constant 0 : i32
    %c0_i32_1 = arith.constant 0 : i32
    return %c0_i32, %c0_i32_0 : i32, i32
  }
  func.func @transform_25(%arg0: i32) -> (i32, i32) {
    %c0_i32 = arith.constant 0 : i32
    %c0_i32_0 = arith.constant 0 : i32
    %c0_i32_1 = arith.constant 0 : i32
    return %c0_i32, %c0_i32_0 : i32, i32
  }
  func.func @transform_26(%arg0: i32) -> (i32, i32) {
    %c0_i32 = arith.constant 0 : i32
    %c0_i32_0 = arith.constant 0 : i32
    %c0_i32_1 = arith.constant 0 : i32
    return %c0_i32, %c0_i32_0 : i32, i32
  }
  func.func @transform_27(%arg0: i32) -> (i32, i32) {
    %c0_i32 = arith.constant 0 : i32
    %c0_i32_0 = arith.constant 0 : i32
    %c0_i32_1 = arith.constant 0 : i32
    return %c0_i32, %c0_i32_0 : i32, i32
  }
  func.func @transform_28(%arg0: i32) -> (i32, i32) {
    %c0_i32 = arith.constant 0 : i32
    %c0_i32_0 = arith.constant 0 : i32
    %c0_i32_1 = arith.constant 0 : i32
    return %c0_i32, %c0_i32_0 : i32, i32
  }
  func.func @transform_29(%arg0: i32) -> (i32, i32) {
    %c0_i32 = arith.constant 0 : i32
    %c0_i32_0 = arith.constant 0 : i32
    %c0_i32_1 = arith.constant 0 : i32
    return %c0_i32, %c0_i32_0 : i32, i32
  }
  func.func @transform_30(%arg0: i32) -> (i32, i32) {
    %c0_i32 = arith.constant 0 : i32
    %c0_i32_0 = arith.constant 0 : i32
    %c0_i32_1 = arith.constant 0 : i32
    return %c0_i32, %c0_i32_0 : i32, i32
  }
  func.func @transform_31(%arg0: i32) -> (i32, i32) {
    %c0_i32 = arith.constant 0 : i32
    %c0_i32_0 = arith.constant 0 : i32
    %c0_i32_1 = arith.constant 0 : i32
    return %c0_i32, %c0_i32_0 : i32, i32
  }
  func.func @transform_32(%arg0: i32) -> (i32, i32) {
    %c0_i32 = arith.constant 0 : i32
    %c0_i32_0 = arith.constant 0 : i32
    %c0_i32_1 = arith.constant 0 : i32
    return %c0_i32, %c0_i32_0 : i32, i32
  }
  func.func @transform_33(%arg0: i32) -> (i32, i32) {
    %c0_i32 = arith.constant 0 : i32
    %c0_i32_0 = arith.constant 0 : i32
    %c0_i32_1 = arith.constant 0 : i32
    return %c0_i32, %c0_i32_0 : i32, i32
  }
  func.func @transform_34(%arg0: i32) -> (i32, i32) {
    %c0_i32 = arith.constant 0 : i32
    %c0_i32_0 = arith.constant 0 : i32
    %c0_i32_1 = arith.constant 0 : i32
    return %c0_i32, %c0_i32_0 : i32, i32
  }
  func.func @transform_35(%arg0: i32) -> (i32, i32) {
    %c0_i32 = arith.constant 0 : i32
    %c0_i32_0 = arith.constant 0 : i32
    %c0_i32_1 = arith.constant 0 : i32
    return %c0_i32, %c0_i32_0 : i32, i32
  }
  func.func @transform_36(%arg0: i32) -> (i32, i32) {
    %c0_i32 = arith.constant 0 : i32
    %c0_i32_0 = arith.constant 0 : i32
    %c0_i32_1 = arith.constant 0 : i32
    return %c0_i32, %c0_i32_0 : i32, i32
  }
  func.func @transform_37(%arg0: i32) -> (i32, i32) {
    %c0_i32 = arith.constant 0 : i32
    %c0_i32_0 = arith.constant 0 : i32
    %c0_i32_1 = arith.constant 0 : i32
    return %c0_i32, %c0_i32_0 : i32, i32
  }
  func.func @transform_38(%arg0: i32) -> (i32, i32) {
    %c0_i32 = arith.constant 0 : i32
    %c0_i32_0 = arith.constant 0 : i32
    %c0_i32_1 = arith.constant 0 : i32
    return %c0_i32, %c0_i32_0 : i32, i32
  }
  func.func @transform_39(%arg0: i32) -> (i32, i32) {
    %c0_i32 = arith.constant 0 : i32
    %c0_i32_0 = arith.constant 0 : i32
    %c0_i32_1 = arith.constant 0 : i32
    return %c0_i32, %c0_i32_0 : i32, i32
  }
  func.func @transform_40(%arg0: i32) -> (i32, i32) {
    %c0_i32 = arith.constant 0 : i32
    %c0_i32_0 = arith.constant 0 : i32
    %c0_i32_1 = arith.constant 0 : i32
    return %c0_i32, %c0_i32_0 : i32, i32
  }
  func.func @transform_41(%arg0: i32) -> (i32, i32) {
    %c0_i32 = arith.constant 0 : i32
    %c0_i32_0 = arith.constant 0 : i32
    %c0_i32_1 = arith.constant 0 : i32
    return %c0_i32, %c0_i32_0 : i32, i32
  }
  func.func @transform_42(%arg0: i32) -> (i32, i32, i32) {
    %c0_i32 = arith.constant 0 : i32
    %c0_i32_0 = arith.constant 0 : i32
    %c0_i32_1 = arith.constant 0 : i32
    return %arg0, %c0_i32, %c0_i32_0 : i32, i32, i32
  }
}

</mosaic_0001>

<llo_original>
// kernel: _lambda_.1
$region0: #{_lambda_.1}
  #allocation0 [shape = 'u32[]', space=smem, size = 0x4, offset = 0x4, fixed_abs, tag = 'smem constant byte address 0x4 - core index']
  #allocation1 [shape = 'u32[144,128]{1,0:T(1,128)}', space=vmem, size = 0x12000, scoped, tag = 'internal scratch']
  #allocation2 [shape = 'f32[18,18,16]{2,1,0:T(8,128)}', space=vmem, size = 0x36000, scoped, tag = 'scratch operand']
  #allocation3 [shape = 'f32[18,18,32]{2,1,0:T(8,128)}', space=vmem, size = 0x36000, scoped, tag = 'scratch operand']
  #allocation4 [shape = 'f32[18,18,64]{2,1,0:T(8,128)}', space=vmem, size = 0x36000, scoped, tag = 'scratch operand']
  %s0 = inlined_call_operand.smem [shape: u32[43], index: -1, kind: input, shape index: {}]
  %s1 = sld [smem:[%s0]]
  %s2 = scalar_lea.smem %s0, 1
  %s3 = sld [smem:[%s2]]
  %s4 = scalar_lea.smem %s0, 2
  %s5 = sld [smem:[%s4]]
  %s6 = scalar_lea.smem %s0, 3
  %s7 = sld [smem:[%s6]]
  %s8 = scalar_lea.smem %s0, 4
  %s9 = sld [smem:[%s8]]
  %s10 = scalar_lea.smem %s0, 5
  %s11 = sld [smem:[%s10]]
  %s12 = scalar_lea.smem %s0, 6
  %s13 = sld [smem:[%s12]]
  %s14 = scalar_lea.smem %s0, 7
  %s15 = sld [smem:[%s14]]
  %s16 = scalar_lea.smem %s0, 8
  %s17 = sld [smem:[%s16]]
  %s18 = scalar_lea.smem %s0, 9
  %s19 = sld [smem:[%s18]]
  %s20 = scalar_lea.smem %s0, 10
  %s21 = sld [smem:[%s20]]
  %s22 = scalar_lea.smem %s0, 11
  %s23 = sld [smem:[%s22]]
  %s24 = scalar_lea.smem %s0, 12
  %s25 = sld [smem:[%s24]]
  %s26 = scalar_lea.smem %s0, 13
  %s27 = sld [smem:[%s26]]
  %s28 = scalar_lea.smem %s0, 14
  %s29 = sld [smem:[%s28]]
  %s30 = scalar_lea.smem %s0, 15
  %s31 = sld [smem:[%s30]]
  %s32 = scalar_lea.smem %s0, 16
  %s33 = sld [smem:[%s32]]
  %s34 = scalar_lea.smem %s0, 17
  %s35 = sld [smem:[%s34]]
  %s36 = scalar_lea.smem %s0, 18
  %s37 = sld [smem:[%s36]]
  %s38 = scalar_lea.smem %s0, 19
  %s39 = sld [smem:[%s38]]
  %s40 = scalar_lea.smem %s0, 20
  %s41 = sld [smem:[%s40]]
  %s42 = scalar_lea.smem %s0, 21
  %s43 = sld [smem:[%s42]]
  %s44 = scalar_lea.smem %s0, 22
  %s45 = sld [smem:[%s44]]
  %s46 = scalar_lea.smem %s0, 23
  %s47 = sld [smem:[%s46]]
  %s48 = scalar_lea.smem %s0, 24
  %s49 = sld [smem:[%s48]]
  %s50 = scalar_lea.smem %s0, 25
  %s51 = sld [smem:[%s50]]
  %s52 = scalar_lea.smem %s0, 26
  %s53 = sld [smem:[%s52]]
  %s54 = scalar_lea.smem %s0, 27
  %s55 = sld [smem:[%s54]]
  %s56 = scalar_lea.smem %s0, 28
  %s57 = sld [smem:[%s56]]
  %s58 = scalar_lea.smem %s0, 29
  %s59 = sld [smem:[%s58]]
  %s60 = scalar_lea.smem %s0, 30
  %s61 = sld [smem:[%s60]]
  %s62 = scalar_lea.smem %s0, 31
  %s63 = sld [smem:[%s62]]
  %s64 = scalar_lea.smem %s0, 32
  %s65 = sld [smem:[%s64]]
  %s66 = scalar_lea.smem %s0, 33
  %s67 = sld [smem:[%s66]]
  %s68 = scalar_lea.smem %s0, 34
  %s69 = sld [smem:[%s68]]
  %s70 = scalar_lea.smem %s0, 35
  %s71 = sld [smem:[%s70]]
  %s72 = scalar_lea.smem %s0, 36
  %s73 = sld [smem:[%s72]]
  %s74 = scalar_lea.smem %s0, 37
  %s75 = sld [smem:[%s74]]
  %s76 = scalar_lea.smem %s0, 38
  %s77 = sld [smem:[%s76]]
  %s78 = scalar_lea.smem %s0, 39
  %s79 = sld [smem:[%s78]]
  %s80 = scalar_lea.smem %s0, 40
  %s81 = sld [smem:[%s80]]
  %s82 = scalar_lea.smem %s0, 41
  %s83 = sld [smem:[%s82]]
  %s84 = scalar_lea.smem %s0, 42
  %s85 = sld [smem:[%s84]]
  %s86 = sld [smem:[#allocation0]]
  $region201: #{_lambda_.1} parent=0
    _
  %s88 = ssub.s32 1, %s86
  %s89 = scalar_select 0, %s88, %s86
  $region1: #{_lambda_.1} parent=0
    #allocation5 [shape = 'u8[262144]{0}', space=vmem, size = 0x40000, scoped, tag = 'output window, operand 0']
    #allocation6 [shape = 's32[2]{0}', space=sflag, size = 0x8, scoped, tag = 'scoped memory for _lambda_.1']
    %90 = vsyncpa [#allocation6], 0
    %s91 = scalar_lea.sflag [#allocation6], 1
    %92 = vsyncpa %s91, 0
    loop: start=0, step=1, limit=4
    $region2: #{_lambda_.1} parent=1 // loop_pre_header
      _
    $region3: #{_lambda_.1} parent=1 // loop_header
      %s94 = sphi 0, %s98
      %p95 = scmp.ge.s32.totalorder %s94, 4
      %s104 = sphi 0, %s106
      %s107 = sphi 0, %s104
      %s108 = sphi 0, %s107
      %s124 = sphi 0, %s108
      %s128 = sphi 0, %s128
      %s130 = sphi 0, %s128
      %s131 = sphi 0, %s130
      %s145 = sphi 0, %s131
      %s149 = sphi 0, %s149
      %s151 = sphi 0, %s149
      %s152 = sphi 0, %s151
      %s166 = sphi 0, %s152
      %s170 = sphi 0, %s170
      %s172 = sphi 0, %s170
      %s173 = sphi 0, %s172
      %s187 = sphi 0, %s173
      %s191 = sphi 0, %s191
      %s193 = sphi 0, %s191
      %s194 = sphi 0, %s193
      %s208 = sphi 0, %s194
      %s212 = sphi 0, %s212
      %s214 = sphi 0, %s212
      %s215 = sphi 0, %s214
      %s229 = sphi 0, %s215
      %s233 = sphi 0, %s233
      %s235 = sphi 0, %s233
      %s236 = sphi 0, %s235
      %s250 = sphi 0, %s236
      %s254 = sphi 0, %s254
      %s256 = sphi 0, %s254
      %s257 = sphi 0, %s256
      %s271 = sphi 0, %s257
      %s275 = sphi 0, %s275
      %s277 = sphi 0, %s275
      %s278 = sphi 0, %s277
      %s292 = sphi 0, %s278
      %s296 = sphi 0, %s296
      %s298 = sphi 0, %s296
      %s299 = sphi 0, %s298
      %s313 = sphi 0, %s299
      %s317 = sphi 0, %s317
      %s319 = sphi 0, %s317
      %s320 = sphi 0, %s319
      %s334 = sphi 0, %s320
      %s338 = sphi 0, %s338
      %s340 = sphi 0, %s338
      %s341 = sphi 0, %s340
      %s355 = sphi 0, %s341
      %s359 = sphi 0, %s359
      %s361 = sphi 0, %s359
      %s362 = sphi 0, %s361
      %s376 = sphi 0, %s362
      %s380 = sphi 0, %s380
      %s382 = sphi 0, %s380
      %s383 = sphi 0, %s382
      %s397 = sphi 0, %s383
      %s401 = sphi 0, %s401
      %s403 = sphi 0, %s401
      %s404 = sphi 0, %s403
      %s418 = sphi 0, %s404
      %s422 = sphi 0, %s422
      %s424 = sphi 0, %s422
      %s425 = sphi 0, %s424
      %s439 = sphi 0, %s425
      %s443 = sphi 0, %s443
      %s445 = sphi 0, %s443
      %s446 = sphi 0, %s445
      %s460 = sphi 0, %s446
      %s464 = sphi 0, %s464
      %s466 = sphi 0, %s464
      %s467 = sphi 0, %s466
      %s481 = sphi 0, %s467
      %s485 = sphi 0, %s485
      %s487 = sphi 0, %s485
      %s488 = sphi 0, %s487
      %s502 = sphi 0, %s488
      %s506 = sphi 0, %s506
      %s508 = sphi 0, %s506
      %s509 = sphi 0, %s508
      %s523 = sphi 0, %s509
      %s527 = sphi 0, %s527
      %s529 = sphi 0, %s527
      %s530 = sphi 0, %s529
      %s544 = sphi 0, %s530
      %s548 = sphi 0, %s548
      %s550 = sphi 0, %s548
      %s551 = sphi 0, %s550
      %s565 = sphi 0, %s551
      %s569 = sphi 0, %s569
      %s571 = sphi 0, %s569
      %s572 = sphi 0, %s571
      %s586 = sphi 0, %s572
      %s590 = sphi 0, %s590
      %s592 = sphi 0, %s590
      %s593 = sphi 0, %s592
      %s607 = sphi 0, %s593
      %s611 = sphi 0, %s611
      %s613 = sphi 0, %s611
      %s614 = sphi 0, %s613
      %s628 = sphi 0, %s614
      %s632 = sphi 0, %s632
      %s634 = sphi 0, %s632
      %s635 = sphi 0, %s634
      %s649 = sphi 0, %s635
      %s653 = sphi 0, %s653
      %s655 = sphi 0, %s653
      %s656 = sphi 0, %s655
      %s670 = sphi 0, %s656
      %s674 = sphi 0, %s674
      %s676 = sphi 0, %s674
      %s677 = sphi 0, %s676
      %s691 = sphi 0, %s677
      %s695 = sphi 0, %s695
      %s697 = sphi 0, %s695
      %s698 = sphi 0, %s697
      %s712 = sphi 0, %s698
      %s716 = sphi 0, %s716
      %s718 = sphi 0, %s716
      %s719 = sphi 0, %s718
      %s733 = sphi 0, %s719
      %s737 = sphi 0, %s737
      %s739 = sphi 0, %s737
      %s740 = sphi 0, %s739
      %s754 = sphi 0, %s740
      %s758 = sphi 0, %s758
      %s760 = sphi 0, %s758
      %s761 = sphi 0, %s760
      %s775 = sphi 0, %s761
      %s779 = sphi 0, %s779
      %s781 = sphi 0, %s779
      %s782 = sphi 0, %s781
      %s796 = sphi 0, %s782
      %s800 = sphi 0, %s800
      %s802 = sphi 0, %s800
      %s803 = sphi 0, %s802
      %s817 = sphi 0, %s803
      %s821 = sphi 0, %s821
      %s823 = sphi 0, %s821
      %s824 = sphi 0, %s823
      %s838 = sphi 0, %s824
      %s842 = sphi 0, %s842
      %s844 = sphi 0, %s842
      %s845 = sphi 0, %s844
      %s859 = sphi 0, %s845
      %s863 = sphi 0, %s863
      %s865 = sphi 0, %s863
      %s866 = sphi 0, %s865
      %s880 = sphi 0, %s866
      %s884 = sphi 0, %s884
      %s886 = sphi 0, %s884
      %s887 = sphi 0, %s886
      %s901 = sphi 0, %s887
      %s905 = sphi 0, %s905
      %s907 = sphi 0, %s905
      %s908 = sphi 0, %s907
      %s922 = sphi 0, %s908
      %s926 = sphi 0, %s926
      %s928 = sphi 0, %s926
      %s929 = sphi 0, %s928
      %s943 = sphi 0, %s929
      %s947 = sphi 0, %s947
      %s949 = sphi 0, %s947
      %s950 = sphi 0, %s949
      %s964 = sphi 0, %s950
      %s968 = sphi 0, %s968
      %s970 = sphi 0, %s968
      %s971 = sphi 0, %s970
      %s985 = sphi 0, %s971
      %s991 = sphi 0, %s993
      %s994 = sphi 0, %s991
      %s995 = sphi 0, %s994
      %s1011 = sphi 0, %s995
    $region4: #{_lambda_.1} parent=1 // loop_header_branch
      %97 = sbr.rel (%p95) target = $region8
    $region5: #{_lambda_.1} parent=1 // loop_body
      %s99 = ssub.s32 %s94, 1
      %s100 = ssub.s32 %s94, 2
      %s101 = sadd.s32 %s94, 1
      %s102 = ssub.s32 %s94, %s101
      %p103 = scmp.eq.s32.totalorder %s102, 0
      %s105 = sadd.s32 %s104, 1
      %s106 = scalar_select %p103, %s104, %s105
      %p109 = pneg %p103
      %p110 = scmp.eq.s32.totalorder %s94, 1
      %p111 = por %p109, %p110
      %p112 = scmp.ne.s32.totalorder %s104, %s107
      %p113 = scmp.eq.s32.totalorder %s94, 0
      %p114 = por %p112, %p113
      %p115 = scmp.ne.s32.totalorder %s104, %s107
      %p116 = scmp.eq.s32.totalorder %s99, 1
      %p117 = por %p115, %p116
      %p118 = scmp.ne.s32.totalorder %s107, %s108
      %p119 = scmp.eq.s32.totalorder %s99, 0
      %p120 = por %p118, %p119
      %p121 = scmp.ne.s32.totalorder %s107, %s108
      %p122 = scmp.eq.s32.totalorder %s100, 1
      %p123 = por %p121, %p122
      %p125 = scmp.ne.s32.totalorder %s108, %s124
      %p126 = scmp.eq.s32.totalorder %s100, 0
      %p127 = por %p125, %p126
      %s129 = sadd.s32 %s128, 1
      %p132 = scmp.eq.s32.totalorder %s94, 1
      %p133 = scmp.ne.s32.totalorder %s128, %s130
      %p134 = scmp.eq.s32.totalorder %s94, 0
      %p135 = por %p133, %p134
      %p136 = scmp.ne.s32.totalorder %s128, %s130
      %p137 = scmp.eq.s32.totalorder %s99, 1
      %p138 = por %p136, %p137
      %p139 = scmp.ne.s32.totalorder %s130, %s131
      %p140 = scmp.eq.s32.totalorder %s99, 0
      %p141 = por %p139, %p140
      %p142 = scmp.ne.s32.totalorder %s130, %s131
      %p143 = scmp.eq.s32.totalorder %s100, 1
      %p144 = por %p142, %p143
      %p146 = scmp.ne.s32.totalorder %s131, %s145
      %p147 = scmp.eq.s32.totalorder %s100, 0
      %p148 = por %p146, %p147
      %s150 = sadd.s32 %s149, 1
      %p153 = scmp.eq.s32.totalorder %s94, 1
      %p154 = scmp.ne.s32.totalorder %s149, %s151
      %p155 = scmp.eq.s32.totalorder %s94, 0
      %p156 = por %p154, %p155
      %p157 = scmp.ne.s32.totalorder %s149, %s151
      %p158 = scmp.eq.s32.totalorder %s99, 1
      %p159 = por %p157, %p158
      %p160 = scmp.ne.s32.totalorder %s151, %s152
      %p161 = scmp.eq.s32.totalorder %s99, 0
      %p162 = por %p160, %p161
      %p163 = scmp.ne.s32.totalorder %s151, %s152
      %p164 = scmp.eq.s32.totalorder %s100, 1
      %p165 = por %p163, %p164
      %p167 = scmp.ne.s32.totalorder %s152, %s166
      %p168 = scmp.eq.s32.totalorder %s100, 0
      %p169 = por %p167, %p168
      %s171 = sadd.s32 %s170, 1
      %p174 = scmp.eq.s32.totalorder %s94, 1
      %p175 = scmp.ne.s32.totalorder %s170, %s172
      %p176 = scmp.eq.s32.totalorder %s94, 0
      %p177 = por %p175, %p176
      %p178 = scmp.ne.s32.totalorder %s170, %s172
      %p179 = scmp.eq.s32.totalorder %s99, 1
      %p180 = por %p178, %p179
      %p181 = scmp.ne.s32.totalorder %s172, %s173
      %p182 = scmp.eq.s32.totalorder %s99, 0
      %p183 = por %p181, %p182
      %p184 = scmp.ne.s32.totalorder %s172, %s173
      %p185 = scmp.eq.s32.totalorder %s100, 1
      %p186 = por %p184, %p185
      %p188 = scmp.ne.s32.totalorder %s173, %s187
      %p189 = scmp.eq.s32.totalorder %s100, 0
      %p190 = por %p188, %p189
      %s192 = sadd.s32 %s191, 1
      %p195 = scmp.eq.s32.totalorder %s94, 1
      %p196 = scmp.ne.s32.totalorder %s191, %s193
      %p197 = scmp.eq.s32.totalorder %s94, 0
      %p198 = por %p196, %p197
      %p199 = scmp.ne.s32.totalorder %s191, %s193
      %p200 = scmp.eq.s32.totalorder %s99, 1
      %p201 = por %p199, %p200
      %p202 = scmp.ne.s32.totalorder %s193, %s194
      %p203 = scmp.eq.s32.totalorder %s99, 0
      %p204 = por %p202, %p203
      %p205 = scmp.ne.s32.totalorder %s193, %s194
      %p206 = scmp.eq.s32.totalorder %s100, 1
      %p207 = por %p205, %p206
      %p209 = scmp.ne.s32.totalorder %s194, %s208
      %p210 = scmp.eq.s32.totalorder %s100, 0
      %p211 = por %p209, %p210
      %s213 = sadd.s32 %s212, 1
      %p216 = scmp.eq.s32.totalorder %s94, 1
      %p217 = scmp.ne.s32.totalorder %s212, %s214
      %p218 = scmp.eq.s32.totalorder %s94, 0
      %p219 = por %p217, %p218
      %p220 = scmp.ne.s32.totalorder %s212, %s214
      %p221 = scmp.eq.s32.totalorder %s99, 1
      %p222 = por %p220, %p221
      %p223 = scmp.ne.s32.totalorder %s214, %s215
      %p224 = scmp.eq.s32.totalorder %s99, 0
      %p225 = por %p223, %p224
      %p226 = scmp.ne.s32.totalorder %s214, %s215
      %p227 = scmp.eq.s32.totalorder %s100, 1
      %p228 = por %p226, %p227
      %p230 = scmp.ne.s32.totalorder %s215, %s229
      %p231 = scmp.eq.s32.totalorder %s100, 0
      %p232 = por %p230, %p231
      %s234 = sadd.s32 %s233, 1
      %p237 = scmp.eq.s32.totalorder %s94, 1
      %p238 = scmp.ne.s32.totalorder %s233, %s235
      %p239 = scmp.eq.s32.totalorder %s94, 0
      %p240 = por %p238, %p239
      %p241 = scmp.ne.s32.totalorder %s233, %s235
      %p242 = scmp.eq.s32.totalorder %s99, 1
      %p243 = por %p241, %p242
      %p244 = scmp.ne.s32.totalorder %s235, %s236
      %p245 = scmp.eq.s32.totalorder %s99, 0
      %p246 = por %p244, %p245
      %p247 = scmp.ne.s32.totalorder %s235, %s236
      %p248 = scmp.eq.s32.totalorder %s100, 1
      %p249 = por %p247, %p248
      %p251 = scmp.ne.s32.totalorder %s236, %s250
      %p252 = scmp.eq.s32.totalorder %s100, 0
      %p253 = por %p251, %p252
      %s255 = sadd.s32 %s254, 1
      %p258 = scmp.eq.s32.totalorder %s94, 1
      %p259 = scmp.ne.s32.totalorder %s254, %s256
      %p260 = scmp.eq.s32.totalorder %s94, 0
      %p261 = por %p259, %p260
      %p262 = scmp.ne.s32.totalorder %s254, %s256
      %p263 = scmp.eq.s32.totalorder %s99, 1
      %p264 = por %p262, %p263
      %p265 = scmp.ne.s32.totalorder %s256, %s257
      %p266 = scmp.eq.s32.totalorder %s99, 0
      %p267 = por %p265, %p266
      %p268 = scmp.ne.s32.totalorder %s256, %s257
      %p269 = scmp.eq.s32.totalorder %s100, 1
      %p270 = por %p268, %p269
      %p272 = scmp.ne.s32.totalorder %s257, %s271
      %p273 = scmp.eq.s32.totalorder %s100, 0
      %p274 = por %p272, %p273
      %s276 = sadd.s32 %s275, 1
      %p279 = scmp.eq.s32.totalorder %s94, 1
      %p280 = scmp.ne.s32.totalorder %s275, %s277
      %p281 = scmp.eq.s32.totalorder %s94, 0
      %p282 = por %p280, %p281
      %p283 = scmp.ne.s32.totalorder %s275, %s277
      %p284 = scmp.eq.s32.totalorder %s99, 1
      %p285 = por %p283, %p284
      %p286 = scmp.ne.s32.totalorder %s277, %s278
      %p287 = scmp.eq.s32.totalorder %s99, 0
      %p288 = por %p286, %p287
      %p289 = scmp.ne.s32.totalorder %s277, %s278
      %p290 = scmp.eq.s32.totalorder %s100, 1
      %p291 = por %p289, %p290
      %p293 = scmp.ne.s32.totalorder %s278, %s292
      %p294 = scmp.eq.s32.totalorder %s100, 0
      %p295 = por %p293, %p294
      %s297 = sadd.s32 %s296, 1
      %p300 = scmp.eq.s32.totalorder %s94, 1
      %p301 = scmp.ne.s32.totalorder %s296, %s298
      %p302 = scmp.eq.s32.totalorder %s94, 0
      %p303 = por %p301, %p302
      %p304 = scmp.ne.s32.totalorder %s296, %s298
      %p305 = scmp.eq.s32.totalorder %s99, 1
      %p306 = por %p304, %p305
      %p307 = scmp.ne.s32.totalorder %s298, %s299
      %p308 = scmp.eq.s32.totalorder %s99, 0
      %p309 = por %p307, %p308
      %p310 = scmp.ne.s32.totalorder %s298, %s299
      %p311 = scmp.eq.s32.totalorder %s100, 1
      %p312 = por %p310, %p311
      %p314 = scmp.ne.s32.totalorder %s299, %s313
      %p315 = scmp.eq.s32.totalorder %s100, 0
      %p316 = por %p314, %p315
      %s318 = sadd.s32 %s317, 1
      %p321 = scmp.eq.s32.totalorder %s94, 1
      %p322 = scmp.ne.s32.totalorder %s317, %s319
      %p323 = scmp.eq.s32.totalorder %s94, 0
      %p324 = por %p322, %p323
      %p325 = scmp.ne.s32.totalorder %s317, %s319
      %p326 = scmp.eq.s32.totalorder %s99, 1
      %p327 = por %p325, %p326
      %p328 = scmp.ne.s32.totalorder %s319, %s320
      %p329 = scmp.eq.s32.totalorder %s99, 0
      %p330 = por %p328, %p329
      %p331 = scmp.ne.s32.totalorder %s319, %s320
      %p332 = scmp.eq.s32.totalorder %s100, 1
      %p333 = por %p331, %p332
      %p335 = scmp.ne.s32.totalorder %s320, %s334
      %p336 = scmp.eq.s32.totalorder %s100, 0
      %p337 = por %p335, %p336
      %s339 = sadd.s32 %s338, 1
      %p342 = scmp.eq.s32.totalorder %s94, 1
      %p343 = scmp.ne.s32.totalorder %s338, %s340
      %p344 = scmp.eq.s32.totalorder %s94, 0
      %p345 = por %p343, %p344
      %p346 = scmp.ne.s32.totalorder %s338, %s340
      %p347 = scmp.eq.s32.totalorder %s99, 1
      %p348 = por %p346, %p347
      %p349 = scmp.ne.s32.totalorder %s340, %s341
      %p350 = scmp.eq.s32.totalorder %s99, 0
      %p351 = por %p349, %p350
      %p352 = scmp.ne.s32.totalorder %s340, %s341
      %p353 = scmp.eq.s32.totalorder %s100, 1
      %p354 = por %p352, %p353
      %p356 = scmp.ne.s32.totalorder %s341, %s355
      %p357 = scmp.eq.s32.totalorder %s100, 0
      %p358 = por %p356, %p357
      %s360 = sadd.s32 %s359, 1
      %p363 = scmp.eq.s32.totalorder %s94, 1
      %p364 = scmp.ne.s32.totalorder %s359, %s361
      %p365 = scmp.eq.s32.totalorder %s94, 0
      %p366 = por %p364, %p365
      %p367 = scmp.ne.s32.totalorder %s359, %s361
      %p368 = scmp.eq.s32.totalorder %s99, 1
      %p369 = por %p367, %p368
      %p370 = scmp.ne.s32.totalorder %s361, %s362
      %p371 = scmp.eq.s32.totalorder %s99, 0
      %p372 = por %p370, %p371
      %p373 = scmp.ne.s32.totalorder %s361, %s362
      %p374 = scmp.eq.s32.totalorder %s100, 1
      %p375 = por %p373, %p374
      %p377 = scmp.ne.s32.totalorder %s362, %s376
      %p378 = scmp.eq.s32.totalorder %s100, 0
      %p379 = por %p377, %p378
      %s381 = sadd.s32 %s380, 1
      %p384 = scmp.eq.s32.totalorder %s94, 1
      %p385 = scmp.ne.s32.totalorder %s380, %s382
      %p386 = scmp.eq.s32.totalorder %s94, 0
      %p387 = por %p385, %p386
      %p388 = scmp.ne.s32.totalorder %s380, %s382
      %p389 = scmp.eq.s32.totalorder %s99, 1
      %p390 = por %p388, %p389
      %p391 = scmp.ne.s32.totalorder %s382, %s383
      %p392 = scmp.eq.s32.totalorder %s99, 0
      %p393 = por %p391, %p392
      %p394 = scmp.ne.s32.totalorder %s382, %s383
      %p395 = scmp.eq.s32.totalorder %s100, 1
      %p396 = por %p394, %p395
      %p398 = scmp.ne.s32.totalorder %s383, %s397
      %p399 = scmp.eq.s32.totalorder %s100, 0
      %p400 = por %p398, %p399
      %s402 = sadd.s32 %s401, 1
      %p405 = scmp.eq.s32.totalorder %s94, 1
      %p406 = scmp.ne.s32.totalorder %s401, %s403
      %p407 = scmp.eq.s32.totalorder %s94, 0
      %p408 = por %p406, %p407
      %p409 = scmp.ne.s32.totalorder %s401, %s403
      %p410 = scmp.eq.s32.totalorder %s99, 1
      %p411 = por %p409, %p410
      %p412 = scmp.ne.s32.totalorder %s403, %s404
      %p413 = scmp.eq.s32.totalorder %s99, 0
      %p414 = por %p412, %p413
      %p415 = scmp.ne.s32.totalorder %s403, %s404
      %p416 = scmp.eq.s32.totalorder %s100, 1
      %p417 = por %p415, %p416
      %p419 = scmp.ne.s32.totalorder %s404, %s418
      %p420 = scmp.eq.s32.totalorder %s100, 0
      %p421 = por %p419, %p420
      %s423 = sadd.s32 %s422, 1
      %p426 = scmp.eq.s32.totalorder %s94, 1
      %p427 = scmp.ne.s32.totalorder %s422, %s424
      %p428 = scmp.eq.s32.totalorder %s94, 0
      %p429 = por %p427, %p428
      %p430 = scmp.ne.s32.totalorder %s422, %s424
      %p431 = scmp.eq.s32.totalorder %s99, 1
      %p432 = por %p430, %p431
      %p433 = scmp.ne.s32.totalorder %s424, %s425
      %p434 = scmp.eq.s32.totalorder %s99, 0
      %p435 = por %p433, %p434
      %p436 = scmp.ne.s32.totalorder %s424, %s425
      %p437 = scmp.eq.s32.totalorder %s100, 1
      %p438 = por %p436, %p437
      %p440 = scmp.ne.s32.totalorder %s425, %s439
      %p441 = scmp.eq.s32.totalorder %s100, 0
      %p442 = por %p440, %p441
      %s444 = sadd.s32 %s443, 1
      %p447 = scmp.eq.s32.totalorder %s94, 1
      %p448 = scmp.ne.s32.totalorder %s443, %s445
      %p449 = scmp.eq.s32.totalorder %s94, 0
      %p450 = por %p448, %p449
      %p451 = scmp.ne.s32.totalorder %s443, %s445
      %p452 = scmp.eq.s32.totalorder %s99, 1
      %p453 = por %p451, %p452
      %p454 = scmp.ne.s32.totalorder %s445, %s446
      %p455 = scmp.eq.s32.totalorder %s99, 0
      %p456 = por %p454, %p455
      %p457 = scmp.ne.s32.totalorder %s445, %s446
      %p458 = scmp.eq.s32.totalorder %s100, 1
      %p459 = por %p457, %p458
      %p461 = scmp.ne.s32.totalorder %s446, %s460
      %p462 = scmp.eq.s32.totalorder %s100, 0
      %p463 = por %p461, %p462
      %s465 = sadd.s32 %s464, 1
      %p468 = scmp.eq.s32.totalorder %s94, 1
      %p469 = scmp.ne.s32.totalorder %s464, %s466
      %p470 = scmp.eq.s32.totalorder %s94, 0
      %p471 = por %p469, %p470
      %p472 = scmp.ne.s32.totalorder %s464, %s466
      %p473 = scmp.eq.s32.totalorder %s99, 1
      %p474 = por %p472, %p473
      %p475 = scmp.ne.s32.totalorder %s466, %s467
      %p476 = scmp.eq.s32.totalorder %s99, 0
      %p477 = por %p475, %p476
      %p478 = scmp.ne.s32.totalorder %s466, %s467
      %p479 = scmp.eq.s32.totalorder %s100, 1
      %p480 = por %p478, %p479
      %p482 = scmp.ne.s32.totalorder %s467, %s481
      %p483 = scmp.eq.s32.totalorder %s100, 0
      %p484 = por %p482, %p483
      %s486 = sadd.s32 %s485, 1
      %p489 = scmp.eq.s32.totalorder %s94, 1
      %p490 = scmp.ne.s32.totalorder %s485, %s487
      %p491 = scmp.eq.s32.totalorder %s94, 0
      %p492 = por %p490, %p491
      %p493 = scmp.ne.s32.totalorder %s485, %s487
      %p494 = scmp.eq.s32.totalorder %s99, 1
      %p495 = por %p493, %p494
      %p496 = scmp.ne.s32.totalorder %s487, %s488
      %p497 = scmp.eq.s32.totalorder %s99, 0
      %p498 = por %p496, %p497
      %p499 = scmp.ne.s32.totalorder %s487, %s488
      %p500 = scmp.eq.s32.totalorder %s100, 1
      %p501 = por %p499, %p500
      %p503 = scmp.ne.s32.totalorder %s488, %s502
      %p504 = scmp.eq.s32.totalorder %s100, 0
      %p505 = por %p503, %p504
      %s507 = sadd.s32 %s506, 1
      %p510 = scmp.eq.s32.totalorder %s94, 1
      %p511 = scmp.ne.s32.totalorder %s506, %s508
      %p512 = scmp.eq.s32.totalorder %s94, 0
      %p513 = por %p511, %p512
      %p514 = scmp.ne.s32.totalorder %s506, %s508
      %p515 = scmp.eq.s32.totalorder %s99, 1
      %p516 = por %p514, %p515
      %p517 = scmp.ne.s32.totalorder %s508, %s509
      %p518 = scmp.eq.s32.totalorder %s99, 0
      %p519 = por %p517, %p518
      %p520 = scmp.ne.s32.totalorder %s508, %s509
      %p521 = scmp.eq.s32.totalorder %s100, 1
      %p522 = por %p520, %p521
      %p524 = scmp.ne.s32.totalorder %s509, %s523
      %p525 = scmp.eq.s32.totalorder %s100, 0
      %p526 = por %p524, %p525
      %s528 = sadd.s32 %s527, 1
      %p531 = scmp.eq.s32.totalorder %s94, 1
      %p532 = scmp.ne.s32.totalorder %s527, %s529
      %p533 = scmp.eq.s32.totalorder %s94, 0
      %p534 = por %p532, %p533
      %p535 = scmp.ne.s32.totalorder %s527, %s529
      %p536 = scmp.eq.s32.totalorder %s99, 1
      %p537 = por %p535, %p536
      %p538 = scmp.ne.s32.totalorder %s529, %s530
      %p539 = scmp.eq.s32.totalorder %s99, 0
      %p540 = por %p538, %p539
      %p541 = scmp.ne.s32.totalorder %s529, %s530
      %p542 = scmp.eq.s32.totalorder %s100, 1
      %p543 = por %p541, %p542
      %p545 = scmp.ne.s32.totalorder %s530, %s544
      %p546 = scmp.eq.s32.totalorder %s100, 0
      %p547 = por %p545, %p546
      %s549 = sadd.s32 %s548, 1
      %p552 = scmp.eq.s32.totalorder %s94, 1
      %p553 = scmp.ne.s32.totalorder %s548, %s550
      %p554 = scmp.eq.s32.totalorder %s94, 0
      %p555 = por %p553, %p554
      %p556 = scmp.ne.s32.totalorder %s548, %s550
      %p557 = scmp.eq.s32.totalorder %s99, 1
      %p558 = por %p556, %p557
      %p559 = scmp.ne.s32.totalorder %s550, %s551
      %p560 = scmp.eq.s32.totalorder %s99, 0
      %p561 = por %p559, %p560
      %p562 = scmp.ne.s32.totalorder %s550, %s551
      %p563 = scmp.eq.s32.totalorder %s100, 1
      %p564 = por %p562, %p563
      %p566 = scmp.ne.s32.totalorder %s551, %s565
      %p567 = scmp.eq.s32.totalorder %s100, 0
      %p568 = por %p566, %p567
      %s570 = sadd.s32 %s569, 1
      %p573 = scmp.eq.s32.totalorder %s94, 1
      %p574 = scmp.ne.s32.totalorder %s569, %s571
      %p575 = scmp.eq.s32.totalorder %s94, 0
      %p576 = por %p574, %p575
      %p577 = scmp.ne.s32.totalorder %s569, %s571
      %p578 = scmp.eq.s32.totalorder %s99, 1
      %p579 = por %p577, %p578
      %p580 = scmp.ne.s32.totalorder %s571, %s572
      %p581 = scmp.eq.s32.totalorder %s99, 0
      %p582 = por %p580, %p581
      %p583 = scmp.ne.s32.totalorder %s571, %s572
      %p584 = scmp.eq.s32.totalorder %s100, 1
      %p585 = por %p583, %p584
      %p587 = scmp.ne.s32.totalorder %s572, %s586
      %p588 = scmp.eq.s32.totalorder %s100, 0
      %p589 = por %p587, %p588
      %s591 = sadd.s32 %s590, 1
      %p594 = scmp.eq.s32.totalorder %s94, 1
      %p595 = scmp.ne.s32.totalorder %s590, %s592
      %p596 = scmp.eq.s32.totalorder %s94, 0
      %p597 = por %p595, %p596
      %p598 = scmp.ne.s32.totalorder %s590, %s592
      %p599 = scmp.eq.s32.totalorder %s99, 1
      %p600 = por %p598, %p599
      %p601 = scmp.ne.s32.totalorder %s592, %s593
      %p602 = scmp.eq.s32.totalorder %s99, 0
      %p603 = por %p601, %p602
      %p604 = scmp.ne.s32.totalorder %s592, %s593
      %p605 = scmp.eq.s32.totalorder %s100, 1
      %p606 = por %p604, %p605
      %p608 = scmp.ne.s32.totalorder %s593, %s607
      %p609 = scmp.eq.s32.totalorder %s100, 0
      %p610 = por %p608, %p609
      %s612 = sadd.s32 %s611, 1
      %p615 = scmp.eq.s32.totalorder %s94, 1
      %p616 = scmp.ne.s32.totalorder %s611, %s613
      %p617 = scmp.eq.s32.totalorder %s94, 0
      %p618 = por %p616, %p617
      %p619 = scmp.ne.s32.totalorder %s611, %s613
      %p620 = scmp.eq.s32.totalorder %s99, 1
      %p621 = por %p619, %p620
      %p622 = scmp.ne.s32.totalorder %s613, %s614
      %p623 = scmp.eq.s32.totalorder %s99, 0
      %p624 = por %p622, %p623
      %p625 = scmp.ne.s32.totalorder %s613, %s614
      %p626 = scmp.eq.s32.totalorder %s100, 1
      %p627 = por %p625, %p626
      %p629 = scmp.ne.s32.totalorder %s614, %s628
      %p630 = scmp.eq.s32.totalorder %s100, 0
      %p631 = por %p629, %p630
      %s633 = sadd.s32 %s632, 1
      %p636 = scmp.eq.s32.totalorder %s94, 1
      %p637 = scmp.ne.s32.totalorder %s632, %s634
      %p638 = scmp.eq.s32.totalorder %s94, 0
      %p639 = por %p637, %p638
      %p640 = scmp.ne.s32.totalorder %s632, %s634
      %p641 = scmp.eq.s32.totalorder %s99, 1
      %p642 = por %p640, %p641
      %p643 = scmp.ne.s32.totalorder %s634, %s635
      %p644 = scmp.eq.s32.totalorder %s99, 0
      %p645 = por %p643, %p644
      %p646 = scmp.ne.s32.totalorder %s634, %s635
      %p647 = scmp.eq.s32.totalorder %s100, 1
      %p648 = por %p646, %p647
      %p650 = scmp.ne.s32.totalorder %s635, %s649
      %p651 = scmp.eq.s32.totalorder %s100, 0
      %p652 = por %p650, %p651
      %s654 = sadd.s32 %s653, 1
      %p657 = scmp.eq.s32.totalorder %s94, 1
      %p658 = scmp.ne.s32.totalorder %s653, %s655
      %p659 = scmp.eq.s32.totalorder %s94, 0
      %p660 = por %p658, %p659
      %p661 = scmp.ne.s32.totalorder %s653, %s655
      %p662 = scmp.eq.s32.totalorder %s99, 1
      %p663 = por %p661, %p662
      %p664 = scmp.ne.s32.totalorder %s655, %s656
      %p665 = scmp.eq.s32.totalorder %s99, 0
      %p666 = por %p664, %p665
      %p667 = scmp.ne.s32.totalorder %s655, %s656
      %p668 = scmp.eq.s32.totalorder %s100, 1
      %p669 = por %p667, %p668
      %p671 = scmp.ne.s32.totalorder %s656, %s670
      %p672 = scmp.eq.s32.totalorder %s100, 0
      %p673 = por %p671, %p672
      %s675 = sadd.s32 %s674, 1
      %p678 = scmp.eq.s32.totalorder %s94, 1
      %p679 = scmp.ne.s32.totalorder %s674, %s676
      %p680 = scmp.eq.s32.totalorder %s94, 0
      %p681 = por %p679, %p680
      %p682 = scmp.ne.s32.totalorder %s674, %s676
      %p683 = scmp.eq.s32.totalorder %s99, 1
      %p684 = por %p682, %p683
      %p685 = scmp.ne.s32.totalorder %s676, %s677
      %p686 = scmp.eq.s32.totalorder %s99, 0
      %p687 = por %p685, %p686
      %p688 = scmp.ne.s32.totalorder %s676, %s677
      %p689 = scmp.eq.s32.totalorder %s100, 1
      %p690 = por %p688, %p689
      %p692 = scmp.ne.s32.totalorder %s677, %s691
      %p693 = scmp.eq.s32.totalorder %s100, 0
      %p694 = por %p692, %p693
      %s696 = sadd.s32 %s695, 1
      %p699 = scmp.eq.s32.totalorder %s94, 1
      %p700 = scmp.ne.s32.totalorder %s695, %s697
      %p701 = scmp.eq.s32.totalorder %s94, 0
      %p702 = por %p700, %p701
      %p703 = scmp.ne.s32.totalorder %s695, %s697
      %p704 = scmp.eq.s32.totalorder %s99, 1
      %p705 = por %p703, %p704
      %p706 = scmp.ne.s32.totalorder %s697, %s698
      %p707 = scmp.eq.s32.totalorder %s99, 0
      %p708 = por %p706, %p707
      %p709 = scmp.ne.s32.totalorder %s697, %s698
      %p710 = scmp.eq.s32.totalorder %s100, 1
      %p711 = por %p709, %p710
      %p713 = scmp.ne.s32.totalorder %s698, %s712
      %p714 = scmp.eq.s32.totalorder %s100, 0
      %p715 = por %p713, %p714
      %s717 = sadd.s32 %s716, 1
      %p720 = scmp.eq.s32.totalorder %s94, 1
      %p721 = scmp.ne.s32.totalorder %s716, %s718
      %p722 = scmp.eq.s32.totalorder %s94, 0
      %p723 = por %p721, %p722
      %p724 = scmp.ne.s32.totalorder %s716, %s718
      %p725 = scmp.eq.s32.totalorder %s99, 1
      %p726 = por %p724, %p725
      %p727 = scmp.ne.s32.totalorder %s718, %s719
      %p728 = scmp.eq.s32.totalorder %s99, 0
      %p729 = por %p727, %p728
      %p730 = scmp.ne.s32.totalorder %s718, %s719
      %p731 = scmp.eq.s32.totalorder %s100, 1
      %p732 = por %p730, %p731
      %p734 = scmp.ne.s32.totalorder %s719, %s733
      %p735 = scmp.eq.s32.totalorder %s100, 0
      %p736 = por %p734, %p735
      %s738 = sadd.s32 %s737, 1
      %p741 = scmp.eq.s32.totalorder %s94, 1
      %p742 = scmp.ne.s32.totalorder %s737, %s739
      %p743 = scmp.eq.s32.totalorder %s94, 0
      %p744 = por %p742, %p743
      %p745 = scmp.ne.s32.totalorder %s737, %s739
      %p746 = scmp.eq.s32.totalorder %s99, 1
      %p747 = por %p745, %p746
      %p748 = scmp.ne.s32.totalorder %s739, %s740
      %p749 = scmp.eq.s32.totalorder %s99, 0
      %p750 = por %p748, %p749
      %p751 = scmp.ne.s32.totalorder %s739, %s740
      %p752 = scmp.eq.s32.totalorder %s100, 1
      %p753 = por %p751, %p752
      %p755 = scmp.ne.s32.totalorder %s740, %s754
      %p756 = scmp.eq.s32.totalorder %s100, 0
      %p757 = por %p755, %p756
      %s759 = sadd.s32 %s758, 1
      %p762 = scmp.eq.s32.totalorder %s94, 1
      %p763 = scmp.ne.s32.totalorder %s758, %s760
      %p764 = scmp.eq.s32.totalorder %s94, 0
      %p765 = por %p763, %p764
      %p766 = scmp.ne.s32.totalorder %s758, %s760
      %p767 = scmp.eq.s32.totalorder %s99, 1
      %p768 = por %p766, %p767
      %p769 = scmp.ne.s32.totalorder %s760, %s761
      %p770 = scmp.eq.s32.totalorder %s99, 0
      %p771 = por %p769, %p770
      %p772 = scmp.ne.s32.totalorder %s760, %s761
      %p773 = scmp.eq.s32.totalorder %s100, 1
      %p774 = por %p772, %p773
      %p776 = scmp.ne.s32.totalorder %s761, %s775
      %p777 = scmp.eq.s32.totalorder %s100, 0
      %p778 = por %p776, %p777
      %s780 = sadd.s32 %s779, 1
      %p783 = scmp.eq.s32.totalorder %s94, 1
      %p784 = scmp.ne.s32.totalorder %s779, %s781
      %p785 = scmp.eq.s32.totalorder %s94, 0
      %p786 = por %p784, %p785
      %p787 = scmp.ne.s32.totalorder %s779, %s781
      %p788 = scmp.eq.s32.totalorder %s99, 1
      %p789 = por %p787, %p788
      %p790 = scmp.ne.s32.totalorder %s781, %s782
      %p791 = scmp.eq.s32.totalorder %s99, 0
      %p792 = por %p790, %p791
      %p793 = scmp.ne.s32.totalorder %s781, %s782
      %p794 = scmp.eq.s32.totalorder %s100, 1
      %p795 = por %p793, %p794
      %p797 = scmp.ne.s32.totalorder %s782, %s796
      %p798 = scmp.eq.s32.totalorder %s100, 0
      %p799 = por %p797, %p798
      %s801 = sadd.s32 %s800, 1
      %p804 = scmp.eq.s32.totalorder %s94, 1
      %p805 = scmp.ne.s32.totalorder %s800, %s802
      %p806 = scmp.eq.s32.totalorder %s94, 0
      %p807 = por %p805, %p806
      %p808 = scmp.ne.s32.totalorder %s800, %s802
      %p809 = scmp.eq.s32.totalorder %s99, 1
      %p810 = por %p808, %p809
      %p811 = scmp.ne.s32.totalorder %s802, %s803
      %p812 = scmp.eq.s32.totalorder %s99, 0
      %p813 = por %p811, %p812
      %p814 = scmp.ne.s32.totalorder %s802, %s803
      %p815 = scmp.eq.s32.totalorder %s100, 1
      %p816 = por %p814, %p815
      %p818 = scmp.ne.s32.totalorder %s803, %s817
      %p819 = scmp.eq.s32.totalorder %s100, 0
      %p820 = por %p818, %p819
      %s822 = sadd.s32 %s821, 1
      %p825 = scmp.eq.s32.totalorder %s94, 1
      %p826 = scmp.ne.s32.totalorder %s821, %s823
      %p827 = scmp.eq.s32.totalorder %s94, 0
      %p828 = por %p826, %p827
      %p829 = scmp.ne.s32.totalorder %s821, %s823
      %p830 = scmp.eq.s32.totalorder %s99, 1
      %p831 = por %p829, %p830
      %p832 = scmp.ne.s32.totalorder %s823, %s824
      %p833 = scmp.eq.s32.totalorder %s99, 0
      %p834 = por %p832, %p833
      %p835 = scmp.ne.s32.totalorder %s823, %s824
      %p836 = scmp.eq.s32.totalorder %s100, 1
      %p837 = por %p835, %p836
      %p839 = scmp.ne.s32.totalorder %s824, %s838
      %p840 = scmp.eq.s32.totalorder %s100, 0
      %p841 = por %p839, %p840
      %s843 = sadd.s32 %s842, 1
      %p846 = scmp.eq.s32.totalorder %s94, 1
      %p847 = scmp.ne.s32.totalorder %s842, %s844
      %p848 = scmp.eq.s32.totalorder %s94, 0
      %p849 = por %p847, %p848
      %p850 = scmp.ne.s32.totalorder %s842, %s844
      %p851 = scmp.eq.s32.totalorder %s99, 1
      %p852 = por %p850, %p851
      %p853 = scmp.ne.s32.totalorder %s844, %s845
      %p854 = scmp.eq.s32.totalorder %s99, 0
      %p855 = por %p853, %p854
      %p856 = scmp.ne.s32.totalorder %s844, %s845
      %p857 = scmp.eq.s32.totalorder %s100, 1
      %p858 = por %p856, %p857
      %p860 = scmp.ne.s32.totalorder %s845, %s859
      %p861 = scmp.eq.s32.totalorder %s100, 0
      %p862 = por %p860, %p861
      %s864 = sadd.s32 %s863, 1
      %p867 = scmp.eq.s32.totalorder %s94, 1
      %p868 = scmp.ne.s32.totalorder %s863, %s865
      %p869 = scmp.eq.s32.totalorder %s94, 0
      %p870 = por %p868, %p869
      %p871 = scmp.ne.s32.totalorder %s863, %s865
      %p872 = scmp.eq.s32.totalorder %s99, 1
      %p873 = por %p871, %p872
      %p874 = scmp.ne.s32.totalorder %s865, %s866
      %p875 = scmp.eq.s32.totalorder %s99, 0
      %p876 = por %p874, %p875
      %p877 = scmp.ne.s32.totalorder %s865, %s866
      %p878 = scmp.eq.s32.totalorder %s100, 1
      %p879 = por %p877, %p878
      %p881 = scmp.ne.s32.totalorder %s866, %s880
      %p882 = scmp.eq.s32.totalorder %s100, 0
      %p883 = por %p881, %p882
      %s885 = sadd.s32 %s884, 1
      %p888 = scmp.eq.s32.totalorder %s94, 1
      %p889 = scmp.ne.s32.totalorder %s884, %s886
      %p890 = scmp.eq.s32.totalorder %s94, 0
      %p891 = por %p889, %p890
      %p892 = scmp.ne.s32.totalorder %s884, %s886
      %p893 = scmp.eq.s32.totalorder %s99, 1
      %p894 = por %p892, %p893
      %p895 = scmp.ne.s32.totalorder %s886, %s887
      %p896 = scmp.eq.s32.totalorder %s99, 0
      %p897 = por %p895, %p896
      %p898 = scmp.ne.s32.totalorder %s886, %s887
      %p899 = scmp.eq.s32.totalorder %s100, 1
      %p900 = por %p898, %p899
      %p902 = scmp.ne.s32.totalorder %s887, %s901
      %p903 = scmp.eq.s32.totalorder %s100, 0
      %p904 = por %p902, %p903
      %s906 = sadd.s32 %s905, 1
      %p909 = scmp.eq.s32.totalorder %s94, 1
      %p910 = scmp.ne.s32.totalorder %s905, %s907
      %p911 = scmp.eq.s32.totalorder %s94, 0
      %p912 = por %p910, %p911
      %p913 = scmp.ne.s32.totalorder %s905, %s907
      %p914 = scmp.eq.s32.totalorder %s99, 1
      %p915 = por %p913, %p914
      %p916 = scmp.ne.s32.totalorder %s907, %s908
      %p917 = scmp.eq.s32.totalorder %s99, 0
      %p918 = por %p916, %p917
      %p919 = scmp.ne.s32.totalorder %s907, %s908
      %p920 = scmp.eq.s32.totalorder %s100, 1
      %p921 = por %p919, %p920
      %p923 = scmp.ne.s32.totalorder %s908, %s922
      %p924 = scmp.eq.s32.totalorder %s100, 0
      %p925 = por %p923, %p924
      %s927 = sadd.s32 %s926, 1
      %p930 = scmp.eq.s32.totalorder %s94, 1
      %p931 = scmp.ne.s32.totalorder %s926, %s928
      %p932 = scmp.eq.s32.totalorder %s94, 0
      %p933 = por %p931, %p932
      %p934 = scmp.ne.s32.totalorder %s926, %s928
      %p935 = scmp.eq.s32.totalorder %s99, 1
      %p936 = por %p934, %p935
      %p937 = scmp.ne.s32.totalorder %s928, %s929
      %p938 = scmp.eq.s32.totalorder %s99, 0
      %p939 = por %p937, %p938
      %p940 = scmp.ne.s32.totalorder %s928, %s929
      %p941 = scmp.eq.s32.totalorder %s100, 1
      %p942 = por %p940, %p941
      %p944 = scmp.ne.s32.totalorder %s929, %s943
      %p945 = scmp.eq.s32.totalorder %s100, 0
      %p946 = por %p944, %p945
      %s948 = sadd.s32 %s947, 1
      %p951 = scmp.eq.s32.totalorder %s94, 1
      %p952 = scmp.ne.s32.totalorder %s947, %s949
      %p953 = scmp.eq.s32.totalorder %s94, 0
      %p954 = por %p952, %p953
      %p955 = scmp.ne.s32.totalorder %s947, %s949
      %p956 = scmp.eq.s32.totalorder %s99, 1
      %p957 = por %p955, %p956
      %p958 = scmp.ne.s32.totalorder %s949, %s950
      %p959 = scmp.eq.s32.totalorder %s99, 0
      %p960 = por %p958, %p959
      %p961 = scmp.ne.s32.totalorder %s949, %s950
      %p962 = scmp.eq.s32.totalorder %s100, 1
      %p963 = por %p961, %p962
      %p965 = scmp.ne.s32.totalorder %s950, %s964
      %p966 = scmp.eq.s32.totalorder %s100, 0
      %p967 = por %p965, %p966
      %s969 = sadd.s32 %s968, 1
      %p972 = scmp.eq.s32.totalorder %s94, 1
      %p973 = scmp.ne.s32.totalorder %s968, %s970
      %p974 = scmp.eq.s32.totalorder %s94, 0
      %p975 = por %p973, %p974
      %p976 = scmp.ne.s32.totalorder %s968, %s970
      %p977 = scmp.eq.s32.totalorder %s99, 1
      %p978 = por %p976, %p977
      %p979 = scmp.ne.s32.totalorder %s970, %s971
      %p980 = scmp.eq.s32.totalorder %s99, 0
      %p981 = por %p979, %p980
      %p982 = scmp.ne.s32.totalorder %s970, %s971
      %p983 = scmp.eq.s32.totalorder %s100, 1
      %p984 = por %p982, %p983
      %p986 = scmp.ne.s32.totalorder %s971, %s985
      %p987 = scmp.eq.s32.totalorder %s100, 0
      %p988 = por %p986, %p987
      %s989 = ssub.s32 %s94, %s101
      %p990 = scmp.eq.s32.totalorder %s989, 0
      %s992 = sadd.s32 %s991, 1
      %s993 = scalar_select %p990, %s991, %s992
      %p996 = pneg %p990
      %p997 = scmp.eq.s32.totalorder %s94, 1
      %p998 = por %p996, %p997
      %p999 = scmp.ne.s32.totalorder %s991, %s994
      %p1000 = scmp.eq.s32.totalorder %s94, 0
      %p1001 = por %p999, %p1000
      %p1002 = scmp.ne.s32.totalorder %s991, %s994
      %p1003 = scmp.eq.s32.totalorder %s99, 1
      %p1004 = por %p1002, %p1003
      %p1005 = scmp.ne.s32.totalorder %s994, %s995
      %p1006 = scmp.eq.s32.totalorder %s99, 0
      %p1007 = por %p1005, %p1006
      %p1008 = scmp.ne.s32.totalorder %s994, %s995
      %p1009 = scmp.eq.s32.totalorder %s100, 1
      %p1010 = por %p1008, %p1009
      %p1012 = scmp.ne.s32.totalorder %s995, %s1011
      %p1013 = scmp.eq.s32.totalorder %s100, 0
      %p1014 = por %p1012, %p1013
      %p1015 = scmp.le.s32.totalorder 1, %s94
      %p1016 = scmp.lt.s32.totalorder %s94, 3
      %p1017 = pnand %p1015, %p1016
      %p1018 = pneg %p1017
      // Predicated region
      $region9: #{_lambda_.1} parent=5 // pred_check
        _
      $region10: #{_lambda_.1} parent=5 // pred_check_branch
        %1020 = sbr.rel (%p1017) target = $region12
      $region11: #{_lambda_.1} parent=5 // pred_region
        %s1021 = ssub.s32 %s94, 1
        // Predicated region
        $region13: #{_lambda_.1} parent=11 // pred_check
          %p1022 = pneg %p141
        $region14: #{_lambda_.1} parent=11 // pred_check_branch
          %1024 = sbr.rel (%p1022) target = $region16
        $region15: #{_lambda_.1} parent=11 // pred_region
          _
        $region16: #{_lambda_.1} parent=11 // pred_fallthru
          _
        // Predicated region
        $region17: #{_lambda_.1} parent=11 // pred_check
          %p1025 = pneg %p162
        $region18: #{_lambda_.1} parent=11 // pred_check_branch
          %1027 = sbr.rel (%p1025) target = $region20
        $region19: #{_lambda_.1} parent=11 // pred_region
          _
        $region20: #{_lambda_.1} parent=11 // pred_fallthru
          _
        // Predicated region
        $region21: #{_lambda_.1} parent=11 // pred_check
          %p1028 = pneg %p183
        $region22: #{_lambda_.1} parent=11 // pred_check_branch
          %1030 = sbr.rel (%p1028) target = $region24
        $region23: #{_lambda_.1} parent=11 // pred_region
          _
        $region24: #{_lambda_.1} parent=11 // pred_fallthru
          _
        // Predicated region
        $region25: #{_lambda_.1} parent=11 // pred_check
          %p1031 = pneg %p204
        $region26: #{_lambda_.1} parent=11 // pred_check_branch
          %1033 = sbr.rel (%p1031) target = $region28
        $region27: #{_lambda_.1} parent=11 // pred_region
          _
        $region28: #{_lambda_.1} parent=11 // pred_fallthru
          _
        // Predicated region
        $region29: #{_lambda_.1} parent=11 // pred_check
          %p1034 = pneg %p225
        $region30: #{_lambda_.1} parent=11 // pred_check_branch
          %1036 = sbr.rel (%p1034) target = $region32
        $region31: #{_lambda_.1} parent=11 // pred_region
          _
        $region32: #{_lambda_.1} parent=11 // pred_fallthru
          _
        // Predicated region
        $region33: #{_lambda_.1} parent=11 // pred_check
          %p1037 = pneg %p246
        $region34: #{_lambda_.1} parent=11 // pred_check_branch
          %1039 = sbr.rel (%p1037) target = $region36
        $region35: #{_lambda_.1} parent=11 // pred_region
          _
        $region36: #{_lambda_.1} parent=11 // pred_fallthru
          _
        // Predicated region
        $region37: #{_lambda_.1} parent=11 // pred_check
          %p1040 = pneg %p267
        $region38: #{_lambda_.1} parent=11 // pred_check_branch
          %1042 = sbr.rel (%p1040) target = $region40
        $region39: #{_lambda_.1} parent=11 // pred_region
          _
        $region40: #{_lambda_.1} parent=11 // pred_fallthru
          _
        // Predicated region
        $region41: #{_lambda_.1} parent=11 // pred_check
          %p1043 = pneg %p288
        $region42: #{_lambda_.1} parent=11 // pred_check_branch
          %1045 = sbr.rel (%p1043) target = $region44
        $region43: #{_lambda_.1} parent=11 // pred_region
          _
        $region44: #{_lambda_.1} parent=11 // pred_fallthru
          _
        // Predicated region
        $region45: #{_lambda_.1} parent=11 // pred_check
          %p1046 = pneg %p309
        $region46: #{_lambda_.1} parent=11 // pred_check_branch
          %1048 = sbr.rel (%p1046) target = $region48
        $region47: #{_lambda_.1} parent=11 // pred_region
          _
        $region48: #{_lambda_.1} parent=11 // pred_fallthru
          _
        // Predicated region
        $region49: #{_lambda_.1} parent=11 // pred_check
          %p1049 = pneg %p330
        $region50: #{_lambda_.1} parent=11 // pred_check_branch
          %1051 = sbr.rel (%p1049) target = $region52
        $region51: #{_lambda_.1} parent=11 // pred_region
          _
        $region52: #{_lambda_.1} parent=11 // pred_fallthru
          _
        // Predicated region
        $region53: #{_lambda_.1} parent=11 // pred_check
          %p1052 = pneg %p351
        $region54: #{_lambda_.1} parent=11 // pred_check_branch
          %1054 = sbr.rel (%p1052) target = $region56
        $region55: #{_lambda_.1} parent=11 // pred_region
          _
        $region56: #{_lambda_.1} parent=11 // pred_fallthru
          _
        // Predicated region
        $region57: #{_lambda_.1} parent=11 // pred_check
          %p1055 = pneg %p372
        $region58: #{_lambda_.1} parent=11 // pred_check_branch
          %1057 = sbr.rel (%p1055) target = $region60
        $region59: #{_lambda_.1} parent=11 // pred_region
          _
        $region60: #{_lambda_.1} parent=11 // pred_fallthru
          _
        // Predicated region
        $region61: #{_lambda_.1} parent=11 // pred_check
          %p1058 = pneg %p393
        $region62: #{_lambda_.1} parent=11 // pred_check_branch
          %1060 = sbr.rel (%p1058) target = $region64
        $region63: #{_lambda_.1} parent=11 // pred_region
          _
        $region64: #{_lambda_.1} parent=11 // pred_fallthru
          _
        // Predicated region
        $region65: #{_lambda_.1} parent=11 // pred_check
          %p1061 = pneg %p414
        $region66: #{_lambda_.1} parent=11 // pred_check_branch
          %1063 = sbr.rel (%p1061) target = $region68
        $region67: #{_lambda_.1} parent=11 // pred_region
          _
        $region68: #{_lambda_.1} parent=11 // pred_fallthru
          _
        // Predicated region
        $region69: #{_lambda_.1} parent=11 // pred_check
          %p1064 = pneg %p435
        $region70: #{_lambda_.1} parent=11 // pred_check_branch
          %1066 = sbr.rel (%p1064) target = $region72
        $region71: #{_lambda_.1} parent=11 // pred_region
          _
        $region72: #{_lambda_.1} parent=11 // pred_fallthru
          _
        // Predicated region
        $region73: #{_lambda_.1} parent=11 // pred_check
          %p1067 = pneg %p456
        $region74: #{_lambda_.1} parent=11 // pred_check_branch
          %1069 = sbr.rel (%p1067) target = $region76
        $region75: #{_lambda_.1} parent=11 // pred_region
          _
        $region76: #{_lambda_.1} parent=11 // pred_fallthru
          _
        // Predicated region
        $region77: #{_lambda_.1} parent=11 // pred_check
          %p1070 = pneg %p477
        $region78: #{_lambda_.1} parent=11 // pred_check_branch
          %1072 = sbr.rel (%p1070) target = $region80
        $region79: #{_lambda_.1} parent=11 // pred_region
          _
        $region80: #{_lambda_.1} parent=11 // pred_fallthru
          _
        // Predicated region
        $region81: #{_lambda_.1} parent=11 // pred_check
          %p1073 = pneg %p498
        $region82: #{_lambda_.1} parent=11 // pred_check_branch
          %1075 = sbr.rel (%p1073) target = $region84
        $region83: #{_lambda_.1} parent=11 // pred_region
          _
        $region84: #{_lambda_.1} parent=11 // pred_fallthru
          _
        // Predicated region
        $region85: #{_lambda_.1} parent=11 // pred_check
          %p1076 = pneg %p519
        $region86: #{_lambda_.1} parent=11 // pred_check_branch
          %1078 = sbr.rel (%p1076) target = $region88
        $region87: #{_lambda_.1} parent=11 // pred_region
          _
        $region88: #{_lambda_.1} parent=11 // pred_fallthru
          _
        // Predicated region
        $region89: #{_lambda_.1} parent=11 // pred_check
          %p1079 = pneg %p540
        $region90: #{_lambda_.1} parent=11 // pred_check_branch
          %1081 = sbr.rel (%p1079) target = $region92
        $region91: #{_lambda_.1} parent=11 // pred_region
          _
        $region92: #{_lambda_.1} parent=11 // pred_fallthru
          _
        // Predicated region
        $region93: #{_lambda_.1} parent=11 // pred_check
          %p1082 = pneg %p561
        $region94: #{_lambda_.1} parent=11 // pred_check_branch
          %1084 = sbr.rel (%p1082) target = $region96
        $region95: #{_lambda_.1} parent=11 // pred_region
          _
        $region96: #{_lambda_.1} parent=11 // pred_fallthru
          _
        // Predicated region
        $region97: #{_lambda_.1} parent=11 // pred_check
          %p1085 = pneg %p582
        $region98: #{_lambda_.1} parent=11 // pred_check_branch
          %1087 = sbr.rel (%p1085) target = $region100
        $region99: #{_lambda_.1} parent=11 // pred_region
          _
        $region100: #{_lambda_.1} parent=11 // pred_fallthru
          _
        // Predicated region
        $region101: #{_lambda_.1} parent=11 // pred_check
          %p1088 = pneg %p603
        $region102: #{_lambda_.1} parent=11 // pred_check_branch
          %1090 = sbr.rel (%p1088) target = $region104
        $region103: #{_lambda_.1} parent=11 // pred_region
          _
        $region104: #{_lambda_.1} parent=11 // pred_fallthru
          _
        // Predicated region
        $region105: #{_lambda_.1} parent=11 // pred_check
          %p1091 = pneg %p624
        $region106: #{_lambda_.1} parent=11 // pred_check_branch
          %1093 = sbr.rel (%p1091) target = $region108
        $region107: #{_lambda_.1} parent=11 // pred_region
          _
        $region108: #{_lambda_.1} parent=11 // pred_fallthru
          _
        // Predicated region
        $region109: #{_lambda_.1} parent=11 // pred_check
          %p1094 = pneg %p645
        $region110: #{_lambda_.1} parent=11 // pred_check_branch
          %1096 = sbr.rel (%p1094) target = $region112
        $region111: #{_lambda_.1} parent=11 // pred_region
          _
        $region112: #{_lambda_.1} parent=11 // pred_fallthru
          _
        // Predicated region
        $region113: #{_lambda_.1} parent=11 // pred_check
          %p1097 = pneg %p666
        $region114: #{_lambda_.1} parent=11 // pred_check_branch
          %1099 = sbr.rel (%p1097) target = $region116
        $region115: #{_lambda_.1} parent=11 // pred_region
          _
        $region116: #{_lambda_.1} parent=11 // pred_fallthru
          _
        // Predicated region
        $region117: #{_lambda_.1} parent=11 // pred_check
          %p1100 = pneg %p687
        $region118: #{_lambda_.1} parent=11 // pred_check_branch
          %1102 = sbr.rel (%p1100) target = $region120
        $region119: #{_lambda_.1} parent=11 // pred_region
          _
        $region120: #{_lambda_.1} parent=11 // pred_fallthru
          _
        // Predicated region
        $region121: #{_lambda_.1} parent=11 // pred_check
          %p1103 = pneg %p708
        $region122: #{_lambda_.1} parent=11 // pred_check_branch
          %1105 = sbr.rel (%p1103) target = $region124
        $region123: #{_lambda_.1} parent=11 // pred_region
          _
        $region124: #{_lambda_.1} parent=11 // pred_fallthru
          _
        // Predicated region
        $region125: #{_lambda_.1} parent=11 // pred_check
          %p1106 = pneg %p729
        $region126: #{_lambda_.1} parent=11 // pred_check_branch
          %1108 = sbr.rel (%p1106) target = $region128
        $region127: #{_lambda_.1} parent=11 // pred_region
          _
        $region128: #{_lambda_.1} parent=11 // pred_fallthru
          _
        // Predicated region
        $region129: #{_lambda_.1} parent=11 // pred_check
          %p1109 = pneg %p750
        $region130: #{_lambda_.1} parent=11 // pred_check_branch
          %1111 = sbr.rel (%p1109) target = $region132
        $region131: #{_lambda_.1} parent=11 // pred_region
          _
        $region132: #{_lambda_.1} parent=11 // pred_fallthru
          _
        // Predicated region
        $region133: #{_lambda_.1} parent=11 // pred_check
          %p1112 = pneg %p771
        $region134: #{_lambda_.1} parent=11 // pred_check_branch
          %1114 = sbr.rel (%p1112) target = $region136
        $region135: #{_lambda_.1} parent=11 // pred_region
          _
        $region136: #{_lambda_.1} parent=11 // pred_fallthru
          _
        // Predicated region
        $region137: #{_lambda_.1} parent=11 // pred_check
          %p1115 = pneg %p792
        $region138: #{_lambda_.1} parent=11 // pred_check_branch
          %1117 = sbr.rel (%p1115) target = $region140
        $region139: #{_lambda_.1} parent=11 // pred_region
          _
        $region140: #{_lambda_.1} parent=11 // pred_fallthru
          _
        // Predicated region
        $region141: #{_lambda_.1} parent=11 // pred_check
          %p1118 = pneg %p813
        $region142: #{_lambda_.1} parent=11 // pred_check_branch
          %1120 = sbr.rel (%p1118) target = $region144
        $region143: #{_lambda_.1} parent=11 // pred_region
          _
        $region144: #{_lambda_.1} parent=11 // pred_fallthru
          _
        // Predicated region
        $region145: #{_lambda_.1} parent=11 // pred_check
          %p1121 = pneg %p834
        $region146: #{_lambda_.1} parent=11 // pred_check_branch
          %1123 = sbr.rel (%p1121) target = $region148
        $region147: #{_lambda_.1} parent=11 // pred_region
          _
        $region148: #{_lambda_.1} parent=11 // pred_fallthru
          _
        // Predicated region
        $region149: #{_lambda_.1} parent=11 // pred_check
          %p1124 = pneg %p855
        $region150: #{_lambda_.1} parent=11 // pred_check_branch
          %1126 = sbr.rel (%p1124) target = $region152
        $region151: #{_lambda_.1} parent=11 // pred_region
          _
        $region152: #{_lambda_.1} parent=11 // pred_fallthru
          _
        // Predicated region
        $region153: #{_lambda_.1} parent=11 // pred_check
          %p1127 = pneg %p876
        $region154: #{_lambda_.1} parent=11 // pred_check_branch
          %1129 = sbr.rel (%p1127) target = $region156
        $region155: #{_lambda_.1} parent=11 // pred_region
          _
        $region156: #{_lambda_.1} parent=11 // pred_fallthru
          _
        // Predicated region
        $region157: #{_lambda_.1} parent=11 // pred_check
          %p1130 = pneg %p897
        $region158: #{_lambda_.1} parent=11 // pred_check_branch
          %1132 = sbr.rel (%p1130) target = $region160
        $region159: #{_lambda_.1} parent=11 // pred_region
          _
        $region160: #{_lambda_.1} parent=11 // pred_fallthru
          _
        // Predicated region
        $region161: #{_lambda_.1} parent=11 // pred_check
          %p1133 = pneg %p918
        $region162: #{_lambda_.1} parent=11 // pred_check_branch
          %1135 = sbr.rel (%p1133) target = $region164
        $region163: #{_lambda_.1} parent=11 // pred_region
          _
        $region164: #{_lambda_.1} parent=11 // pred_fallthru
          _
        // Predicated region
        $region165: #{_lambda_.1} parent=11 // pred_check
          %p1136 = pneg %p939
        $region166: #{_lambda_.1} parent=11 // pred_check_branch
          %1138 = sbr.rel (%p1136) target = $region168
        $region167: #{_lambda_.1} parent=11 // pred_region
          _
        $region168: #{_lambda_.1} parent=11 // pred_fallthru
          _
        // Predicated region
        $region169: #{_lambda_.1} parent=11 // pred_check
          %p1139 = pneg %p960
        $region170: #{_lambda_.1} parent=11 // pred_check_branch
          %1141 = sbr.rel (%p1139) target = $region172
        $region171: #{_lambda_.1} parent=11 // pred_region
          _
        $region172: #{_lambda_.1} parent=11 // pred_fallthru
          _
        // Predicated region
        $region173: #{_lambda_.1} parent=11 // pred_check
          %p1142 = pneg %p981
        $region174: #{_lambda_.1} parent=11 // pred_check_branch
          %1144 = sbr.rel (%p1142) target = $region176
        $region175: #{_lambda_.1} parent=11 // pred_region
          _
        $region176: #{_lambda_.1} parent=11 // pred_fallthru
          _
      $region12: #{_lambda_.1} parent=5 // pred_fallthru
        _
      %p1145 = scmp.lt.s32.totalorder %s94, 2
      // Predicated region
      $region177: #{_lambda_.1} parent=5 // pred_check
        %p1146 = pneg %p1145
      $region178: #{_lambda_.1} parent=5 // pred_check_branch
        %1148 = sbr.rel (%p1146) target = $region180
      $region179: #{_lambda_.1} parent=5 // pred_region
        // Predicated region
        $region181: #{_lambda_.1} parent=179 // pred_check
          %p1149 = pneg %p114
        $region182: #{_lambda_.1} parent=179 // pred_check_branch
          %1151 = sbr.rel (%p1149) target = $region184
        $region183: #{_lambda_.1} parent=179 // pred_region
          %p1152 = scmp.lt.s32.totalorder %s94, 1
          %s1153 = scalar_select %p1152, %s94, 1
          %s1154 = smul.addr %s1153, 32
          %s1155 = smul.addr %s1154, 8
          %s1156 = scalar_lea.vmem %s1, %s1155
        $region184: #{_lambda_.1} parent=179 // pred_fallthru
          _
      $region180: #{_lambda_.1} parent=5 // pred_fallthru
        _
      %p1157 = scmp.le.s32.totalorder 1, %s94
      %p1158 = scmp.lt.s32.totalorder %s94, 3
      %p1159 = pnand %p1157, %p1158
      %p1160 = pneg %p1159
      // Predicated region
      $region185: #{_lambda_.1} parent=5 // pred_check
        _
      $region186: #{_lambda_.1} parent=5 // pred_check_branch
        %1162 = sbr.rel (%p1159) target = $region188
      $region187: #{_lambda_.1} parent=5 // pred_region
        %s1163 = ssub.s32 %s94, 1
        %p1164 = scmp.lt.s32.totalorder %s99, 1
        %s1165 = scalar_select %p1164, %s99, 1
        %s1166 = smul.addr %s1165, 32
        %s1167 = smul.addr %s1166, 8
        %s1168 = scalar_lea.vmem %s1, %s1167
        %p1169 = pneg %p120
        %p1170 = pneg %p117
        %p1171 = pneg %p141
        %p1172 = pneg %p138
        %p1173 = pneg %p162
        %p1174 = pneg %p159
        %p1175 = pneg %p183
        %p1176 = pneg %p180
        %p1177 = pneg %p204
        %p1178 = pneg %p201
        %p1179 = pneg %p225
        %p1180 = pneg %p222
        %p1181 = pneg %p246
        %p1182 = pneg %p243
        %p1183 = pneg %p267
        %p1184 = pneg %p264
        %p1185 = pneg %p288
        %p1186 = pneg %p285
        %p1187 = pneg %p309
        %p1188 = pneg %p306
        %p1189 = pneg %p330
        %p1190 = pneg %p327
        %p1191 = pneg %p351
        %p1192 = pneg %p348
        %p1193 = pneg %p372
        %p1194 = pneg %p369
        %p1195 = pneg %p393
        %p1196 = pneg %p390
        %p1197 = pneg %p414
        %p1198 = pneg %p411
        %p1199 = pneg %p435
        %p1200 = pneg %p432
        %p1201 = pneg %p456
        %p1202 = pneg %p453
        %p1203 = pneg %p477
        %p1204 = pneg %p474
        %p1205 = pneg %p498
        %p1206 = pneg %p495
        %p1207 = pneg %p519
        %p1208 = pneg %p516
        %p1209 = pneg %p540
        %p1210 = pneg %p537
        %p1211 = pneg %p561
        %p1212 = pneg %p558
        %p1213 = pneg %p582
        %p1214 = pneg %p579
        %p1215 = pneg %p603
        %p1216 = pneg %p600
        %p1217 = pneg %p624
        %p1218 = pneg %p621
        %p1219 = pneg %p645
        %p1220 = pneg %p642
        %p1221 = pneg %p666
        %p1222 = pneg %p663
        %p1223 = pneg %p687
        %p1224 = pneg %p684
        %p1225 = pneg %p708
        %p1226 = pneg %p705
        %p1227 = pneg %p729
        %p1228 = pneg %p726
        %p1229 = pneg %p750
        %p1230 = pneg %p747
        %p1231 = pneg %p771
        %p1232 = pneg %p768
        %p1233 = pneg %p792
        %p1234 = pneg %p789
        %p1235 = pneg %p813
        %p1236 = pneg %p810
        %p1237 = pneg %p834
        %p1238 = pneg %p831
        %p1239 = pneg %p855
        %p1240 = pneg %p852
        %p1241 = pneg %p876
        %p1242 = pneg %p873
        %p1243 = pneg %p897
        %p1244 = pneg %p894
        %p1245 = pneg %p918
        %p1246 = pneg %p915
        %p1247 = pneg %p939
        %p1248 = pneg %p936
        %p1249 = pneg %p960
        %p1250 = pneg %p957
        %p1251 = pneg %p981
        %p1252 = pneg %p978
        %p1253 = pneg %p1007
        %p1254 = pneg %p1004
        %s1255 = sand.u32 %s994, 1
        %s1256 = scalar_lea.sflag [#allocation6], %s1255
        %s1257 = sand.u32 %s994, 1
        %s1258 = smul.addr %s1257, 256
        %s1259 = scalar_lea.vmem [#allocation5], %s1258
        %p1260 = scmp.lt.s32.totalorder %s99, 1
        %s1261 = scalar_select %p1260, %s99, 1
        %s1262 = smul.addr %s1261, 32
        %s1263 = smul.addr %s1262, 8
        %s1264 = scalar_lea.vmem %s1, %s1263
        %v1265 = vld [vmem:[%s1264] sm:$0xff]
        %v1266 = vld [vmem:[%s1264 + $0x8] sm:$0xff]
        %v1267 = vld [vmem:[%s1264 + $0x10] sm:$0xff]
        %v1268 = vld [vmem:[%s1264 + $0x18] sm:$0xff]
        %v1269 = vld [vmem:[%s1264 + $0x20] sm:$0xff]
        %v1270 = vld [vmem:[%s1264 + $0x28] sm:$0xff]
        %v1271 = vld [vmem:[%s1264 + $0x30] sm:$0xff]
        %v1272 = vld [vmem:[%s1264 + $0x38] sm:$0xff]
        %v1273 = vld [vmem:[%s1264 + $0x40] sm:$0xff]
        %v1274 = vld [vmem:[%s1264 + $0x48] sm:$0xff]
        %v1275 = vld [vmem:[%s1264 + $0x50] sm:$0xff]
        %v1276 = vld [vmem:[%s1264 + $0x58] sm:$0xff]
        %v1277 = vld [vmem:[%s1264 + $0x60] sm:$0xff]
        %v1278 = vld [vmem:[%s1264 + $0x68] sm:$0xff]
        %v1279 = vld [vmem:[%s1264 + $0x70] sm:$0xff]
        %v1280 = vld [vmem:[%s1264 + $0x78] sm:$0xff]
        %v1281 = vld [vmem:[%s1264 + $0x80] sm:$0xff]
        %v1282 = vld [vmem:[%s1264 + $0x88] sm:$0xff]
        %v1283 = vld [vmem:[%s1264 + $0x90] sm:$0xff]
        %v1284 = vld [vmem:[%s1264 + $0x98] sm:$0xff]
        %v1285 = vld [vmem:[%s1264 + $0xa0] sm:$0xff]
        %v1286 = vld [vmem:[%s1264 + $0xa8] sm:$0xff]
        %v1287 = vld [vmem:[%s1264 + $0xb0] sm:$0xff]
        %v1288 = vld [vmem:[%s1264 + $0xb8] sm:$0xff]
        %v1289 = vld [vmem:[%s1264 + $0xc0] sm:$0xff]
        %v1290 = vld [vmem:[%s1264 + $0xc8] sm:$0xff]
        %v1291 = vld [vmem:[%s1264 + $0xd0] sm:$0xff]
        %v1292 = vld [vmem:[%s1264 + $0xd8] sm:$0xff]
        %v1293 = vld [vmem:[%s1264 + $0xe0] sm:$0xff]
        %v1294 = vld [vmem:[%s1264 + $0xe8] sm:$0xff]
        %v1295 = vld [vmem:[%s1264 + $0xf0] sm:$0xff]
        %v1296 = vld [vmem:[%s1264 + $0xf8] sm:$0xff]
        %vm1297 = vcmask 130048
        %1298 = vst.msk [vmem:[#allocation2] sm:$0xff] %vm1297, 0.0
        %1299 = vst.msk [vmem:[#allocation2 + $0x8] sm:$0xff] %vm1297, 0.0
        %vm1300 = vcmask 123904
        %1301 = vst.msk [vmem:[#allocation2 + $0x10] sm:$0x3] %vm1300, 0.0
        %1302 = vst.msk [vmem:[#allocation2 + $0x18] sm:$0xff] %vm1297, 0.0
        %1303 = vst.msk [vmem:[#allocation2 + $0x20] sm:$0xff] %vm1297, 0.0
        %1304 = vst.msk [vmem:[#allocation2 + $0x28] sm:$0x3] %vm1300, 0.0
        %1305 = vst.msk [vmem:[#allocation2 + $0x30] sm:$0xff] %vm1297, 0.0
        %1306 = vst.msk [vmem:[#allocation2 + $0x38] sm:$0xff] %vm1297, 0.0
        %1307 = vst.msk [vmem:[#allocation2 + $0x40] sm:$0x3] %vm1300, 0.0
        %1308 = vst.msk [vmem:[#allocation2 + $0x48] sm:$0xff] %vm1297, 0.0
        %1309 = vst.msk [vmem:[#allocation2 + $0x50] sm:$0xff] %vm1297, 0.0
        %1310 = vst.msk [vmem:[#allocation2 + $0x58] sm:$0x3] %vm1300, 0.0
        %1311 = vst.msk [vmem:[#allocation2 + $0x60] sm:$0xff] %vm1297, 0.0
        %1312 = vst.msk [vmem:[#allocation2 + $0x68] sm:$0xff] %vm1297, 0.0
        %1313 = vst.msk [vmem:[#allocation2 + $0x70] sm:$0x3] %vm1300, 0.0
        %1314 = vst.msk [vmem:[#allocation2 + $0x78] sm:$0xff] %vm1297, 0.0
        %1315 = vst.msk [vmem:[#allocation2 + $0x80] sm:$0xff] %vm1297, 0.0
        %1316 = vst.msk [vmem:[#allocation2 + $0x88] sm:$0x3] %vm1300, 0.0
        %1317 = vst.msk [vmem:[#allocation2 + $0x90] sm:$0xff] %vm1297, 0.0
        %1318 = vst.msk [vmem:[#allocation2 + $0x98] sm:$0xff] %vm1297, 0.0
        %1319 = vst.msk [vmem:[#allocation2 + $0xa0] sm:$0x3] %vm1300, 0.0
        %1320 = vst.msk [vmem:[#allocation2 + $0xa8] sm:$0xff] %vm1297, 0.0
        %1321 = vst.msk [vmem:[#allocation2 + $0xb0] sm:$0xff] %vm1297, 0.0
        %1322 = vst.msk [vmem:[#allocation2 + $0xb8] sm:$0x3] %vm1300, 0.0
        %1323 = vst.msk [vmem:[#allocation2 + $0xc0] sm:$0xff] %vm1297, 0.0
        %1324 = vst.msk [vmem:[#allocation2 + $0xc8] sm:$0xff] %vm1297, 0.0
        %1325 = vst.msk [vmem:[#allocation2 + $0xd0] sm:$0x3] %vm1300, 0.0
        %1326 = vst.msk [vmem:[#allocation2 + $0xd8] sm:$0xff] %vm1297, 0.0
        %1327 = vst.msk [vmem:[#allocation2 + $0xe0] sm:$0xff] %vm1297, 0.0
        %1328 = vst.msk [vmem:[#allocation2 + $0xe8] sm:$0x3] %vm1300, 0.0
        %1329 = vst.msk [vmem:[#allocation2 + $0xf0] sm:$0xff] %vm1297, 0.0
        %1330 = vst.msk [vmem:[#allocation2 + $0xf8] sm:$0xff] %vm1297, 0.0
        %1331 = vst.msk [vmem:[#allocation2 + $0x100] sm:$0x3] %vm1300, 0.0
        %1332 = vst.msk [vmem:[#allocation2 + $0x108] sm:$0xff] %vm1297, 0.0
        %1333 = vst.msk [vmem:[#allocation2 + $0x110] sm:$0xff] %vm1297, 0.0
        %1334 = vst.msk [vmem:[#allocation2 + $0x118] sm:$0x3] %vm1300, 0.0
        %1335 = vst.msk [vmem:[#allocation2 + $0x120] sm:$0xff] %vm1297, 0.0
        %1336 = vst.msk [vmem:[#allocation2 + $0x128] sm:$0xff] %vm1297, 0.0
        %1337 = vst.msk [vmem:[#allocation2 + $0x130] sm:$0x3] %vm1300, 0.0
        %1338 = vst.msk [vmem:[#allocation2 + $0x138] sm:$0xff] %vm1297, 0.0
        %1339 = vst.msk [vmem:[#allocation2 + $0x140] sm:$0xff] %vm1297, 0.0
        %1340 = vst.msk [vmem:[#allocation2 + $0x148] sm:$0x3] %vm1300, 0.0
        %1341 = vst.msk [vmem:[#allocation2 + $0x150] sm:$0xff] %vm1297, 0.0
        %1342 = vst.msk [vmem:[#allocation2 + $0x158] sm:$0xff] %vm1297, 0.0
        %1343 = vst.msk [vmem:[#allocation2 + $0x160] sm:$0x3] %vm1300, 0.0
        %1344 = vst.msk [vmem:[#allocation2 + $0x168] sm:$0xff] %vm1297, 0.0
        %1345 = vst.msk [vmem:[#allocation2 + $0x170] sm:$0xff] %vm1297, 0.0
        %1346 = vst.msk [vmem:[#allocation2 + $0x178] sm:$0x3] %vm1300, 0.0
        %1347 = vst.msk [vmem:[#allocation2 + $0x180] sm:$0xff] %vm1297, 0.0
        %1348 = vst.msk [vmem:[#allocation2 + $0x188] sm:$0xff] %vm1297, 0.0
        %1349 = vst.msk [vmem:[#allocation2 + $0x190] sm:$0x3] %vm1300, 0.0
        %1350 = vst.msk [vmem:[#allocation2 + $0x198] sm:$0xff] %vm1297, 0.0
        %1351 = vst.msk [vmem:[#allocation2 + $0x1a0] sm:$0xff] %vm1297, 0.0
        %1352 = vst.msk [vmem:[#allocation2 + $0x1a8] sm:$0x3] %vm1300, 0.0
        %s1353 = scalar_lea.vmem [#allocation2], 24
        %1354 = vst.msk [vmem:[%s1353 + $0x1] sm:$0xff] %vm1297, %v1265
        %1355 = vst.msk [vmem:[%s1353 + $0x9] sm:$0xff] %vm1297, %v1266
        %1356 = vst.msk [vmem:[%s1353 + $0x19] sm:$0xff] %vm1297, %v1267
        %1357 = vst.msk [vmem:[%s1353 + $0x21] sm:$0xff] %vm1297, %v1268
        %1358 = vst.msk [vmem:[%s1353 + $0x31] sm:$0xff] %vm1297, %v1269
        %1359 = vst.msk [vmem:[%s1353 + $0x39] sm:$0xff] %vm1297, %v1270
        %1360 = vst.msk [vmem:[%s1353 + $0x49] sm:$0xff] %vm1297, %v1271
        %1361 = vst.msk [vmem:[%s1353 + $0x51] sm:$0xff] %vm1297, %v1272
        %1362 = vst.msk [vmem:[%s1353 + $0x61] sm:$0xff] %vm1297, %v1273
        %1363 = vst.msk [vmem:[%s1353 + $0x69] sm:$0xff] %vm1297, %v1274
        %1364 = vst.msk [vmem:[%s1353 + $0x79] sm:$0xff] %vm1297, %v1275
        %1365 = vst.msk [vmem:[%s1353 + $0x81] sm:$0xff] %vm1297, %v1276
        %1366 = vst.msk [vmem:[%s1353 + $0x91] sm:$0xff] %vm1297, %v1277
        %1367 = vst.msk [vmem:[%s1353 + $0x99] sm:$0xff] %vm1297, %v1278
        %1368 = vst.msk [vmem:[%s1353 + $0xa9] sm:$0xff] %vm1297, %v1279
        %1369 = vst.msk [vmem:[%s1353 + $0xb1] sm:$0xff] %vm1297, %v1280
        %1370 = vst.msk [vmem:[%s1353 + $0xc1] sm:$0xff] %vm1297, %v1281
        %1371 = vst.msk [vmem:[%s1353 + $0xc9] sm:$0xff] %vm1297, %v1282
        %1372 = vst.msk [vmem:[%s1353 + $0xd9] sm:$0xff] %vm1297, %v1283
        %1373 = vst.msk [vmem:[%s1353 + $0xe1] sm:$0xff] %vm1297, %v1284
        %1374 = vst.msk [vmem:[%s1353 + $0xf1] sm:$0xff] %vm1297, %v1285
        %1375 = vst.msk [vmem:[%s1353 + $0xf9] sm:$0xff] %vm1297, %v1286
        %1376 = vst.msk [vmem:[%s1353 + $0x109] sm:$0xff] %vm1297, %v1287
        %1377 = vst.msk [vmem:[%s1353 + $0x111] sm:$0xff] %vm1297, %v1288
        %1378 = vst.msk [vmem:[%s1353 + $0x121] sm:$0xff] %vm1297, %v1289
        %1379 = vst.msk [vmem:[%s1353 + $0x129] sm:$0xff] %vm1297, %v1290
        %1380 = vst.msk [vmem:[%s1353 + $0x139] sm:$0xff] %vm1297, %v1291
        %1381 = vst.msk [vmem:[%s1353 + $0x141] sm:$0xff] %vm1297, %v1292
        %1382 = vst.msk [vmem:[%s1353 + $0x151] sm:$0xff] %vm1297, %v1293
        %1383 = vst.msk [vmem:[%s1353 + $0x159] sm:$0xff] %vm1297, %v1294
        %1384 = vst.msk [vmem:[%s1353 + $0x169] sm:$0xff] %vm1297, %v1295
        %1385 = vst.msk [vmem:[%s1353 + $0x171] sm:$0xff] %vm1297, %v1296
        %v1386 = vld [vmem:[%s9] sm:$0x1]
        %v1387 = vld [vmem:[#allocation2] sm:$0xff]
        %v1388 = vld [vmem:[#allocation2 + $0x8] sm:$0xff]
        %v1389 = vld [vmem:[#allocation2 + $0x18] sm:$0xff]
        %v1390 = vld [vmem:[#allocation2 + $0x20] sm:$0xff]
        %v1391 = vld [vmem:[#allocation2 + $0x30] sm:$0xff]
        %v1392 = vld [vmem:[#allocation2 + $0x38] sm:$0xff]
        %v1393 = vld [vmem:[#allocation2 + $0x48] sm:$0xff]
        %v1394 = vld [vmem:[#allocation2 + $0x50] sm:$0xff]
        %v1395 = vld [vmem:[#allocation2 + $0x60] sm:$0xff]
        %v1396 = vld [vmem:[#allocation2 + $0x68] sm:$0xff]
        %v1397 = vld [vmem:[#allocation2 + $0x78] sm:$0xff]
        %v1398 = vld [vmem:[#allocation2 + $0x80] sm:$0xff]
        %v1399 = vld [vmem:[#allocation2 + $0x90] sm:$0xff]
        %v1400 = vld [vmem:[#allocation2 + $0x98] sm:$0xff]
        %v1401 = vld [vmem:[#allocation2 + $0xa8] sm:$0xff]
        %v1402 = vld [vmem:[#allocation2 + $0xb0] sm:$0xff]
        %v1403 = vld [vmem:[#allocation2 + $0xc0] sm:$0xff]
        %v1404 = vld [vmem:[#allocation2 + $0xc8] sm:$0xff]
        %v1405 = vld [vmem:[#allocation2 + $0xd8] sm:$0xff]
        %v1406 = vld [vmem:[#allocation2 + $0xe0] sm:$0xff]
        %v1407 = vld [vmem:[#allocation2 + $0xf0] sm:$0xff]
        %v1408 = vld [vmem:[#allocation2 + $0xf8] sm:$0xff]
        %v1409 = vld [vmem:[#allocation2 + $0x108] sm:$0xff]
        %v1410 = vld [vmem:[#allocation2 + $0x110] sm:$0xff]
        %v1411 = vld [vmem:[#allocation2 + $0x120] sm:$0xff]
        %v1412 = vld [vmem:[#allocation2 + $0x128] sm:$0xff]
        %v1413 = vld [vmem:[#allocation2 + $0x138] sm:$0xff]
        %v1414 = vld [vmem:[#allocation2 + $0x140] sm:$0xff]
        %v1415 = vld [vmem:[#allocation2 + $0x150] sm:$0xff]
        %v1416 = vld [vmem:[#allocation2 + $0x158] sm:$0xff]
        %v1417 = vld [vmem:[#allocation2 + $0x168] sm:$0xff]
        %v1418 = vld [vmem:[#allocation2 + $0x170] sm:$0xff]
        %v1419 = vlaneseq
        %v1420 = vshrl.u32 %v1419, 7
        %v1421 = vsub.s32 0, %v1420
        %v1422 = vrot.slane %v1386, %v1421
        %v1423 = vmul.f32 %v1387, %v1422
        %v1424 = vmul.f32 %v1388, %v1422
        %v1425 = vmul.f32 %v1389, %v1422
        %v1426 = vmul.f32 %v1390, %v1422
        %v1427 = vmul.f32 %v1391, %v1422
        %v1428 = vmul.f32 %v1392, %v1422
        %v1429 = vmul.f32 %v1393, %v1422
        %v1430 = vmul.f32 %v1394, %v1422
        %v1431 = vmul.f32 %v1395, %v1422
        %v1432 = vmul.f32 %v1396, %v1422
        %v1433 = vmul.f32 %v1397, %v1422
        %v1434 = vmul.f32 %v1398, %v1422
        %v1435 = vmul.f32 %v1399, %v1422
        %v1436 = vmul.f32 %v1400, %v1422
        %v1437 = vmul.f32 %v1401, %v1422
        %v1438 = vmul.f32 %v1402, %v1422
        %v1439 = vmul.f32 %v1403, %v1422
        %v1440 = vmul.f32 %v1404, %v1422
        %v1441 = vmul.f32 %v1405, %v1422
        %v1442 = vmul.f32 %v1406, %v1422
        %v1443 = vmul.f32 %v1407, %v1422
        %v1444 = vmul.f32 %v1408, %v1422
        %v1445 = vmul.f32 %v1409, %v1422
        %v1446 = vmul.f32 %v1410, %v1422
        %v1447 = vmul.f32 %v1411, %v1422
        %v1448 = vmul.f32 %v1412, %v1422
        %v1449 = vmul.f32 %v1413, %v1422
        %v1450 = vmul.f32 %v1414, %v1422
        %v1451 = vmul.f32 %v1415, %v1422
        %v1452 = vmul.f32 %v1416, %v1422
        %v1453 = vmul.f32 %v1417, %v1422
        %v1454 = vmul.f32 %v1418, %v1422
        %v1455 = vadd.f32 %v1423, 0.0
        %v1456 = vadd.f32 %v1424, 0.0
        %v1457 = vadd.f32 %v1425, 0.0
        %v1458 = vadd.f32 %v1426, 0.0
        %v1459 = vadd.f32 %v1427, 0.0
        %v1460 = vadd.f32 %v1428, 0.0
        %v1461 = vadd.f32 %v1429, 0.0
        %v1462 = vadd.f32 %v1430, 0.0
        %v1463 = vadd.f32 %v1431, 0.0
        %v1464 = vadd.f32 %v1432, 0.0
        %v1465 = vadd.f32 %v1433, 0.0
        %v1466 = vadd.f32 %v1434, 0.0
        %v1467 = vadd.f32 %v1435, 0.0
        %v1468 = vadd.f32 %v1436, 0.0
        %v1469 = vadd.f32 %v1437, 0.0
        %v1470 = vadd.f32 %v1438, 0.0
        %v1471 = vadd.f32 %v1439, 0.0
        %v1472 = vadd.f32 %v1440, 0.0
        %v1473 = vadd.f32 %v1441, 0.0
        %v1474 = vadd.f32 %v1442, 0.0
        %v1475 = vadd.f32 %v1443, 0.0
        %v1476 = vadd.f32 %v1444, 0.0
        %v1477 = vadd.f32 %v1445, 0.0
        %v1478 = vadd.f32 %v1446, 0.0
        %v1479 = vadd.f32 %v1447, 0.0
        %v1480 = vadd.f32 %v1448, 0.0
        %v1481 = vadd.f32 %v1449, 0.0
        %v1482 = vadd.f32 %v1450, 0.0
        %v1483 = vadd.f32 %v1451, 0.0
        %v1484 = vadd.f32 %v1452, 0.0
        %v1485 = vadd.f32 %v1453, 0.0
        %v1486 = vadd.f32 %v1454, 0.0
        %v1487 = vld [vmem:[%s9 + $0x1] sm:$0x1]
        %v1488 = vld [vmem:[#allocation2 + $0x1] sm:$0xff]
        %v1489 = vld [vmem:[#allocation2 + $0x9] sm:$0xff]
        %v1490 = vld [vmem:[#allocation2 + $0x19] sm:$0xff]
        %v1491 = vld [vmem:[#allocation2 + $0x21] sm:$0xff]
        %v1492 = vld [vmem:[#allocation2 + $0x31] sm:$0xff]
        %v1493 = vld [vmem:[#allocation2 + $0x39] sm:$0xff]
        %v1494 = vld [vmem:[#allocation2 + $0x49] sm:$0xff]
        %v1495 = vld [vmem:[#allocation2 + $0x51] sm:$0xff]
        %v1496 = vld [vmem:[#allocation2 + $0x61] sm:$0xff]
        %v1497 = vld [vmem:[#allocation2 + $0x69] sm:$0xff]
        %v1498 = vld [vmem:[#allocation2 + $0x79] sm:$0xff]
        %v1499 = vld [vmem:[#allocation2 + $0x81] sm:$0xff]
        %v1500 = vld [vmem:[#allocation2 + $0x91] sm:$0xff]
        %v1501 = vld [vmem:[#allocation2 + $0x99] sm:$0xff]
        %v1502 = vld [vmem:[#allocation2 + $0xa9] sm:$0xff]
        %v1503 = vld [vmem:[#allocation2 + $0xb1] sm:$0xff]
        %v1504 = vld [vmem:[#allocation2 + $0xc1] sm:$0xff]
        %v1505 = vld [vmem:[#allocation2 + $0xc9] sm:$0xff]
        %v1506 = vld [vmem:[#allocation2 + $0xd9] sm:$0xff]
        %v1507 = vld [vmem:[#allocation2 + $0xe1] sm:$0xff]
        %v1508 = vld [vmem:[#allocation2 + $0xf1] sm:$0xff]
        %v1509 = vld [vmem:[#allocation2 + $0xf9] sm:$0xff]
        %v1510 = vld [vmem:[#allocation2 + $0x109] sm:$0xff]
        %v1511 = vld [vmem:[#allocation2 + $0x111] sm:$0xff]
        %v1512 = vld [vmem:[#allocation2 + $0x121] sm:$0xff]
        %v1513 = vld [vmem:[#allocation2 + $0x129] sm:$0xff]
        %v1514 = vld [vmem:[#allocation2 + $0x139] sm:$0xff]
        %v1515 = vld [vmem:[#allocation2 + $0x141] sm:$0xff]
        %v1516 = vld [vmem:[#allocation2 + $0x151] sm:$0xff]
        %v1517 = vld [vmem:[#allocation2 + $0x159] sm:$0xff]
        %v1518 = vld [vmem:[#allocation2 + $0x169] sm:$0xff]
        %v1519 = vld [vmem:[#allocation2 + $0x171] sm:$0xff]
        %v1520 = vlaneseq
        %v1521 = vshrl.u32 %v1520, 7
        %v1522 = vsub.s32 0, %v1521
        %v1523 = vrot.slane %v1487, %v1522
        %v1524 = vmul.f32 %v1488, %v1523
        %v1525 = vmul.f32 %v1489, %v1523
        %v1526 = vmul.f32 %v1490, %v1523
        %v1527 = vmul.f32 %v1491, %v1523
        %v1528 = vmul.f32 %v1492, %v1523
        %v1529 = vmul.f32 %v1493, %v1523
        %v1530 = vmul.f32 %v1494, %v1523
        %v1531 = vmul.f32 %v1495, %v1523
        %v1532 = vmul.f32 %v1496, %v1523
        %v1533 = vmul.f32 %v1497, %v1523
        %v1534 = vmul.f32 %v1498, %v1523
        %v1535 = vmul.f32 %v1499, %v1523
        %v1536 = vmul.f32 %v1500, %v1523
        %v1537 = vmul.f32 %v1501, %v1523
        %v1538 = vmul.f32 %v1502, %v1523
        %v1539 = vmul.f32 %v1503, %v1523
        %v1540 = vmul.f32 %v1504, %v1523
        %v1541 = vmul.f32 %v1505, %v1523
        %v1542 = vmul.f32 %v1506, %v1523
        %v1543 = vmul.f32 %v1507, %v1523
        %v1544 = vmul.f32 %v1508, %v1523
        %v1545 = vmul.f32 %v1509, %v1523
        %v1546 = vmul.f32 %v1510, %v1523
        %v1547 = vmul.f32 %v1511, %v1523
        %v1548 = vmul.f32 %v1512, %v1523
        %v1549 = vmul.f32 %v1513, %v1523
        %v1550 = vmul.f32 %v1514, %v1523
        %v1551 = vmul.f32 %v1515, %v1523
        %v1552 = vmul.f32 %v1516, %v1523
        %v1553 = vmul.f32 %v1517, %v1523
        %v1554 = vmul.f32 %v1518, %v1523
        %v1555 = vmul.f32 %v1519, %v1523
        %v1556 = vadd.f32 %v1455, %v1524
        %v1557 = vadd.f32 %v1456, %v1525
        %v1558 = vadd.f32 %v1457, %v1526
        %v1559 = vadd.f32 %v1458, %v1527
        %v1560 = vadd.f32 %v1459, %v1528
        %v1561 = vadd.f32 %v1460, %v1529
        %v1562 = vadd.f32 %v1461, %v1530
        %v1563 = vadd.f32 %v1462, %v1531
        %v1564 = vadd.f32 %v1463, %v1532
        %v1565 = vadd.f32 %v1464, %v1533
        %v1566 = vadd.f32 %v1465, %v1534
        %v1567 = vadd.f32 %v1466, %v1535
        %v1568 = vadd.f32 %v1467, %v1536
        %v1569 = vadd.f32 %v1468, %v1537
        %v1570 = vadd.f32 %v1469, %v1538
        %v1571 = vadd.f32 %v1470, %v1539
        %v1572 = vadd.f32 %v1471, %v1540
        %v1573 = vadd.f32 %v1472, %v1541
        %v1574 = vadd.f32 %v1473, %v1542
        %v1575 = vadd.f32 %v1474, %v1543
        %v1576 = vadd.f32 %v1475, %v1544
        %v1577 = vadd.f32 %v1476, %v1545
        %v1578 = vadd.f32 %v1477, %v1546
        %v1579 = vadd.f32 %v1478, %v1547
        %v1580 = vadd.f32 %v1479, %v1548
        %v1581 = vadd.f32 %v1480, %v1549
        %v1582 = vadd.f32 %v1481, %v1550
        %v1583 = vadd.f32 %v1482, %v1551
        %v1584 = vadd.f32 %v1483, %v1552
        %v1585 = vadd.f32 %v1484, %v1553
        %v1586 = vadd.f32 %v1485, %v1554
        %v1587 = vadd.f32 %v1486, %v1555
        %v1588 = vld [vmem:[%s9 + $0x2] sm:$0x1]
        %v1589 = vld [vmem:[#allocation2 + $0x2] sm:$0xff]
        %v1590 = vld [vmem:[#allocation2 + $0xa] sm:$0xff]
        %v1591 = vld [vmem:[#allocation2 + $0x1a] sm:$0xff]
        %v1592 = vld [vmem:[#allocation2 + $0x22] sm:$0xff]
        %v1593 = vld [vmem:[#allocation2 + $0x32] sm:$0xff]
        %v1594 = vld [vmem:[#allocation2 + $0x3a] sm:$0xff]
        %v1595 = vld [vmem:[#allocation2 + $0x4a] sm:$0xff]
        %v1596 = vld [vmem:[#allocation2 + $0x52] sm:$0xff]
        %v1597 = vld [vmem:[#allocation2 + $0x62] sm:$0xff]
        %v1598 = vld [vmem:[#allocation2 + $0x6a] sm:$0xff]
        %v1599 = vld [vmem:[#allocation2 + $0x7a] sm:$0xff]
        %v1600 = vld [vmem:[#allocation2 + $0x82] sm:$0xff]
        %v1601 = vld [vmem:[#allocation2 + $0x92] sm:$0xff]
        %v1602 = vld [vmem:[#allocation2 + $0x9a] sm:$0xff]
        %v1603 = vld [vmem:[#allocation2 + $0xaa] sm:$0xff]
        %v1604 = vld [vmem:[#allocation2 + $0xb2] sm:$0xff]
        %v1605 = vld [vmem:[#allocation2 + $0xc2] sm:$0xff]
        %v1606 = vld [vmem:[#allocation2 + $0xca] sm:$0xff]
        %v1607 = vld [vmem:[#allocation2 + $0xda] sm:$0xff]
        %v1608 = vld [vmem:[#allocation2 + $0xe2] sm:$0xff]
        %v1609 = vld [vmem:[#allocation2 + $0xf2] sm:$0xff]
        %v1610 = vld [vmem:[#allocation2 + $0xfa] sm:$0xff]
        %v1611 = vld [vmem:[#allocation2 + $0x10a] sm:$0xff]
        %v1612 = vld [vmem:[#allocation2 + $0x112] sm:$0xff]
        %v1613 = vld [vmem:[#allocation2 + $0x122] sm:$0xff]
        %v1614 = vld [vmem:[#allocation2 + $0x12a] sm:$0xff]
        %v1615 = vld [vmem:[#allocation2 + $0x13a] sm:$0xff]
        %v1616 = vld [vmem:[#allocation2 + $0x142] sm:$0xff]
        %v1617 = vld [vmem:[#allocation2 + $0x152] sm:$0xff]
        %v1618 = vld [vmem:[#allocation2 + $0x15a] sm:$0xff]
        %v1619 = vld [vmem:[#allocation2 + $0x16a] sm:$0xff]
        %v1620 = vld [vmem:[#allocation2 + $0x172] sm:$0xff]
        %v1621 = vlaneseq
        %v1622 = vshrl.u32 %v1621, 7
        %v1623 = vsub.s32 0, %v1622
        %v1624 = vrot.slane %v1588, %v1623
        %v1625 = vmul.f32 %v1589, %v1624
        %v1626 = vmul.f32 %v1590, %v1624
        %v1627 = vmul.f32 %v1591, %v1624
        %v1628 = vmul.f32 %v1592, %v1624
        %v1629 = vmul.f32 %v1593, %v1624
        %v1630 = vmul.f32 %v1594, %v1624
        %v1631 = vmul.f32 %v1595, %v1624
        %v1632 = vmul.f32 %v1596, %v1624
        %v1633 = vmul.f32 %v1597, %v1624
        %v1634 = vmul.f32 %v1598, %v1624
        %v1635 = vmul.f32 %v1599, %v1624
        %v1636 = vmul.f32 %v1600, %v1624
        %v1637 = vmul.f32 %v1601, %v1624
        %v1638 = vmul.f32 %v1602, %v1624
        %v1639 = vmul.f32 %v1603, %v1624
        %v1640 = vmul.f32 %v1604, %v1624
        %v1641 = vmul.f32 %v1605, %v1624
        %v1642 = vmul.f32 %v1606, %v1624
        %v1643 = vmul.f32 %v1607, %v1624
        %v1644 = vmul.f32 %v1608, %v1624
        %v1645 = vmul.f32 %v1609, %v1624
        %v1646 = vmul.f32 %v1610, %v1624
        %v1647 = vmul.f32 %v1611, %v1624
        %v1648 = vmul.f32 %v1612, %v1624
        %v1649 = vmul.f32 %v1613, %v1624
        %v1650 = vmul.f32 %v1614, %v1624
        %v1651 = vmul.f32 %v1615, %v1624
        %v1652 = vmul.f32 %v1616, %v1624
        %v1653 = vmul.f32 %v1617, %v1624
        %v1654 = vmul.f32 %v1618, %v1624
        %v1655 = vmul.f32 %v1619, %v1624
        %v1656 = vmul.f32 %v1620, %v1624
        %v1657 = vadd.f32 %v1556, %v1625
        %v1658 = vadd.f32 %v1557, %v1626
        %v1659 = vadd.f32 %v1558, %v1627
        %v1660 = vadd.f32 %v1559, %v1628
        %v1661 = vadd.f32 %v1560, %v1629
        %v1662 = vadd.f32 %v1561, %v1630
        %v1663 = vadd.f32 %v1562, %v1631
        %v1664 = vadd.f32 %v1563, %v1632
        %v1665 = vadd.f32 %v1564, %v1633
        %v1666 = vadd.f32 %v1565, %v1634
        %v1667 = vadd.f32 %v1566, %v1635
        %v1668 = vadd.f32 %v1567, %v1636
        %v1669 = vadd.f32 %v1568, %v1637
        %v1670 = vadd.f32 %v1569, %v1638
        %v1671 = vadd.f32 %v1570, %v1639
        %v1672 = vadd.f32 %v1571, %v1640
        %v1673 = vadd.f32 %v1572, %v1641
        %v1674 = vadd.f32 %v1573, %v1642
        %v1675 = vadd.f32 %v1574, %v1643
        %v1676 = vadd.f32 %v1575, %v1644
        %v1677 = vadd.f32 %v1576, %v1645
        %v1678 = vadd.f32 %v1577, %v1646
        %v1679 = vadd.f32 %v1578, %v1647
        %v1680 = vadd.f32 %v1579, %v1648
        %v1681 = vadd.f32 %v1580, %v1649
        %v1682 = vadd.f32 %v1581, %v1650
        %v1683 = vadd.f32 %v1582, %v1651
        %v1684 = vadd.f32 %v1583, %v1652
        %v1685 = vadd.f32 %v1584, %v1653
        %v1686 = vadd.f32 %v1585, %v1654
        %v1687 = vadd.f32 %v1586, %v1655
        %v1688 = vadd.f32 %v1587, %v1656
        %s1689 = scalar_lea.vmem %s9, 4
        %v1690 = vld [vmem:[%s1689] sm:$0x1]
        %v1691 = vld [vmem:[%s1353] sm:$0xff]
        %v1692 = vld [vmem:[%s1353 + $0x8] sm:$0xff]
        %v1693 = vld [vmem:[%s1353 + $0x18] sm:$0xff]
        %v1694 = vld [vmem:[%s1353 + $0x20] sm:$0xff]
        %v1695 = vld [vmem:[%s1353 + $0x30] sm:$0xff]
        %v1696 = vld [vmem:[%s1353 + $0x38] sm:$0xff]
        %v1697 = vld [vmem:[%s1353 + $0x48] sm:$0xff]
        %v1698 = vld [vmem:[%s1353 + $0x50] sm:$0xff]
        %v1699 = vld [vmem:[%s1353 + $0x60] sm:$0xff]
        %v1700 = vld [vmem:[%s1353 + $0x68] sm:$0xff]
        %v1701 = vld [vmem:[%s1353 + $0x78] sm:$0xff]
        %v1702 = vld [vmem:[%s1353 + $0x80] sm:$0xff]
        %v1703 = vld [vmem:[%s1353 + $0x90] sm:$0xff]
        %v1704 = vld [vmem:[%s1353 + $0x98] sm:$0xff]
        %v1705 = vld [vmem:[%s1353 + $0xa8] sm:$0xff]
        %v1706 = vld [vmem:[%s1353 + $0xb0] sm:$0xff]
        %v1707 = vld [vmem:[%s1353 + $0xc0] sm:$0xff]
        %v1708 = vld [vmem:[%s1353 + $0xc8] sm:$0xff]
        %v1709 = vld [vmem:[%s1353 + $0xd8] sm:$0xff]
        %v1710 = vld [vmem:[%s1353 + $0xe0] sm:$0xff]
        %v1711 = vld [vmem:[%s1353 + $0xf0] sm:$0xff]
        %v1712 = vld [vmem:[%s1353 + $0xf8] sm:$0xff]
        %v1713 = vld [vmem:[%s1353 + $0x108] sm:$0xff]
        %v1714 = vld [vmem:[%s1353 + $0x110] sm:$0xff]
        %v1715 = vld [vmem:[%s1353 + $0x120] sm:$0xff]
        %v1716 = vld [vmem:[%s1353 + $0x128] sm:$0xff]
        %v1717 = vld [vmem:[%s1353 + $0x138] sm:$0xff]
        %v1718 = vld [vmem:[%s1353 + $0x140] sm:$0xff]
        %v1719 = vld [vmem:[%s1353 + $0x150] sm:$0xff]
        %v1720 = vld [vmem:[%s1353 + $0x158] sm:$0xff]
        %v1721 = vld [vmem:[%s1353 + $0x168] sm:$0xff]
        %v1722 = vld [vmem:[%s1353 + $0x170] sm:$0xff]
        %v1723 = vlaneseq
        %v1724 = vshrl.u32 %v1723, 7
        %v1725 = vsub.s32 0, %v1724
        %v1726 = vrot.slane %v1690, %v1725
        %v1727 = vmul.f32 %v1691, %v1726
        %v1728 = vmul.f32 %v1692, %v1726
        %v1729 = vmul.f32 %v1693, %v1726
        %v1730 = vmul.f32 %v1694, %v1726
        %v1731 = vmul.f32 %v1695, %v1726
        %v1732 = vmul.f32 %v1696, %v1726
        %v1733 = vmul.f32 %v1697, %v1726
        %v1734 = vmul.f32 %v1698, %v1726
        %v1735 = vmul.f32 %v1699, %v1726
        %v1736 = vmul.f32 %v1700, %v1726
        %v1737 = vmul.f32 %v1701, %v1726
        %v1738 = vmul.f32 %v1702, %v1726
        %v1739 = vmul.f32 %v1703, %v1726
        %v1740 = vmul.f32 %v1704, %v1726
        %v1741 = vmul.f32 %v1705, %v1726
        %v1742 = vmul.f32 %v1706, %v1726
        %v1743 = vmul.f32 %v1707, %v1726
        %v1744 = vmul.f32 %v1708, %v1726
        %v1745 = vmul.f32 %v1709, %v1726
        %v1746 = vmul.f32 %v1710, %v1726
        %v1747 = vmul.f32 %v1711, %v1726
        %v1748 = vmul.f32 %v1712, %v1726
        %v1749 = vmul.f32 %v1713, %v1726
        %v1750 = vmul.f32 %v1714, %v1726
        %v1751 = vmul.f32 %v1715, %v1726
        %v1752 = vmul.f32 %v1716, %v1726
        %v1753 = vmul.f32 %v1717, %v1726
        %v1754 = vmul.f32 %v1718, %v1726
        %v1755 = vmul.f32 %v1719, %v1726
        %v1756 = vmul.f32 %v1720, %v1726
        %v1757 = vmul.f32 %v1721, %v1726
        %v1758 = vmul.f32 %v1722, %v1726
        %v1759 = vadd.f32 %v1657, %v1727
        %v1760 = vadd.f32 %v1658, %v1728
        %v1761 = vadd.f32 %v1659, %v1729
        %v1762 = vadd.f32 %v1660, %v1730
        %v1763 = vadd.f32 %v1661, %v1731
        %v1764 = vadd.f32 %v1662, %v1732
        %v1765 = vadd.f32 %v1663, %v1733
        %v1766 = vadd.f32 %v1664, %v1734
        %v1767 = vadd.f32 %v1665, %v1735
        %v1768 = vadd.f32 %v1666, %v1736
        %v1769 = vadd.f32 %v1667, %v1737
        %v1770 = vadd.f32 %v1668, %v1738
        %v1771 = vadd.f32 %v1669, %v1739
        %v1772 = vadd.f32 %v1670, %v1740
        %v1773 = vadd.f32 %v1671, %v1741
        %v1774 = vadd.f32 %v1672, %v1742
        %v1775 = vadd.f32 %v1673, %v1743
        %v1776 = vadd.f32 %v1674, %v1744
        %v1777 = vadd.f32 %v1675, %v1745
        %v1778 = vadd.f32 %v1676, %v1746
        %v1779 = vadd.f32 %v1677, %v1747
        %v1780 = vadd.f32 %v1678, %v1748
        %v1781 = vadd.f32 %v1679, %v1749
        %v1782 = vadd.f32 %v1680, %v1750
        %v1783 = vadd.f32 %v1681, %v1751
        %v1784 = vadd.f32 %v1682, %v1752
        %v1785 = vadd.f32 %v1683, %v1753
        %v1786 = vadd.f32 %v1684, %v1754
        %v1787 = vadd.f32 %v1685, %v1755
        %v1788 = vadd.f32 %v1686, %v1756
        %v1789 = vadd.f32 %v1687, %v1757
        %v1790 = vadd.f32 %v1688, %v1758
        %v1791 = vld [vmem:[%s1689 + $0x1] sm:$0x1]
        %v1792 = vld [vmem:[%s1353 + $0x1] sm:$0xff]
        %v1793 = vld [vmem:[%s1353 + $0x9] sm:$0xff]
        %v1794 = vld [vmem:[%s1353 + $0x19] sm:$0xff]
        %v1795 = vld [vmem:[%s1353 + $0x21] sm:$0xff]
        %v1796 = vld [vmem:[%s1353 + $0x31] sm:$0xff]
        %v1797 = vld [vmem:[%s1353 + $0x39] sm:$0xff]
        %v1798 = vld [vmem:[%s1353 + $0x49] sm:$0xff]
        %v1799 = vld [vmem:[%s1353 + $0x51] sm:$0xff]
        %v1800 = vld [vmem:[%s1353 + $0x61] sm:$0xff]
        %v1801 = vld [vmem:[%s1353 + $0x69] sm:$0xff]
        %v1802 = vld [vmem:[%s1353 + $0x79] sm:$0xff]
        %v1803 = vld [vmem:[%s1353 + $0x81] sm:$0xff]
        %v1804 = vld [vmem:[%s1353 + $0x91] sm:$0xff]
        %v1805 = vld [vmem:[%s1353 + $0x99] sm:$0xff]
        %v1806 = vld [vmem:[%s1353 + $0xa9] sm:$0xff]
        %v1807 = vld [vmem:[%s1353 + $0xb1] sm:$0xff]
        %v1808 = vld [vmem:[%s1353 + $0xc1] sm:$0xff]
        %v1809 = vld [vmem:[%s1353 + $0xc9] sm:$0xff]
        %v1810 = vld [vmem:[%s1353 + $0xd9] sm:$0xff]
        %v1811 = vld [vmem:[%s1353 + $0xe1] sm:$0xff]
        %v1812 = vld [vmem:[%s1353 + $0xf1] sm:$0xff]
        %v1813 = vld [vmem:[%s1353 + $0xf9] sm:$0xff]
        %v1814 = vld [vmem:[%s1353 + $0x109] sm:$0xff]
        %v1815 = vld [vmem:[%s1353 + $0x111] sm:$0xff]
        %v1816 = vld [vmem:[%s1353 + $0x121] sm:$0xff]
        %v1817 = vld [vmem:[%s1353 + $0x129] sm:$0xff]
        %v1818 = vld [vmem:[%s1353 + $0x139] sm:$0xff]
        %v1819 = vld [vmem:[%s1353 + $0x141] sm:$0xff]
        %v1820 = vld [vmem:[%s1353 + $0x151] sm:$0xff]
        %v1821 = vld [vmem:[%s1353 + $0x159] sm:$0xff]
        %v1822 = vld [vmem:[%s1353 + $0x169] sm:$0xff]
        %v1823 = vld [vmem:[%s1353 + $0x171] sm:$0xff]
        %v1824 = vlaneseq
        %v1825 = vshrl.u32 %v1824, 7
        %v1826 = vsub.s32 0, %v1825
        %v1827 = vrot.slane %v1791, %v1826
        %v1828 = vmul.f32 %v1792, %v1827
        %v1829 = vmul.f32 %v1793, %v1827
        %v1830 = vmul.f32 %v1794, %v1827
        %v1831 = vmul.f32 %v1795, %v1827
        %v1832 = vmul.f32 %v1796, %v1827
        %v1833 = vmul.f32 %v1797, %v1827
        %v1834 = vmul.f32 %v1798, %v1827
        %v1835 = vmul.f32 %v1799, %v1827
        %v1836 = vmul.f32 %v1800, %v1827
        %v1837 = vmul.f32 %v1801, %v1827
        %v1838 = vmul.f32 %v1802, %v1827
        %v1839 = vmul.f32 %v1803, %v1827
        %v1840 = vmul.f32 %v1804, %v1827
        %v1841 = vmul.f32 %v1805, %v1827
        %v1842 = vmul.f32 %v1806, %v1827
        %v1843 = vmul.f32 %v1807, %v1827
        %v1844 = vmul.f32 %v1808, %v1827
        %v1845 = vmul.f32 %v1809, %v1827
        %v1846 = vmul.f32 %v1810, %v1827
        %v1847 = vmul.f32 %v1811, %v1827
        %v1848 = vmul.f32 %v1812, %v1827
        %v1849 = vmul.f32 %v1813, %v1827
        %v1850 = vmul.f32 %v1814, %v1827
        %v1851 = vmul.f32 %v1815, %v1827
        %v1852 = vmul.f32 %v1816, %v1827
        %v1853 = vmul.f32 %v1817, %v1827
        %v1854 = vmul.f32 %v1818, %v1827
        %v1855 = vmul.f32 %v1819, %v1827
        %v1856 = vmul.f32 %v1820, %v1827
        %v1857 = vmul.f32 %v1821, %v1827
        %v1858 = vmul.f32 %v1822, %v1827
        %v1859 = vmul.f32 %v1823, %v1827
        %v1860 = vadd.f32 %v1759, %v1828
        %v1861 = vadd.f32 %v1760, %v1829
        %v1862 = vadd.f32 %v1761, %v1830
        %v1863 = vadd.f32 %v1762, %v1831
        %v1864 = vadd.f32 %v1763, %v1832
        %v1865 = vadd.f32 %v1764, %v1833
        %v1866 = vadd.f32 %v1765, %v1834
        %v1867 = vadd.f32 %v1766, %v1835
        %v1868 = vadd.f32 %v1767, %v1836
        %v1869 = vadd.f32 %v1768, %v1837
        %v1870 = vadd.f32 %v1769, %v1838
        %v1871 = vadd.f32 %v1770, %v1839
        %v1872 = vadd.f32 %v1771, %v1840
        %v1873 = vadd.f32 %v1772, %v1841
        %v1874 = vadd.f32 %v1773, %v1842
        %v1875 = vadd.f32 %v1774, %v1843
        %v1876 = vadd.f32 %v1775, %v1844
        %v1877 = vadd.f32 %v1776, %v1845
        %v1878 = vadd.f32 %v1777, %v1846
        %v1879 = vadd.f32 %v1778, %v1847
        %v1880 = vadd.f32 %v1779, %v1848
        %v1881 = vadd.f32 %v1780, %v1849
        %v1882 = vadd.f32 %v1781, %v1850
        %v1883 = vadd.f32 %v1782, %v1851
        %v1884 = vadd.f32 %v1783, %v1852
        %v1885 = vadd.f32 %v1784, %v1853
        %v1886 = vadd.f32 %v1785, %v1854
        %v1887 = vadd.f32 %v1786, %v1855
        %v1888 = vadd.f32 %v1787, %v1856
        %v1889 = vadd.f32 %v1788, %v1857
        %v1890 = vadd.f32 %v1789, %v1858
        %v1891 = vadd.f32 %v1790, %v1859
        %v1892 = vld [vmem:[%s1689 + $0x2] sm:$0x1]
        %v1893 = vld [vmem:[%s1353 + $0x2] sm:$0xff]
        %v1894 = vld [vmem:[%s1353 + $0xa] sm:$0xff]
        %v1895 = vld [vmem:[%s1353 + $0x1a] sm:$0xff]
        %v1896 = vld [vmem:[%s1353 + $0x22] sm:$0xff]
        %v1897 = vld [vmem:[%s1353 + $0x32] sm:$0xff]
        %v1898 = vld [vmem:[%s1353 + $0x3a] sm:$0xff]
        %v1899 = vld [vmem:[%s1353 + $0x4a] sm:$0xff]
        %v1900 = vld [vmem:[%s1353 + $0x52] sm:$0xff]
        %v1901 = vld [vmem:[%s1353 + $0x62] sm:$0xff]
        %v1902 = vld [vmem:[%s1353 + $0x6a] sm:$0xff]
        %v1903 = vld [vmem:[%s1353 + $0x7a] sm:$0xff]
        %v1904 = vld [vmem:[%s1353 + $0x82] sm:$0xff]
        %v1905 = vld [vmem:[%s1353 + $0x92] sm:$0xff]
        %v1906 = vld [vmem:[%s1353 + $0x9a] sm:$0xff]
        %v1907 = vld [vmem:[%s1353 + $0xaa] sm:$0xff]
        %v1908 = vld [vmem:[%s1353 + $0xb2] sm:$0xff]
        %v1909 = vld [vmem:[%s1353 + $0xc2] sm:$0xff]
        %v1910 = vld [vmem:[%s1353 + $0xca] sm:$0xff]
        %v1911 = vld [vmem:[%s1353 + $0xda] sm:$0xff]
        %v1912 = vld [vmem:[%s1353 + $0xe2] sm:$0xff]
        %v1913 = vld [vmem:[%s1353 + $0xf2] sm:$0xff]
        %v1914 = vld [vmem:[%s1353 + $0xfa] sm:$0xff]
        %v1915 = vld [vmem:[%s1353 + $0x10a] sm:$0xff]
        %v1916 = vld [vmem:[%s1353 + $0x112] sm:$0xff]
        %v1917 = vld [vmem:[%s1353 + $0x122] sm:$0xff]
        %v1918 = vld [vmem:[%s1353 + $0x12a] sm:$0xff]
        %v1919 = vld [vmem:[%s1353 + $0x13a] sm:$0xff]
        %v1920 = vld [vmem:[%s1353 + $0x142] sm:$0xff]
        %v1921 = vld [vmem:[%s1353 + $0x152] sm:$0xff]
        %v1922 = vld [vmem:[%s1353 + $0x15a] sm:$0xff]
        %v1923 = vld [vmem:[%s1353 + $0x16a] sm:$0xff]
        %v1924 = vld [vmem:[%s1353 + $0x172] sm:$0xff]
        %v1925 = vlaneseq
        %v1926 = vshrl.u32 %v1925, 7
        %v1927 = vsub.s32 0, %v1926
        %v1928 = vrot.slane %v1892, %v1927
        %v1929 = vmul.f32 %v1893, %v1928
        %v1930 = vmul.f32 %v1894, %v1928
        %v1931 = vmul.f32 %v1895, %v1928
        %v1932 = vmul.f32 %v1896, %v1928
        %v1933 = vmul.f32 %v1897, %v1928
        %v1934 = vmul.f32 %v1898, %v1928
        %v1935 = vmul.f32 %v1899, %v1928
        %v1936 = vmul.f32 %v1900, %v1928
        %v1937 = vmul.f32 %v1901, %v1928
        %v1938 = vmul.f32 %v1902, %v1928
        %v1939 = vmul.f32 %v1903, %v1928
        %v1940 = vmul.f32 %v1904, %v1928
        %v1941 = vmul.f32 %v1905, %v1928
        %v1942 = vmul.f32 %v1906, %v1928
        %v1943 = vmul.f32 %v1907, %v1928
        %v1944 = vmul.f32 %v1908, %v1928
        %v1945 = vmul.f32 %v1909, %v1928
        %v1946 = vmul.f32 %v1910, %v1928
        %v1947 = vmul.f32 %v1911, %v1928
        %v1948 = vmul.f32 %v1912, %v1928
        %v1949 = vmul.f32 %v1913, %v1928
        %v1950 = vmul.f32 %v1914, %v1928
        %v1951 = vmul.f32 %v1915, %v1928
        %v1952 = vmul.f32 %v1916, %v1928
        %v1953 = vmul.f32 %v1917, %v1928
        %v1954 = vmul.f32 %v1918, %v1928
        %v1955 = vmul.f32 %v1919, %v1928
        %v1956 = vmul.f32 %v1920, %v1928
        %v1957 = vmul.f32 %v1921, %v1928
        %v1958 = vmul.f32 %v1922, %v1928
        %v1959 = vmul.f32 %v1923, %v1928
        %v1960 = vmul.f32 %v1924, %v1928
        %v1961 = vadd.f32 %v1860, %v1929
        %v1962 = vadd.f32 %v1861, %v1930
        %v1963 = vadd.f32 %v1862, %v1931
        %v1964 = vadd.f32 %v1863, %v1932
        %v1965 = vadd.f32 %v1864, %v1933
        %v1966 = vadd.f32 %v1865, %v1934
        %v1967 = vadd.f32 %v1866, %v1935
        %v1968 = vadd.f32 %v1867, %v1936
        %v1969 = vadd.f32 %v1868, %v1937
        %v1970 = vadd.f32 %v1869, %v1938
        %v1971 = vadd.f32 %v1870, %v1939
        %v1972 = vadd.f32 %v1871, %v1940
        %v1973 = vadd.f32 %v1872, %v1941
        %v1974 = vadd.f32 %v1873, %v1942
        %v1975 = vadd.f32 %v1874, %v1943
        %v1976 = vadd.f32 %v1875, %v1944
        %v1977 = vadd.f32 %v1876, %v1945
        %v1978 = vadd.f32 %v1877, %v1946
        %v1979 = vadd.f32 %v1878, %v1947
        %v1980 = vadd.f32 %v1879, %v1948
        %v1981 = vadd.f32 %v1880, %v1949
        %v1982 = vadd.f32 %v1881, %v1950
        %v1983 = vadd.f32 %v1882, %v1951
        %v1984 = vadd.f32 %v1883, %v1952
        %v1985 = vadd.f32 %v1884, %v1953
        %v1986 = vadd.f32 %v1885, %v1954
        %v1987 = vadd.f32 %v1886, %v1955
        %v1988 = vadd.f32 %v1887, %v1956
        %v1989 = vadd.f32 %v1888, %v1957
        %v1990 = vadd.f32 %v1889, %v1958
        %v1991 = vadd.f32 %v1890, %v1959
        %v1992 = vadd.f32 %v1891, %v1960
        %s1993 = scalar_lea.vmem %s9, 8
        %v1994 = vld [vmem:[%s1993] sm:$0x1]
        %s1995 = scalar_lea.vmem [#allocation2], 48
        %v1996 = vld [vmem:[%s1995] sm:$0xff]
        %v1997 = vld [vmem:[%s1995 + $0x8] sm:$0xff]
        %v1998 = vld [vmem:[%s1995 + $0x18] sm:$0xff]
        %v1999 = vld [vmem:[%s1995 + $0x20] sm:$0xff]
        %v2000 = vld [vmem:[%s1995 + $0x30] sm:$0xff]
        %v2001 = vld [vmem:[%s1995 + $0x38] sm:$0xff]
        %v2002 = vld [vmem:[%s1995 + $0x48] sm:$0xff]
        %v2003 = vld [vmem:[%s1995 + $0x50] sm:$0xff]
        %v2004 = vld [vmem:[%s1995 + $0x60] sm:$0xff]
        %v2005 = vld [vmem:[%s1995 + $0x68] sm:$0xff]
        %v2006 = vld [vmem:[%s1995 + $0x78] sm:$0xff]
        %v2007 = vld [vmem:[%s1995 + $0x80] sm:$0xff]
        %v2008 = vld [vmem:[%s1995 + $0x90] sm:$0xff]
        %v2009 = vld [vmem:[%s1995 + $0x98] sm:$0xff]
        %v2010 = vld [vmem:[%s1995 + $0xa8] sm:$0xff]
        %v2011 = vld [vmem:[%s1995 + $0xb0] sm:$0xff]
        %v2012 = vld [vmem:[%s1995 + $0xc0] sm:$0xff]
        %v2013 = vld [vmem:[%s1995 + $0xc8] sm:$0xff]
        %v2014 = vld [vmem:[%s1995 + $0xd8] sm:$0xff]
        %v2015 = vld [vmem:[%s1995 + $0xe0] sm:$0xff]
        %v2016 = vld [vmem:[%s1995 + $0xf0] sm:$0xff]
        %v2017 = vld [vmem:[%s1995 + $0xf8] sm:$0xff]
        %v2018 = vld [vmem:[%s1995 + $0x108] sm:$0xff]
        %v2019 = vld [vmem:[%s1995 + $0x110] sm:$0xff]
        %v2020 = vld [vmem:[%s1995 + $0x120] sm:$0xff]
        %v2021 = vld [vmem:[%s1995 + $0x128] sm:$0xff]
        %v2022 = vld [vmem:[%s1995 + $0x138] sm:$0xff]
        %v2023 = vld [vmem:[%s1995 + $0x140] sm:$0xff]
        %v2024 = vld [vmem:[%s1995 + $0x150] sm:$0xff]
        %v2025 = vld [vmem:[%s1995 + $0x158] sm:$0xff]
        %v2026 = vld [vmem:[%s1995 + $0x168] sm:$0xff]
        %v2027 = vld [vmem:[%s1995 + $0x170] sm:$0xff]
        %v2028 = vlaneseq
        %v2029 = vshrl.u32 %v2028, 7
        %v2030 = vsub.s32 0, %v2029
        %v2031 = vrot.slane %v1994, %v2030
        %v2032 = vmul.f32 %v1996, %v2031
        %v2033 = vmul.f32 %v1997, %v2031
        %v2034 = vmul.f32 %v1998, %v2031
        %v2035 = vmul.f32 %v1999, %v2031
        %v2036 = vmul.f32 %v2000, %v2031
        %v2037 = vmul.f32 %v2001, %v2031
        %v2038 = vmul.f32 %v2002, %v2031
        %v2039 = vmul.f32 %v2003, %v2031
        %v2040 = vmul.f32 %v2004, %v2031
        %v2041 = vmul.f32 %v2005, %v2031
        %v2042 = vmul.f32 %v2006, %v2031
        %v2043 = vmul.f32 %v2007, %v2031
        %v2044 = vmul.f32 %v2008, %v2031
        %v2045 = vmul.f32 %v2009, %v2031
        %v2046 = vmul.f32 %v2010, %v2031
        %v2047 = vmul.f32 %v2011, %v2031
        %v2048 = vmul.f32 %v2012, %v2031
        %v2049 = vmul.f32 %v2013, %v2031
        %v2050 = vmul.f32 %v2014, %v2031
        %v2051 = vmul.f32 %v2015, %v2031
        %v2052 = vmul.f32 %v2016, %v2031
        %v2053 = vmul.f32 %v2017, %v2031
        %v2054 = vmul.f32 %v2018, %v2031
        %v2055 = vmul.f32 %v2019, %v2031
        %v2056 = vmul.f32 %v2020, %v2031
        %v2057 = vmul.f32 %v2021, %v2031
        %v2058 = vmul.f32 %v2022, %v2031
        %v2059 = vmul.f32 %v2023, %v2031
        %v2060 = vmul.f32 %v2024, %v2031
        %v2061 = vmul.f32 %v2025, %v2031
        %v2062 = vmul.f32 %v2026, %v2031
        %v2063 = vmul.f32 %v2027, %v2031
        %v2064 = vadd.f32 %v1961, %v2032
        %v2065 = vadd.f32 %v1962, %v2033
        %v2066 = vadd.f32 %v1963, %v2034
        %v2067 = vadd.f32 %v1964, %v2035
        %v2068 = vadd.f32 %v1965, %v2036
        %v2069 = vadd.f32 %v1966, %v2037
        %v2070 = vadd.f32 %v1967, %v2038
        %v2071 = vadd.f32 %v1968, %v2039
        %v2072 = vadd.f32 %v1969, %v2040
        %v2073 = vadd.f32 %v1970, %v2041
        %v2074 = vadd.f32 %v1971, %v2042
        %v2075 = vadd.f32 %v1972, %v2043
        %v2076 = vadd.f32 %v1973, %v2044
        %v2077 = vadd.f32 %v1974, %v2045
        %v2078 = vadd.f32 %v1975, %v2046
        %v2079 = vadd.f32 %v1976, %v2047
        %v2080 = vadd.f32 %v1977, %v2048
        %v2081 = vadd.f32 %v1978, %v2049
        %v2082 = vadd.f32 %v1979, %v2050
        %v2083 = vadd.f32 %v1980, %v2051
        %v2084 = vadd.f32 %v1981, %v2052
        %v2085 = vadd.f32 %v1982, %v2053
        %v2086 = vadd.f32 %v1983, %v2054
        %v2087 = vadd.f32 %v1984, %v2055
        %v2088 = vadd.f32 %v1985, %v2056
        %v2089 = vadd.f32 %v1986, %v2057
        %v2090 = vadd.f32 %v1987, %v2058
        %v2091 = vadd.f32 %v1988, %v2059
        %v2092 = vadd.f32 %v1989, %v2060
        %v2093 = vadd.f32 %v1990, %v2061
        %v2094 = vadd.f32 %v1991, %v2062
        %v2095 = vadd.f32 %v1992, %v2063
        %v2096 = vld [vmem:[%s1993 + $0x1] sm:$0x1]
        %v2097 = vld [vmem:[%s1995 + $0x1] sm:$0xff]
        %v2098 = vld [vmem:[%s1995 + $0x9] sm:$0xff]
        %v2099 = vld [vmem:[%s1995 + $0x19] sm:$0xff]
        %v2100 = vld [vmem:[%s1995 + $0x21] sm:$0xff]
        %v2101 = vld [vmem:[%s1995 + $0x31] sm:$0xff]
        %v2102 = vld [vmem:[%s1995 + $0x39] sm:$0xff]
        %v2103 = vld [vmem:[%s1995 + $0x49] sm:$0xff]
        %v2104 = vld [vmem:[%s1995 + $0x51] sm:$0xff]
        %v2105 = vld [vmem:[%s1995 + $0x61] sm:$0xff]
        %v2106 = vld [vmem:[%s1995 + $0x69] sm:$0xff]
        %v2107 = vld [vmem:[%s1995 + $0x79] sm:$0xff]
        %v2108 = vld [vmem:[%s1995 + $0x81] sm:$0xff]
        %v2109 = vld [vmem:[%s1995 + $0x91] sm:$0xff]
        %v2110 = vld [vmem:[%s1995 + $0x99] sm:$0xff]
        %v2111 = vld [vmem:[%s1995 + $0xa9] sm:$0xff]
        %v2112 = vld [vmem:[%s1995 + $0xb1] sm:$0xff]
        %v2113 = vld [vmem:[%s1995 + $0xc1] sm:$0xff]
        %v2114 = vld [vmem:[%s1995 + $0xc9] sm:$0xff]
        %v2115 = vld [vmem:[%s1995 + $0xd9] sm:$0xff]
        %v2116 = vld [vmem:[%s1995 + $0xe1] sm:$0xff]
        %v2117 = vld [vmem:[%s1995 + $0xf1] sm:$0xff]
        %v2118 = vld [vmem:[%s1995 + $0xf9] sm:$0xff]
        %v2119 = vld [vmem:[%s1995 + $0x109] sm:$0xff]
        %v2120 = vld [vmem:[%s1995 + $0x111] sm:$0xff]
        %v2121 = vld [vmem:[%s1995 + $0x121] sm:$0xff]
        %v2122 = vld [vmem:[%s1995 + $0x129] sm:$0xff]
        %v2123 = vld [vmem:[%s1995 + $0x139] sm:$0xff]
        %v2124 = vld [vmem:[%s1995 + $0x141] sm:$0xff]
        %v2125 = vld [vmem:[%s1995 + $0x151] sm:$0xff]
        %v2126 = vld [vmem:[%s1995 + $0x159] sm:$0xff]
        %v2127 = vld [vmem:[%s1995 + $0x169] sm:$0xff]
        %v2128 = vld [vmem:[%s1995 + $0x171] sm:$0xff]
        %v2129 = vlaneseq
        %v2130 = vshrl.u32 %v2129, 7
        %v2131 = vsub.s32 0, %v2130
        %v2132 = vrot.slane %v2096, %v2131
        %v2133 = vmul.f32 %v2097, %v2132
        %v2134 = vmul.f32 %v2098, %v2132
        %v2135 = vmul.f32 %v2099, %v2132
        %v2136 = vmul.f32 %v2100, %v2132
        %v2137 = vmul.f32 %v2101, %v2132
        %v2138 = vmul.f32 %v2102, %v2132
        %v2139 = vmul.f32 %v2103, %v2132
        %v2140 = vmul.f32 %v2104, %v2132
        %v2141 = vmul.f32 %v2105, %v2132
        %v2142 = vmul.f32 %v2106, %v2132
        %v2143 = vmul.f32 %v2107, %v2132
        %v2144 = vmul.f32 %v2108, %v2132
        %v2145 = vmul.f32 %v2109, %v2132
        %v2146 = vmul.f32 %v2110, %v2132
        %v2147 = vmul.f32 %v2111, %v2132
        %v2148 = vmul.f32 %v2112, %v2132
        %v2149 = vmul.f32 %v2113, %v2132
        %v2150 = vmul.f32 %v2114, %v2132
        %v2151 = vmul.f32 %v2115, %v2132
        %v2152 = vmul.f32 %v2116, %v2132
        %v2153 = vmul.f32 %v2117, %v2132
        %v2154 = vmul.f32 %v2118, %v2132
        %v2155 = vmul.f32 %v2119, %v2132
        %v2156 = vmul.f32 %v2120, %v2132
        %v2157 = vmul.f32 %v2121, %v2132
        %v2158 = vmul.f32 %v2122, %v2132
        %v2159 = vmul.f32 %v2123, %v2132
        %v2160 = vmul.f32 %v2124, %v2132
        %v2161 = vmul.f32 %v2125, %v2132
        %v2162 = vmul.f32 %v2126, %v2132
        %v2163 = vmul.f32 %v2127, %v2132
        %v2164 = vmul.f32 %v2128, %v2132
        %v2165 = vadd.f32 %v2064, %v2133
        %v2166 = vadd.f32 %v2065, %v2134
        %v2167 = vadd.f32 %v2066, %v2135
        %v2168 = vadd.f32 %v2067, %v2136
        %v2169 = vadd.f32 %v2068, %v2137
        %v2170 = vadd.f32 %v2069, %v2138
        %v2171 = vadd.f32 %v2070, %v2139
        %v2172 = vadd.f32 %v2071, %v2140
        %v2173 = vadd.f32 %v2072, %v2141
        %v2174 = vadd.f32 %v2073, %v2142
        %v2175 = vadd.f32 %v2074, %v2143
        %v2176 = vadd.f32 %v2075, %v2144
        %v2177 = vadd.f32 %v2076, %v2145
        %v2178 = vadd.f32 %v2077, %v2146
        %v2179 = vadd.f32 %v2078, %v2147
        %v2180 = vadd.f32 %v2079, %v2148
        %v2181 = vadd.f32 %v2080, %v2149
        %v2182 = vadd.f32 %v2081, %v2150
        %v2183 = vadd.f32 %v2082, %v2151
        %v2184 = vadd.f32 %v2083, %v2152
        %v2185 = vadd.f32 %v2084, %v2153
        %v2186 = vadd.f32 %v2085, %v2154
        %v2187 = vadd.f32 %v2086, %v2155
        %v2188 = vadd.f32 %v2087, %v2156
        %v2189 = vadd.f32 %v2088, %v2157
        %v2190 = vadd.f32 %v2089, %v2158
        %v2191 = vadd.f32 %v2090, %v2159
        %v2192 = vadd.f32 %v2091, %v2160
        %v2193 = vadd.f32 %v2092, %v2161
        %v2194 = vadd.f32 %v2093, %v2162
        %v2195 = vadd.f32 %v2094, %v2163
        %v2196 = vadd.f32 %v2095, %v2164
        %v2197 = vld [vmem:[%s1993 + $0x2] sm:$0x1]
        %v2198 = vld [vmem:[%s1995 + $0x2] sm:$0xff]
        %v2199 = vld [vmem:[%s1995 + $0xa] sm:$0xff]
        %v2200 = vld [vmem:[%s1995 + $0x1a] sm:$0xff]
        %v2201 = vld [vmem:[%s1995 + $0x22] sm:$0xff]
        %v2202 = vld [vmem:[%s1995 + $0x32] sm:$0xff]
        %v2203 = vld [vmem:[%s1995 + $0x3a] sm:$0xff]
        %v2204 = vld [vmem:[%s1995 + $0x4a] sm:$0xff]
        %v2205 = vld [vmem:[%s1995 + $0x52] sm:$0xff]
        %v2206 = vld [vmem:[%s1995 + $0x62] sm:$0xff]
        %v2207 = vld [vmem:[%s1995 + $0x6a] sm:$0xff]
        %v2208 = vld [vmem:[%s1995 + $0x7a] sm:$0xff]
        %v2209 = vld [vmem:[%s1995 + $0x82] sm:$0xff]
        %v2210 = vld [vmem:[%s1995 + $0x92] sm:$0xff]
        %v2211 = vld [vmem:[%s1995 + $0x9a] sm:$0xff]
        %v2212 = vld [vmem:[%s1995 + $0xaa] sm:$0xff]
        %v2213 = vld [vmem:[%s1995 + $0xb2] sm:$0xff]
        %v2214 = vld [vmem:[%s1995 + $0xc2] sm:$0xff]
        %v2215 = vld [vmem:[%s1995 + $0xca] sm:$0xff]
        %v2216 = vld [vmem:[%s1995 + $0xda] sm:$0xff]
        %v2217 = vld [vmem:[%s1995 + $0xe2] sm:$0xff]
        %v2218 = vld [vmem:[%s1995 + $0xf2] sm:$0xff]
        %v2219 = vld [vmem:[%s1995 + $0xfa] sm:$0xff]
        %v2220 = vld [vmem:[%s1995 + $0x10a] sm:$0xff]
        %v2221 = vld [vmem:[%s1995 + $0x112] sm:$0xff]
        %v2222 = vld [vmem:[%s1995 + $0x122] sm:$0xff]
        %v2223 = vld [vmem:[%s1995 + $0x12a] sm:$0xff]
        %v2224 = vld [vmem:[%s1995 + $0x13a] sm:$0xff]
        %v2225 = vld [vmem:[%s1995 + $0x142] sm:$0xff]
        %v2226 = vld [vmem:[%s1995 + $0x152] sm:$0xff]
        %v2227 = vld [vmem:[%s1995 + $0x15a] sm:$0xff]
        %v2228 = vld [vmem:[%s1995 + $0x16a] sm:$0xff]
        %v2229 = vld [vmem:[%s1995 + $0x172] sm:$0xff]
        %v2230 = vlaneseq
        %v2231 = vshrl.u32 %v2230, 7
        %v2232 = vsub.s32 0, %v2231
        %v2233 = vrot.slane %v2197, %v2232
        %v2234 = vmul.f32 %v2198, %v2233
        %v2235 = vmul.f32 %v2199, %v2233
        %v2236 = vmul.f32 %v2200, %v2233
        %v2237 = vmul.f32 %v2201, %v2233
        %v2238 = vmul.f32 %v2202, %v2233
        %v2239 = vmul.f32 %v2203, %v2233
        %v2240 = vmul.f32 %v2204, %v2233
        %v2241 = vmul.f32 %v2205, %v2233
        %v2242 = vmul.f32 %v2206, %v2233
        %v2243 = vmul.f32 %v2207, %v2233
        %v2244 = vmul.f32 %v2208, %v2233
        %v2245 = vmul.f32 %v2209, %v2233
        %v2246 = vmul.f32 %v2210, %v2233
        %v2247 = vmul.f32 %v2211, %v2233
        %v2248 = vmul.f32 %v2212, %v2233
        %v2249 = vmul.f32 %v2213, %v2233
        %v2250 = vmul.f32 %v2214, %v2233
        %v2251 = vmul.f32 %v2215, %v2233
        %v2252 = vmul.f32 %v2216, %v2233
        %v2253 = vmul.f32 %v2217, %v2233
        %v2254 = vmul.f32 %v2218, %v2233
        %v2255 = vmul.f32 %v2219, %v2233
        %v2256 = vmul.f32 %v2220, %v2233
        %v2257 = vmul.f32 %v2221, %v2233
        %v2258 = vmul.f32 %v2222, %v2233
        %v2259 = vmul.f32 %v2223, %v2233
        %v2260 = vmul.f32 %v2224, %v2233
        %v2261 = vmul.f32 %v2225, %v2233
        %v2262 = vmul.f32 %v2226, %v2233
        %v2263 = vmul.f32 %v2227, %v2233
        %v2264 = vmul.f32 %v2228, %v2233
        %v2265 = vmul.f32 %v2229, %v2233
        %v2266 = vadd.f32 %v2165, %v2234
        %v2267 = vadd.f32 %v2166, %v2235
        %v2268 = vadd.f32 %v2167, %v2236
        %v2269 = vadd.f32 %v2168, %v2237
        %v2270 = vadd.f32 %v2169, %v2238
        %v2271 = vadd.f32 %v2170, %v2239
        %v2272 = vadd.f32 %v2171, %v2240
        %v2273 = vadd.f32 %v2172, %v2241
        %v2274 = vadd.f32 %v2173, %v2242
        %v2275 = vadd.f32 %v2174, %v2243
        %v2276 = vadd.f32 %v2175, %v2244
        %v2277 = vadd.f32 %v2176, %v2245
        %v2278 = vadd.f32 %v2177, %v2246
        %v2279 = vadd.f32 %v2178, %v2247
        %v2280 = vadd.f32 %v2179, %v2248
        %v2281 = vadd.f32 %v2180, %v2249
        %v2282 = vadd.f32 %v2181, %v2250
        %v2283 = vadd.f32 %v2182, %v2251
        %v2284 = vadd.f32 %v2183, %v2252
        %v2285 = vadd.f32 %v2184, %v2253
        %v2286 = vadd.f32 %v2185, %v2254
        %v2287 = vadd.f32 %v2186, %v2255
        %v2288 = vadd.f32 %v2187, %v2256
        %v2289 = vadd.f32 %v2188, %v2257
        %v2290 = vadd.f32 %v2189, %v2258
        %v2291 = vadd.f32 %v2190, %v2259
        %v2292 = vadd.f32 %v2191, %v2260
        %v2293 = vadd.f32 %v2192, %v2261
        %v2294 = vadd.f32 %v2193, %v2262
        %v2295 = vadd.f32 %v2194, %v2263
        %v2296 = vadd.f32 %v2195, %v2264
        %v2297 = vadd.f32 %v2196, %v2265
        %v2298 = vld [vmem:[%s11] sm:$0xff]
        %v2299 = vld [vmem:[%s11 + $0x8] sm:$0xff]
        %v2301 = vsel %vm1297, %v2266, 0
        %v2304 = vsel %vm1297, %v2267, 0
        %v2307 = vsel %vm1297, %v2268, 0
        %v2310 = vsel %vm1297, %v2269, 0
        %v2313 = vsel %vm1297, %v2270, 0
        %v2316 = vsel %vm1297, %v2271, 0
        %v2319 = vsel %vm1297, %v2272, 0
        %v2322 = vsel %vm1297, %v2273, 0
        %v2325 = vsel %vm1297, %v2274, 0
        %v2328 = vsel %vm1297, %v2275, 0
        %v2331 = vsel %vm1297, %v2276, 0
        %v2334 = vsel %vm1297, %v2277, 0
        %v2337 = vsel %vm1297, %v2278, 0
        %v2340 = vsel %vm1297, %v2279, 0
        %v2343 = vsel %vm1297, %v2280, 0
        %v2346 = vsel %vm1297, %v2281, 0
        %v2349 = vsel %vm1297, %v2282, 0
        %v2352 = vsel %vm1297, %v2283, 0
        %v2355 = vsel %vm1297, %v2284, 0
        %v2358 = vsel %vm1297, %v2285, 0
        %v2361 = vsel %vm1297, %v2286, 0
        %v2364 = vsel %vm1297, %v2287, 0
        %v2367 = vsel %vm1297, %v2288, 0
        %v2370 = vsel %vm1297, %v2289, 0
        %v2373 = vsel %vm1297, %v2290, 0
        %v2376 = vsel %vm1297, %v2291, 0
        %v2379 = vsel %vm1297, %v2292, 0
        %v2382 = vsel %vm1297, %v2293, 0
        %v2385 = vsel %vm1297, %v2294, 0
        %v2388 = vsel %vm1297, %v2295, 0
        %v2391 = vsel %vm1297, %v2296, 0
        %v2394 = vsel %vm1297, %v2297, 0
        %2396 = vmatprep.subr.mxu0 0.0
        %2397 = vmatpush1.msra.mxu0 %v2298
        %2398 = vmatprep.subr.mxu0 0.0
        %2399 = vmatpush1.msra.mxu0 %v2299
        %2400 = vmatprep.subr.mxu0 0.0
        %2401 = vmatpush1.msra.mxu0 0.0
        %2402 = vmatprep.subr.mxu0 0.0
        %2403 = vmatpush1.msra.mxu0 0.0
        %2404 = vmatprep.subr.mxu0 0.0
        %2405 = vmatpush1.msra.mxu0 0.0
        %2406 = vmatprep.subr.mxu0 0.0
        %2407 = vmatpush1.msra.mxu0 0.0
        %2408 = vmatprep.subr.mxu0 0.0
        %2409 = vmatpush1.msra.mxu0 0.0
        %2410 = vmatprep.subr.mxu0 0.0
        %2411 = vmatpush1.msra.mxu0 0.0
        %2412 = vmatprep.subr.mxu0 0.0
        %2413 = vmatpush1.msra.mxu0 0.0
        %2414 = vmatprep.subr.mxu0 0.0
        %2415 = vmatpush1.msra.mxu0 0.0
        %2416 = vmatprep.subr.mxu0 0.0
        %2417 = vmatpush1.msra.mxu0 0.0
        %2418 = vmatprep.subr.mxu0 0.0
        %2419 = vmatpush1.msra.mxu0 0.0
        %2420 = vmatprep.subr.mxu0 0.0
        %2421 = vmatpush1.msra.mxu0 0.0
        %2422 = vmatprep.subr.mxu0 0.0
        %2423 = vmatpush1.msra.mxu0 0.0
        %2424 = vmatprep.subr.mxu0 0.0
        %2425 = vmatpush1.msra.mxu0 0.0
        %2426 = vmatprep.subr.mxu0 0.0
        %2427 = vmatpush1.msra.mxu0 0.0
        %2428 = vmatprep.subr.mxu0 0.0
        %2429 = vmatpush1.msra.mxu0 0.0
        %2430 = vmatprep.subr.mxu0 0.0
        %2431 = vmatpush1.msra.mxu0 0.0
        %2432 = vmatprep.subr.mxu0 0.0
        %2433 = vmatpush1.msra.mxu0 0.0
        %2434 = vmatprep.subr.mxu0 0.0
        %2435 = vmatpush1.msra.mxu0 0.0
        %2436 = vmatprep.subr.mxu0 0.0
        %2437 = vmatpush1.msra.mxu0 0.0
        %2438 = vmatprep.subr.mxu0 0.0
        %2439 = vmatpush1.msra.mxu0 0.0
        %2440 = vmatprep.subr.mxu0 0.0
        %2441 = vmatpush1.msra.mxu0 0.0
        %2442 = vmatprep.subr.mxu0 0.0
        %2443 = vmatpush1.msra.mxu0 0.0
        %2444 = vmatprep.subr.mxu0 0.0
        %2445 = vmatpush1.msra.mxu0 0.0
        %2446 = vmatprep.subr.mxu0 0.0
        %2447 = vmatpush1.msra.mxu0 0.0
        %2448 = vmatprep.subr.mxu0 0.0
        %2449 = vmatpush1.msra.mxu0 0.0
        %2450 = vmatprep.subr.mxu0 0.0
        %2451 = vmatpush1.msra.mxu0 0.0
        %2452 = vmatprep.subr.mxu0 0.0
        %2453 = vmatpush1.msra.mxu0 0.0
        %2454 = vmatprep.subr.mxu0 0.0
        %2455 = vmatpush1.msra.mxu0 0.0
        %2456 = vmatprep.subr.mxu0 0.0
        %2457 = vmatpush1.msra.mxu0 0.0
        %2458 = vmatprep.subr.mxu0 0.0
        %2459 = vmatpush1.msra.mxu0 0.0
        %2460 = vmatprep.mubr.f32.mxu0 0.0
        %2461 = vmatmul.mubr.f32.gmra.mrb[0].mxu0 %v2301
        %v2462 = vpop.f32.mrb[0].mxu0
        %v2463 = vadd.f32 0.0, %v2462
        %v2464 = vpop.f32.mrb[0].mxu0
        %2465 = vmatprep.mubr.f32.mxu0 0.0
        %2466 = vmatmul.mubr.f32.gmra.mrb[0].mxu0 %v2304
        %v2467 = vpop.f32.mrb[0].mxu0
        %v2468 = vadd.f32 0.0, %v2467
        %v2469 = vpop.f32.mrb[0].mxu0
        %2470 = vmatprep.mubr.f32.mxu0 0.0
        %2471 = vmatmul.mubr.f32.gmra.mrb[0].mxu0 %v2307
        %v2472 = vpop.f32.mrb[0].mxu0
        %v2473 = vadd.f32 0.0, %v2472
        %v2474 = vpop.f32.mrb[0].mxu0
        %2475 = vmatprep.mubr.f32.mxu0 0.0
        %2476 = vmatmul.mubr.f32.gmra.mrb[0].mxu0 %v2310
        %v2477 = vpop.f32.mrb[0].mxu0
        %v2478 = vadd.f32 0.0, %v2477
        %v2479 = vpop.f32.mrb[0].mxu0
        %2480 = vmatprep.mubr.f32.mxu0 0.0
        %2481 = vmatmul.mubr.f32.gmra.mrb[0].mxu0 %v2313
        %v2482 = vpop.f32.mrb[0].mxu0
        %v2483 = vadd.f32 0.0, %v2482
        %v2484 = vpop.f32.mrb[0].mxu0
        %2485 = vmatprep.mubr.f32.mxu0 0.0
        %2486 = vmatmul.mubr.f32.gmra.mrb[0].mxu0 %v2316
        %v2487 = vpop.f32.mrb[0].mxu0
        %v2488 = vadd.f32 0.0, %v2487
        %v2489 = vpop.f32.mrb[0].mxu0
        %2490 = vmatprep.mubr.f32.mxu0 0.0
        %2491 = vmatmul.mubr.f32.gmra.mrb[0].mxu0 %v2319
        %v2492 = vpop.f32.mrb[0].mxu0
        %v2493 = vadd.f32 0.0, %v2492
        %v2494 = vpop.f32.mrb[0].mxu0
        %2495 = vmatprep.mubr.f32.mxu0 0.0
        %2496 = vmatmul.mubr.f32.gmra.mrb[0].mxu0 %v2322
        %v2497 = vpop.f32.mrb[0].mxu0
        %v2498 = vadd.f32 0.0, %v2497
        %v2499 = vpop.f32.mrb[0].mxu0
        %2500 = vmatprep.mubr.f32.mxu0 0.0
        %2501 = vmatmul.mubr.f32.gmra.mrb[0].mxu0 %v2325
        %v2502 = vpop.f32.mrb[0].mxu0
        %v2503 = vadd.f32 0.0, %v2502
        %v2504 = vpop.f32.mrb[0].mxu0
        %2505 = vmatprep.mubr.f32.mxu0 0.0
        %2506 = vmatmul.mubr.f32.gmra.mrb[0].mxu0 %v2328
        %v2507 = vpop.f32.mrb[0].mxu0
        %v2508 = vadd.f32 0.0, %v2507
        %v2509 = vpop.f32.mrb[0].mxu0
        %2510 = vmatprep.mubr.f32.mxu0 0.0
        %2511 = vmatmul.mubr.f32.gmra.mrb[0].mxu0 %v2331
        %v2512 = vpop.f32.mrb[0].mxu0
        %v2513 = vadd.f32 0.0, %v2512
        %v2514 = vpop.f32.mrb[0].mxu0
        %2515 = vmatprep.mubr.f32.mxu0 0.0
        %2516 = vmatmul.mubr.f32.gmra.mrb[0].mxu0 %v2334
        %v2517 = vpop.f32.mrb[0].mxu0
        %v2518 = vadd.f32 0.0, %v2517
        %v2519 = vpop.f32.mrb[0].mxu0
        %2520 = vmatprep.mubr.f32.mxu0 0.0
        %2521 = vmatmul.mubr.f32.gmra.mrb[0].mxu0 %v2337
        %v2522 = vpop.f32.mrb[0].mxu0
        %v2523 = vadd.f32 0.0, %v2522
        %v2524 = vpop.f32.mrb[0].mxu0
        %2525 = vmatprep.mubr.f32.mxu0 0.0
        %2526 = vmatmul.mubr.f32.gmra.mrb[0].mxu0 %v2340
        %v2527 = vpop.f32.mrb[0].mxu0
        %v2528 = vadd.f32 0.0, %v2527
        %v2529 = vpop.f32.mrb[0].mxu0
        %2530 = vmatprep.mubr.f32.mxu0 0.0
        %2531 = vmatmul.mubr.f32.gmra.mrb[0].mxu0 %v2343
        %v2532 = vpop.f32.mrb[0].mxu0
        %v2533 = vadd.f32 0.0, %v2532
        %v2534 = vpop.f32.mrb[0].mxu0
        %2535 = vmatprep.mubr.f32.mxu0 0.0
        %2536 = vmatmul.mubr.f32.gmra.mrb[0].mxu0 %v2346
        %v2537 = vpop.f32.mrb[0].mxu0
        %v2538 = vadd.f32 0.0, %v2537
        %v2539 = vpop.f32.mrb[0].mxu0
        %2540 = vmatprep.mubr.f32.mxu0 0.0
        %2541 = vmatmul.mubr.f32.gmra.mrb[0].mxu0 %v2349
        %v2542 = vpop.f32.mrb[0].mxu0
        %v2543 = vadd.f32 0.0, %v2542
        %v2544 = vpop.f32.mrb[0].mxu0
        %2545 = vmatprep.mubr.f32.mxu0 0.0
        %2546 = vmatmul.mubr.f32.gmra.mrb[0].mxu0 %v2352
        %v2547 = vpop.f32.mrb[0].mxu0
        %v2548 = vadd.f32 0.0, %v2547
        %v2549 = vpop.f32.mrb[0].mxu0
        %2550 = vmatprep.mubr.f32.mxu0 0.0
        %2551 = vmatmul.mubr.f32.gmra.mrb[0].mxu0 %v2355
        %v2552 = vpop.f32.mrb[0].mxu0
        %v2553 = vadd.f32 0.0, %v2552
        %v2554 = vpop.f32.mrb[0].mxu0
        %2555 = vmatprep.mubr.f32.mxu0 0.0
        %2556 = vmatmul.mubr.f32.gmra.mrb[0].mxu0 %v2358
        %v2557 = vpop.f32.mrb[0].mxu0
        %v2558 = vadd.f32 0.0, %v2557
        %v2559 = vpop.f32.mrb[0].mxu0
        %2560 = vmatprep.mubr.f32.mxu0 0.0
        %2561 = vmatmul.mubr.f32.gmra.mrb[0].mxu0 %v2361
        %v2562 = vpop.f32.mrb[0].mxu0
        %v2563 = vadd.f32 0.0, %v2562
        %v2564 = vpop.f32.mrb[0].mxu0
        %2565 = vmatprep.mubr.f32.mxu0 0.0
        %2566 = vmatmul.mubr.f32.gmra.mrb[0].mxu0 %v2364
        %v2567 = vpop.f32.mrb[0].mxu0
        %v2568 = vadd.f32 0.0, %v2567
        %v2569 = vpop.f32.mrb[0].mxu0
        %2570 = vmatprep.mubr.f32.mxu0 0.0
        %2571 = vmatmul.mubr.f32.gmra.mrb[0].mxu0 %v2367
        %v2572 = vpop.f32.mrb[0].mxu0
        %v2573 = vadd.f32 0.0, %v2572
        %v2574 = vpop.f32.mrb[0].mxu0
        %2575 = vmatprep.mubr.f32.mxu0 0.0
        %2576 = vmatmul.mubr.f32.gmra.mrb[0].mxu0 %v2370
        %v2577 = vpop.f32.mrb[0].mxu0
        %v2578 = vadd.f32 0.0, %v2577
        %v2579 = vpop.f32.mrb[0].mxu0
        %2580 = vmatprep.mubr.f32.mxu0 0.0
        %2581 = vmatmul.mubr.f32.gmra.mrb[0].mxu0 %v2373
        %v2582 = vpop.f32.mrb[0].mxu0
        %v2583 = vadd.f32 0.0, %v2582
        %v2584 = vpop.f32.mrb[0].mxu0
        %2585 = vmatprep.mubr.f32.mxu0 0.0
        %2586 = vmatmul.mubr.f32.gmra.mrb[0].mxu0 %v2376
        %v2587 = vpop.f32.mrb[0].mxu0
        %v2588 = vadd.f32 0.0, %v2587
        %v2589 = vpop.f32.mrb[0].mxu0
        %2590 = vmatprep.mubr.f32.mxu0 0.0
        %2591 = vmatmul.mubr.f32.gmra.mrb[0].mxu0 %v2379
        %v2592 = vpop.f32.mrb[0].mxu0
        %v2593 = vadd.f32 0.0, %v2592
        %v2594 = vpop.f32.mrb[0].mxu0
        %2595 = vmatprep.mubr.f32.mxu0 0.0
        %2596 = vmatmul.mubr.f32.gmra.mrb[0].mxu0 %v2382
        %v2597 = vpop.f32.mrb[0].mxu0
        %v2598 = vadd.f32 0.0, %v2597
        %v2599 = vpop.f32.mrb[0].mxu0
        %2600 = vmatprep.mubr.f32.mxu0 0.0
        %2601 = vmatmul.mubr.f32.gmra.mrb[0].mxu0 %v2385
        %v2602 = vpop.f32.mrb[0].mxu0
        %v2603 = vadd.f32 0.0, %v2602
        %v2604 = vpop.f32.mrb[0].mxu0
        %2605 = vmatprep.mubr.f32.mxu0 0.0
        %2606 = vmatmul.mubr.f32.gmra.mrb[0].mxu0 %v2388
        %v2607 = vpop.f32.mrb[0].mxu0
        %v2608 = vadd.f32 0.0, %v2607
        %v2609 = vpop.f32.mrb[0].mxu0
        %2610 = vmatprep.mubr.f32.mxu0 0.0
        %2611 = vmatmul.mubr.f32.gmra.mrb[0].mxu0 %v2391
        %v2612 = vpop.f32.mrb[0].mxu0
        %v2613 = vadd.f32 0.0, %v2612
        %v2614 = vpop.f32.mrb[0].mxu0
        %2615 = vmatprep.mubr.f32.mxu0 0.0
        %2616 = vmatmul.mubr.f32.gmra.mrb[0].mxu0 %v2394
        %v2617 = vpop.f32.mrb[0].mxu0
        %v2618 = vadd.f32 0.0, %v2617
        %v2619 = vpop.f32.mrb[0].mxu0
        %2620 = vdwg.mxu0
        %v2621 = vld [vmem:[%s13] sm:$0x1]
        %v2623 = vlaneseq
        %v2624 = vshrl.u32 %v2623, 7
        %v2625 = vsub.s32 0, %v2624
        %v2626 = vrot.slane %v2621, %v2625
        %v2628 = vmul.f32 %v2463, %v2626
        %v2629 = vmul.f32 %v2468, %v2626
        %v2630 = vmul.f32 %v2473, %v2626
        %v2631 = vmul.f32 %v2478, %v2626
        %v2632 = vmul.f32 %v2483, %v2626
        %v2633 = vmul.f32 %v2488, %v2626
        %v2634 = vmul.f32 %v2493, %v2626
        %v2635 = vmul.f32 %v2498, %v2626
        %v2636 = vmul.f32 %v2503, %v2626
        %v2637 = vmul.f32 %v2508, %v2626
        %v2638 = vmul.f32 %v2513, %v2626
        %v2639 = vmul.f32 %v2518, %v2626
        %v2640 = vmul.f32 %v2523, %v2626
        %v2641 = vmul.f32 %v2528, %v2626
        %v2642 = vmul.f32 %v2533, %v2626
        %v2643 = vmul.f32 %v2538, %v2626
        %v2644 = vmul.f32 %v2543, %v2626
        %v2645 = vmul.f32 %v2548, %v2626
        %v2646 = vmul.f32 %v2553, %v2626
        %v2647 = vmul.f32 %v2558, %v2626
        %v2648 = vmul.f32 %v2563, %v2626
        %v2649 = vmul.f32 %v2568, %v2626
        %v2650 = vmul.f32 %v2573, %v2626
        %v2651 = vmul.f32 %v2578, %v2626
        %v2652 = vmul.f32 %v2583, %v2626
        %v2653 = vmul.f32 %v2588, %v2626
        %v2654 = vmul.f32 %v2593, %v2626
        %v2655 = vmul.f32 %v2598, %v2626
        %v2656 = vmul.f32 %v2603, %v2626
        %v2657 = vmul.f32 %v2608, %v2626
        %v2658 = vmul.f32 %v2613, %v2626
        %v2659 = vmul.f32 %v2618, %v2626
        %v2660 = vld [vmem:[%s15] sm:$0x1]
        %v2662 = vlaneseq
        %v2663 = vshrl.u32 %v2662, 7
        %v2664 = vsub.s32 0, %v2663
        %v2665 = vrot.slane %v2660, %v2664
        %v2667 = vadd.f32 %v2628, %v2665
        %v2668 = vadd.f32 %v2629, %v2665
        %v2669 = vadd.f32 %v2630, %v2665
        %v2670 = vadd.f32 %v2631, %v2665
        %v2671 = vadd.f32 %v2632, %v2665
        %v2672 = vadd.f32 %v2633, %v2665
        %v2673 = vadd.f32 %v2634, %v2665
        %v2674 = vadd.f32 %v2635, %v2665
        %v2675 = vadd.f32 %v2636, %v2665
        %v2676 = vadd.f32 %v2637, %v2665
        %v2677 = vadd.f32 %v2638, %v2665
        %v2678 = vadd.f32 %v2639, %v2665
        %v2679 = vadd.f32 %v2640, %v2665
        %v2680 = vadd.f32 %v2641, %v2665
        %v2681 = vadd.f32 %v2642, %v2665
        %v2682 = vadd.f32 %v2643, %v2665
        %v2683 = vadd.f32 %v2644, %v2665
        %v2684 = vadd.f32 %v2645, %v2665
        %v2685 = vadd.f32 %v2646, %v2665
        %v2686 = vadd.f32 %v2647, %v2665
        %v2687 = vadd.f32 %v2648, %v2665
        %v2688 = vadd.f32 %v2649, %v2665
        %v2689 = vadd.f32 %v2650, %v2665
        %v2690 = vadd.f32 %v2651, %v2665
        %v2691 = vadd.f32 %v2652, %v2665
        %v2692 = vadd.f32 %v2653, %v2665
        %v2693 = vadd.f32 %v2654, %v2665
        %v2694 = vadd.f32 %v2655, %v2665
        %v2695 = vadd.f32 %v2656, %v2665
        %v2696 = vadd.f32 %v2657, %v2665
        %v2697 = vadd.f32 %v2658, %v2665
        %v2698 = vadd.f32 %v2659, %v2665
        %vm2699 = vcmp.ge.f32.partialorder %v2667, 0.0
        %vm2700 = vcmp.ge.f32.partialorder %v2668, 0.0
        %vm2701 = vcmp.ge.f32.partialorder %v2669, 0.0
        %vm2702 = vcmp.ge.f32.partialorder %v2670, 0.0
        %vm2703 = vcmp.ge.f32.partialorder %v2671, 0.0
        %vm2704 = vcmp.ge.f32.partialorder %v2672, 0.0
        %vm2705 = vcmp.ge.f32.partialorder %v2673, 0.0
        %vm2706 = vcmp.ge.f32.partialorder %v2674, 0.0
        %vm2707 = vcmp.ge.f32.partialorder %v2675, 0.0
        %vm2708 = vcmp.ge.f32.partialorder %v2676, 0.0
        %vm2709 = vcmp.ge.f32.partialorder %v2677, 0.0
        %vm2710 = vcmp.ge.f32.partialorder %v2678, 0.0
        %vm2711 = vcmp.ge.f32.partialorder %v2679, 0.0
        %vm2712 = vcmp.ge.f32.partialorder %v2680, 0.0
        %vm2713 = vcmp.ge.f32.partialorder %v2681, 0.0
        %vm2714 = vcmp.ge.f32.partialorder %v2682, 0.0
        %vm2715 = vcmp.ge.f32.partialorder %v2683, 0.0
        %vm2716 = vcmp.ge.f32.partialorder %v2684, 0.0
        %vm2717 = vcmp.ge.f32.partialorder %v2685, 0.0
        %vm2718 = vcmp.ge.f32.partialorder %v2686, 0.0
        %vm2719 = vcmp.ge.f32.partialorder %v2687, 0.0
        %vm2720 = vcmp.ge.f32.partialorder %v2688, 0.0
        %vm2721 = vcmp.ge.f32.partialorder %v2689, 0.0
        %vm2722 = vcmp.ge.f32.partialorder %v2690, 0.0
        %vm2723 = vcmp.ge.f32.partialorder %v2691, 0.0
        %vm2724 = vcmp.ge.f32.partialorder %v2692, 0.0
        %vm2725 = vcmp.ge.f32.partialorder %v2693, 0.0
        %vm2726 = vcmp.ge.f32.partialorder %v2694, 0.0
        %vm2727 = vcmp.ge.f32.partialorder %v2695, 0.0
        %vm2728 = vcmp.ge.f32.partialorder %v2696, 0.0
        %vm2729 = vcmp.ge.f32.partialorder %v2697, 0.0
        %vm2730 = vcmp.ge.f32.partialorder %v2698, 0.0
        %v2731 = vmul.f32 %v2667, 0.2
        %v2732 = vmul.f32 %v2668, 0.2
        %v2733 = vmul.f32 %v2669, 0.2
        %v2734 = vmul.f32 %v2670, 0.2
        %v2735 = vmul.f32 %v2671, 0.2
        %v2736 = vmul.f32 %v2672, 0.2
        %v2737 = vmul.f32 %v2673, 0.2
        %v2738 = vmul.f32 %v2674, 0.2
        %v2739 = vmul.f32 %v2675, 0.2
        %v2740 = vmul.f32 %v2676, 0.2
        %v2741 = vmul.f32 %v2677, 0.2
        %v2742 = vmul.f32 %v2678, 0.2
        %v2743 = vmul.f32 %v2679, 0.2
        %v2744 = vmul.f32 %v2680, 0.2
        %v2745 = vmul.f32 %v2681, 0.2
        %v2746 = vmul.f32 %v2682, 0.2
        %v2747 = vmul.f32 %v2683, 0.2
        %v2748 = vmul.f32 %v2684, 0.2
        %v2749 = vmul.f32 %v2685, 0.2
        %v2750 = vmul.f32 %v2686, 0.2
        %v2751 = vmul.f32 %v2687, 0.2
        %v2752 = vmul.f32 %v2688, 0.2
        %v2753 = vmul.f32 %v2689, 0.2
        %v2754 = vmul.f32 %v2690, 0.2
        %v2755 = vmul.f32 %v2691, 0.2
        %v2756 = vmul.f32 %v2692, 0.2
        %v2757 = vmul.f32 %v2693, 0.2
        %v2758 = vmul.f32 %v2694, 0.2
        %v2759 = vmul.f32 %v2695, 0.2
        %v2760 = vmul.f32 %v2696, 0.2
        %v2761 = vmul.f32 %v2697, 0.2
        %v2762 = vmul.f32 %v2698, 0.2
        %v2763 = vsel %vm2699, %v2667, %v2731
        %v2764 = vsel %vm2700, %v2668, %v2732
        %v2765 = vsel %vm2701, %v2669, %v2733
        %v2766 = vsel %vm2702, %v2670, %v2734
        %v2767 = vsel %vm2703, %v2671, %v2735
        %v2768 = vsel %vm2704, %v2672, %v2736
        %v2769 = vsel %vm2705, %v2673, %v2737
        %v2770 = vsel %vm2706, %v2674, %v2738
        %v2771 = vsel %vm2707, %v2675, %v2739
        %v2772 = vsel %vm2708, %v2676, %v2740
        %v2773 = vsel %vm2709, %v2677, %v2741
        %v2774 = vsel %vm2710, %v2678, %v2742
        %v2775 = vsel %vm2711, %v2679, %v2743
        %v2776 = vsel %vm2712, %v2680, %v2744
        %v2777 = vsel %vm2713, %v2681, %v2745
        %v2778 = vsel %vm2714, %v2682, %v2746
        %v2779 = vsel %vm2715, %v2683, %v2747
        %v2780 = vsel %vm2716, %v2684, %v2748
        %v2781 = vsel %vm2717, %v2685, %v2749
        %v2782 = vsel %vm2718, %v2686, %v2750
        %v2783 = vsel %vm2719, %v2687, %v2751
        %v2784 = vsel %vm2720, %v2688, %v2752
        %v2785 = vsel %vm2721, %v2689, %v2753
        %v2786 = vsel %vm2722, %v2690, %v2754
        %v2787 = vsel %vm2723, %v2691, %v2755
        %v2788 = vsel %vm2724, %v2692, %v2756
        %v2789 = vsel %vm2725, %v2693, %v2757
        %v2790 = vsel %vm2726, %v2694, %v2758
        %v2791 = vsel %vm2727, %v2695, %v2759
        %v2792 = vsel %vm2728, %v2696, %v2760
        %v2793 = vsel %vm2729, %v2697, %v2761
        %v2794 = vsel %vm2730, %v2698, %v2762
        %vm2795 = vcmask 261120
        %2796 = vst.msk [vmem:[#allocation3] sm:$0xff] %vm2795, 0.0
        %2797 = vst.msk [vmem:[#allocation3 + $0x8] sm:$0xff] %vm2795, 0.0
        %vm2798 = vcmask 254976
        %2799 = vst.msk [vmem:[#allocation3 + $0x10] sm:$0x3] %vm2798, 0.0
        %2800 = vst.msk [vmem:[#allocation3 + $0x18] sm:$0xff] %vm2795, 0.0
        %2801 = vst.msk [vmem:[#allocation3 + $0x20] sm:$0xff] %vm2795, 0.0
        %2802 = vst.msk [vmem:[#allocation3 + $0x28] sm:$0x3] %vm2798, 0.0
        %2803 = vst.msk [vmem:[#allocation3 + $0x30] sm:$0xff] %vm2795, 0.0
        %2804 = vst.msk [vmem:[#allocation3 + $0x38] sm:$0xff] %vm2795, 0.0
        %2805 = vst.msk [vmem:[#allocation3 + $0x40] sm:$0x3] %vm2798, 0.0
        %2806 = vst.msk [vmem:[#allocation3 + $0x48] sm:$0xff] %vm2795, 0.0
        %2807 = vst.msk [vmem:[#allocation3 + $0x50] sm:$0xff] %vm2795, 0.0
        %2808 = vst.msk [vmem:[#allocation3 + $0x58] sm:$0x3] %vm2798, 0.0
        %2809 = vst.msk [vmem:[#allocation3 + $0x60] sm:$0xff] %vm2795, 0.0
        %2810 = vst.msk [vmem:[#allocation3 + $0x68] sm:$0xff] %vm2795, 0.0
        %2811 = vst.msk [vmem:[#allocation3 + $0x70] sm:$0x3] %vm2798, 0.0
        %2812 = vst.msk [vmem:[#allocation3 + $0x78] sm:$0xff] %vm2795, 0.0
        %2813 = vst.msk [vmem:[#allocation3 + $0x80] sm:$0xff] %vm2795, 0.0
        %2814 = vst.msk [vmem:[#allocation3 + $0x88] sm:$0x3] %vm2798, 0.0
        %2815 = vst.msk [vmem:[#allocation3 + $0x90] sm:$0xff] %vm2795, 0.0
        %2816 = vst.msk [vmem:[#allocation3 + $0x98] sm:$0xff] %vm2795, 0.0
        %2817 = vst.msk [vmem:[#allocation3 + $0xa0] sm:$0x3] %vm2798, 0.0
        %2818 = vst.msk [vmem:[#allocation3 + $0xa8] sm:$0xff] %vm2795, 0.0
        %2819 = vst.msk [vmem:[#allocation3 + $0xb0] sm:$0xff] %vm2795, 0.0
        %2820 = vst.msk [vmem:[#allocation3 + $0xb8] sm:$0x3] %vm2798, 0.0
        %2821 = vst.msk [vmem:[#allocation3 + $0xc0] sm:$0xff] %vm2795, 0.0
        %2822 = vst.msk [vmem:[#allocation3 + $0xc8] sm:$0xff] %vm2795, 0.0
        %2823 = vst.msk [vmem:[#allocation3 + $0xd0] sm:$0x3] %vm2798, 0.0
        %2824 = vst.msk [vmem:[#allocation3 + $0xd8] sm:$0xff] %vm2795, 0.0
        %2825 = vst.msk [vmem:[#allocation3 + $0xe0] sm:$0xff] %vm2795, 0.0
        %2826 = vst.msk [vmem:[#allocation3 + $0xe8] sm:$0x3] %vm2798, 0.0
        %2827 = vst.msk [vmem:[#allocation3 + $0xf0] sm:$0xff] %vm2795, 0.0
        %2828 = vst.msk [vmem:[#allocation3 + $0xf8] sm:$0xff] %vm2795, 0.0
        %2829 = vst.msk [vmem:[#allocation3 + $0x100] sm:$0x3] %vm2798, 0.0
        %2830 = vst.msk [vmem:[#allocation3 + $0x108] sm:$0xff] %vm2795, 0.0
        %2831 = vst.msk [vmem:[#allocation3 + $0x110] sm:$0xff] %vm2795, 0.0
        %2832 = vst.msk [vmem:[#allocation3 + $0x118] sm:$0x3] %vm2798, 0.0
        %2833 = vst.msk [vmem:[#allocation3 + $0x120] sm:$0xff] %vm2795, 0.0
        %2834 = vst.msk [vmem:[#allocation3 + $0x128] sm:$0xff] %vm2795, 0.0
        %2835 = vst.msk [vmem:[#allocation3 + $0x130] sm:$0x3] %vm2798, 0.0
        %2836 = vst.msk [vmem:[#allocation3 + $0x138] sm:$0xff] %vm2795, 0.0
        %2837 = vst.msk [vmem:[#allocation3 + $0x140] sm:$0xff] %vm2795, 0.0
        %2838 = vst.msk [vmem:[#allocation3 + $0x148] sm:$0x3] %vm2798, 0.0
        %2839 = vst.msk [vmem:[#allocation3 + $0x150] sm:$0xff] %vm2795, 0.0
        %2840 = vst.msk [vmem:[#allocation3 + $0x158] sm:$0xff] %vm2795, 0.0
        %2841 = vst.msk [vmem:[#allocation3 + $0x160] sm:$0x3] %vm2798, 0.0
        %2842 = vst.msk [vmem:[#allocation3 + $0x168] sm:$0xff] %vm2795, 0.0
        %2843 = vst.msk [vmem:[#allocation3 + $0x170] sm:$0xff] %vm2795, 0.0
        %2844 = vst.msk [vmem:[#allocation3 + $0x178] sm:$0x3] %vm2798, 0.0
        %2845 = vst.msk [vmem:[#allocation3 + $0x180] sm:$0xff] %vm2795, 0.0
        %2846 = vst.msk [vmem:[#allocation3 + $0x188] sm:$0xff] %vm2795, 0.0
        %2847 = vst.msk [vmem:[#allocation3 + $0x190] sm:$0x3] %vm2798, 0.0
        %2848 = vst.msk [vmem:[#allocation3 + $0x198] sm:$0xff] %vm2795, 0.0
        %2849 = vst.msk [vmem:[#allocation3 + $0x1a0] sm:$0xff] %vm2795, 0.0
        %2850 = vst.msk [vmem:[#allocation3 + $0x1a8] sm:$0x3] %vm2798, 0.0
        %s2851 = scalar_lea.vmem [#allocation3], 24
        %2852 = vst.msk [vmem:[%s2851 + $0x1] sm:$0xff] %vm2795, %v2763
        %2853 = vst.msk [vmem:[%s2851 + $0x9] sm:$0xff] %vm2795, %v2764
        %2854 = vst.msk [vmem:[%s2851 + $0x19] sm:$0xff] %vm2795, %v2765
        %2855 = vst.msk [vmem:[%s2851 + $0x21] sm:$0xff] %vm2795, %v2766
        %2856 = vst.msk [vmem:[%s2851 + $0x31] sm:$0xff] %vm2795, %v2767
        %2857 = vst.msk [vmem:[%s2851 + $0x39] sm:$0xff] %vm2795, %v2768
        %2858 = vst.msk [vmem:[%s2851 + $0x49] sm:$0xff] %vm2795, %v2769
        %2859 = vst.msk [vmem:[%s2851 + $0x51] sm:$0xff] %vm2795, %v2770
        %2860 = vst.msk [vmem:[%s2851 + $0x61] sm:$0xff] %vm2795, %v2771
        %2861 = vst.msk [vmem:[%s2851 + $0x69] sm:$0xff] %vm2795, %v2772
        %2862 = vst.msk [vmem:[%s2851 + $0x79] sm:$0xff] %vm2795, %v2773
        %2863 = vst.msk [vmem:[%s2851 + $0x81] sm:$0xff] %vm2795, %v2774
        %2864 = vst.msk [vmem:[%s2851 + $0x91] sm:$0xff] %vm2795, %v2775
        %2865 = vst.msk [vmem:[%s2851 + $0x99] sm:$0xff] %vm2795, %v2776
        %2866 = vst.msk [vmem:[%s2851 + $0xa9] sm:$0xff] %vm2795, %v2777
        %2867 = vst.msk [vmem:[%s2851 + $0xb1] sm:$0xff] %vm2795, %v2778
        %2868 = vst.msk [vmem:[%s2851 + $0xc1] sm:$0xff] %vm2795, %v2779
        %2869 = vst.msk [vmem:[%s2851 + $0xc9] sm:$0xff] %vm2795, %v2780
        %2870 = vst.msk [vmem:[%s2851 + $0xd9] sm:$0xff] %vm2795, %v2781
        %2871 = vst.msk [vmem:[%s2851 + $0xe1] sm:$0xff] %vm2795, %v2782
        %2872 = vst.msk [vmem:[%s2851 + $0xf1] sm:$0xff] %vm2795, %v2783
        %2873 = vst.msk [vmem:[%s2851 + $0xf9] sm:$0xff] %vm2795, %v2784
        %2874 = vst.msk [vmem:[%s2851 + $0x109] sm:$0xff] %vm2795, %v2785
        %2875 = vst.msk [vmem:[%s2851 + $0x111] sm:$0xff] %vm2795, %v2786
        %2876 = vst.msk [vmem:[%s2851 + $0x121] sm:$0xff] %vm2795, %v2787
        %2877 = vst.msk [vmem:[%s2851 + $0x129] sm:$0xff] %vm2795, %v2788
        %2878 = vst.msk [vmem:[%s2851 + $0x139] sm:$0xff] %vm2795, %v2789
        %2879 = vst.msk [vmem:[%s2851 + $0x141] sm:$0xff] %vm2795, %v2790
        %2880 = vst.msk [vmem:[%s2851 + $0x151] sm:$0xff] %vm2795, %v2791
        %2881 = vst.msk [vmem:[%s2851 + $0x159] sm:$0xff] %vm2795, %v2792
        %2882 = vst.msk [vmem:[%s2851 + $0x169] sm:$0xff] %vm2795, %v2793
        %2883 = vst.msk [vmem:[%s2851 + $0x171] sm:$0xff] %vm2795, %v2794
        %v2884 = vld [vmem:[%s17] sm:$0x1]
        %v2885 = vld [vmem:[#allocation3] sm:$0xff]
        %v2886 = vld [vmem:[#allocation3 + $0x8] sm:$0xff]
        %v2887 = vld [vmem:[#allocation3 + $0x18] sm:$0xff]
        %v2888 = vld [vmem:[#allocation3 + $0x20] sm:$0xff]
        %v2889 = vld [vmem:[#allocation3 + $0x30] sm:$0xff]
        %v2890 = vld [vmem:[#allocation3 + $0x38] sm:$0xff]
        %v2891 = vld [vmem:[#allocation3 + $0x48] sm:$0xff]
        %v2892 = vld [vmem:[#allocation3 + $0x50] sm:$0xff]
        %v2893 = vld [vmem:[#allocation3 + $0x60] sm:$0xff]
        %v2894 = vld [vmem:[#allocation3 + $0x68] sm:$0xff]
        %v2895 = vld [vmem:[#allocation3 + $0x78] sm:$0xff]
        %v2896 = vld [vmem:[#allocation3 + $0x80] sm:$0xff]
        %v2897 = vld [vmem:[#allocation3 + $0x90] sm:$0xff]
        %v2898 = vld [vmem:[#allocation3 + $0x98] sm:$0xff]
        %v2899 = vld [vmem:[#allocation3 + $0xa8] sm:$0xff]
        %v2900 = vld [vmem:[#allocation3 + $0xb0] sm:$0xff]
        %v2901 = vld [vmem:[#allocation3 + $0xc0] sm:$0xff]
        %v2902 = vld [vmem:[#allocation3 + $0xc8] sm:$0xff]
        %v2903 = vld [vmem:[#allocation3 + $0xd8] sm:$0xff]
        %v2904 = vld [vmem:[#allocation3 + $0xe0] sm:$0xff]
        %v2905 = vld [vmem:[#allocation3 + $0xf0] sm:$0xff]
        %v2906 = vld [vmem:[#allocation3 + $0xf8] sm:$0xff]
        %v2907 = vld [vmem:[#allocation3 + $0x108] sm:$0xff]
        %v2908 = vld [vmem:[#allocation3 + $0x110] sm:$0xff]
        %v2909 = vld [vmem:[#allocation3 + $0x120] sm:$0xff]
        %v2910 = vld [vmem:[#allocation3 + $0x128] sm:$0xff]
        %v2911 = vld [vmem:[#allocation3 + $0x138] sm:$0xff]
        %v2912 = vld [vmem:[#allocation3 + $0x140] sm:$0xff]
        %v2913 = vld [vmem:[#allocation3 + $0x150] sm:$0xff]
        %v2914 = vld [vmem:[#allocation3 + $0x158] sm:$0xff]
        %v2915 = vld [vmem:[#allocation3 + $0x168] sm:$0xff]
        %v2916 = vld [vmem:[#allocation3 + $0x170] sm:$0xff]
        %v2917 = vlaneseq
        %v2918 = vshrl.u32 %v2917, 7
        %v2919 = vsub.s32 0, %v2918
        %v2920 = vrot.slane %v2884, %v2919
        %v2921 = vmul.f32 %v2885, %v2920
        %v2922 = vmul.f32 %v2886, %v2920
        %v2923 = vmul.f32 %v2887, %v2920
        %v2924 = vmul.f32 %v2888, %v2920
        %v2925 = vmul.f32 %v2889, %v2920
        %v2926 = vmul.f32 %v2890, %v2920
        %v2927 = vmul.f32 %v2891, %v2920
        %v2928 = vmul.f32 %v2892, %v2920
        %v2929 = vmul.f32 %v2893, %v2920
        %v2930 = vmul.f32 %v2894, %v2920
        %v2931 = vmul.f32 %v2895, %v2920
        %v2932 = vmul.f32 %v2896, %v2920
        %v2933 = vmul.f32 %v2897, %v2920
        %v2934 = vmul.f32 %v2898, %v2920
        %v2935 = vmul.f32 %v2899, %v2920
        %v2936 = vmul.f32 %v2900, %v2920
        %v2937 = vmul.f32 %v2901, %v2920
        %v2938 = vmul.f32 %v2902, %v2920
        %v2939 = vmul.f32 %v2903, %v2920
        %v2940 = vmul.f32 %v2904, %v2920
        %v2941 = vmul.f32 %v2905, %v2920
        %v2942 = vmul.f32 %v2906, %v2920
        %v2943 = vmul.f32 %v2907, %v2920
        %v2944 = vmul.f32 %v2908, %v2920
        %v2945 = vmul.f32 %v2909, %v2920
        %v2946 = vmul.f32 %v2910, %v2920
        %v2947 = vmul.f32 %v2911, %v2920
        %v2948 = vmul.f32 %v2912, %v2920
        %v2949 = vmul.f32 %v2913, %v2920
        %v2950 = vmul.f32 %v2914, %v2920
        %v2951 = vmul.f32 %v2915, %v2920
        %v2952 = vmul.f32 %v2916, %v2920
        %v2953 = vadd.f32 %v2921, 0.0
        %v2954 = vadd.f32 %v2922, 0.0
        %v2955 = vadd.f32 %v2923, 0.0
        %v2956 = vadd.f32 %v2924, 0.0
        %v2957 = vadd.f32 %v2925, 0.0
        %v2958 = vadd.f32 %v2926, 0.0
        %v2959 = vadd.f32 %v2927, 0.0
        %v2960 = vadd.f32 %v2928, 0.0
        %v2961 = vadd.f32 %v2929, 0.0
        %v2962 = vadd.f32 %v2930, 0.0
        %v2963 = vadd.f32 %v2931, 0.0
        %v2964 = vadd.f32 %v2932, 0.0
        %v2965 = vadd.f32 %v2933, 0.0
        %v2966 = vadd.f32 %v2934, 0.0
        %v2967 = vadd.f32 %v2935, 0.0
        %v2968 = vadd.f32 %v2936, 0.0
        %v2969 = vadd.f32 %v2937, 0.0
        %v2970 = vadd.f32 %v2938, 0.0
        %v2971 = vadd.f32 %v2939, 0.0
        %v2972 = vadd.f32 %v2940, 0.0
        %v2973 = vadd.f32 %v2941, 0.0
        %v2974 = vadd.f32 %v2942, 0.0
        %v2975 = vadd.f32 %v2943, 0.0
        %v2976 = vadd.f32 %v2944, 0.0
        %v2977 = vadd.f32 %v2945, 0.0
        %v2978 = vadd.f32 %v2946, 0.0
        %v2979 = vadd.f32 %v2947, 0.0
        %v2980 = vadd.f32 %v2948, 0.0
        %v2981 = vadd.f32 %v2949, 0.0
        %v2982 = vadd.f32 %v2950, 0.0
        %v2983 = vadd.f32 %v2951, 0.0
        %v2984 = vadd.f32 %v2952, 0.0
        %v2985 = vld [vmem:[%s17 + $0x1] sm:$0x1]
        %v2986 = vld [vmem:[#allocation3 + $0x1] sm:$0xff]
        %v2987 = vld [vmem:[#allocation3 + $0x9] sm:$0xff]
        %v2988 = vld [vmem:[#allocation3 + $0x19] sm:$0xff]
        %v2989 = vld [vmem:[#allocation3 + $0x21] sm:$0xff]
        %v2990 = vld [vmem:[#allocation3 + $0x31] sm:$0xff]
        %v2991 = vld [vmem:[#allocation3 + $0x39] sm:$0xff]
        %v2992 = vld [vmem:[#allocation3 + $0x49] sm:$0xff]
        %v2993 = vld [vmem:[#allocation3 + $0x51] sm:$0xff]
        %v2994 = vld [vmem:[#allocation3 + $0x61] sm:$0xff]
        %v2995 = vld [vmem:[#allocation3 + $0x69] sm:$0xff]
        %v2996 = vld [vmem:[#allocation3 + $0x79] sm:$0xff]
        %v2997 = vld [vmem:[#allocation3 + $0x81] sm:$0xff]
        %v2998 = vld [vmem:[#allocation3 + $0x91] sm:$0xff]
        %v2999 = vld [vmem:[#allocation3 + $0x99] sm:$0xff]
        %v3000 = vld [vmem:[#allocation3 + $0xa9] sm:$0xff]
        %v3001 = vld [vmem:[#allocation3 + $0xb1] sm:$0xff]
        %v3002 = vld [vmem:[#allocation3 + $0xc1] sm:$0xff]
        %v3003 = vld [vmem:[#allocation3 + $0xc9] sm:$0xff]
        %v3004 = vld [vmem:[#allocation3 + $0xd9] sm:$0xff]
        %v3005 = vld [vmem:[#allocation3 + $0xe1] sm:$0xff]
        %v3006 = vld [vmem:[#allocation3 + $0xf1] sm:$0xff]
        %v3007 = vld [vmem:[#allocation3 + $0xf9] sm:$0xff]
        %v3008 = vld [vmem:[#allocation3 + $0x109] sm:$0xff]
        %v3009 = vld [vmem:[#allocation3 + $0x111] sm:$0xff]
        %v3010 = vld [vmem:[#allocation3 + $0x121] sm:$0xff]
        %v3011 = vld [vmem:[#allocation3 + $0x129] sm:$0xff]
        %v3012 = vld [vmem:[#allocation3 + $0x139] sm:$0xff]
        %v3013 = vld [vmem:[#allocation3 + $0x141] sm:$0xff]
        %v3014 = vld [vmem:[#allocation3 + $0x151] sm:$0xff]
        %v3015 = vld [vmem:[#allocation3 + $0x159] sm:$0xff]
        %v3016 = vld [vmem:[#allocation3 + $0x169] sm:$0xff]
        %v3017 = vld [vmem:[#allocation3 + $0x171] sm:$0xff]
        %v3018 = vlaneseq
        %v3019 = vshrl.u32 %v3018, 7
        %v3020 = vsub.s32 0, %v3019
        %v3021 = vrot.slane %v2985, %v3020
        %v3022 = vmul.f32 %v2986, %v3021
        %v3023 = vmul.f32 %v2987, %v3021
        %v3024 = vmul.f32 %v2988, %v3021
        %v3025 = vmul.f32 %v2989, %v3021
        %v3026 = vmul.f32 %v2990, %v3021
        %v3027 = vmul.f32 %v2991, %v3021
        %v3028 = vmul.f32 %v2992, %v3021
        %v3029 = vmul.f32 %v2993, %v3021
        %v3030 = vmul.f32 %v2994, %v3021
        %v3031 = vmul.f32 %v2995, %v3021
        %v3032 = vmul.f32 %v2996, %v3021
        %v3033 = vmul.f32 %v2997, %v3021
        %v3034 = vmul.f32 %v2998, %v3021
        %v3035 = vmul.f32 %v2999, %v3021
        %v3036 = vmul.f32 %v3000, %v3021
        %v3037 = vmul.f32 %v3001, %v3021
        %v3038 = vmul.f32 %v3002, %v3021
        %v3039 = vmul.f32 %v3003, %v3021
        %v3040 = vmul.f32 %v3004, %v3021
        %v3041 = vmul.f32 %v3005, %v3021
        %v3042 = vmul.f32 %v3006, %v3021
        %v3043 = vmul.f32 %v3007, %v3021
        %v3044 = vmul.f32 %v3008, %v3021
        %v3045 = vmul.f32 %v3009, %v3021
        %v3046 = vmul.f32 %v3010, %v3021
        %v3047 = vmul.f32 %v3011, %v3021
        %v3048 = vmul.f32 %v3012, %v3021
        %v3049 = vmul.f32 %v3013, %v3021
        %v3050 = vmul.f32 %v3014, %v3021
        %v3051 = vmul.f32 %v3015, %v3021
        %v3052 = vmul.f32 %v3016, %v3021
        %v3053 = vmul.f32 %v3017, %v3021
        %v3054 = vadd.f32 %v2953, %v3022
        %v3055 = vadd.f32 %v2954, %v3023
        %v3056 = vadd.f32 %v2955, %v3024
        %v3057 = vadd.f32 %v2956, %v3025
        %v3058 = vadd.f32 %v2957, %v3026
        %v3059 = vadd.f32 %v2958, %v3027
        %v3060 = vadd.f32 %v2959, %v3028
        %v3061 = vadd.f32 %v2960, %v3029
        %v3062 = vadd.f32 %v2961, %v3030
        %v3063 = vadd.f32 %v2962, %v3031
        %v3064 = vadd.f32 %v2963, %v3032
        %v3065 = vadd.f32 %v2964, %v3033
        %v3066 = vadd.f32 %v2965, %v3034
        %v3067 = vadd.f32 %v2966, %v3035
        %v3068 = vadd.f32 %v2967, %v3036
        %v3069 = vadd.f32 %v2968, %v3037
        %v3070 = vadd.f32 %v2969, %v3038
        %v3071 = vadd.f32 %v2970, %v3039
        %v3072 = vadd.f32 %v2971, %v3040
        %v3073 = vadd.f32 %v2972, %v3041
        %v3074 = vadd.f32 %v2973, %v3042
        %v3075 = vadd.f32 %v2974, %v3043
        %v3076 = vadd.f32 %v2975, %v3044
        %v3077 = vadd.f32 %v2976, %v3045
        %v3078 = vadd.f32 %v2977, %v3046
        %v3079 = vadd.f32 %v2978, %v3047
        %v3080 = vadd.f32 %v2979, %v3048
        %v3081 = vadd.f32 %v2980, %v3049
        %v3082 = vadd.f32 %v2981, %v3050
        %v3083 = vadd.f32 %v2982, %v3051
        %v3084 = vadd.f32 %v2983, %v3052
        %v3085 = vadd.f32 %v2984, %v3053
        %v3086 = vld [vmem:[%s17 + $0x2] sm:$0x1]
        %v3087 = vld [vmem:[#allocation3 + $0x2] sm:$0xff]
        %v3088 = vld [vmem:[#allocation3 + $0xa] sm:$0xff]
        %v3089 = vld [vmem:[#allocation3 + $0x1a] sm:$0xff]
        %v3090 = vld [vmem:[#allocation3 + $0x22] sm:$0xff]
        %v3091 = vld [vmem:[#allocation3 + $0x32] sm:$0xff]
        %v3092 = vld [vmem:[#allocation3 + $0x3a] sm:$0xff]
        %v3093 = vld [vmem:[#allocation3 + $0x4a] sm:$0xff]
        %v3094 = vld [vmem:[#allocation3 + $0x52] sm:$0xff]
        %v3095 = vld [vmem:[#allocation3 + $0x62] sm:$0xff]
        %v3096 = vld [vmem:[#allocation3 + $0x6a] sm:$0xff]
        %v3097 = vld [vmem:[#allocation3 + $0x7a] sm:$0xff]
        %v3098 = vld [vmem:[#allocation3 + $0x82] sm:$0xff]
        %v3099 = vld [vmem:[#allocation3 + $0x92] sm:$0xff]
        %v3100 = vld [vmem:[#allocation3 + $0x9a] sm:$0xff]
        %v3101 = vld [vmem:[#allocation3 + $0xaa] sm:$0xff]
        %v3102 = vld [vmem:[#allocation3 + $0xb2] sm:$0xff]
        %v3103 = vld [vmem:[#allocation3 + $0xc2] sm:$0xff]
        %v3104 = vld [vmem:[#allocation3 + $0xca] sm:$0xff]
        %v3105 = vld [vmem:[#allocation3 + $0xda] sm:$0xff]
        %v3106 = vld [vmem:[#allocation3 + $0xe2] sm:$0xff]
        %v3107 = vld [vmem:[#allocation3 + $0xf2] sm:$0xff]
        %v3108 = vld [vmem:[#allocation3 + $0xfa] sm:$0xff]
        %v3109 = vld [vmem:[#allocation3 + $0x10a] sm:$0xff]
        %v3110 = vld [vmem:[#allocation3 + $0x112] sm:$0xff]
        %v3111 = vld [vmem:[#allocation3 + $0x122] sm:$0xff]
        %v3112 = vld [vmem:[#allocation3 + $0x12a] sm:$0xff]
        %v3113 = vld [vmem:[#allocation3 + $0x13a] sm:$0xff]
        %v3114 = vld [vmem:[#allocation3 + $0x142] sm:$0xff]
        %v3115 = vld [vmem:[#allocation3 + $0x152] sm:$0xff]
        %v3116 = vld [vmem:[#allocation3 + $0x15a] sm:$0xff]
        %v3117 = vld [vmem:[#allocation3 + $0x16a] sm:$0xff]
        %v3118 = vld [vmem:[#allocation3 + $0x172] sm:$0xff]
        %v3119 = vlaneseq
        %v3120 = vshrl.u32 %v3119, 7
        %v3121 = vsub.s32 0, %v3120
        %v3122 = vrot.slane %v3086, %v3121
        %v3123 = vmul.f32 %v3087, %v3122
        %v3124 = vmul.f32 %v3088, %v3122
        %v3125 = vmul.f32 %v3089, %v3122
        %v3126 = vmul.f32 %v3090, %v3122
        %v3127 = vmul.f32 %v3091, %v3122
        %v3128 = vmul.f32 %v3092, %v3122
        %v3129 = vmul.f32 %v3093, %v3122
        %v3130 = vmul.f32 %v3094, %v3122
        %v3131 = vmul.f32 %v3095, %v3122
        %v3132 = vmul.f32 %v3096, %v3122
        %v3133 = vmul.f32 %v3097, %v3122
        %v3134 = vmul.f32 %v3098, %v3122
        %v3135 = vmul.f32 %v3099, %v3122
        %v3136 = vmul.f32 %v3100, %v3122
        %v3137 = vmul.f32 %v3101, %v3122
        %v3138 = vmul.f32 %v3102, %v3122
        %v3139 = vmul.f32 %v3103, %v3122
        %v3140 = vmul.f32 %v3104, %v3122
        %v3141 = vmul.f32 %v3105, %v3122
        %v3142 = vmul.f32 %v3106, %v3122
        %v3143 = vmul.f32 %v3107, %v3122
        %v3144 = vmul.f32 %v3108, %v3122
        %v3145 = vmul.f32 %v3109, %v3122
        %v3146 = vmul.f32 %v3110, %v3122
        %v3147 = vmul.f32 %v3111, %v3122
        %v3148 = vmul.f32 %v3112, %v3122
        %v3149 = vmul.f32 %v3113, %v3122
        %v3150 = vmul.f32 %v3114, %v3122
        %v3151 = vmul.f32 %v3115, %v3122
        %v3152 = vmul.f32 %v3116, %v3122
        %v3153 = vmul.f32 %v3117, %v3122
        %v3154 = vmul.f32 %v3118, %v3122
        %v3155 = vadd.f32 %v3054, %v3123
        %v3156 = vadd.f32 %v3055, %v3124
        %v3157 = vadd.f32 %v3056, %v3125
        %v3158 = vadd.f32 %v3057, %v3126
        %v3159 = vadd.f32 %v3058, %v3127
        %v3160 = vadd.f32 %v3059, %v3128
        %v3161 = vadd.f32 %v3060, %v3129
        %v3162 = vadd.f32 %v3061, %v3130
        %v3163 = vadd.f32 %v3062, %v3131
        %v3164 = vadd.f32 %v3063, %v3132
        %v3165 = vadd.f32 %v3064, %v3133
        %v3166 = vadd.f32 %v3065, %v3134
        %v3167 = vadd.f32 %v3066, %v3135
        %v3168 = vadd.f32 %v3067, %v3136
        %v3169 = vadd.f32 %v3068, %v3137
        %v3170 = vadd.f32 %v3069, %v3138
        %v3171 = vadd.f32 %v3070, %v3139
        %v3172 = vadd.f32 %v3071, %v3140
        %v3173 = vadd.f32 %v3072, %v3141
        %v3174 = vadd.f32 %v3073, %v3142
        %v3175 = vadd.f32 %v3074, %v3143
        %v3176 = vadd.f32 %v3075, %v3144
        %v3177 = vadd.f32 %v3076, %v3145
        %v3178 = vadd.f32 %v3077, %v3146
        %v3179 = vadd.f32 %v3078, %v3147
        %v3180 = vadd.f32 %v3079, %v3148
        %v3181 = vadd.f32 %v3080, %v3149
        %v3182 = vadd.f32 %v3081, %v3150
        %v3183 = vadd.f32 %v3082, %v3151
        %v3184 = vadd.f32 %v3083, %v3152
        %v3185 = vadd.f32 %v3084, %v3153
        %v3186 = vadd.f32 %v3085, %v3154
        %s3187 = scalar_lea.vmem %s17, 4
        %v3188 = vld [vmem:[%s3187] sm:$0x1]
        %v3189 = vld [vmem:[%s2851] sm:$0xff]
        %v3190 = vld [vmem:[%s2851 + $0x8] sm:$0xff]
        %v3191 = vld [vmem:[%s2851 + $0x18] sm:$0xff]
        %v3192 = vld [vmem:[%s2851 + $0x20] sm:$0xff]
        %v3193 = vld [vmem:[%s2851 + $0x30] sm:$0xff]
        %v3194 = vld [vmem:[%s2851 + $0x38] sm:$0xff]
        %v3195 = vld [vmem:[%s2851 + $0x48] sm:$0xff]
        %v3196 = vld [vmem:[%s2851 + $0x50] sm:$0xff]
        %v3197 = vld [vmem:[%s2851 + $0x60] sm:$0xff]
        %v3198 = vld [vmem:[%s2851 + $0x68] sm:$0xff]
        %v3199 = vld [vmem:[%s2851 + $0x78] sm:$0xff]
        %v3200 = vld [vmem:[%s2851 + $0x80] sm:$0xff]
        %v3201 = vld [vmem:[%s2851 + $0x90] sm:$0xff]
        %v3202 = vld [vmem:[%s2851 + $0x98] sm:$0xff]
        %v3203 = vld [vmem:[%s2851 + $0xa8] sm:$0xff]
        %v3204 = vld [vmem:[%s2851 + $0xb0] sm:$0xff]
        %v3205 = vld [vmem:[%s2851 + $0xc0] sm:$0xff]
        %v3206 = vld [vmem:[%s2851 + $0xc8] sm:$0xff]
        %v3207 = vld [vmem:[%s2851 + $0xd8] sm:$0xff]
        %v3208 = vld [vmem:[%s2851 + $0xe0] sm:$0xff]
        %v3209 = vld [vmem:[%s2851 + $0xf0] sm:$0xff]
        %v3210 = vld [vmem:[%s2851 + $0xf8] sm:$0xff]
        %v3211 = vld [vmem:[%s2851 + $0x108] sm:$0xff]
        %v3212 = vld [vmem:[%s2851 + $0x110] sm:$0xff]
        %v3213 = vld [vmem:[%s2851 + $0x120] sm:$0xff]
        %v3214 = vld [vmem:[%s2851 + $0x128] sm:$0xff]
        %v3215 = vld [vmem:[%s2851 + $0x138] sm:$0xff]
        %v3216 = vld [vmem:[%s2851 + $0x140] sm:$0xff]
        %v3217 = vld [vmem:[%s2851 + $0x150] sm:$0xff]
        %v3218 = vld [vmem:[%s2851 + $0x158] sm:$0xff]
        %v3219 = vld [vmem:[%s2851 + $0x168] sm:$0xff]
        %v3220 = vld [vmem:[%s2851 + $0x170] sm:$0xff]
        %v3221 = vlaneseq
        %v3222 = vshrl.u32 %v3221, 7
        %v3223 = vsub.s32 0, %v3222
        %v3224 = vrot.slane %v3188, %v3223
        %v3225 = vmul.f32 %v3189, %v3224
        %v3226 = vmul.f32 %v3190, %v3224
        %v3227 = vmul.f32 %v3191, %v3224
        %v3228 = vmul.f32 %v3192, %v3224
        %v3229 = vmul.f32 %v3193, %v3224
        %v3230 = vmul.f32 %v3194, %v3224
        %v3231 = vmul.f32 %v3195, %v3224
        %v3232 = vmul.f32 %v3196, %v3224
        %v3233 = vmul.f32 %v3197, %v3224
        %v3234 = vmul.f32 %v3198, %v3224
        %v3235 = vmul.f32 %v3199, %v3224
        %v3236 = vmul.f32 %v3200, %v3224
        %v3237 = vmul.f32 %v3201, %v3224
        %v3238 = vmul.f32 %v3202, %v3224
        %v3239 = vmul.f32 %v3203, %v3224
        %v3240 = vmul.f32 %v3204, %v3224
        %v3241 = vmul.f32 %v3205, %v3224
        %v3242 = vmul.f32 %v3206, %v3224
        %v3243 = vmul.f32 %v3207, %v3224
        %v3244 = vmul.f32 %v3208, %v3224
        %v3245 = vmul.f32 %v3209, %v3224
        %v3246 = vmul.f32 %v3210, %v3224
        %v3247 = vmul.f32 %v3211, %v3224
        %v3248 = vmul.f32 %v3212, %v3224
        %v3249 = vmul.f32 %v3213, %v3224
        %v3250 = vmul.f32 %v3214, %v3224
        %v3251 = vmul.f32 %v3215, %v3224
        %v3252 = vmul.f32 %v3216, %v3224
        %v3253 = vmul.f32 %v3217, %v3224
        %v3254 = vmul.f32 %v3218, %v3224
        %v3255 = vmul.f32 %v3219, %v3224
        %v3256 = vmul.f32 %v3220, %v3224
        %v3257 = vadd.f32 %v3155, %v3225
        %v3258 = vadd.f32 %v3156, %v3226
        %v3259 = vadd.f32 %v3157, %v3227
        %v3260 = vadd.f32 %v3158, %v3228
        %v3261 = vadd.f32 %v3159, %v3229
        %v3262 = vadd.f32 %v3160, %v3230
        %v3263 = vadd.f32 %v3161, %v3231
        %v3264 = vadd.f32 %v3162, %v3232
        %v3265 = vadd.f32 %v3163, %v3233
        %v3266 = vadd.f32 %v3164, %v3234
        %v3267 = vadd.f32 %v3165, %v3235
        %v3268 = vadd.f32 %v3166, %v3236
        %v3269 = vadd.f32 %v3167, %v3237
        %v3270 = vadd.f32 %v3168, %v3238
        %v3271 = vadd.f32 %v3169, %v3239
        %v3272 = vadd.f32 %v3170, %v3240
        %v3273 = vadd.f32 %v3171, %v3241
        %v3274 = vadd.f32 %v3172, %v3242
        %v3275 = vadd.f32 %v3173, %v3243
        %v3276 = vadd.f32 %v3174, %v3244
        %v3277 = vadd.f32 %v3175, %v3245
        %v3278 = vadd.f32 %v3176, %v3246
        %v3279 = vadd.f32 %v3177, %v3247
        %v3280 = vadd.f32 %v3178, %v3248
        %v3281 = vadd.f32 %v3179, %v3249
        %v3282 = vadd.f32 %v3180, %v3250
        %v3283 = vadd.f32 %v3181, %v3251
        %v3284 = vadd.f32 %v3182, %v3252
        %v3285 = vadd.f32 %v3183, %v3253
        %v3286 = vadd.f32 %v3184, %v3254
        %v3287 = vadd.f32 %v3185, %v3255
        %v3288 = vadd.f32 %v3186, %v3256
        %v3289 = vld [vmem:[%s3187 + $0x1] sm:$0x1]
        %v3290 = vld [vmem:[%s2851 + $0x1] sm:$0xff]
        %v3291 = vld [vmem:[%s2851 + $0x9] sm:$0xff]
        %v3292 = vld [vmem:[%s2851 + $0x19] sm:$0xff]
        %v3293 = vld [vmem:[%s2851 + $0x21] sm:$0xff]
        %v3294 = vld [vmem:[%s2851 + $0x31] sm:$0xff]
        %v3295 = vld [vmem:[%s2851 + $0x39] sm:$0xff]
        %v3296 = vld [vmem:[%s2851 + $0x49] sm:$0xff]
        %v3297 = vld [vmem:[%s2851 + $0x51] sm:$0xff]
        %v3298 = vld [vmem:[%s2851 + $0x61] sm:$0xff]
        %v3299 = vld [vmem:[%s2851 + $0x69] sm:$0xff]
        %v3300 = vld [vmem:[%s2851 + $0x79] sm:$0xff]
        %v3301 = vld [vmem:[%s2851 + $0x81] sm:$0xff]
        %v3302 = vld [vmem:[%s2851 + $0x91] sm:$0xff]
        %v3303 = vld [vmem:[%s2851 + $0x99] sm:$0xff]
        %v3304 = vld [vmem:[%s2851 + $0xa9] sm:$0xff]
        %v3305 = vld [vmem:[%s2851 + $0xb1] sm:$0xff]
        %v3306 = vld [vmem:[%s2851 + $0xc1] sm:$0xff]
        %v3307 = vld [vmem:[%s2851 + $0xc9] sm:$0xff]
        %v3308 = vld [vmem:[%s2851 + $0xd9] sm:$0xff]
        %v3309 = vld [vmem:[%s2851 + $0xe1] sm:$0xff]
        %v3310 = vld [vmem:[%s2851 + $0xf1] sm:$0xff]
        %v3311 = vld [vmem:[%s2851 + $0xf9] sm:$0xff]
        %v3312 = vld [vmem:[%s2851 + $0x109] sm:$0xff]
        %v3313 = vld [vmem:[%s2851 + $0x111] sm:$0xff]
        %v3314 = vld [vmem:[%s2851 + $0x121] sm:$0xff]
        %v3315 = vld [vmem:[%s2851 + $0x129] sm:$0xff]
        %v3316 = vld [vmem:[%s2851 + $0x139] sm:$0xff]
        %v3317 = vld [vmem:[%s2851 + $0x141] sm:$0xff]
        %v3318 = vld [vmem:[%s2851 + $0x151] sm:$0xff]
        %v3319 = vld [vmem:[%s2851 + $0x159] sm:$0xff]
        %v3320 = vld [vmem:[%s2851 + $0x169] sm:$0xff]
        %v3321 = vld [vmem:[%s2851 + $0x171] sm:$0xff]
        %v3322 = vlaneseq
        %v3323 = vshrl.u32 %v3322, 7
        %v3324 = vsub.s32 0, %v3323
        %v3325 = vrot.slane %v3289, %v3324
        %v3326 = vmul.f32 %v3290, %v3325
        %v3327 = vmul.f32 %v3291, %v3325
        %v3328 = vmul.f32 %v3292, %v3325
        %v3329 = vmul.f32 %v3293, %v3325
        %v3330 = vmul.f32 %v3294, %v3325
        %v3331 = vmul.f32 %v3295, %v3325
        %v3332 = vmul.f32 %v3296, %v3325
        %v3333 = vmul.f32 %v3297, %v3325
        %v3334 = vmul.f32 %v3298, %v3325
        %v3335 = vmul.f32 %v3299, %v3325
        %v3336 = vmul.f32 %v3300, %v3325
        %v3337 = vmul.f32 %v3301, %v3325
        %v3338 = vmul.f32 %v3302, %v3325
        %v3339 = vmul.f32 %v3303, %v3325
        %v3340 = vmul.f32 %v3304, %v3325
        %v3341 = vmul.f32 %v3305, %v3325
        %v3342 = vmul.f32 %v3306, %v3325
        %v3343 = vmul.f32 %v3307, %v3325
        %v3344 = vmul.f32 %v3308, %v3325
        %v3345 = vmul.f32 %v3309, %v3325
        %v3346 = vmul.f32 %v3310, %v3325
        %v3347 = vmul.f32 %v3311, %v3325
        %v3348 = vmul.f32 %v3312, %v3325
        %v3349 = vmul.f32 %v3313, %v3325
        %v3350 = vmul.f32 %v3314, %v3325
        %v3351 = vmul.f32 %v3315, %v3325
        %v3352 = vmul.f32 %v3316, %v3325
        %v3353 = vmul.f32 %v3317, %v3325
        %v3354 = vmul.f32 %v3318, %v3325
        %v3355 = vmul.f32 %v3319, %v3325
        %v3356 = vmul.f32 %v3320, %v3325
        %v3357 = vmul.f32 %v3321, %v3325
        %v3358 = vadd.f32 %v3257, %v3326
        %v3359 = vadd.f32 %v3258, %v3327
        %v3360 = vadd.f32 %v3259, %v3328
        %v3361 = vadd.f32 %v3260, %v3329
        %v3362 = vadd.f32 %v3261, %v3330
        %v3363 = vadd.f32 %v3262, %v3331
        %v3364 = vadd.f32 %v3263, %v3332
        %v3365 = vadd.f32 %v3264, %v3333
        %v3366 = vadd.f32 %v3265, %v3334
        %v3367 = vadd.f32 %v3266, %v3335
        %v3368 = vadd.f32 %v3267, %v3336
        %v3369 = vadd.f32 %v3268, %v3337
        %v3370 = vadd.f32 %v3269, %v3338
        %v3371 = vadd.f32 %v3270, %v3339
        %v3372 = vadd.f32 %v3271, %v3340
        %v3373 = vadd.f32 %v3272, %v3341
        %v3374 = vadd.f32 %v3273, %v3342
        %v3375 = vadd.f32 %v3274, %v3343
        %v3376 = vadd.f32 %v3275, %v3344
        %v3377 = vadd.f32 %v3276, %v3345
        %v3378 = vadd.f32 %v3277, %v3346
        %v3379 = vadd.f32 %v3278, %v3347
        %v3380 = vadd.f32 %v3279, %v3348
        %v3381 = vadd.f32 %v3280, %v3349
        %v3382 = vadd.f32 %v3281, %v3350
        %v3383 = vadd.f32 %v3282, %v3351
        %v3384 = vadd.f32 %v3283, %v3352
        %v3385 = vadd.f32 %v3284, %v3353
        %v3386 = vadd.f32 %v3285, %v3354
        %v3387 = vadd.f32 %v3286, %v3355
        %v3388 = vadd.f32 %v3287, %v3356
        %v3389 = vadd.f32 %v3288, %v3357
        %v3390 = vld [vmem:[%s3187 + $0x2] sm:$0x1]
        %v3391 = vld [vmem:[%s2851 + $0x2] sm:$0xff]
        %v3392 = vld [vmem:[%s2851 + $0xa] sm:$0xff]
        %v3393 = vld [vmem:[%s2851 + $0x1a] sm:$0xff]
        %v3394 = vld [vmem:[%s2851 + $0x22] sm:$0xff]
        %v3395 = vld [vmem:[%s2851 + $0x32] sm:$0xff]
        %v3396 = vld [vmem:[%s2851 + $0x3a] sm:$0xff]
        %v3397 = vld [vmem:[%s2851 + $0x4a] sm:$0xff]
        %v3398 = vld [vmem:[%s2851 + $0x52] sm:$0xff]
        %v3399 = vld [vmem:[%s2851 + $0x62] sm:$0xff]
        %v3400 = vld [vmem:[%s2851 + $0x6a] sm:$0xff]
        %v3401 = vld [vmem:[%s2851 + $0x7a] sm:$0xff]
        %v3402 = vld [vmem:[%s2851 + $0x82] sm:$0xff]
        %v3403 = vld [vmem:[%s2851 + $0x92] sm:$0xff]
        %v3404 = vld [vmem:[%s2851 + $0x9a] sm:$0xff]
        %v3405 = vld [vmem:[%s2851 + $0xaa] sm:$0xff]
        %v3406 = vld [vmem:[%s2851 + $0xb2] sm:$0xff]
        %v3407 = vld [vmem:[%s2851 + $0xc2] sm:$0xff]
        %v3408 = vld [vmem:[%s2851 + $0xca] sm:$0xff]
        %v3409 = vld [vmem:[%s2851 + $0xda] sm:$0xff]
        %v3410 = vld [vmem:[%s2851 + $0xe2] sm:$0xff]
        %v3411 = vld [vmem:[%s2851 + $0xf2] sm:$0xff]
        %v3412 = vld [vmem:[%s2851 + $0xfa] sm:$0xff]
        %v3413 = vld [vmem:[%s2851 + $0x10a] sm:$0xff]
        %v3414 = vld [vmem:[%s2851 + $0x112] sm:$0xff]
        %v3415 = vld [vmem:[%s2851 + $0x122] sm:$0xff]
        %v3416 = vld [vmem:[%s2851 + $0x12a] sm:$0xff]
        %v3417 = vld [vmem:[%s2851 + $0x13a] sm:$0xff]
        %v3418 = vld [vmem:[%s2851 + $0x142] sm:$0xff]
        %v3419 = vld [vmem:[%s2851 + $0x152] sm:$0xff]
        %v3420 = vld [vmem:[%s2851 + $0x15a] sm:$0xff]
        %v3421 = vld [vmem:[%s2851 + $0x16a] sm:$0xff]
        %v3422 = vld [vmem:[%s2851 + $0x172] sm:$0xff]
        %v3423 = vlaneseq
        %v3424 = vshrl.u32 %v3423, 7
        %v3425 = vsub.s32 0, %v3424
        %v3426 = vrot.slane %v3390, %v3425
        %v3427 = vmul.f32 %v3391, %v3426
        %v3428 = vmul.f32 %v3392, %v3426
        %v3429 = vmul.f32 %v3393, %v3426
        %v3430 = vmul.f32 %v3394, %v3426
        %v3431 = vmul.f32 %v3395, %v3426
        %v3432 = vmul.f32 %v3396, %v3426
        %v3433 = vmul.f32 %v3397, %v3426
        %v3434 = vmul.f32 %v3398, %v3426
        %v3435 = vmul.f32 %v3399, %v3426
        %v3436 = vmul.f32 %v3400, %v3426
        %v3437 = vmul.f32 %v3401, %v3426
        %v3438 = vmul.f32 %v3402, %v3426
        %v3439 = vmul.f32 %v3403, %v3426
        %v3440 = vmul.f32 %v3404, %v3426
        %v3441 = vmul.f32 %v3405, %v3426
        %v3442 = vmul.f32 %v3406, %v3426
        %v3443 = vmul.f32 %v3407, %v3426
        %v3444 = vmul.f32 %v3408, %v3426
        %v3445 = vmul.f32 %v3409, %v3426
        %v3446 = vmul.f32 %v3410, %v3426
        %v3447 = vmul.f32 %v3411, %v3426
        %v3448 = vmul.f32 %v3412, %v3426
        %v3449 = vmul.f32 %v3413, %v3426
        %v3450 = vmul.f32 %v3414, %v3426
        %v3451 = vmul.f32 %v3415, %v3426
        %v3452 = vmul.f32 %v3416, %v3426
        %v3453 = vmul.f32 %v3417, %v3426
        %v3454 = vmul.f32 %v3418, %v3426
        %v3455 = vmul.f32 %v3419, %v3426
        %v3456 = vmul.f32 %v3420, %v3426
        %v3457 = vmul.f32 %v3421, %v3426
        %v3458 = vmul.f32 %v3422, %v3426
        %v3459 = vadd.f32 %v3358, %v3427
        %v3460 = vadd.f32 %v3359, %v3428
        %v3461 = vadd.f32 %v3360, %v3429
        %v3462 = vadd.f32 %v3361, %v3430
        %v3463 = vadd.f32 %v3362, %v3431
        %v3464 = vadd.f32 %v3363, %v3432
        %v3465 = vadd.f32 %v3364, %v3433
        %v3466 = vadd.f32 %v3365, %v3434
        %v3467 = vadd.f32 %v3366, %v3435
        %v3468 = vadd.f32 %v3367, %v3436
        %v3469 = vadd.f32 %v3368, %v3437
        %v3470 = vadd.f32 %v3369, %v3438
        %v3471 = vadd.f32 %v3370, %v3439
        %v3472 = vadd.f32 %v3371, %v3440
        %v3473 = vadd.f32 %v3372, %v3441
        %v3474 = vadd.f32 %v3373, %v3442
        %v3475 = vadd.f32 %v3374, %v3443
        %v3476 = vadd.f32 %v3375, %v3444
        %v3477 = vadd.f32 %v3376, %v3445
        %v3478 = vadd.f32 %v3377, %v3446
        %v3479 = vadd.f32 %v3378, %v3447
        %v3480 = vadd.f32 %v3379, %v3448
        %v3481 = vadd.f32 %v3380, %v3449
        %v3482 = vadd.f32 %v3381, %v3450
        %v3483 = vadd.f32 %v3382, %v3451
        %v3484 = vadd.f32 %v3383, %v3452
        %v3485 = vadd.f32 %v3384, %v3453
        %v3486 = vadd.f32 %v3385, %v3454
        %v3487 = vadd.f32 %v3386, %v3455
        %v3488 = vadd.f32 %v3387, %v3456
        %v3489 = vadd.f32 %v3388, %v3457
        %v3490 = vadd.f32 %v3389, %v3458
        %s3491 = scalar_lea.vmem %s17, 8
        %v3492 = vld [vmem:[%s3491] sm:$0x1]
        %s3493 = scalar_lea.vmem [#allocation3], 48
        %v3494 = vld [vmem:[%s3493] sm:$0xff]
        %v3495 = vld [vmem:[%s3493 + $0x8] sm:$0xff]
        %v3496 = vld [vmem:[%s3493 + $0x18] sm:$0xff]
        %v3497 = vld [vmem:[%s3493 + $0x20] sm:$0xff]
        %v3498 = vld [vmem:[%s3493 + $0x30] sm:$0xff]
        %v3499 = vld [vmem:[%s3493 + $0x38] sm:$0xff]
        %v3500 = vld [vmem:[%s3493 + $0x48] sm:$0xff]
        %v3501 = vld [vmem:[%s3493 + $0x50] sm:$0xff]
        %v3502 = vld [vmem:[%s3493 + $0x60] sm:$0xff]
        %v3503 = vld [vmem:[%s3493 + $0x68] sm:$0xff]
        %v3504 = vld [vmem:[%s3493 + $0x78] sm:$0xff]
        %v3505 = vld [vmem:[%s3493 + $0x80] sm:$0xff]
        %v3506 = vld [vmem:[%s3493 + $0x90] sm:$0xff]
        %v3507 = vld [vmem:[%s3493 + $0x98] sm:$0xff]
        %v3508 = vld [vmem:[%s3493 + $0xa8] sm:$0xff]
        %v3509 = vld [vmem:[%s3493 + $0xb0] sm:$0xff]
        %v3510 = vld [vmem:[%s3493 + $0xc0] sm:$0xff]
        %v3511 = vld [vmem:[%s3493 + $0xc8] sm:$0xff]
        %v3512 = vld [vmem:[%s3493 + $0xd8] sm:$0xff]
        %v3513 = vld [vmem:[%s3493 + $0xe0] sm:$0xff]
        %v3514 = vld [vmem:[%s3493 + $0xf0] sm:$0xff]
        %v3515 = vld [vmem:[%s3493 + $0xf8] sm:$0xff]
        %v3516 = vld [vmem:[%s3493 + $0x108] sm:$0xff]
        %v3517 = vld [vmem:[%s3493 + $0x110] sm:$0xff]
        %v3518 = vld [vmem:[%s3493 + $0x120] sm:$0xff]
        %v3519 = vld [vmem:[%s3493 + $0x128] sm:$0xff]
        %v3520 = vld [vmem:[%s3493 + $0x138] sm:$0xff]
        %v3521 = vld [vmem:[%s3493 + $0x140] sm:$0xff]
        %v3522 = vld [vmem:[%s3493 + $0x150] sm:$0xff]
        %v3523 = vld [vmem:[%s3493 + $0x158] sm:$0xff]
        %v3524 = vld [vmem:[%s3493 + $0x168] sm:$0xff]
        %v3525 = vld [vmem:[%s3493 + $0x170] sm:$0xff]
        %v3526 = vlaneseq
        %v3527 = vshrl.u32 %v3526, 7
        %v3528 = vsub.s32 0, %v3527
        %v3529 = vrot.slane %v3492, %v3528
        %v3530 = vmul.f32 %v3494, %v3529
        %v3531 = vmul.f32 %v3495, %v3529
        %v3532 = vmul.f32 %v3496, %v3529
        %v3533 = vmul.f32 %v3497, %v3529
        %v3534 = vmul.f32 %v3498, %v3529
        %v3535 = vmul.f32 %v3499, %v3529
        %v3536 = vmul.f32 %v3500, %v3529
        %v3537 = vmul.f32 %v3501, %v3529
        %v3538 = vmul.f32 %v3502, %v3529
        %v3539 = vmul.f32 %v3503, %v3529
        %v3540 = vmul.f32 %v3504, %v3529
        %v3541 = vmul.f32 %v3505, %v3529
        %v3542 = vmul.f32 %v3506, %v3529
        %v3543 = vmul.f32 %v3507, %v3529
        %v3544 = vmul.f32 %v3508, %v3529
        %v3545 = vmul.f32 %v3509, %v3529
        %v3546 = vmul.f32 %v3510, %v3529
        %v3547 = vmul.f32 %v3511, %v3529
        %v3548 = vmul.f32 %v3512, %v3529
        %v3549 = vmul.f32 %v3513, %v3529
        %v3550 = vmul.f32 %v3514, %v3529
        %v3551 = vmul.f32 %v3515, %v3529
        %v3552 = vmul.f32 %v3516, %v3529
        %v3553 = vmul.f32 %v3517, %v3529
        %v3554 = vmul.f32 %v3518, %v3529
        %v3555 = vmul.f32 %v3519, %v3529
        %v3556 = vmul.f32 %v3520, %v3529
        %v3557 = vmul.f32 %v3521, %v3529
        %v3558 = vmul.f32 %v3522, %v3529
        %v3559 = vmul.f32 %v3523, %v3529
        %v3560 = vmul.f32 %v3524, %v3529
        %v3561 = vmul.f32 %v3525, %v3529
        %v3562 = vadd.f32 %v3459, %v3530
        %v3563 = vadd.f32 %v3460, %v3531
        %v3564 = vadd.f32 %v3461, %v3532
        %v3565 = vadd.f32 %v3462, %v3533
        %v3566 = vadd.f32 %v3463, %v3534
        %v3567 = vadd.f32 %v3464, %v3535
        %v3568 = vadd.f32 %v3465, %v3536
        %v3569 = vadd.f32 %v3466, %v3537
        %v3570 = vadd.f32 %v3467, %v3538
        %v3571 = vadd.f32 %v3468, %v3539
        %v3572 = vadd.f32 %v3469, %v3540
        %v3573 = vadd.f32 %v3470, %v3541
        %v3574 = vadd.f32 %v3471, %v3542
        %v3575 = vadd.f32 %v3472, %v3543
        %v3576 = vadd.f32 %v3473, %v3544
        %v3577 = vadd.f32 %v3474, %v3545
        %v3578 = vadd.f32 %v3475, %v3546
        %v3579 = vadd.f32 %v3476, %v3547
        %v3580 = vadd.f32 %v3477, %v3548
        %v3581 = vadd.f32 %v3478, %v3549
        %v3582 = vadd.f32 %v3479, %v3550
        %v3583 = vadd.f32 %v3480, %v3551
        %v3584 = vadd.f32 %v3481, %v3552
        %v3585 = vadd.f32 %v3482, %v3553
        %v3586 = vadd.f32 %v3483, %v3554
        %v3587 = vadd.f32 %v3484, %v3555
        %v3588 = vadd.f32 %v3485, %v3556
        %v3589 = vadd.f32 %v3486, %v3557
        %v3590 = vadd.f32 %v3487, %v3558
        %v3591 = vadd.f32 %v3488, %v3559
        %v3592 = vadd.f32 %v3489, %v3560
        %v3593 = vadd.f32 %v3490, %v3561
        %v3594 = vld [vmem:[%s3491 + $0x1] sm:$0x1]
        %v3595 = vld [vmem:[%s3493 + $0x1] sm:$0xff]
        %v3596 = vld [vmem:[%s3493 + $0x9] sm:$0xff]
        %v3597 = vld [vmem:[%s3493 + $0x19] sm:$0xff]
        %v3598 = vld [vmem:[%s3493 + $0x21] sm:$0xff]
        %v3599 = vld [vmem:[%s3493 + $0x31] sm:$0xff]
        %v3600 = vld [vmem:[%s3493 + $0x39] sm:$0xff]
        %v3601 = vld [vmem:[%s3493 + $0x49] sm:$0xff]
        %v3602 = vld [vmem:[%s3493 + $0x51] sm:$0xff]
        %v3603 = vld [vmem:[%s3493 + $0x61] sm:$0xff]
        %v3604 = vld [vmem:[%s3493 + $0x69] sm:$0xff]
        %v3605 = vld [vmem:[%s3493 + $0x79] sm:$0xff]
        %v3606 = vld [vmem:[%s3493 + $0x81] sm:$0xff]
        %v3607 = vld [vmem:[%s3493 + $0x91] sm:$0xff]
        %v3608 = vld [vmem:[%s3493 + $0x99] sm:$0xff]
        %v3609 = vld [vmem:[%s3493 + $0xa9] sm:$0xff]
        %v3610 = vld [vmem:[%s3493 + $0xb1] sm:$0xff]
        %v3611 = vld [vmem:[%s3493 + $0xc1] sm:$0xff]
        %v3612 = vld [vmem:[%s3493 + $0xc9] sm:$0xff]
        %v3613 = vld [vmem:[%s3493 + $0xd9] sm:$0xff]
        %v3614 = vld [vmem:[%s3493 + $0xe1] sm:$0xff]
        %v3615 = vld [vmem:[%s3493 + $0xf1] sm:$0xff]
        %v3616 = vld [vmem:[%s3493 + $0xf9] sm:$0xff]
        %v3617 = vld [vmem:[%s3493 + $0x109] sm:$0xff]
        %v3618 = vld [vmem:[%s3493 + $0x111] sm:$0xff]
        %v3619 = vld [vmem:[%s3493 + $0x121] sm:$0xff]
        %v3620 = vld [vmem:[%s3493 + $0x129] sm:$0xff]
        %v3621 = vld [vmem:[%s3493 + $0x139] sm:$0xff]
        %v3622 = vld [vmem:[%s3493 + $0x141] sm:$0xff]
        %v3623 = vld [vmem:[%s3493 + $0x151] sm:$0xff]
        %v3624 = vld [vmem:[%s3493 + $0x159] sm:$0xff]
        %v3625 = vld [vmem:[%s3493 + $0x169] sm:$0xff]
        %v3626 = vld [vmem:[%s3493 + $0x171] sm:$0xff]
        %v3627 = vlaneseq
        %v3628 = vshrl.u32 %v3627, 7
        %v3629 = vsub.s32 0, %v3628
        %v3630 = vrot.slane %v3594, %v3629
        %v3631 = vmul.f32 %v3595, %v3630
        %v3632 = vmul.f32 %v3596, %v3630
        %v3633 = vmul.f32 %v3597, %v3630
        %v3634 = vmul.f32 %v3598, %v3630
        %v3635 = vmul.f32 %v3599, %v3630
        %v3636 = vmul.f32 %v3600, %v3630
        %v3637 = vmul.f32 %v3601, %v3630
        %v3638 = vmul.f32 %v3602, %v3630
        %v3639 = vmul.f32 %v3603, %v3630
        %v3640 = vmul.f32 %v3604, %v3630
        %v3641 = vmul.f32 %v3605, %v3630
        %v3642 = vmul.f32 %v3606, %v3630
        %v3643 = vmul.f32 %v3607, %v3630
        %v3644 = vmul.f32 %v3608, %v3630
        %v3645 = vmul.f32 %v3609, %v3630
        %v3646 = vmul.f32 %v3610, %v3630
        %v3647 = vmul.f32 %v3611, %v3630
        %v3648 = vmul.f32 %v3612, %v3630
        %v3649 = vmul.f32 %v3613, %v3630
        %v3650 = vmul.f32 %v3614, %v3630
        %v3651 = vmul.f32 %v3615, %v3630
        %v3652 = vmul.f32 %v3616, %v3630
        %v3653 = vmul.f32 %v3617, %v3630
        %v3654 = vmul.f32 %v3618, %v3630
        %v3655 = vmul.f32 %v3619, %v3630
        %v3656 = vmul.f32 %v3620, %v3630
        %v3657 = vmul.f32 %v3621, %v3630
        %v3658 = vmul.f32 %v3622, %v3630
        %v3659 = vmul.f32 %v3623, %v3630
        %v3660 = vmul.f32 %v3624, %v3630
        %v3661 = vmul.f32 %v3625, %v3630
        %v3662 = vmul.f32 %v3626, %v3630
        %v3663 = vadd.f32 %v3562, %v3631
        %v3664 = vadd.f32 %v3563, %v3632
        %v3665 = vadd.f32 %v3564, %v3633
        %v3666 = vadd.f32 %v3565, %v3634
        %v3667 = vadd.f32 %v3566, %v3635
        %v3668 = vadd.f32 %v3567, %v3636
        %v3669 = vadd.f32 %v3568, %v3637
        %v3670 = vadd.f32 %v3569, %v3638
        %v3671 = vadd.f32 %v3570, %v3639
        %v3672 = vadd.f32 %v3571, %v3640
        %v3673 = vadd.f32 %v3572, %v3641
        %v3674 = vadd.f32 %v3573, %v3642
        %v3675 = vadd.f32 %v3574, %v3643
        %v3676 = vadd.f32 %v3575, %v3644
        %v3677 = vadd.f32 %v3576, %v3645
        %v3678 = vadd.f32 %v3577, %v3646
        %v3679 = vadd.f32 %v3578, %v3647
        %v3680 = vadd.f32 %v3579, %v3648
        %v3681 = vadd.f32 %v3580, %v3649
        %v3682 = vadd.f32 %v3581, %v3650
        %v3683 = vadd.f32 %v3582, %v3651
        %v3684 = vadd.f32 %v3583, %v3652
        %v3685 = vadd.f32 %v3584, %v3653
        %v3686 = vadd.f32 %v3585, %v3654
        %v3687 = vadd.f32 %v3586, %v3655
        %v3688 = vadd.f32 %v3587, %v3656
        %v3689 = vadd.f32 %v3588, %v3657
        %v3690 = vadd.f32 %v3589, %v3658
        %v3691 = vadd.f32 %v3590, %v3659
        %v3692 = vadd.f32 %v3591, %v3660
        %v3693 = vadd.f32 %v3592, %v3661
        %v3694 = vadd.f32 %v3593, %v3662
        %v3695 = vld [vmem:[%s3491 + $0x2] sm:$0x1]
        %v3696 = vld [vmem:[%s3493 + $0x2] sm:$0xff]
        %v3697 = vld [vmem:[%s3493 + $0xa] sm:$0xff]
        %v3698 = vld [vmem:[%s3493 + $0x1a] sm:$0xff]
        %v3699 = vld [vmem:[%s3493 + $0x22] sm:$0xff]
        %v3700 = vld [vmem:[%s3493 + $0x32] sm:$0xff]
        %v3701 = vld [vmem:[%s3493 + $0x3a] sm:$0xff]
        %v3702 = vld [vmem:[%s3493 + $0x4a] sm:$0xff]
        %v3703 = vld [vmem:[%s3493 + $0x52] sm:$0xff]
        %v3704 = vld [vmem:[%s3493 + $0x62] sm:$0xff]
        %v3705 = vld [vmem:[%s3493 + $0x6a] sm:$0xff]
        %v3706 = vld [vmem:[%s3493 + $0x7a] sm:$0xff]
        %v3707 = vld [vmem:[%s3493 + $0x82] sm:$0xff]
        %v3708 = vld [vmem:[%s3493 + $0x92] sm:$0xff]
        %v3709 = vld [vmem:[%s3493 + $0x9a] sm:$0xff]
        %v3710 = vld [vmem:[%s3493 + $0xaa] sm:$0xff]
        %v3711 = vld [vmem:[%s3493 + $0xb2] sm:$0xff]
        %v3712 = vld [vmem:[%s3493 + $0xc2] sm:$0xff]
        %v3713 = vld [vmem:[%s3493 + $0xca] sm:$0xff]
        %v3714 = vld [vmem:[%s3493 + $0xda] sm:$0xff]
        %v3715 = vld [vmem:[%s3493 + $0xe2] sm:$0xff]
        %v3716 = vld [vmem:[%s3493 + $0xf2] sm:$0xff]
        %v3717 = vld [vmem:[%s3493 + $0xfa] sm:$0xff]
        %v3718 = vld [vmem:[%s3493 + $0x10a] sm:$0xff]
        %v3719 = vld [vmem:[%s3493 + $0x112] sm:$0xff]
        %v3720 = vld [vmem:[%s3493 + $0x122] sm:$0xff]
        %v3721 = vld [vmem:[%s3493 + $0x12a] sm:$0xff]
        %v3722 = vld [vmem:[%s3493 + $0x13a] sm:$0xff]
        %v3723 = vld [vmem:[%s3493 + $0x142] sm:$0xff]
        %v3724 = vld [vmem:[%s3493 + $0x152] sm:$0xff]
        %v3725 = vld [vmem:[%s3493 + $0x15a] sm:$0xff]
        %v3726 = vld [vmem:[%s3493 + $0x16a] sm:$0xff]
        %v3727 = vld [vmem:[%s3493 + $0x172] sm:$0xff]
        %v3728 = vlaneseq
        %v3729 = vshrl.u32 %v3728, 7
        %v3730 = vsub.s32 0, %v3729
        %v3731 = vrot.slane %v3695, %v3730
        %v3732 = vmul.f32 %v3696, %v3731
        %v3733 = vmul.f32 %v3697, %v3731
        %v3734 = vmul.f32 %v3698, %v3731
        %v3735 = vmul.f32 %v3699, %v3731
        %v3736 = vmul.f32 %v3700, %v3731
        %v3737 = vmul.f32 %v3701, %v3731
        %v3738 = vmul.f32 %v3702, %v3731
        %v3739 = vmul.f32 %v3703, %v3731
        %v3740 = vmul.f32 %v3704, %v3731
        %v3741 = vmul.f32 %v3705, %v3731
        %v3742 = vmul.f32 %v3706, %v3731
        %v3743 = vmul.f32 %v3707, %v3731
        %v3744 = vmul.f32 %v3708, %v3731
        %v3745 = vmul.f32 %v3709, %v3731
        %v3746 = vmul.f32 %v3710, %v3731
        %v3747 = vmul.f32 %v3711, %v3731
        %v3748 = vmul.f32 %v3712, %v3731
        %v3749 = vmul.f32 %v3713, %v3731
        %v3750 = vmul.f32 %v3714, %v3731
        %v3751 = vmul.f32 %v3715, %v3731
        %v3752 = vmul.f32 %v3716, %v3731
        %v3753 = vmul.f32 %v3717, %v3731
        %v3754 = vmul.f32 %v3718, %v3731
        %v3755 = vmul.f32 %v3719, %v3731
        %v3756 = vmul.f32 %v3720, %v3731
        %v3757 = vmul.f32 %v3721, %v3731
        %v3758 = vmul.f32 %v3722, %v3731
        %v3759 = vmul.f32 %v3723, %v3731
        %v3760 = vmul.f32 %v3724, %v3731
        %v3761 = vmul.f32 %v3725, %v3731
        %v3762 = vmul.f32 %v3726, %v3731
        %v3763 = vmul.f32 %v3727, %v3731
        %v3764 = vadd.f32 %v3663, %v3732
        %v3765 = vadd.f32 %v3664, %v3733
        %v3766 = vadd.f32 %v3665, %v3734
        %v3767 = vadd.f32 %v3666, %v3735
        %v3768 = vadd.f32 %v3667, %v3736
        %v3769 = vadd.f32 %v3668, %v3737
        %v3770 = vadd.f32 %v3669, %v3738
        %v3771 = vadd.f32 %v3670, %v3739
        %v3772 = vadd.f32 %v3671, %v3740
        %v3773 = vadd.f32 %v3672, %v3741
        %v3774 = vadd.f32 %v3673, %v3742
        %v3775 = vadd.f32 %v3674, %v3743
        %v3776 = vadd.f32 %v3675, %v3744
        %v3777 = vadd.f32 %v3676, %v3745
        %v3778 = vadd.f32 %v3677, %v3746
        %v3779 = vadd.f32 %v3678, %v3747
        %v3780 = vadd.f32 %v3679, %v3748
        %v3781 = vadd.f32 %v3680, %v3749
        %v3782 = vadd.f32 %v3681, %v3750
        %v3783 = vadd.f32 %v3682, %v3751
        %v3784 = vadd.f32 %v3683, %v3752
        %v3785 = vadd.f32 %v3684, %v3753
        %v3786 = vadd.f32 %v3685, %v3754
        %v3787 = vadd.f32 %v3686, %v3755
        %v3788 = vadd.f32 %v3687, %v3756
        %v3789 = vadd.f32 %v3688, %v3757
        %v3790 = vadd.f32 %v3689, %v3758
        %v3791 = vadd.f32 %v3690, %v3759
        %v3792 = vadd.f32 %v3691, %v3760
        %v3793 = vadd.f32 %v3692, %v3761
        %v3794 = vadd.f32 %v3693, %v3762
        %v3795 = vadd.f32 %v3694, %v3763
        %v3796 = vld [vmem:[%s19] sm:$0xff]
        %v3797 = vld [vmem:[%s19 + $0x8] sm:$0xff]
        %v3798 = vld [vmem:[%s19 + $0x10] sm:$0xff]
        %v3799 = vld [vmem:[%s19 + $0x18] sm:$0xff]
        %v3801 = vsel %vm2795, %v3764, 0
        %v3804 = vsel %vm2795, %v3765, 0
        %v3807 = vsel %vm2795, %v3766, 0
        %v3810 = vsel %vm2795, %v3767, 0
        %v3813 = vsel %vm2795, %v3768, 0
        %v3816 = vsel %vm2795, %v3769, 0
        %v3819 = vsel %vm2795, %v3770, 0
        %v3822 = vsel %vm2795, %v3771, 0
        %v3825 = vsel %vm2795, %v3772, 0
        %v3828 = vsel %vm2795, %v3773, 0
        %v3831 = vsel %vm2795, %v3774, 0
        %v3834 = vsel %vm2795, %v3775, 0
        %v3837 = vsel %vm2795, %v3776, 0
        %v3840 = vsel %vm2795, %v3777, 0
        %v3843 = vsel %vm2795, %v3778, 0
        %v3846 = vsel %vm2795, %v3779, 0
        %v3849 = vsel %vm2795, %v3780, 0
        %v3852 = vsel %vm2795, %v3781, 0
        %v3855 = vsel %vm2795, %v3782, 0
        %v3858 = vsel %vm2795, %v3783, 0
        %v3861 = vsel %vm2795, %v3784, 0
        %v3864 = vsel %vm2795, %v3785, 0
        %v3867 = vsel %vm2795, %v3786, 0
        %v3870 = vsel %vm2795, %v3787, 0
        %v3873 = vsel %vm2795, %v3788, 0
        %v3876 = vsel %vm2795, %v3789, 0
        %v3879 = vsel %vm2795, %v3790, 0
        %v3882 = vsel %vm2795, %v3791, 0
        %v3885 = vsel %vm2795, %v3792, 0
        %v3888 = vsel %vm2795, %v3793, 0
        %v3891 = vsel %vm2795, %v3794, 0
        %v3894 = vsel %vm2795, %v3795, 0
        %3896 = vmatprep.subr.mxu0 0.0
        %3897 = vmatpush1.msra.mxu0 %v3796
        %3898 = vmatprep.subr.mxu0 0.0
        %3899 = vmatpush1.msra.mxu0 %v3797
        %3900 = vmatprep.subr.mxu0 0.0
        %3901 = vmatpush1.msra.mxu0 %v3798
        %3902 = vmatprep.subr.mxu0 0.0
        %3903 = vmatpush1.msra.mxu0 %v3799
        %3904 = vmatprep.subr.mxu0 0.0
        %3905 = vmatpush1.msra.mxu0 0.0
        %3906 = vmatprep.subr.mxu0 0.0
        %3907 = vmatpush1.msra.mxu0 0.0
        %3908 = vmatprep.subr.mxu0 0.0
        %3909 = vmatpush1.msra.mxu0 0.0
        %3910 = vmatprep.subr.mxu0 0.0
        %3911 = vmatpush1.msra.mxu0 0.0
        %3912 = vmatprep.subr.mxu0 0.0
        %3913 = vmatpush1.msra.mxu0 0.0
        %3914 = vmatprep.subr.mxu0 0.0
        %3915 = vmatpush1.msra.mxu0 0.0
        %3916 = vmatprep.subr.mxu0 0.0
        %3917 = vmatpush1.msra.mxu0 0.0
        %3918 = vmatprep.subr.mxu0 0.0
        %3919 = vmatpush1.msra.mxu0 0.0
        %3920 = vmatprep.subr.mxu0 0.0
        %3921 = vmatpush1.msra.mxu0 0.0
        %3922 = vmatprep.subr.mxu0 0.0
        %3923 = vmatpush1.msra.mxu0 0.0
        %3924 = vmatprep.subr.mxu0 0.0
        %3925 = vmatpush1.msra.mxu0 0.0
        %3926 = vmatprep.subr.mxu0 0.0
        %3927 = vmatpush1.msra.mxu0 0.0
        %3928 = vmatprep.subr.mxu0 0.0
        %3929 = vmatpush1.msra.mxu0 0.0
        %3930 = vmatprep.subr.mxu0 0.0
        %3931 = vmatpush1.msra.mxu0 0.0
        %3932 = vmatprep.subr.mxu0 0.0
        %3933 = vmatpush1.msra.mxu0 0.0
        %3934 = vmatprep.subr.mxu0 0.0
        %3935 = vmatpush1.msra.mxu0 0.0
        %3936 = vmatprep.subr.mxu0 0.0
        %3937 = vmatpush1.msra.mxu0 0.0
        %3938 = vmatprep.subr.mxu0 0.0
        %3939 = vmatpush1.msra.mxu0 0.0
        %3940 = vmatprep.subr.mxu0 0.0
        %3941 = vmatpush1.msra.mxu0 0.0
        %3942 = vmatprep.subr.mxu0 0.0
        %3943 = vmatpush1.msra.mxu0 0.0
        %3944 = vmatprep.subr.mxu0 0.0
        %3945 = vmatpush1.msra.mxu0 0.0
        %3946 = vmatprep.subr.mxu0 0.0
        %3947 = vmatpush1.msra.mxu0 0.0
        %3948 = vmatprep.subr.mxu0 0.0
        %3949 = vmatpush1.msra.mxu0 0.0
        %3950 = vmatprep.subr.mxu0 0.0
        %3951 = vmatpush1.msra.mxu0 0.0
        %3952 = vmatprep.subr.mxu0 0.0
        %3953 = vmatpush1.msra.mxu0 0.0
        %3954 = vmatprep.subr.mxu0 0.0
        %3955 = vmatpush1.msra.mxu0 0.0
        %3956 = vmatprep.subr.mxu0 0.0
        %3957 = vmatpush1.msra.mxu0 0.0
        %3958 = vmatprep.subr.mxu0 0.0
        %3959 = vmatpush1.msra.mxu0 0.0
        %3960 = vmatprep.mubr.f32.mxu0 0.0
        %3961 = vmatmul.mubr.f32.gmra.mrb[0].mxu0 %v3801
        %v3962 = vpop.f32.mrb[0].mxu0
        %v3963 = vadd.f32 0.0, %v3962
        %v3964 = vpop.f32.mrb[0].mxu0
        %3965 = vmatprep.mubr.f32.mxu0 0.0
        %3966 = vmatmul.mubr.f32.gmra.mrb[0].mxu0 %v3804
        %v3967 = vpop.f32.mrb[0].mxu0
        %v3968 = vadd.f32 0.0, %v3967
        %v3969 = vpop.f32.mrb[0].mxu0
        %3970 = vmatprep.mubr.f32.mxu0 0.0
        %3971 = vmatmul.mubr.f32.gmra.mrb[0].mxu0 %v3807
        %v3972 = vpop.f32.mrb[0].mxu0
        %v3973 = vadd.f32 0.0, %v3972
        %v3974 = vpop.f32.mrb[0].mxu0
        %3975 = vmatprep.mubr.f32.mxu0 0.0
        %3976 = vmatmul.mubr.f32.gmra.mrb[0].mxu0 %v3810
        %v3977 = vpop.f32.mrb[0].mxu0
        %v3978 = vadd.f32 0.0, %v3977
        %v3979 = vpop.f32.mrb[0].mxu0
        %3980 = vmatprep.mubr.f32.mxu0 0.0
        %3981 = vmatmul.mubr.f32.gmra.mrb[0].mxu0 %v3813
        %v3982 = vpop.f32.mrb[0].mxu0
        %v3983 = vadd.f32 0.0, %v3982
        %v3984 = vpop.f32.mrb[0].mxu0
        %3985 = vmatprep.mubr.f32.mxu0 0.0
        %3986 = vmatmul.mubr.f32.gmra.mrb[0].mxu0 %v3816
        %v3987 = vpop.f32.mrb[0].mxu0
        %v3988 = vadd.f32 0.0, %v3987
        %v3989 = vpop.f32.mrb[0].mxu0
        %3990 = vmatprep.mubr.f32.mxu0 0.0
        %3991 = vmatmul.mubr.f32.gmra.mrb[0].mxu0 %v3819
        %v3992 = vpop.f32.mrb[0].mxu0
        %v3993 = vadd.f32 0.0, %v3992
        %v3994 = vpop.f32.mrb[0].mxu0
        %3995 = vmatprep.mubr.f32.mxu0 0.0
        %3996 = vmatmul.mubr.f32.gmra.mrb[0].mxu0 %v3822
        %v3997 = vpop.f32.mrb[0].mxu0
        %v3998 = vadd.f32 0.0, %v3997
        %v3999 = vpop.f32.mrb[0].mxu0
        %4000 = vmatprep.mubr.f32.mxu0 0.0
        %4001 = vmatmul.mubr.f32.gmra.mrb[0].mxu0 %v3825
        %v4002 = vpop.f32.mrb[0].mxu0
        %v4003 = vadd.f32 0.0, %v4002
        %v4004 = vpop.f32.mrb[0].mxu0
        %4005 = vmatprep.mubr.f32.mxu0 0.0
        %4006 = vmatmul.mubr.f32.gmra.mrb[0].mxu0 %v3828
        %v4007 = vpop.f32.mrb[0].mxu0
        %v4008 = vadd.f32 0.0, %v4007
        %v4009 = vpop.f32.mrb[0].mxu0
        %4010 = vmatprep.mubr.f32.mxu0 0.0
        %4011 = vmatmul.mubr.f32.gmra.mrb[0].mxu0 %v3831
        %v4012 = vpop.f32.mrb[0].mxu0
        %v4013 = vadd.f32 0.0, %v4012
        %v4014 = vpop.f32.mrb[0].mxu0
        %4015 = vmatprep.mubr.f32.mxu0 0.0
        %4016 = vmatmul.mubr.f32.gmra.mrb[0].mxu0 %v3834
        %v4017 = vpop.f32.mrb[0].mxu0
        %v4018 = vadd.f32 0.0, %v4017
        %v4019 = vpop.f32.mrb[0].mxu0
        %4020 = vmatprep.mubr.f32.mxu0 0.0
        %4021 = vmatmul.mubr.f32.gmra.mrb[0].mxu0 %v3837
        %v4022 = vpop.f32.mrb[0].mxu0
        %v4023 = vadd.f32 0.0, %v4022
        %v4024 = vpop.f32.mrb[0].mxu0
        %4025 = vmatprep.mubr.f32.mxu0 0.0
        %4026 = vmatmul.mubr.f32.gmra.mrb[0].mxu0 %v3840
        %v4027 = vpop.f32.mrb[0].mxu0
        %v4028 = vadd.f32 0.0, %v4027
        %v4029 = vpop.f32.mrb[0].mxu0
        %4030 = vmatprep.mubr.f32.mxu0 0.0
        %4031 = vmatmul.mubr.f32.gmra.mrb[0].mxu0 %v3843
        %v4032 = vpop.f32.mrb[0].mxu0
        %v4033 = vadd.f32 0.0, %v4032
        %v4034 = vpop.f32.mrb[0].mxu0
        %4035 = vmatprep.mubr.f32.mxu0 0.0
        %4036 = vmatmul.mubr.f32.gmra.mrb[0].mxu0 %v3846
        %v4037 = vpop.f32.mrb[0].mxu0
        %v4038 = vadd.f32 0.0, %v4037
        %v4039 = vpop.f32.mrb[0].mxu0
        %4040 = vmatprep.mubr.f32.mxu0 0.0
        %4041 = vmatmul.mubr.f32.gmra.mrb[0].mxu0 %v3849
        %v4042 = vpop.f32.mrb[0].mxu0
        %v4043 = vadd.f32 0.0, %v4042
        %v4044 = vpop.f32.mrb[0].mxu0
        %4045 = vmatprep.mubr.f32.mxu0 0.0
        %4046 = vmatmul.mubr.f32.gmra.mrb[0].mxu0 %v3852
        %v4047 = vpop.f32.mrb[0].mxu0
        %v4048 = vadd.f32 0.0, %v4047
        %v4049 = vpop.f32.mrb[0].mxu0
        %4050 = vmatprep.mubr.f32.mxu0 0.0
        %4051 = vmatmul.mubr.f32.gmra.mrb[0].mxu0 %v3855
        %v4052 = vpop.f32.mrb[0].mxu0
        %v4053 = vadd.f32 0.0, %v4052
        %v4054 = vpop.f32.mrb[0].mxu0
        %4055 = vmatprep.mubr.f32.mxu0 0.0
        %4056 = vmatmul.mubr.f32.gmra.mrb[0].mxu0 %v3858
        %v4057 = vpop.f32.mrb[0].mxu0
        %v4058 = vadd.f32 0.0, %v4057
        %v4059 = vpop.f32.mrb[0].mxu0
        %4060 = vmatprep.mubr.f32.mxu0 0.0
        %4061 = vmatmul.mubr.f32.gmra.mrb[0].mxu0 %v3861
        %v4062 = vpop.f32.mrb[0].mxu0
        %v4063 = vadd.f32 0.0, %v4062
        %v4064 = vpop.f32.mrb[0].mxu0
        %4065 = vmatprep.mubr.f32.mxu0 0.0
        %4066 = vmatmul.mubr.f32.gmra.mrb[0].mxu0 %v3864
        %v4067 = vpop.f32.mrb[0].mxu0
        %v4068 = vadd.f32 0.0, %v4067
        %v4069 = vpop.f32.mrb[0].mxu0
        %4070 = vmatprep.mubr.f32.mxu0 0.0
        %4071 = vmatmul.mubr.f32.gmra.mrb[0].mxu0 %v3867
        %v4072 = vpop.f32.mrb[0].mxu0
        %v4073 = vadd.f32 0.0, %v4072
        %v4074 = vpop.f32.mrb[0].mxu0
        %4075 = vmatprep.mubr.f32.mxu0 0.0
        %4076 = vmatmul.mubr.f32.gmra.mrb[0].mxu0 %v3870
        %v4077 = vpop.f32.mrb[0].mxu0
        %v4078 = vadd.f32 0.0, %v4077
        %v4079 = vpop.f32.mrb[0].mxu0
        %4080 = vmatprep.mubr.f32.mxu0 0.0
        %4081 = vmatmul.mubr.f32.gmra.mrb[0].mxu0 %v3873
        %v4082 = vpop.f32.mrb[0].mxu0
        %v4083 = vadd.f32 0.0, %v4082
        %v4084 = vpop.f32.mrb[0].mxu0
        %4085 = vmatprep.mubr.f32.mxu0 0.0
        %4086 = vmatmul.mubr.f32.gmra.mrb[0].mxu0 %v3876
        %v4087 = vpop.f32.mrb[0].mxu0
        %v4088 = vadd.f32 0.0, %v4087
        %v4089 = vpop.f32.mrb[0].mxu0
        %4090 = vmatprep.mubr.f32.mxu0 0.0
        %4091 = vmatmul.mubr.f32.gmra.mrb[0].mxu0 %v3879
        %v4092 = vpop.f32.mrb[0].mxu0
        %v4093 = vadd.f32 0.0, %v4092
        %v4094 = vpop.f32.mrb[0].mxu0
        %4095 = vmatprep.mubr.f32.mxu0 0.0
        %4096 = vmatmul.mubr.f32.gmra.mrb[0].mxu0 %v3882
        %v4097 = vpop.f32.mrb[0].mxu0
        %v4098 = vadd.f32 0.0, %v4097
        %v4099 = vpop.f32.mrb[0].mxu0
        %4100 = vmatprep.mubr.f32.mxu0 0.0
        %4101 = vmatmul.mubr.f32.gmra.mrb[0].mxu0 %v3885
        %v4102 = vpop.f32.mrb[0].mxu0
        %v4103 = vadd.f32 0.0, %v4102
        %v4104 = vpop.f32.mrb[0].mxu0
        %4105 = vmatprep.mubr.f32.mxu0 0.0
        %4106 = vmatmul.mubr.f32.gmra.mrb[0].mxu0 %v3888
        %v4107 = vpop.f32.mrb[0].mxu0
        %v4108 = vadd.f32 0.0, %v4107
        %v4109 = vpop.f32.mrb[0].mxu0
        %4110 = vmatprep.mubr.f32.mxu0 0.0
        %4111 = vmatmul.mubr.f32.gmra.mrb[0].mxu0 %v3891
        %v4112 = vpop.f32.mrb[0].mxu0
        %v4113 = vadd.f32 0.0, %v4112
        %v4114 = vpop.f32.mrb[0].mxu0
        %4115 = vmatprep.mubr.f32.mxu0 0.0
        %4116 = vmatmul.mubr.f32.gmra.mrb[0].mxu0 %v3894
        %v4117 = vpop.f32.mrb[0].mxu0
        %v4118 = vadd.f32 0.0, %v4117
        %v4119 = vpop.f32.mrb[0].mxu0
        %4120 = vdwg.mxu0
        %v4121 = vld [vmem:[%s21] sm:$0x1]
        %v4123 = vlaneseq
        %v4124 = vshrl.u32 %v4123, 7
        %v4125 = vsub.s32 0, %v4124
        %v4126 = vrot.slane %v4121, %v4125
        %v4128 = vmul.f32 %v3963, %v4126
        %v4129 = vmul.f32 %v3968, %v4126
        %v4130 = vmul.f32 %v3973, %v4126
        %v4131 = vmul.f32 %v3978, %v4126
        %v4132 = vmul.f32 %v3983, %v4126
        %v4133 = vmul.f32 %v3988, %v4126
        %v4134 = vmul.f32 %v3993, %v4126
        %v4135 = vmul.f32 %v3998, %v4126
        %v4136 = vmul.f32 %v4003, %v4126
        %v4137 = vmul.f32 %v4008, %v4126
        %v4138 = vmul.f32 %v4013, %v4126
        %v4139 = vmul.f32 %v4018, %v4126
        %v4140 = vmul.f32 %v4023, %v4126
        %v4141 = vmul.f32 %v4028, %v4126
        %v4142 = vmul.f32 %v4033, %v4126
        %v4143 = vmul.f32 %v4038, %v4126
        %v4144 = vmul.f32 %v4043, %v4126
        %v4145 = vmul.f32 %v4048, %v4126
        %v4146 = vmul.f32 %v4053, %v4126
        %v4147 = vmul.f32 %v4058, %v4126
        %v4148 = vmul.f32 %v4063, %v4126
        %v4149 = vmul.f32 %v4068, %v4126
        %v4150 = vmul.f32 %v4073, %v4126
        %v4151 = vmul.f32 %v4078, %v4126
        %v4152 = vmul.f32 %v4083, %v4126
        %v4153 = vmul.f32 %v4088, %v4126
        %v4154 = vmul.f32 %v4093, %v4126
        %v4155 = vmul.f32 %v4098, %v4126
        %v4156 = vmul.f32 %v4103, %v4126
        %v4157 = vmul.f32 %v4108, %v4126
        %v4158 = vmul.f32 %v4113, %v4126
        %v4159 = vmul.f32 %v4118, %v4126
        %v4160 = vld [vmem:[%s23] sm:$0x1]
        %v4162 = vlaneseq
        %v4163 = vshrl.u32 %v4162, 7
        %v4164 = vsub.s32 0, %v4163
        %v4165 = vrot.slane %v4160, %v4164
        %v4167 = vadd.f32 %v4128, %v4165
        %v4168 = vadd.f32 %v4129, %v4165
        %v4169 = vadd.f32 %v4130, %v4165
        %v4170 = vadd.f32 %v4131, %v4165
        %v4171 = vadd.f32 %v4132, %v4165
        %v4172 = vadd.f32 %v4133, %v4165
        %v4173 = vadd.f32 %v4134, %v4165
        %v4174 = vadd.f32 %v4135, %v4165
        %v4175 = vadd.f32 %v4136, %v4165
        %v4176 = vadd.f32 %v4137, %v4165
        %v4177 = vadd.f32 %v4138, %v4165
        %v4178 = vadd.f32 %v4139, %v4165
        %v4179 = vadd.f32 %v4140, %v4165
        %v4180 = vadd.f32 %v4141, %v4165
        %v4181 = vadd.f32 %v4142, %v4165
        %v4182 = vadd.f32 %v4143, %v4165
        %v4183 = vadd.f32 %v4144, %v4165
        %v4184 = vadd.f32 %v4145, %v4165
        %v4185 = vadd.f32 %v4146, %v4165
        %v4186 = vadd.f32 %v4147, %v4165
        %v4187 = vadd.f32 %v4148, %v4165
        %v4188 = vadd.f32 %v4149, %v4165
        %v4189 = vadd.f32 %v4150, %v4165
        %v4190 = vadd.f32 %v4151, %v4165
        %v4191 = vadd.f32 %v4152, %v4165
        %v4192 = vadd.f32 %v4153, %v4165
        %v4193 = vadd.f32 %v4154, %v4165
        %v4194 = vadd.f32 %v4155, %v4165
        %v4195 = vadd.f32 %v4156, %v4165
        %v4196 = vadd.f32 %v4157, %v4165
        %v4197 = vadd.f32 %v4158, %v4165
        %v4198 = vadd.f32 %v4159, %v4165
        %vm4199 = vcmp.ge.f32.partialorder %v4167, 0.0
        %vm4200 = vcmp.ge.f32.partialorder %v4168, 0.0
        %vm4201 = vcmp.ge.f32.partialorder %v4169, 0.0
        %vm4202 = vcmp.ge.f32.partialorder %v4170, 0.0
        %vm4203 = vcmp.ge.f32.partialorder %v4171, 0.0
        %vm4204 = vcmp.ge.f32.partialorder %v4172, 0.0
        %vm4205 = vcmp.ge.f32.partialorder %v4173, 0.0
        %vm4206 = vcmp.ge.f32.partialorder %v4174, 0.0
        %vm4207 = vcmp.ge.f32.partialorder %v4175, 0.0
        %vm4208 = vcmp.ge.f32.partialorder %v4176, 0.0
        %vm4209 = vcmp.ge.f32.partialorder %v4177, 0.0
        %vm4210 = vcmp.ge.f32.partialorder %v4178, 0.0
        %vm4211 = vcmp.ge.f32.partialorder %v4179, 0.0
        %vm4212 = vcmp.ge.f32.partialorder %v4180, 0.0
        %vm4213 = vcmp.ge.f32.partialorder %v4181, 0.0
        %vm4214 = vcmp.ge.f32.partialorder %v4182, 0.0
        %vm4215 = vcmp.ge.f32.partialorder %v4183, 0.0
        %vm4216 = vcmp.ge.f32.partialorder %v4184, 0.0
        %vm4217 = vcmp.ge.f32.partialorder %v4185, 0.0
        %vm4218 = vcmp.ge.f32.partialorder %v4186, 0.0
        %vm4219 = vcmp.ge.f32.partialorder %v4187, 0.0
        %vm4220 = vcmp.ge.f32.partialorder %v4188, 0.0
        %vm4221 = vcmp.ge.f32.partialorder %v4189, 0.0
        %vm4222 = vcmp.ge.f32.partialorder %v4190, 0.0
        %vm4223 = vcmp.ge.f32.partialorder %v4191, 0.0
        %vm4224 = vcmp.ge.f32.partialorder %v4192, 0.0
        %vm4225 = vcmp.ge.f32.partialorder %v4193, 0.0
        %vm4226 = vcmp.ge.f32.partialorder %v4194, 0.0
        %vm4227 = vcmp.ge.f32.partialorder %v4195, 0.0
        %vm4228 = vcmp.ge.f32.partialorder %v4196, 0.0
        %vm4229 = vcmp.ge.f32.partialorder %v4197, 0.0
        %vm4230 = vcmp.ge.f32.partialorder %v4198, 0.0
        %v4231 = vmul.f32 %v4167, 0.2
        %v4232 = vmul.f32 %v4168, 0.2
        %v4233 = vmul.f32 %v4169, 0.2
        %v4234 = vmul.f32 %v4170, 0.2
        %v4235 = vmul.f32 %v4171, 0.2
        %v4236 = vmul.f32 %v4172, 0.2
        %v4237 = vmul.f32 %v4173, 0.2
        %v4238 = vmul.f32 %v4174, 0.2
        %v4239 = vmul.f32 %v4175, 0.2
        %v4240 = vmul.f32 %v4176, 0.2
        %v4241 = vmul.f32 %v4177, 0.2
        %v4242 = vmul.f32 %v4178, 0.2
        %v4243 = vmul.f32 %v4179, 0.2
        %v4244 = vmul.f32 %v4180, 0.2
        %v4245 = vmul.f32 %v4181, 0.2
        %v4246 = vmul.f32 %v4182, 0.2
        %v4247 = vmul.f32 %v4183, 0.2
        %v4248 = vmul.f32 %v4184, 0.2
        %v4249 = vmul.f32 %v4185, 0.2
        %v4250 = vmul.f32 %v4186, 0.2
        %v4251 = vmul.f32 %v4187, 0.2
        %v4252 = vmul.f32 %v4188, 0.2
        %v4253 = vmul.f32 %v4189, 0.2
        %v4254 = vmul.f32 %v4190, 0.2
        %v4255 = vmul.f32 %v4191, 0.2
        %v4256 = vmul.f32 %v4192, 0.2
        %v4257 = vmul.f32 %v4193, 0.2
        %v4258 = vmul.f32 %v4194, 0.2
        %v4259 = vmul.f32 %v4195, 0.2
        %v4260 = vmul.f32 %v4196, 0.2
        %v4261 = vmul.f32 %v4197, 0.2
        %v4262 = vmul.f32 %v4198, 0.2
        %v4263 = vsel %vm4199, %v4167, %v4231
        %v4264 = vsel %vm4200, %v4168, %v4232
        %v4265 = vsel %vm4201, %v4169, %v4233
        %v4266 = vsel %vm4202, %v4170, %v4234
        %v4267 = vsel %vm4203, %v4171, %v4235
        %v4268 = vsel %vm4204, %v4172, %v4236
        %v4269 = vsel %vm4205, %v4173, %v4237
        %v4270 = vsel %vm4206, %v4174, %v4238
        %v4271 = vsel %vm4207, %v4175, %v4239
        %v4272 = vsel %vm4208, %v4176, %v4240
        %v4273 = vsel %vm4209, %v4177, %v4241
        %v4274 = vsel %vm4210, %v4178, %v4242
        %v4275 = vsel %vm4211, %v4179, %v4243
        %v4276 = vsel %vm4212, %v4180, %v4244
        %v4277 = vsel %vm4213, %v4181, %v4245
        %v4278 = vsel %vm4214, %v4182, %v4246
        %v4279 = vsel %vm4215, %v4183, %v4247
        %v4280 = vsel %vm4216, %v4184, %v4248
        %v4281 = vsel %vm4217, %v4185, %v4249
        %v4282 = vsel %vm4218, %v4186, %v4250
        %v4283 = vsel %vm4219, %v4187, %v4251
        %v4284 = vsel %vm4220, %v4188, %v4252
        %v4285 = vsel %vm4221, %v4189, %v4253
        %v4286 = vsel %vm4222, %v4190, %v4254
        %v4287 = vsel %vm4223, %v4191, %v4255
        %v4288 = vsel %vm4224, %v4192, %v4256
        %v4289 = vsel %vm4225, %v4193, %v4257
        %v4290 = vsel %vm4226, %v4194, %v4258
        %v4291 = vsel %vm4227, %v4195, %v4259
        %v4292 = vsel %vm4228, %v4196, %v4260
        %v4293 = vsel %vm4229, %v4197, %v4261
        %v4294 = vsel %vm4230, %v4198, %v4262
        %vm4295 = vcmask 523264
        %4296 = vst.msk [vmem:[#allocation4] sm:$0xff] %vm4295, 0.0
        %4297 = vst.msk [vmem:[#allocation4 + $0x8] sm:$0xff] %vm4295, 0.0
        %vm4298 = vcmask 517120
        %4299 = vst.msk [vmem:[#allocation4 + $0x10] sm:$0x3] %vm4298, 0.0
        %4300 = vst.msk [vmem:[#allocation4 + $0x18] sm:$0xff] %vm4295, 0.0
        %4301 = vst.msk [vmem:[#allocation4 + $0x20] sm:$0xff] %vm4295, 0.0
        %4302 = vst.msk [vmem:[#allocation4 + $0x28] sm:$0x3] %vm4298, 0.0
        %4303 = vst.msk [vmem:[#allocation4 + $0x30] sm:$0xff] %vm4295, 0.0
        %4304 = vst.msk [vmem:[#allocation4 + $0x38] sm:$0xff] %vm4295, 0.0
        %4305 = vst.msk [vmem:[#allocation4 + $0x40] sm:$0x3] %vm4298, 0.0
        %4306 = vst.msk [vmem:[#allocation4 + $0x48] sm:$0xff] %vm4295, 0.0
        %4307 = vst.msk [vmem:[#allocation4 + $0x50] sm:$0xff] %vm4295, 0.0
        %4308 = vst.msk [vmem:[#allocation4 + $0x58] sm:$0x3] %vm4298, 0.0
        %4309 = vst.msk [vmem:[#allocation4 + $0x60] sm:$0xff] %vm4295, 0.0
        %4310 = vst.msk [vmem:[#allocation4 + $0x68] sm:$0xff] %vm4295, 0.0
        %4311 = vst.msk [vmem:[#allocation4 + $0x70] sm:$0x3] %vm4298, 0.0
        %4312 = vst.msk [vmem:[#allocation4 + $0x78] sm:$0xff] %vm4295, 0.0
        %4313 = vst.msk [vmem:[#allocation4 + $0x80] sm:$0xff] %vm4295, 0.0
        %4314 = vst.msk [vmem:[#allocation4 + $0x88] sm:$0x3] %vm4298, 0.0
        %4315 = vst.msk [vmem:[#allocation4 + $0x90] sm:$0xff] %vm4295, 0.0
        %4316 = vst.msk [vmem:[#allocation4 + $0x98] sm:$0xff] %vm4295, 0.0
        %4317 = vst.msk [vmem:[#allocation4 + $0xa0] sm:$0x3] %vm4298, 0.0
        %4318 = vst.msk [vmem:[#allocation4 + $0xa8] sm:$0xff] %vm4295, 0.0
        %4319 = vst.msk [vmem:[#allocation4 + $0xb0] sm:$0xff] %vm4295, 0.0
        %4320 = vst.msk [vmem:[#allocation4 + $0xb8] sm:$0x3] %vm4298, 0.0
        %4321 = vst.msk [vmem:[#allocation4 + $0xc0] sm:$0xff] %vm4295, 0.0
        %4322 = vst.msk [vmem:[#allocation4 + $0xc8] sm:$0xff] %vm4295, 0.0
        %4323 = vst.msk [vmem:[#allocation4 + $0xd0] sm:$0x3] %vm4298, 0.0
        %4324 = vst.msk [vmem:[#allocation4 + $0xd8] sm:$0xff] %vm4295, 0.0
        %4325 = vst.msk [vmem:[#allocation4 + $0xe0] sm:$0xff] %vm4295, 0.0
        %4326 = vst.msk [vmem:[#allocation4 + $0xe8] sm:$0x3] %vm4298, 0.0
        %4327 = vst.msk [vmem:[#allocation4 + $0xf0] sm:$0xff] %vm4295, 0.0
        %4328 = vst.msk [vmem:[#allocation4 + $0xf8] sm:$0xff] %vm4295, 0.0
        %4329 = vst.msk [vmem:[#allocation4 + $0x100] sm:$0x3] %vm4298, 0.0
        %4330 = vst.msk [vmem:[#allocation4 + $0x108] sm:$0xff] %vm4295, 0.0
        %4331 = vst.msk [vmem:[#allocation4 + $0x110] sm:$0xff] %vm4295, 0.0
        %4332 = vst.msk [vmem:[#allocation4 + $0x118] sm:$0x3] %vm4298, 0.0
        %4333 = vst.msk [vmem:[#allocation4 + $0x120] sm:$0xff] %vm4295, 0.0
        %4334 = vst.msk [vmem:[#allocation4 + $0x128] sm:$0xff] %vm4295, 0.0
        %4335 = vst.msk [vmem:[#allocation4 + $0x130] sm:$0x3] %vm4298, 0.0
        %4336 = vst.msk [vmem:[#allocation4 + $0x138] sm:$0xff] %vm4295, 0.0
        %4337 = vst.msk [vmem:[#allocation4 + $0x140] sm:$0xff] %vm4295, 0.0
        %4338 = vst.msk [vmem:[#allocation4 + $0x148] sm:$0x3] %vm4298, 0.0
        %4339 = vst.msk [vmem:[#allocation4 + $0x150] sm:$0xff] %vm4295, 0.0
        %4340 = vst.msk [vmem:[#allocation4 + $0x158] sm:$0xff] %vm4295, 0.0
        %4341 = vst.msk [vmem:[#allocation4 + $0x160] sm:$0x3] %vm4298, 0.0
        %4342 = vst.msk [vmem:[#allocation4 + $0x168] sm:$0xff] %vm4295, 0.0
        %4343 = vst.msk [vmem:[#allocation4 + $0x170] sm:$0xff] %vm4295, 0.0
        %4344 = vst.msk [vmem:[#allocation4 + $0x178] sm:$0x3] %vm4298, 0.0
        %4345 = vst.msk [vmem:[#allocation4 + $0x180] sm:$0xff] %vm4295, 0.0
        %4346 = vst.msk [vmem:[#allocation4 + $0x188] sm:$0xff] %vm4295, 0.0
        %4347 = vst.msk [vmem:[#allocation4 + $0x190] sm:$0x3] %vm4298, 0.0
        %4348 = vst.msk [vmem:[#allocation4 + $0x198] sm:$0xff] %vm4295, 0.0
        %4349 = vst.msk [vmem:[#allocation4 + $0x1a0] sm:$0xff] %vm4295, 0.0
        %4350 = vst.msk [vmem:[#allocation4 + $0x1a8] sm:$0x3] %vm4298, 0.0
        %s4351 = scalar_lea.vmem [#allocation4], 24
        %4352 = vst.msk [vmem:[%s4351 + $0x1] sm:$0xff] %vm4295, %v4263
        %4353 = vst.msk [vmem:[%s4351 + $0x9] sm:$0xff] %vm4295, %v4264
        %4354 = vst.msk [vmem:[%s4351 + $0x19] sm:$0xff] %vm4295, %v4265
        %4355 = vst.msk [vmem:[%s4351 + $0x21] sm:$0xff] %vm4295, %v4266
        %4356 = vst.msk [vmem:[%s4351 + $0x31] sm:$0xff] %vm4295, %v4267
        %4357 = vst.msk [vmem:[%s4351 + $0x39] sm:$0xff] %vm4295, %v4268
        %4358 = vst.msk [vmem:[%s4351 + $0x49] sm:$0xff] %vm4295, %v4269
        %4359 = vst.msk [vmem:[%s4351 + $0x51] sm:$0xff] %vm4295, %v4270
        %4360 = vst.msk [vmem:[%s4351 + $0x61] sm:$0xff] %vm4295, %v4271
        %4361 = vst.msk [vmem:[%s4351 + $0x69] sm:$0xff] %vm4295, %v4272
        %4362 = vst.msk [vmem:[%s4351 + $0x79] sm:$0xff] %vm4295, %v4273
        %4363 = vst.msk [vmem:[%s4351 + $0x81] sm:$0xff] %vm4295, %v4274
        %4364 = vst.msk [vmem:[%s4351 + $0x91] sm:$0xff] %vm4295, %v4275
        %4365 = vst.msk [vmem:[%s4351 + $0x99] sm:$0xff] %vm4295, %v4276
        %4366 = vst.msk [vmem:[%s4351 + $0xa9] sm:$0xff] %vm4295, %v4277
        %4367 = vst.msk [vmem:[%s4351 + $0xb1] sm:$0xff] %vm4295, %v4278
        %4368 = vst.msk [vmem:[%s4351 + $0xc1] sm:$0xff] %vm4295, %v4279
        %4369 = vst.msk [vmem:[%s4351 + $0xc9] sm:$0xff] %vm4295, %v4280
        %4370 = vst.msk [vmem:[%s4351 + $0xd9] sm:$0xff] %vm4295, %v4281
        %4371 = vst.msk [vmem:[%s4351 + $0xe1] sm:$0xff] %vm4295, %v4282
        %4372 = vst.msk [vmem:[%s4351 + $0xf1] sm:$0xff] %vm4295, %v4283
        %4373 = vst.msk [vmem:[%s4351 + $0xf9] sm:$0xff] %vm4295, %v4284
        %4374 = vst.msk [vmem:[%s4351 + $0x109] sm:$0xff] %vm4295, %v4285
        %4375 = vst.msk [vmem:[%s4351 + $0x111] sm:$0xff] %vm4295, %v4286
        %4376 = vst.msk [vmem:[%s4351 + $0x121] sm:$0xff] %vm4295, %v4287
        %4377 = vst.msk [vmem:[%s4351 + $0x129] sm:$0xff] %vm4295, %v4288
        %4378 = vst.msk [vmem:[%s4351 + $0x139] sm:$0xff] %vm4295, %v4289
        %4379 = vst.msk [vmem:[%s4351 + $0x141] sm:$0xff] %vm4295, %v4290
        %4380 = vst.msk [vmem:[%s4351 + $0x151] sm:$0xff] %vm4295, %v4291
        %4381 = vst.msk [vmem:[%s4351 + $0x159] sm:$0xff] %vm4295, %v4292
        %4382 = vst.msk [vmem:[%s4351 + $0x169] sm:$0xff] %vm4295, %v4293
        %4383 = vst.msk [vmem:[%s4351 + $0x171] sm:$0xff] %vm4295, %v4294
        %v4384 = vld [vmem:[%s25] sm:$0x1]
        %v4385 = vld [vmem:[#allocation4] sm:$0xff]
        %v4386 = vld [vmem:[#allocation4 + $0x8] sm:$0xff]
        %v4387 = vld [vmem:[#allocation4 + $0x18] sm:$0xff]
        %v4388 = vld [vmem:[#allocation4 + $0x20] sm:$0xff]
        %v4389 = vld [vmem:[#allocation4 + $0x30] sm:$0xff]
        %v4390 = vld [vmem:[#allocation4 + $0x38] sm:$0xff]
        %v4391 = vld [vmem:[#allocation4 + $0x48] sm:$0xff]
        %v4392 = vld [vmem:[#allocation4 + $0x50] sm:$0xff]
        %v4393 = vld [vmem:[#allocation4 + $0x60] sm:$0xff]
        %v4394 = vld [vmem:[#allocation4 + $0x68] sm:$0xff]
        %v4395 = vld [vmem:[#allocation4 + $0x78] sm:$0xff]
        %v4396 = vld [vmem:[#allocation4 + $0x80] sm:$0xff]
        %v4397 = vld [vmem:[#allocation4 + $0x90] sm:$0xff]
        %v4398 = vld [vmem:[#allocation4 + $0x98] sm:$0xff]
        %v4399 = vld [vmem:[#allocation4 + $0xa8] sm:$0xff]
        %v4400 = vld [vmem:[#allocation4 + $0xb0] sm:$0xff]
        %v4401 = vld [vmem:[#allocation4 + $0xc0] sm:$0xff]
        %v4402 = vld [vmem:[#allocation4 + $0xc8] sm:$0xff]
        %v4403 = vld [vmem:[#allocation4 + $0xd8] sm:$0xff]
        %v4404 = vld [vmem:[#allocation4 + $0xe0] sm:$0xff]
        %v4405 = vld [vmem:[#allocation4 + $0xf0] sm:$0xff]
        %v4406 = vld [vmem:[#allocation4 + $0xf8] sm:$0xff]
        %v4407 = vld [vmem:[#allocation4 + $0x108] sm:$0xff]
        %v4408 = vld [vmem:[#allocation4 + $0x110] sm:$0xff]
        %v4409 = vld [vmem:[#allocation4 + $0x120] sm:$0xff]
        %v4410 = vld [vmem:[#allocation4 + $0x128] sm:$0xff]
        %v4411 = vld [vmem:[#allocation4 + $0x138] sm:$0xff]
        %v4412 = vld [vmem:[#allocation4 + $0x140] sm:$0xff]
        %v4413 = vld [vmem:[#allocation4 + $0x150] sm:$0xff]
        %v4414 = vld [vmem:[#allocation4 + $0x158] sm:$0xff]
        %v4415 = vld [vmem:[#allocation4 + $0x168] sm:$0xff]
        %v4416 = vld [vmem:[#allocation4 + $0x170] sm:$0xff]
        %v4417 = vlaneseq
        %v4418 = vshrl.u32 %v4417, 7
        %v4419 = vsub.s32 0, %v4418
        %v4420 = vrot.slane %v4384, %v4419
        %v4421 = vmul.f32 %v4385, %v4420
        %v4422 = vmul.f32 %v4386, %v4420
        %v4423 = vmul.f32 %v4387, %v4420
        %v4424 = vmul.f32 %v4388, %v4420
        %v4425 = vmul.f32 %v4389, %v4420
        %v4426 = vmul.f32 %v4390, %v4420
        %v4427 = vmul.f32 %v4391, %v4420
        %v4428 = vmul.f32 %v4392, %v4420
        %v4429 = vmul.f32 %v4393, %v4420
        %v4430 = vmul.f32 %v4394, %v4420
        %v4431 = vmul.f32 %v4395, %v4420
        %v4432 = vmul.f32 %v4396, %v4420
        %v4433 = vmul.f32 %v4397, %v4420
        %v4434 = vmul.f32 %v4398, %v4420
        %v4435 = vmul.f32 %v4399, %v4420
        %v4436 = vmul.f32 %v4400, %v4420
        %v4437 = vmul.f32 %v4401, %v4420
        %v4438 = vmul.f32 %v4402, %v4420
        %v4439 = vmul.f32 %v4403, %v4420
        %v4440 = vmul.f32 %v4404, %v4420
        %v4441 = vmul.f32 %v4405, %v4420
        %v4442 = vmul.f32 %v4406, %v4420
        %v4443 = vmul.f32 %v4407, %v4420
        %v4444 = vmul.f32 %v4408, %v4420
        %v4445 = vmul.f32 %v4409, %v4420
        %v4446 = vmul.f32 %v4410, %v4420
        %v4447 = vmul.f32 %v4411, %v4420
        %v4448 = vmul.f32 %v4412, %v4420
        %v4449 = vmul.f32 %v4413, %v4420
        %v4450 = vmul.f32 %v4414, %v4420
        %v4451 = vmul.f32 %v4415, %v4420
        %v4452 = vmul.f32 %v4416, %v4420
        %v4453 = vadd.f32 %v4421, 0.0
        %v4454 = vadd.f32 %v4422, 0.0
        %v4455 = vadd.f32 %v4423, 0.0
        %v4456 = vadd.f32 %v4424, 0.0
        %v4457 = vadd.f32 %v4425, 0.0
        %v4458 = vadd.f32 %v4426, 0.0
        %v4459 = vadd.f32 %v4427, 0.0
        %v4460 = vadd.f32 %v4428, 0.0
        %v4461 = vadd.f32 %v4429, 0.0
        %v4462 = vadd.f32 %v4430, 0.0
        %v4463 = vadd.f32 %v4431, 0.0
        %v4464 = vadd.f32 %v4432, 0.0
        %v4465 = vadd.f32 %v4433, 0.0
        %v4466 = vadd.f32 %v4434, 0.0
        %v4467 = vadd.f32 %v4435, 0.0
        %v4468 = vadd.f32 %v4436, 0.0
        %v4469 = vadd.f32 %v4437, 0.0
        %v4470 = vadd.f32 %v4438, 0.0
        %v4471 = vadd.f32 %v4439, 0.0
        %v4472 = vadd.f32 %v4440, 0.0
        %v4473 = vadd.f32 %v4441, 0.0
        %v4474 = vadd.f32 %v4442, 0.0
        %v4475 = vadd.f32 %v4443, 0.0
        %v4476 = vadd.f32 %v4444, 0.0
        %v4477 = vadd.f32 %v4445, 0.0
        %v4478 = vadd.f32 %v4446, 0.0
        %v4479 = vadd.f32 %v4447, 0.0
        %v4480 = vadd.f32 %v4448, 0.0
        %v4481 = vadd.f32 %v4449, 0.0
        %v4482 = vadd.f32 %v4450, 0.0
        %v4483 = vadd.f32 %v4451, 0.0
        %v4484 = vadd.f32 %v4452, 0.0
        %v4485 = vld [vmem:[%s25 + $0x1] sm:$0x1]
        %v4486 = vld [vmem:[#allocation4 + $0x1] sm:$0xff]
        %v4487 = vld [vmem:[#allocation4 + $0x9] sm:$0xff]
        %v4488 = vld [vmem:[#allocation4 + $0x19] sm:$0xff]
        %v4489 = vld [vmem:[#allocation4 + $0x21] sm:$0xff]
        %v4490 = vld [vmem:[#allocation4 + $0x31] sm:$0xff]
        %v4491 = vld [vmem:[#allocation4 + $0x39] sm:$0xff]
        %v4492 = vld [vmem:[#allocation4 + $0x49] sm:$0xff]
        %v4493 = vld [vmem:[#allocation4 + $0x51] sm:$0xff]
        %v4494 = vld [vmem:[#allocation4 + $0x61] sm:$0xff]
        %v4495 = vld [vmem:[#allocation4 + $0x69] sm:$0xff]
        %v4496 = vld [vmem:[#allocation4 + $0x79] sm:$0xff]
        %v4497 = vld [vmem:[#allocation4 + $0x81] sm:$0xff]
        %v4498 = vld [vmem:[#allocation4 + $0x91] sm:$0xff]
        %v4499 = vld [vmem:[#allocation4 + $0x99] sm:$0xff]
        %v4500 = vld [vmem:[#allocation4 + $0xa9] sm:$0xff]
        %v4501 = vld [vmem:[#allocation4 + $0xb1] sm:$0xff]
        %v4502 = vld [vmem:[#allocation4 + $0xc1] sm:$0xff]
        %v4503 = vld [vmem:[#allocation4 + $0xc9] sm:$0xff]
        %v4504 = vld [vmem:[#allocation4 + $0xd9] sm:$0xff]
        %v4505 = vld [vmem:[#allocation4 + $0xe1] sm:$0xff]
        %v4506 = vld [vmem:[#allocation4 + $0xf1] sm:$0xff]
        %v4507 = vld [vmem:[#allocation4 + $0xf9] sm:$0xff]
        %v4508 = vld [vmem:[#allocation4 + $0x109] sm:$0xff]
        %v4509 = vld [vmem:[#allocation4 + $0x111] sm:$0xff]
        %v4510 = vld [vmem:[#allocation4 + $0x121] sm:$0xff]
        %v4511 = vld [vmem:[#allocation4 + $0x129] sm:$0xff]
        %v4512 = vld [vmem:[#allocation4 + $0x139] sm:$0xff]
        %v4513 = vld [vmem:[#allocation4 + $0x141] sm:$0xff]
        %v4514 = vld [vmem:[#allocation4 + $0x151] sm:$0xff]
        %v4515 = vld [vmem:[#allocation4 + $0x159] sm:$0xff]
        %v4516 = vld [vmem:[#allocation4 + $0x169] sm:$0xff]
        %v4517 = vld [vmem:[#allocation4 + $0x171] sm:$0xff]
        %v4518 = vlaneseq
        %v4519 = vshrl.u32 %v4518, 7
        %v4520 = vsub.s32 0, %v4519
        %v4521 = vrot.slane %v4485, %v4520
        %v4522 = vmul.f32 %v4486, %v4521
        %v4523 = vmul.f32 %v4487, %v4521
        %v4524 = vmul.f32 %v4488, %v4521
        %v4525 = vmul.f32 %v4489, %v4521
        %v4526 = vmul.f32 %v4490, %v4521
        %v4527 = vmul.f32 %v4491, %v4521
        %v4528 = vmul.f32 %v4492, %v4521
        %v4529 = vmul.f32 %v4493, %v4521
        %v4530 = vmul.f32 %v4494, %v4521
        %v4531 = vmul.f32 %v4495, %v4521
        %v4532 = vmul.f32 %v4496, %v4521
        %v4533 = vmul.f32 %v4497, %v4521
        %v4534 = vmul.f32 %v4498, %v4521
        %v4535 = vmul.f32 %v4499, %v4521
        %v4536 = vmul.f32 %v4500, %v4521
        %v4537 = vmul.f32 %v4501, %v4521
        %v4538 = vmul.f32 %v4502, %v4521
        %v4539 = vmul.f32 %v4503, %v4521
        %v4540 = vmul.f32 %v4504, %v4521
        %v4541 = vmul.f32 %v4505, %v4521
        %v4542 = vmul.f32 %v4506, %v4521
        %v4543 = vmul.f32 %v4507, %v4521
        %v4544 = vmul.f32 %v4508, %v4521
        %v4545 = vmul.f32 %v4509, %v4521
        %v4546 = vmul.f32 %v4510, %v4521
        %v4547 = vmul.f32 %v4511, %v4521
        %v4548 = vmul.f32 %v4512, %v4521
        %v4549 = vmul.f32 %v4513, %v4521
        %v4550 = vmul.f32 %v4514, %v4521
        %v4551 = vmul.f32 %v4515, %v4521
        %v4552 = vmul.f32 %v4516, %v4521
        %v4553 = vmul.f32 %v4517, %v4521
        %v4554 = vadd.f32 %v4453, %v4522
        %v4555 = vadd.f32 %v4454, %v4523
        %v4556 = vadd.f32 %v4455, %v4524
        %v4557 = vadd.f32 %v4456, %v4525
        %v4558 = vadd.f32 %v4457, %v4526
        %v4559 = vadd.f32 %v4458, %v4527
        %v4560 = vadd.f32 %v4459, %v4528
        %v4561 = vadd.f32 %v4460, %v4529
        %v4562 = vadd.f32 %v4461, %v4530
        %v4563 = vadd.f32 %v4462, %v4531
        %v4564 = vadd.f32 %v4463, %v4532
        %v4565 = vadd.f32 %v4464, %v4533
        %v4566 = vadd.f32 %v4465, %v4534
        %v4567 = vadd.f32 %v4466, %v4535
        %v4568 = vadd.f32 %v4467, %v4536
        %v4569 = vadd.f32 %v4468, %v4537
        %v4570 = vadd.f32 %v4469, %v4538
        %v4571 = vadd.f32 %v4470, %v4539
        %v4572 = vadd.f32 %v4471, %v4540
        %v4573 = vadd.f32 %v4472, %v4541
        %v4574 = vadd.f32 %v4473, %v4542
        %v4575 = vadd.f32 %v4474, %v4543
        %v4576 = vadd.f32 %v4475, %v4544
        %v4577 = vadd.f32 %v4476, %v4545
        %v4578 = vadd.f32 %v4477, %v4546
        %v4579 = vadd.f32 %v4478, %v4547
        %v4580 = vadd.f32 %v4479, %v4548
        %v4581 = vadd.f32 %v4480, %v4549
        %v4582 = vadd.f32 %v4481, %v4550
        %v4583 = vadd.f32 %v4482, %v4551
        %v4584 = vadd.f32 %v4483, %v4552
        %v4585 = vadd.f32 %v4484, %v4553
        %v4586 = vld [vmem:[%s25 + $0x2] sm:$0x1]
        %v4587 = vld [vmem:[#allocation4 + $0x2] sm:$0xff]
        %v4588 = vld [vmem:[#allocation4 + $0xa] sm:$0xff]
        %v4589 = vld [vmem:[#allocation4 + $0x1a] sm:$0xff]
        %v4590 = vld [vmem:[#allocation4 + $0x22] sm:$0xff]
        %v4591 = vld [vmem:[#allocation4 + $0x32] sm:$0xff]
        %v4592 = vld [vmem:[#allocation4 + $0x3a] sm:$0xff]
        %v4593 = vld [vmem:[#allocation4 + $0x4a] sm:$0xff]
        %v4594 = vld [vmem:[#allocation4 + $0x52] sm:$0xff]
        %v4595 = vld [vmem:[#allocation4 + $0x62] sm:$0xff]
        %v4596 = vld [vmem:[#allocation4 + $0x6a] sm:$0xff]
        %v4597 = vld [vmem:[#allocation4 + $0x7a] sm:$0xff]
        %v4598 = vld [vmem:[#allocation4 + $0x82] sm:$0xff]
        %v4599 = vld [vmem:[#allocation4 + $0x92] sm:$0xff]
        %v4600 = vld [vmem:[#allocation4 + $0x9a] sm:$0xff]
        %v4601 = vld [vmem:[#allocation4 + $0xaa] sm:$0xff]
        %v4602 = vld [vmem:[#allocation4 + $0xb2] sm:$0xff]
        %v4603 = vld [vmem:[#allocation4 + $0xc2] sm:$0xff]
        %v4604 = vld [vmem:[#allocation4 + $0xca] sm:$0xff]
        %v4605 = vld [vmem:[#allocation4 + $0xda] sm:$0xff]
        %v4606 = vld [vmem:[#allocation4 + $0xe2] sm:$0xff]
        %v4607 = vld [vmem:[#allocation4 + $0xf2] sm:$0xff]
        %v4608 = vld [vmem:[#allocation4 + $0xfa] sm:$0xff]
        %v4609 = vld [vmem:[#allocation4 + $0x10a] sm:$0xff]
        %v4610 = vld [vmem:[#allocation4 + $0x112] sm:$0xff]
        %v4611 = vld [vmem:[#allocation4 + $0x122] sm:$0xff]
        %v4612 = vld [vmem:[#allocation4 + $0x12a] sm:$0xff]
        %v4613 = vld [vmem:[#allocation4 + $0x13a] sm:$0xff]
        %v4614 = vld [vmem:[#allocation4 + $0x142] sm:$0xff]
        %v4615 = vld [vmem:[#allocation4 + $0x152] sm:$0xff]
        %v4616 = vld [vmem:[#allocation4 + $0x15a] sm:$0xff]
        %v4617 = vld [vmem:[#allocation4 + $0x16a] sm:$0xff]
        %v4618 = vld [vmem:[#allocation4 + $0x172] sm:$0xff]
        %v4619 = vlaneseq
        %v4620 = vshrl.u32 %v4619, 7
        %v4621 = vsub.s32 0, %v4620
        %v4622 = vrot.slane %v4586, %v4621
        %v4623 = vmul.f32 %v4587, %v4622
        %v4624 = vmul.f32 %v4588, %v4622
        %v4625 = vmul.f32 %v4589, %v4622
        %v4626 = vmul.f32 %v4590, %v4622
        %v4627 = vmul.f32 %v4591, %v4622
        %v4628 = vmul.f32 %v4592, %v4622
        %v4629 = vmul.f32 %v4593, %v4622
        %v4630 = vmul.f32 %v4594, %v4622
        %v4631 = vmul.f32 %v4595, %v4622
        %v4632 = vmul.f32 %v4596, %v4622
        %v4633 = vmul.f32 %v4597, %v4622
        %v4634 = vmul.f32 %v4598, %v4622
        %v4635 = vmul.f32 %v4599, %v4622
        %v4636 = vmul.f32 %v4600, %v4622
        %v4637 = vmul.f32 %v4601, %v4622
        %v4638 = vmul.f32 %v4602, %v4622
        %v4639 = vmul.f32 %v4603, %v4622
        %v4640 = vmul.f32 %v4604, %v4622
        %v4641 = vmul.f32 %v4605, %v4622
        %v4642 = vmul.f32 %v4606, %v4622
        %v4643 = vmul.f32 %v4607, %v4622
        %v4644 = vmul.f32 %v4608, %v4622
        %v4645 = vmul.f32 %v4609, %v4622
        %v4646 = vmul.f32 %v4610, %v4622
        %v4647 = vmul.f32 %v4611, %v4622
        %v4648 = vmul.f32 %v4612, %v4622
        %v4649 = vmul.f32 %v4613, %v4622
        %v4650 = vmul.f32 %v4614, %v4622
        %v4651 = vmul.f32 %v4615, %v4622
        %v4652 = vmul.f32 %v4616, %v4622
        %v4653 = vmul.f32 %v4617, %v4622
        %v4654 = vmul.f32 %v4618, %v4622
        %v4655 = vadd.f32 %v4554, %v4623
        %v4656 = vadd.f32 %v4555, %v4624
        %v4657 = vadd.f32 %v4556, %v4625
        %v4658 = vadd.f32 %v4557, %v4626
        %v4659 = vadd.f32 %v4558, %v4627
        %v4660 = vadd.f32 %v4559, %v4628
        %v4661 = vadd.f32 %v4560, %v4629
        %v4662 = vadd.f32 %v4561, %v4630
        %v4663 = vadd.f32 %v4562, %v4631
        %v4664 = vadd.f32 %v4563, %v4632
        %v4665 = vadd.f32 %v4564, %v4633
        %v4666 = vadd.f32 %v4565, %v4634
        %v4667 = vadd.f32 %v4566, %v4635
        %v4668 = vadd.f32 %v4567, %v4636
        %v4669 = vadd.f32 %v4568, %v4637
        %v4670 = vadd.f32 %v4569, %v4638
        %v4671 = vadd.f32 %v4570, %v4639
        %v4672 = vadd.f32 %v4571, %v4640
        %v4673 = vadd.f32 %v4572, %v4641
        %v4674 = vadd.f32 %v4573, %v4642
        %v4675 = vadd.f32 %v4574, %v4643
        %v4676 = vadd.f32 %v4575, %v4644
        %v4677 = vadd.f32 %v4576, %v4645
        %v4678 = vadd.f32 %v4577, %v4646
        %v4679 = vadd.f32 %v4578, %v4647
        %v4680 = vadd.f32 %v4579, %v4648
        %v4681 = vadd.f32 %v4580, %v4649
        %v4682 = vadd.f32 %v4581, %v4650
        %v4683 = vadd.f32 %v4582, %v4651
        %v4684 = vadd.f32 %v4583, %v4652
        %v4685 = vadd.f32 %v4584, %v4653
        %v4686 = vadd.f32 %v4585, %v4654
        %s4687 = scalar_lea.vmem %s25, 4
        %v4688 = vld [vmem:[%s4687] sm:$0x1]
        %v4689 = vld [vmem:[%s4351] sm:$0xff]
        %v4690 = vld [vmem:[%s4351 + $0x8] sm:$0xff]
        %v4691 = vld [vmem:[%s4351 + $0x18] sm:$0xff]
        %v4692 = vld [vmem:[%s4351 + $0x20] sm:$0xff]
        %v4693 = vld [vmem:[%s4351 + $0x30] sm:$0xff]
        %v4694 = vld [vmem:[%s4351 + $0x38] sm:$0xff]
        %v4695 = vld [vmem:[%s4351 + $0x48] sm:$0xff]
        %v4696 = vld [vmem:[%s4351 + $0x50] sm:$0xff]
        %v4697 = vld [vmem:[%s4351 + $0x60] sm:$0xff]
        %v4698 = vld [vmem:[%s4351 + $0x68] sm:$0xff]
        %v4699 = vld [vmem:[%s4351 + $0x78] sm:$0xff]
        %v4700 = vld [vmem:[%s4351 + $0x80] sm:$0xff]
        %v4701 = vld [vmem:[%s4351 + $0x90] sm:$0xff]
        %v4702 = vld [vmem:[%s4351 + $0x98] sm:$0xff]
        %v4703 = vld [vmem:[%s4351 + $0xa8] sm:$0xff]
        %v4704 = vld [vmem:[%s4351 + $0xb0] sm:$0xff]
        %v4705 = vld [vmem:[%s4351 + $0xc0] sm:$0xff]
        %v4706 = vld [vmem:[%s4351 + $0xc8] sm:$0xff]
        %v4707 = vld [vmem:[%s4351 + $0xd8] sm:$0xff]
        %v4708 = vld [vmem:[%s4351 + $0xe0] sm:$0xff]
        %v4709 = vld [vmem:[%s4351 + $0xf0] sm:$0xff]
        %v4710 = vld [vmem:[%s4351 + $0xf8] sm:$0xff]
        %v4711 = vld [vmem:[%s4351 + $0x108] sm:$0xff]
        %v4712 = vld [vmem:[%s4351 + $0x110] sm:$0xff]
        %v4713 = vld [vmem:[%s4351 + $0x120] sm:$0xff]
        %v4714 = vld [vmem:[%s4351 + $0x128] sm:$0xff]
        %v4715 = vld [vmem:[%s4351 + $0x138] sm:$0xff]
        %v4716 = vld [vmem:[%s4351 + $0x140] sm:$0xff]
        %v4717 = vld [vmem:[%s4351 + $0x150] sm:$0xff]
        %v4718 = vld [vmem:[%s4351 + $0x158] sm:$0xff]
        %v4719 = vld [vmem:[%s4351 + $0x168] sm:$0xff]
        %v4720 = vld [vmem:[%s4351 + $0x170] sm:$0xff]
        %v4721 = vlaneseq
        %v4722 = vshrl.u32 %v4721, 7
        %v4723 = vsub.s32 0, %v4722
        %v4724 = vrot.slane %v4688, %v4723
        %v4725 = vmul.f32 %v4689, %v4724
        %v4726 = vmul.f32 %v4690, %v4724
        %v4727 = vmul.f32 %v4691, %v4724
        %v4728 = vmul.f32 %v4692, %v4724
        %v4729 = vmul.f32 %v4693, %v4724
        %v4730 = vmul.f32 %v4694, %v4724
        %v4731 = vmul.f32 %v4695, %v4724
        %v4732 = vmul.f32 %v4696, %v4724
        %v4733 = vmul.f32 %v4697, %v4724
        %v4734 = vmul.f32 %v4698, %v4724
        %v4735 = vmul.f32 %v4699, %v4724
        %v4736 = vmul.f32 %v4700, %v4724
        %v4737 = vmul.f32 %v4701, %v4724
        %v4738 = vmul.f32 %v4702, %v4724
        %v4739 = vmul.f32 %v4703, %v4724
        %v4740 = vmul.f32 %v4704, %v4724
        %v4741 = vmul.f32 %v4705, %v4724
        %v4742 = vmul.f32 %v4706, %v4724
        %v4743 = vmul.f32 %v4707, %v4724
        %v4744 = vmul.f32 %v4708, %v4724
        %v4745 = vmul.f32 %v4709, %v4724
        %v4746 = vmul.f32 %v4710, %v4724
        %v4747 = vmul.f32 %v4711, %v4724
        %v4748 = vmul.f32 %v4712, %v4724
        %v4749 = vmul.f32 %v4713, %v4724
        %v4750 = vmul.f32 %v4714, %v4724
        %v4751 = vmul.f32 %v4715, %v4724
        %v4752 = vmul.f32 %v4716, %v4724
        %v4753 = vmul.f32 %v4717, %v4724
        %v4754 = vmul.f32 %v4718, %v4724
        %v4755 = vmul.f32 %v4719, %v4724
        %v4756 = vmul.f32 %v4720, %v4724
        %v4757 = vadd.f32 %v4655, %v4725
        %v4758 = vadd.f32 %v4656, %v4726
        %v4759 = vadd.f32 %v4657, %v4727
        %v4760 = vadd.f32 %v4658, %v4728
        %v4761 = vadd.f32 %v4659, %v4729
        %v4762 = vadd.f32 %v4660, %v4730
        %v4763 = vadd.f32 %v4661, %v4731
        %v4764 = vadd.f32 %v4662, %v4732
        %v4765 = vadd.f32 %v4663, %v4733
        %v4766 = vadd.f32 %v4664, %v4734
        %v4767 = vadd.f32 %v4665, %v4735
        %v4768 = vadd.f32 %v4666, %v4736
        %v4769 = vadd.f32 %v4667, %v4737
        %v4770 = vadd.f32 %v4668, %v4738
        %v4771 = vadd.f32 %v4669, %v4739
        %v4772 = vadd.f32 %v4670, %v4740
        %v4773 = vadd.f32 %v4671, %v4741
        %v4774 = vadd.f32 %v4672, %v4742
        %v4775 = vadd.f32 %v4673, %v4743
        %v4776 = vadd.f32 %v4674, %v4744
        %v4777 = vadd.f32 %v4675, %v4745
        %v4778 = vadd.f32 %v4676, %v4746
        %v4779 = vadd.f32 %v4677, %v4747
        %v4780 = vadd.f32 %v4678, %v4748
        %v4781 = vadd.f32 %v4679, %v4749
        %v4782 = vadd.f32 %v4680, %v4750
        %v4783 = vadd.f32 %v4681, %v4751
        %v4784 = vadd.f32 %v4682, %v4752
        %v4785 = vadd.f32 %v4683, %v4753
        %v4786 = vadd.f32 %v4684, %v4754
        %v4787 = vadd.f32 %v4685, %v4755
        %v4788 = vadd.f32 %v4686, %v4756
        %v4789 = vld [vmem:[%s4687 + $0x1] sm:$0x1]
        %v4790 = vld [vmem:[%s4351 + $0x1] sm:$0xff]
        %v4791 = vld [vmem:[%s4351 + $0x9] sm:$0xff]
        %v4792 = vld [vmem:[%s4351 + $0x19] sm:$0xff]
        %v4793 = vld [vmem:[%s4351 + $0x21] sm:$0xff]
        %v4794 = vld [vmem:[%s4351 + $0x31] sm:$0xff]
        %v4795 = vld [vmem:[%s4351 + $0x39] sm:$0xff]
        %v4796 = vld [vmem:[%s4351 + $0x49] sm:$0xff]
        %v4797 = vld [vmem:[%s4351 + $0x51] sm:$0xff]
        %v4798 = vld [vmem:[%s4351 + $0x61] sm:$0xff]
        %v4799 = vld [vmem:[%s4351 + $0x69] sm:$0xff]
        %v4800 = vld [vmem:[%s4351 + $0x79] sm:$0xff]
        %v4801 = vld [vmem:[%s4351 + $0x81] sm:$0xff]
        %v4802 = vld [vmem:[%s4351 + $0x91] sm:$0xff]
        %v4803 = vld [vmem:[%s4351 + $0x99] sm:$0xff]
        %v4804 = vld [vmem:[%s4351 + $0xa9] sm:$0xff]
        %v4805 = vld [vmem:[%s4351 + $0xb1] sm:$0xff]
        %v4806 = vld [vmem:[%s4351 + $0xc1] sm:$0xff]
        %v4807 = vld [vmem:[%s4351 + $0xc9] sm:$0xff]
        %v4808 = vld [vmem:[%s4351 + $0xd9] sm:$0xff]
        %v4809 = vld [vmem:[%s4351 + $0xe1] sm:$0xff]
        %v4810 = vld [vmem:[%s4351 + $0xf1] sm:$0xff]
        %v4811 = vld [vmem:[%s4351 + $0xf9] sm:$0xff]
        %v4812 = vld [vmem:[%s4351 + $0x109] sm:$0xff]
        %v4813 = vld [vmem:[%s4351 + $0x111] sm:$0xff]
        %v4814 = vld [vmem:[%s4351 + $0x121] sm:$0xff]
        %v4815 = vld [vmem:[%s4351 + $0x129] sm:$0xff]
        %v4816 = vld [vmem:[%s4351 + $0x139] sm:$0xff]
        %v4817 = vld [vmem:[%s4351 + $0x141] sm:$0xff]
        %v4818 = vld [vmem:[%s4351 + $0x151] sm:$0xff]
        %v4819 = vld [vmem:[%s4351 + $0x159] sm:$0xff]
        %v4820 = vld [vmem:[%s4351 + $0x169] sm:$0xff]
        %v4821 = vld [vmem:[%s4351 + $0x171] sm:$0xff]
        %v4822 = vlaneseq
        %v4823 = vshrl.u32 %v4822, 7
        %v4824 = vsub.s32 0, %v4823
        %v4825 = vrot.slane %v4789, %v4824
        %v4826 = vmul.f32 %v4790, %v4825
        %v4827 = vmul.f32 %v4791, %v4825
        %v4828 = vmul.f32 %v4792, %v4825
        %v4829 = vmul.f32 %v4793, %v4825
        %v4830 = vmul.f32 %v4794, %v4825
        %v4831 = vmul.f32 %v4795, %v4825
        %v4832 = vmul.f32 %v4796, %v4825
        %v4833 = vmul.f32 %v4797, %v4825
        %v4834 = vmul.f32 %v4798, %v4825
        %v4835 = vmul.f32 %v4799, %v4825
        %v4836 = vmul.f32 %v4800, %v4825
        %v4837 = vmul.f32 %v4801, %v4825
        %v4838 = vmul.f32 %v4802, %v4825
        %v4839 = vmul.f32 %v4803, %v4825
        %v4840 = vmul.f32 %v4804, %v4825
        %v4841 = vmul.f32 %v4805, %v4825
        %v4842 = vmul.f32 %v4806, %v4825
        %v4843 = vmul.f32 %v4807, %v4825
        %v4844 = vmul.f32 %v4808, %v4825
        %v4845 = vmul.f32 %v4809, %v4825
        %v4846 = vmul.f32 %v4810, %v4825
        %v4847 = vmul.f32 %v4811, %v4825
        %v4848 = vmul.f32 %v4812, %v4825
        %v4849 = vmul.f32 %v4813, %v4825
        %v4850 = vmul.f32 %v4814, %v4825
        %v4851 = vmul.f32 %v4815, %v4825
        %v4852 = vmul.f32 %v4816, %v4825
        %v4853 = vmul.f32 %v4817, %v4825
        %v4854 = vmul.f32 %v4818, %v4825
        %v4855 = vmul.f32 %v4819, %v4825
        %v4856 = vmul.f32 %v4820, %v4825
        %v4857 = vmul.f32 %v4821, %v4825
        %v4858 = vadd.f32 %v4757, %v4826
        %v4859 = vadd.f32 %v4758, %v4827
        %v4860 = vadd.f32 %v4759, %v4828
        %v4861 = vadd.f32 %v4760, %v4829
        %v4862 = vadd.f32 %v4761, %v4830
        %v4863 = vadd.f32 %v4762, %v4831
        %v4864 = vadd.f32 %v4763, %v4832
        %v4865 = vadd.f32 %v4764, %v4833
        %v4866 = vadd.f32 %v4765, %v4834
        %v4867 = vadd.f32 %v4766, %v4835
        %v4868 = vadd.f32 %v4767, %v4836
        %v4869 = vadd.f32 %v4768, %v4837
        %v4870 = vadd.f32 %v4769, %v4838
        %v4871 = vadd.f32 %v4770, %v4839
        %v4872 = vadd.f32 %v4771, %v4840
        %v4873 = vadd.f32 %v4772, %v4841
        %v4874 = vadd.f32 %v4773, %v4842
        %v4875 = vadd.f32 %v4774, %v4843
        %v4876 = vadd.f32 %v4775, %v4844
        %v4877 = vadd.f32 %v4776, %v4845
        %v4878 = vadd.f32 %v4777, %v4846
        %v4879 = vadd.f32 %v4778, %v4847
        %v4880 = vadd.f32 %v4779, %v4848
        %v4881 = vadd.f32 %v4780, %v4849
        %v4882 = vadd.f32 %v4781, %v4850
        %v4883 = vadd.f32 %v4782, %v4851
        %v4884 = vadd.f32 %v4783, %v4852
        %v4885 = vadd.f32 %v4784, %v4853
        %v4886 = vadd.f32 %v4785, %v4854
        %v4887 = vadd.f32 %v4786, %v4855
        %v4888 = vadd.f32 %v4787, %v4856
        %v4889 = vadd.f32 %v4788, %v4857
        %v4890 = vld [vmem:[%s4687 + $0x2] sm:$0x1]
        %v4891 = vld [vmem:[%s4351 + $0x2] sm:$0xff]
        %v4892 = vld [vmem:[%s4351 + $0xa] sm:$0xff]
        %v4893 = vld [vmem:[%s4351 + $0x1a] sm:$0xff]
        %v4894 = vld [vmem:[%s4351 + $0x22] sm:$0xff]
        %v4895 = vld [vmem:[%s4351 + $0x32] sm:$0xff]
        %v4896 = vld [vmem:[%s4351 + $0x3a] sm:$0xff]
        %v4897 = vld [vmem:[%s4351 + $0x4a] sm:$0xff]
        %v4898 = vld [vmem:[%s4351 + $0x52] sm:$0xff]
        %v4899 = vld [vmem:[%s4351 + $0x62] sm:$0xff]
        %v4900 = vld [vmem:[%s4351 + $0x6a] sm:$0xff]
        %v4901 = vld [vmem:[%s4351 + $0x7a] sm:$0xff]
        %v4902 = vld [vmem:[%s4351 + $0x82] sm:$0xff]
        %v4903 = vld [vmem:[%s4351 + $0x92] sm:$0xff]
        %v4904 = vld [vmem:[%s4351 + $0x9a] sm:$0xff]
        %v4905 = vld [vmem:[%s4351 + $0xaa] sm:$0xff]
        %v4906 = vld [vmem:[%s4351 + $0xb2] sm:$0xff]
        %v4907 = vld [vmem:[%s4351 + $0xc2] sm:$0xff]
        %v4908 = vld [vmem:[%s4351 + $0xca] sm:$0xff]
        %v4909 = vld [vmem:[%s4351 + $0xda] sm:$0xff]
        %v4910 = vld [vmem:[%s4351 + $0xe2] sm:$0xff]
        %v4911 = vld [vmem:[%s4351 + $0xf2] sm:$0xff]
        %v4912 = vld [vmem:[%s4351 + $0xfa] sm:$0xff]
        %v4913 = vld [vmem:[%s4351 + $0x10a] sm:$0xff]
        %v4914 = vld [vmem:[%s4351 + $0x112] sm:$0xff]
        %v4915 = vld [vmem:[%s4351 + $0x122] sm:$0xff]
        %v4916 = vld [vmem:[%s4351 + $0x12a] sm:$0xff]
        %v4917 = vld [vmem:[%s4351 + $0x13a] sm:$0xff]
        %v4918 = vld [vmem:[%s4351 + $0x142] sm:$0xff]
        %v4919 = vld [vmem:[%s4351 + $0x152] sm:$0xff]
        %v4920 = vld [vmem:[%s4351 + $0x15a] sm:$0xff]
        %v4921 = vld [vmem:[%s4351 + $0x16a] sm:$0xff]
        %v4922 = vld [vmem:[%s4351 + $0x172] sm:$0xff]
        %v4923 = vlaneseq
        %v4924 = vshrl.u32 %v4923, 7
        %v4925 = vsub.s32 0, %v4924
        %v4926 = vrot.slane %v4890, %v4925
        %v4927 = vmul.f32 %v4891, %v4926
        %v4928 = vmul.f32 %v4892, %v4926
        %v4929 = vmul.f32 %v4893, %v4926
        %v4930 = vmul.f32 %v4894, %v4926
        %v4931 = vmul.f32 %v4895, %v4926
        %v4932 = vmul.f32 %v4896, %v4926
        %v4933 = vmul.f32 %v4897, %v4926
        %v4934 = vmul.f32 %v4898, %v4926
        %v4935 = vmul.f32 %v4899, %v4926
        %v4936 = vmul.f32 %v4900, %v4926
        %v4937 = vmul.f32 %v4901, %v4926
        %v4938 = vmul.f32 %v4902, %v4926
        %v4939 = vmul.f32 %v4903, %v4926
        %v4940 = vmul.f32 %v4904, %v4926
        %v4941 = vmul.f32 %v4905, %v4926
        %v4942 = vmul.f32 %v4906, %v4926
        %v4943 = vmul.f32 %v4907, %v4926
        %v4944 = vmul.f32 %v4908, %v4926
        %v4945 = vmul.f32 %v4909, %v4926
        %v4946 = vmul.f32 %v4910, %v4926
        %v4947 = vmul.f32 %v4911, %v4926
        %v4948 = vmul.f32 %v4912, %v4926
        %v4949 = vmul.f32 %v4913, %v4926
        %v4950 = vmul.f32 %v4914, %v4926
        %v4951 = vmul.f32 %v4915, %v4926
        %v4952 = vmul.f32 %v4916, %v4926
        %v4953 = vmul.f32 %v4917, %v4926
        %v4954 = vmul.f32 %v4918, %v4926
        %v4955 = vmul.f32 %v4919, %v4926
        %v4956 = vmul.f32 %v4920, %v4926
        %v4957 = vmul.f32 %v4921, %v4926
        %v4958 = vmul.f32 %v4922, %v4926
        %v4959 = vadd.f32 %v4858, %v4927
        %v4960 = vadd.f32 %v4859, %v4928
        %v4961 = vadd.f32 %v4860, %v4929
        %v4962 = vadd.f32 %v4861, %v4930
        %v4963 = vadd.f32 %v4862, %v4931
        %v4964 = vadd.f32 %v4863, %v4932
        %v4965 = vadd.f32 %v4864, %v4933
        %v4966 = vadd.f32 %v4865, %v4934
        %v4967 = vadd.f32 %v4866, %v4935
        %v4968 = vadd.f32 %v4867, %v4936
        %v4969 = vadd.f32 %v4868, %v4937
        %v4970 = vadd.f32 %v4869, %v4938
        %v4971 = vadd.f32 %v4870, %v4939
        %v4972 = vadd.f32 %v4871, %v4940
        %v4973 = vadd.f32 %v4872, %v4941
        %v4974 = vadd.f32 %v4873, %v4942
        %v4975 = vadd.f32 %v4874, %v4943
        %v4976 = vadd.f32 %v4875, %v4944
        %v4977 = vadd.f32 %v4876, %v4945
        %v4978 = vadd.f32 %v4877, %v4946
        %v4979 = vadd.f32 %v4878, %v4947
        %v4980 = vadd.f32 %v4879, %v4948
        %v4981 = vadd.f32 %v4880, %v4949
        %v4982 = vadd.f32 %v4881, %v4950
        %v4983 = vadd.f32 %v4882, %v4951
        %v4984 = vadd.f32 %v4883, %v4952
        %v4985 = vadd.f32 %v4884, %v4953
        %v4986 = vadd.f32 %v4885, %v4954
        %v4987 = vadd.f32 %v4886, %v4955
        %v4988 = vadd.f32 %v4887, %v4956
        %v4989 = vadd.f32 %v4888, %v4957
        %v4990 = vadd.f32 %v4889, %v4958
        %s4991 = scalar_lea.vmem %s25, 8
        %v4992 = vld [vmem:[%s4991] sm:$0x1]
        %s4993 = scalar_lea.vmem [#allocation4], 48
        %v4994 = vld [vmem:[%s4993] sm:$0xff]
        %v4995 = vld [vmem:[%s4993 + $0x8] sm:$0xff]
        %v4996 = vld [vmem:[%s4993 + $0x18] sm:$0xff]
        %v4997 = vld [vmem:[%s4993 + $0x20] sm:$0xff]
        %v4998 = vld [vmem:[%s4993 + $0x30] sm:$0xff]
        %v4999 = vld [vmem:[%s4993 + $0x38] sm:$0xff]
        %v5000 = vld [vmem:[%s4993 + $0x48] sm:$0xff]
        %v5001 = vld [vmem:[%s4993 + $0x50] sm:$0xff]
        %v5002 = vld [vmem:[%s4993 + $0x60] sm:$0xff]
        %v5003 = vld [vmem:[%s4993 + $0x68] sm:$0xff]
        %v5004 = vld [vmem:[%s4993 + $0x78] sm:$0xff]
        %v5005 = vld [vmem:[%s4993 + $0x80] sm:$0xff]
        %v5006 = vld [vmem:[%s4993 + $0x90] sm:$0xff]
        %v5007 = vld [vmem:[%s4993 + $0x98] sm:$0xff]
        %v5008 = vld [vmem:[%s4993 + $0xa8] sm:$0xff]
        %v5009 = vld [vmem:[%s4993 + $0xb0] sm:$0xff]
        %v5010 = vld [vmem:[%s4993 + $0xc0] sm:$0xff]
        %v5011 = vld [vmem:[%s4993 + $0xc8] sm:$0xff]
        %v5012 = vld [vmem:[%s4993 + $0xd8] sm:$0xff]
        %v5013 = vld [vmem:[%s4993 + $0xe0] sm:$0xff]
        %v5014 = vld [vmem:[%s4993 + $0xf0] sm:$0xff]
        %v5015 = vld [vmem:[%s4993 + $0xf8] sm:$0xff]
        %v5016 = vld [vmem:[%s4993 + $0x108] sm:$0xff]
        %v5017 = vld [vmem:[%s4993 + $0x110] sm:$0xff]
        %v5018 = vld [vmem:[%s4993 + $0x120] sm:$0xff]
        %v5019 = vld [vmem:[%s4993 + $0x128] sm:$0xff]
        %v5020 = vld [vmem:[%s4993 + $0x138] sm:$0xff]
        %v5021 = vld [vmem:[%s4993 + $0x140] sm:$0xff]
        %v5022 = vld [vmem:[%s4993 + $0x150] sm:$0xff]
        %v5023 = vld [vmem:[%s4993 + $0x158] sm:$0xff]
        %v5024 = vld [vmem:[%s4993 + $0x168] sm:$0xff]
        %v5025 = vld [vmem:[%s4993 + $0x170] sm:$0xff]
        %v5026 = vlaneseq
        %v5027 = vshrl.u32 %v5026, 7
        %v5028 = vsub.s32 0, %v5027
        %v5029 = vrot.slane %v4992, %v5028
        %v5030 = vmul.f32 %v4994, %v5029
        %v5031 = vmul.f32 %v4995, %v5029
        %v5032 = vmul.f32 %v4996, %v5029
        %v5033 = vmul.f32 %v4997, %v5029
        %v5034 = vmul.f32 %v4998, %v5029
        %v5035 = vmul.f32 %v4999, %v5029
        %v5036 = vmul.f32 %v5000, %v5029
        %v5037 = vmul.f32 %v5001, %v5029
        %v5038 = vmul.f32 %v5002, %v5029
        %v5039 = vmul.f32 %v5003, %v5029
        %v5040 = vmul.f32 %v5004, %v5029
        %v5041 = vmul.f32 %v5005, %v5029
        %v5042 = vmul.f32 %v5006, %v5029
        %v5043 = vmul.f32 %v5007, %v5029
        %v5044 = vmul.f32 %v5008, %v5029
        %v5045 = vmul.f32 %v5009, %v5029
        %v5046 = vmul.f32 %v5010, %v5029
        %v5047 = vmul.f32 %v5011, %v5029
        %v5048 = vmul.f32 %v5012, %v5029
        %v5049 = vmul.f32 %v5013, %v5029
        %v5050 = vmul.f32 %v5014, %v5029
        %v5051 = vmul.f32 %v5015, %v5029
        %v5052 = vmul.f32 %v5016, %v5029
        %v5053 = vmul.f32 %v5017, %v5029
        %v5054 = vmul.f32 %v5018, %v5029
        %v5055 = vmul.f32 %v5019, %v5029
        %v5056 = vmul.f32 %v5020, %v5029
        %v5057 = vmul.f32 %v5021, %v5029
        %v5058 = vmul.f32 %v5022, %v5029
        %v5059 = vmul.f32 %v5023, %v5029
        %v5060 = vmul.f32 %v5024, %v5029
        %v5061 = vmul.f32 %v5025, %v5029
        %v5062 = vadd.f32 %v4959, %v5030
        %v5063 = vadd.f32 %v4960, %v5031
        %v5064 = vadd.f32 %v4961, %v5032
        %v5065 = vadd.f32 %v4962, %v5033
        %v5066 = vadd.f32 %v4963, %v5034
        %v5067 = vadd.f32 %v4964, %v5035
        %v5068 = vadd.f32 %v4965, %v5036
        %v5069 = vadd.f32 %v4966, %v5037
        %v5070 = vadd.f32 %v4967, %v5038
        %v5071 = vadd.f32 %v4968, %v5039
        %v5072 = vadd.f32 %v4969, %v5040
        %v5073 = vadd.f32 %v4970, %v5041
        %v5074 = vadd.f32 %v4971, %v5042
        %v5075 = vadd.f32 %v4972, %v5043
        %v5076 = vadd.f32 %v4973, %v5044
        %v5077 = vadd.f32 %v4974, %v5045
        %v5078 = vadd.f32 %v4975, %v5046
        %v5079 = vadd.f32 %v4976, %v5047
        %v5080 = vadd.f32 %v4977, %v5048
        %v5081 = vadd.f32 %v4978, %v5049
        %v5082 = vadd.f32 %v4979, %v5050
        %v5083 = vadd.f32 %v4980, %v5051
        %v5084 = vadd.f32 %v4981, %v5052
        %v5085 = vadd.f32 %v4982, %v5053
        %v5086 = vadd.f32 %v4983, %v5054
        %v5087 = vadd.f32 %v4984, %v5055
        %v5088 = vadd.f32 %v4985, %v5056
        %v5089 = vadd.f32 %v4986, %v5057
        %v5090 = vadd.f32 %v4987, %v5058
        %v5091 = vadd.f32 %v4988, %v5059
        %v5092 = vadd.f32 %v4989, %v5060
        %v5093 = vadd.f32 %v4990, %v5061
        %v5094 = vld [vmem:[%s4991 + $0x1] sm:$0x1]
        %v5095 = vld [vmem:[%s4993 + $0x1] sm:$0xff]
        %v5096 = vld [vmem:[%s4993 + $0x9] sm:$0xff]
        %v5097 = vld [vmem:[%s4993 + $0x19] sm:$0xff]
        %v5098 = vld [vmem:[%s4993 + $0x21] sm:$0xff]
        %v5099 = vld [vmem:[%s4993 + $0x31] sm:$0xff]
        %v5100 = vld [vmem:[%s4993 + $0x39] sm:$0xff]
        %v5101 = vld [vmem:[%s4993 + $0x49] sm:$0xff]
        %v5102 = vld [vmem:[%s4993 + $0x51] sm:$0xff]
        %v5103 = vld [vmem:[%s4993 + $0x61] sm:$0xff]
        %v5104 = vld [vmem:[%s4993 + $0x69] sm:$0xff]
        %v5105 = vld [vmem:[%s4993 + $0x79] sm:$0xff]
        %v5106 = vld [vmem:[%s4993 + $0x81] sm:$0xff]
        %v5107 = vld [vmem:[%s4993 + $0x91] sm:$0xff]
        %v5108 = vld [vmem:[%s4993 + $0x99] sm:$0xff]
        %v5109 = vld [vmem:[%s4993 + $0xa9] sm:$0xff]
        %v5110 = vld [vmem:[%s4993 + $0xb1] sm:$0xff]
        %v5111 = vld [vmem:[%s4993 + $0xc1] sm:$0xff]
        %v5112 = vld [vmem:[%s4993 + $0xc9] sm:$0xff]
        %v5113 = vld [vmem:[%s4993 + $0xd9] sm:$0xff]
        %v5114 = vld [vmem:[%s4993 + $0xe1] sm:$0xff]
        %v5115 = vld [vmem:[%s4993 + $0xf1] sm:$0xff]
        %v5116 = vld [vmem:[%s4993 + $0xf9] sm:$0xff]
        %v5117 = vld [vmem:[%s4993 + $0x109] sm:$0xff]
        %v5118 = vld [vmem:[%s4993 + $0x111] sm:$0xff]
        %v5119 = vld [vmem:[%s4993 + $0x121] sm:$0xff]
        %v5120 = vld [vmem:[%s4993 + $0x129] sm:$0xff]
        %v5121 = vld [vmem:[%s4993 + $0x139] sm:$0xff]
        %v5122 = vld [vmem:[%s4993 + $0x141] sm:$0xff]
        %v5123 = vld [vmem:[%s4993 + $0x151] sm:$0xff]
        %v5124 = vld [vmem:[%s4993 + $0x159] sm:$0xff]
        %v5125 = vld [vmem:[%s4993 + $0x169] sm:$0xff]
        %v5126 = vld [vmem:[%s4993 + $0x171] sm:$0xff]
        %v5127 = vlaneseq
        %v5128 = vshrl.u32 %v5127, 7
        %v5129 = vsub.s32 0, %v5128
        %v5130 = vrot.slane %v5094, %v5129
        %v5131 = vmul.f32 %v5095, %v5130
        %v5132 = vmul.f32 %v5096, %v5130
        %v5133 = vmul.f32 %v5097, %v5130
        %v5134 = vmul.f32 %v5098, %v5130
        %v5135 = vmul.f32 %v5099, %v5130
        %v5136 = vmul.f32 %v5100, %v5130
        %v5137 = vmul.f32 %v5101, %v5130
        %v5138 = vmul.f32 %v5102, %v5130
        %v5139 = vmul.f32 %v5103, %v5130
        %v5140 = vmul.f32 %v5104, %v5130
        %v5141 = vmul.f32 %v5105, %v5130
        %v5142 = vmul.f32 %v5106, %v5130
        %v5143 = vmul.f32 %v5107, %v5130
        %v5144 = vmul.f32 %v5108, %v5130
        %v5145 = vmul.f32 %v5109, %v5130
        %v5146 = vmul.f32 %v5110, %v5130
        %v5147 = vmul.f32 %v5111, %v5130
        %v5148 = vmul.f32 %v5112, %v5130
        %v5149 = vmul.f32 %v5113, %v5130
        %v5150 = vmul.f32 %v5114, %v5130
        %v5151 = vmul.f32 %v5115, %v5130
        %v5152 = vmul.f32 %v5116, %v5130
        %v5153 = vmul.f32 %v5117, %v5130
        %v5154 = vmul.f32 %v5118, %v5130
        %v5155 = vmul.f32 %v5119, %v5130
        %v5156 = vmul.f32 %v5120, %v5130
        %v5157 = vmul.f32 %v5121, %v5130
        %v5158 = vmul.f32 %v5122, %v5130
        %v5159 = vmul.f32 %v5123, %v5130
        %v5160 = vmul.f32 %v5124, %v5130
        %v5161 = vmul.f32 %v5125, %v5130
        %v5162 = vmul.f32 %v5126, %v5130
        %v5163 = vadd.f32 %v5062, %v5131
        %v5164 = vadd.f32 %v5063, %v5132
        %v5165 = vadd.f32 %v5064, %v5133
        %v5166 = vadd.f32 %v5065, %v5134
        %v5167 = vadd.f32 %v5066, %v5135
        %v5168 = vadd.f32 %v5067, %v5136
        %v5169 = vadd.f32 %v5068, %v5137
        %v5170 = vadd.f32 %v5069, %v5138
        %v5171 = vadd.f32 %v5070, %v5139
        %v5172 = vadd.f32 %v5071, %v5140
        %v5173 = vadd.f32 %v5072, %v5141
        %v5174 = vadd.f32 %v5073, %v5142
        %v5175 = vadd.f32 %v5074, %v5143
        %v5176 = vadd.f32 %v5075, %v5144
        %v5177 = vadd.f32 %v5076, %v5145
        %v5178 = vadd.f32 %v5077, %v5146
        %v5179 = vadd.f32 %v5078, %v5147
        %v5180 = vadd.f32 %v5079, %v5148
        %v5181 = vadd.f32 %v5080, %v5149
        %v5182 = vadd.f32 %v5081, %v5150
        %v5183 = vadd.f32 %v5082, %v5151
        %v5184 = vadd.f32 %v5083, %v5152
        %v5185 = vadd.f32 %v5084, %v5153
        %v5186 = vadd.f32 %v5085, %v5154
        %v5187 = vadd.f32 %v5086, %v5155
        %v5188 = vadd.f32 %v5087, %v5156
        %v5189 = vadd.f32 %v5088, %v5157
        %v5190 = vadd.f32 %v5089, %v5158
        %v5191 = vadd.f32 %v5090, %v5159
        %v5192 = vadd.f32 %v5091, %v5160
        %v5193 = vadd.f32 %v5092, %v5161
        %v5194 = vadd.f32 %v5093, %v5162
        %v5195 = vld [vmem:[%s4991 + $0x2] sm:$0x1]
        %v5196 = vld [vmem:[%s4993 + $0x2] sm:$0xff]
        %v5197 = vld [vmem:[%s4993 + $0xa] sm:$0xff]
        %v5198 = vld [vmem:[%s4993 + $0x1a] sm:$0xff]
        %v5199 = vld [vmem:[%s4993 + $0x22] sm:$0xff]
        %v5200 = vld [vmem:[%s4993 + $0x32] sm:$0xff]
        %v5201 = vld [vmem:[%s4993 + $0x3a] sm:$0xff]
        %v5202 = vld [vmem:[%s4993 + $0x4a] sm:$0xff]
        %v5203 = vld [vmem:[%s4993 + $0x52] sm:$0xff]
        %v5204 = vld [vmem:[%s4993 + $0x62] sm:$0xff]
        %v5205 = vld [vmem:[%s4993 + $0x6a] sm:$0xff]
        %v5206 = vld [vmem:[%s4993 + $0x7a] sm:$0xff]
        %v5207 = vld [vmem:[%s4993 + $0x82] sm:$0xff]
        %v5208 = vld [vmem:[%s4993 + $0x92] sm:$0xff]
        %v5209 = vld [vmem:[%s4993 + $0x9a] sm:$0xff]
        %v5210 = vld [vmem:[%s4993 + $0xaa] sm:$0xff]
        %v5211 = vld [vmem:[%s4993 + $0xb2] sm:$0xff]
        %v5212 = vld [vmem:[%s4993 + $0xc2] sm:$0xff]
        %v5213 = vld [vmem:[%s4993 + $0xca] sm:$0xff]
        %v5214 = vld [vmem:[%s4993 + $0xda] sm:$0xff]
        %v5215 = vld [vmem:[%s4993 + $0xe2] sm:$0xff]
        %v5216 = vld [vmem:[%s4993 + $0xf2] sm:$0xff]
        %v5217 = vld [vmem:[%s4993 + $0xfa] sm:$0xff]
        %v5218 = vld [vmem:[%s4993 + $0x10a] sm:$0xff]
        %v5219 = vld [vmem:[%s4993 + $0x112] sm:$0xff]
        %v5220 = vld [vmem:[%s4993 + $0x122] sm:$0xff]
        %v5221 = vld [vmem:[%s4993 + $0x12a] sm:$0xff]
        %v5222 = vld [vmem:[%s4993 + $0x13a] sm:$0xff]
        %v5223 = vld [vmem:[%s4993 + $0x142] sm:$0xff]
        %v5224 = vld [vmem:[%s4993 + $0x152] sm:$0xff]
        %v5225 = vld [vmem:[%s4993 + $0x15a] sm:$0xff]
        %v5226 = vld [vmem:[%s4993 + $0x16a] sm:$0xff]
        %v5227 = vld [vmem:[%s4993 + $0x172] sm:$0xff]
        %v5228 = vlaneseq
        %v5229 = vshrl.u32 %v5228, 7
        %v5230 = vsub.s32 0, %v5229
        %v5231 = vrot.slane %v5195, %v5230
        %v5232 = vmul.f32 %v5196, %v5231
        %v5233 = vmul.f32 %v5197, %v5231
        %v5234 = vmul.f32 %v5198, %v5231
        %v5235 = vmul.f32 %v5199, %v5231
        %v5236 = vmul.f32 %v5200, %v5231
        %v5237 = vmul.f32 %v5201, %v5231
        %v5238 = vmul.f32 %v5202, %v5231
        %v5239 = vmul.f32 %v5203, %v5231
        %v5240 = vmul.f32 %v5204, %v5231
        %v5241 = vmul.f32 %v5205, %v5231
        %v5242 = vmul.f32 %v5206, %v5231
        %v5243 = vmul.f32 %v5207, %v5231
        %v5244 = vmul.f32 %v5208, %v5231
        %v5245 = vmul.f32 %v5209, %v5231
        %v5246 = vmul.f32 %v5210, %v5231
        %v5247 = vmul.f32 %v5211, %v5231
        %v5248 = vmul.f32 %v5212, %v5231
        %v5249 = vmul.f32 %v5213, %v5231
        %v5250 = vmul.f32 %v5214, %v5231
        %v5251 = vmul.f32 %v5215, %v5231
        %v5252 = vmul.f32 %v5216, %v5231
        %v5253 = vmul.f32 %v5217, %v5231
        %v5254 = vmul.f32 %v5218, %v5231
        %v5255 = vmul.f32 %v5219, %v5231
        %v5256 = vmul.f32 %v5220, %v5231
        %v5257 = vmul.f32 %v5221, %v5231
        %v5258 = vmul.f32 %v5222, %v5231
        %v5259 = vmul.f32 %v5223, %v5231
        %v5260 = vmul.f32 %v5224, %v5231
        %v5261 = vmul.f32 %v5225, %v5231
        %v5262 = vmul.f32 %v5226, %v5231
        %v5263 = vmul.f32 %v5227, %v5231
        %v5264 = vadd.f32 %v5163, %v5232
        %v5265 = vadd.f32 %v5164, %v5233
        %v5266 = vadd.f32 %v5165, %v5234
        %v5267 = vadd.f32 %v5166, %v5235
        %v5268 = vadd.f32 %v5167, %v5236
        %v5269 = vadd.f32 %v5168, %v5237
        %v5270 = vadd.f32 %v5169, %v5238
        %v5271 = vadd.f32 %v5170, %v5239
        %v5272 = vadd.f32 %v5171, %v5240
        %v5273 = vadd.f32 %v5172, %v5241
        %v5274 = vadd.f32 %v5173, %v5242
        %v5275 = vadd.f32 %v5174, %v5243
        %v5276 = vadd.f32 %v5175, %v5244
        %v5277 = vadd.f32 %v5176, %v5245
        %v5278 = vadd.f32 %v5177, %v5246
        %v5279 = vadd.f32 %v5178, %v5247
        %v5280 = vadd.f32 %v5179, %v5248
        %v5281 = vadd.f32 %v5180, %v5249
        %v5282 = vadd.f32 %v5181, %v5250
        %v5283 = vadd.f32 %v5182, %v5251
        %v5284 = vadd.f32 %v5183, %v5252
        %v5285 = vadd.f32 %v5184, %v5253
        %v5286 = vadd.f32 %v5185, %v5254
        %v5287 = vadd.f32 %v5186, %v5255
        %v5288 = vadd.f32 %v5187, %v5256
        %v5289 = vadd.f32 %v5188, %v5257
        %v5290 = vadd.f32 %v5189, %v5258
        %v5291 = vadd.f32 %v5190, %v5259
        %v5292 = vadd.f32 %v5191, %v5260
        %v5293 = vadd.f32 %v5192, %v5261
        %v5294 = vadd.f32 %v5193, %v5262
        %v5295 = vadd.f32 %v5194, %v5263
        %v5296 = vld [vmem:[%s27] sm:$0xff]
        %v5297 = vld [vmem:[%s27 + $0x8] sm:$0xff]
        %v5298 = vld [vmem:[%s27 + $0x10] sm:$0xff]
        %v5299 = vld [vmem:[%s27 + $0x18] sm:$0xff]
        %v5300 = vld [vmem:[%s27 + $0x20] sm:$0xff]
        %v5301 = vld [vmem:[%s27 + $0x28] sm:$0xff]
        %v5302 = vld [vmem:[%s27 + $0x30] sm:$0xff]
        %v5303 = vld [vmem:[%s27 + $0x38] sm:$0xff]
        %v5305 = vsel %vm4295, %v5264, 0
        %v5308 = vsel %vm4295, %v5265, 0
        %v5311 = vsel %vm4295, %v5266, 0
        %v5314 = vsel %vm4295, %v5267, 0
        %v5317 = vsel %vm4295, %v5268, 0
        %v5320 = vsel %vm4295, %v5269, 0
        %v5323 = vsel %vm4295, %v5270, 0
        %v5326 = vsel %vm4295, %v5271, 0
        %v5329 = vsel %vm4295, %v5272, 0
        %v5332 = vsel %vm4295, %v5273, 0
        %v5335 = vsel %vm4295, %v5274, 0
        %v5338 = vsel %vm4295, %v5275, 0
        %v5341 = vsel %vm4295, %v5276, 0
        %v5344 = vsel %vm4295, %v5277, 0
        %v5347 = vsel %vm4295, %v5278, 0
        %v5350 = vsel %vm4295, %v5279, 0
        %v5353 = vsel %vm4295, %v5280, 0
        %v5356 = vsel %vm4295, %v5281, 0
        %v5359 = vsel %vm4295, %v5282, 0
        %v5362 = vsel %vm4295, %v5283, 0
        %v5365 = vsel %vm4295, %v5284, 0
        %v5368 = vsel %vm4295, %v5285, 0
        %v5371 = vsel %vm4295, %v5286, 0
        %v5374 = vsel %vm4295, %v5287, 0
        %v5377 = vsel %vm4295, %v5288, 0
        %v5380 = vsel %vm4295, %v5289, 0
        %v5383 = vsel %vm4295, %v5290, 0
        %v5386 = vsel %vm4295, %v5291, 0
        %v5389 = vsel %vm4295, %v5292, 0
        %v5392 = vsel %vm4295, %v5293, 0
        %v5395 = vsel %vm4295, %v5294, 0
        %v5398 = vsel %vm4295, %v5295, 0
        %5400 = vmatprep.subr.mxu0 0.0
        %5401 = vmatpush1.msra.mxu0 %v5296
        %5402 = vmatprep.subr.mxu0 0.0
        %5403 = vmatpush1.msra.mxu0 %v5297
        %5404 = vmatprep.subr.mxu0 0.0
        %5405 = vmatpush1.msra.mxu0 %v5298
        %5406 = vmatprep.subr.mxu0 0.0
        %5407 = vmatpush1.msra.mxu0 %v5299
        %5408 = vmatprep.subr.mxu0 0.0
        %5409 = vmatpush1.msra.mxu0 %v5300
        %5410 = vmatprep.subr.mxu0 0.0
        %5411 = vmatpush1.msra.mxu0 %v5301
        %5412 = vmatprep.subr.mxu0 0.0
        %5413 = vmatpush1.msra.mxu0 %v5302
        %5414 = vmatprep.subr.mxu0 0.0
        %5415 = vmatpush1.msra.mxu0 %v5303
        %5416 = vmatprep.subr.mxu0 0.0
        %5417 = vmatpush1.msra.mxu0 0.0
        %5418 = vmatprep.subr.mxu0 0.0
        %5419 = vmatpush1.msra.mxu0 0.0
        %5420 = vmatprep.subr.mxu0 0.0
        %5421 = vmatpush1.msra.mxu0 0.0
        %5422 = vmatprep.subr.mxu0 0.0
        %5423 = vmatpush1.msra.mxu0 0.0
        %5424 = vmatprep.subr.mxu0 0.0
        %5425 = vmatpush1.msra.mxu0 0.0
        %5426 = vmatprep.subr.mxu0 0.0
        %5427 = vmatpush1.msra.mxu0 0.0
        %5428 = vmatprep.subr.mxu0 0.0
        %5429 = vmatpush1.msra.mxu0 0.0
        %5430 = vmatprep.subr.mxu0 0.0
        %5431 = vmatpush1.msra.mxu0 0.0
        %5432 = vmatprep.subr.mxu0 0.0
        %5433 = vmatpush1.msra.mxu0 0.0
        %5434 = vmatprep.subr.mxu0 0.0
        %5435 = vmatpush1.msra.mxu0 0.0
        %5436 = vmatprep.subr.mxu0 0.0
        %5437 = vmatpush1.msra.mxu0 0.0
        %5438 = vmatprep.subr.mxu0 0.0
        %5439 = vmatpush1.msra.mxu0 0.0
        %5440 = vmatprep.subr.mxu0 0.0
        %5441 = vmatpush1.msra.mxu0 0.0
        %5442 = vmatprep.subr.mxu0 0.0
        %5443 = vmatpush1.msra.mxu0 0.0
        %5444 = vmatprep.subr.mxu0 0.0
        %5445 = vmatpush1.msra.mxu0 0.0
        %5446 = vmatprep.subr.mxu0 0.0
        %5447 = vmatpush1.msra.mxu0 0.0
        %5448 = vmatprep.subr.mxu0 0.0
        %5449 = vmatpush1.msra.mxu0 0.0
        %5450 = vmatprep.subr.mxu0 0.0
        %5451 = vmatpush1.msra.mxu0 0.0
        %5452 = vmatprep.subr.mxu0 0.0
        %5453 = vmatpush1.msra.mxu0 0.0
        %5454 = vmatprep.subr.mxu0 0.0
        %5455 = vmatpush1.msra.mxu0 0.0
        %5456 = vmatprep.subr.mxu0 0.0
        %5457 = vmatpush1.msra.mxu0 0.0
        %5458 = vmatprep.subr.mxu0 0.0
        %5459 = vmatpush1.msra.mxu0 0.0
        %5460 = vmatprep.subr.mxu0 0.0
        %5461 = vmatpush1.msra.mxu0 0.0
        %5462 = vmatprep.subr.mxu0 0.0
        %5463 = vmatpush1.msra.mxu0 0.0
        %5464 = vmatprep.mubr.f32.mxu0 0.0
        %5465 = vmatmul.mubr.f32.gmra.mrb[0].mxu0 %v5305
        %v5466 = vpop.f32.mrb[0].mxu0
        %v5467 = vadd.f32 0.0, %v5466
        %v5468 = vpop.f32.mrb[0].mxu0
        %5469 = vmatprep.mubr.f32.mxu0 0.0
        %5470 = vmatmul.mubr.f32.gmra.mrb[0].mxu0 %v5308
        %v5471 = vpop.f32.mrb[0].mxu0
        %v5472 = vadd.f32 0.0, %v5471
        %v5473 = vpop.f32.mrb[0].mxu0
        %5474 = vmatprep.mubr.f32.mxu0 0.0
        %5475 = vmatmul.mubr.f32.gmra.mrb[0].mxu0 %v5311
        %v5476 = vpop.f32.mrb[0].mxu0
        %v5477 = vadd.f32 0.0, %v5476
        %v5478 = vpop.f32.mrb[0].mxu0
        %5479 = vmatprep.mubr.f32.mxu0 0.0
        %5480 = vmatmul.mubr.f32.gmra.mrb[0].mxu0 %v5314
        %v5481 = vpop.f32.mrb[0].mxu0
        %v5482 = vadd.f32 0.0, %v5481
        %v5483 = vpop.f32.mrb[0].mxu0
        %5484 = vmatprep.mubr.f32.mxu0 0.0
        %5485 = vmatmul.mubr.f32.gmra.mrb[0].mxu0 %v5317
        %v5486 = vpop.f32.mrb[0].mxu0
        %v5487 = vadd.f32 0.0, %v5486
        %v5488 = vpop.f32.mrb[0].mxu0
        %5489 = vmatprep.mubr.f32.mxu0 0.0
        %5490 = vmatmul.mubr.f32.gmra.mrb[0].mxu0 %v5320
        %v5491 = vpop.f32.mrb[0].mxu0
        %v5492 = vadd.f32 0.0, %v5491
        %v5493 = vpop.f32.mrb[0].mxu0
        %5494 = vmatprep.mubr.f32.mxu0 0.0
        %5495 = vmatmul.mubr.f32.gmra.mrb[0].mxu0 %v5323
        %v5496 = vpop.f32.mrb[0].mxu0
        %v5497 = vadd.f32 0.0, %v5496
        %v5498 = vpop.f32.mrb[0].mxu0
        %5499 = vmatprep.mubr.f32.mxu0 0.0
        %5500 = vmatmul.mubr.f32.gmra.mrb[0].mxu0 %v5326
        %v5501 = vpop.f32.mrb[0].mxu0
        %v5502 = vadd.f32 0.0, %v5501
        %v5503 = vpop.f32.mrb[0].mxu0
        %5504 = vmatprep.mubr.f32.mxu0 0.0
        %5505 = vmatmul.mubr.f32.gmra.mrb[0].mxu0 %v5329
        %v5506 = vpop.f32.mrb[0].mxu0
        %v5507 = vadd.f32 0.0, %v5506
        %v5508 = vpop.f32.mrb[0].mxu0
        %5509 = vmatprep.mubr.f32.mxu0 0.0
        %5510 = vmatmul.mubr.f32.gmra.mrb[0].mxu0 %v5332
        %v5511 = vpop.f32.mrb[0].mxu0
        %v5512 = vadd.f32 0.0, %v5511
        %v5513 = vpop.f32.mrb[0].mxu0
        %5514 = vmatprep.mubr.f32.mxu0 0.0
        %5515 = vmatmul.mubr.f32.gmra.mrb[0].mxu0 %v5335
        %v5516 = vpop.f32.mrb[0].mxu0
        %v5517 = vadd.f32 0.0, %v5516
        %v5518 = vpop.f32.mrb[0].mxu0
        %5519 = vmatprep.mubr.f32.mxu0 0.0
        %5520 = vmatmul.mubr.f32.gmra.mrb[0].mxu0 %v5338
        %v5521 = vpop.f32.mrb[0].mxu0
        %v5522 = vadd.f32 0.0, %v5521
        %v5523 = vpop.f32.mrb[0].mxu0
        %5524 = vmatprep.mubr.f32.mxu0 0.0
        %5525 = vmatmul.mubr.f32.gmra.mrb[0].mxu0 %v5341
        %v5526 = vpop.f32.mrb[0].mxu0
        %v5527 = vadd.f32 0.0, %v5526
        %v5528 = vpop.f32.mrb[0].mxu0
        %5529 = vmatprep.mubr.f32.mxu0 0.0
        %5530 = vmatmul.mubr.f32.gmra.mrb[0].mxu0 %v5344
        %v5531 = vpop.f32.mrb[0].mxu0
        %v5532 = vadd.f32 0.0, %v5531
        %v5533 = vpop.f32.mrb[0].mxu0
        %5534 = vmatprep.mubr.f32.mxu0 0.0
        %5535 = vmatmul.mubr.f32.gmra.mrb[0].mxu0 %v5347
        %v5536 = vpop.f32.mrb[0].mxu0
        %v5537 = vadd.f32 0.0, %v5536
        %v5538 = vpop.f32.mrb[0].mxu0
        %5539 = vmatprep.mubr.f32.mxu0 0.0
        %5540 = vmatmul.mubr.f32.gmra.mrb[0].mxu0 %v5350
        %v5541 = vpop.f32.mrb[0].mxu0
        %v5542 = vadd.f32 0.0, %v5541
        %v5543 = vpop.f32.mrb[0].mxu0
        %5544 = vmatprep.mubr.f32.mxu0 0.0
        %5545 = vmatmul.mubr.f32.gmra.mrb[0].mxu0 %v5353
        %v5546 = vpop.f32.mrb[0].mxu0
        %v5547 = vadd.f32 0.0, %v5546
        %v5548 = vpop.f32.mrb[0].mxu0
        %5549 = vmatprep.mubr.f32.mxu0 0.0
        %5550 = vmatmul.mubr.f32.gmra.mrb[0].mxu0 %v5356
        %v5551 = vpop.f32.mrb[0].mxu0
        %v5552 = vadd.f32 0.0, %v5551
        %v5553 = vpop.f32.mrb[0].mxu0
        %5554 = vmatprep.mubr.f32.mxu0 0.0
        %5555 = vmatmul.mubr.f32.gmra.mrb[0].mxu0 %v5359
        %v5556 = vpop.f32.mrb[0].mxu0
        %v5557 = vadd.f32 0.0, %v5556
        %v5558 = vpop.f32.mrb[0].mxu0
        %5559 = vmatprep.mubr.f32.mxu0 0.0
        %5560 = vmatmul.mubr.f32.gmra.mrb[0].mxu0 %v5362
        %v5561 = vpop.f32.mrb[0].mxu0
        %v5562 = vadd.f32 0.0, %v5561
        %v5563 = vpop.f32.mrb[0].mxu0
        %5564 = vmatprep.mubr.f32.mxu0 0.0
        %5565 = vmatmul.mubr.f32.gmra.mrb[0].mxu0 %v5365
        %v5566 = vpop.f32.mrb[0].mxu0
        %v5567 = vadd.f32 0.0, %v5566
        %v5568 = vpop.f32.mrb[0].mxu0
        %5569 = vmatprep.mubr.f32.mxu0 0.0
        %5570 = vmatmul.mubr.f32.gmra.mrb[0].mxu0 %v5368
        %v5571 = vpop.f32.mrb[0].mxu0
        %v5572 = vadd.f32 0.0, %v5571
        %v5573 = vpop.f32.mrb[0].mxu0
        %5574 = vmatprep.mubr.f32.mxu0 0.0
        %5575 = vmatmul.mubr.f32.gmra.mrb[0].mxu0 %v5371
        %v5576 = vpop.f32.mrb[0].mxu0
        %v5577 = vadd.f32 0.0, %v5576
        %v5578 = vpop.f32.mrb[0].mxu0
        %5579 = vmatprep.mubr.f32.mxu0 0.0
        %5580 = vmatmul.mubr.f32.gmra.mrb[0].mxu0 %v5374
        %v5581 = vpop.f32.mrb[0].mxu0
        %v5582 = vadd.f32 0.0, %v5581
        %v5583 = vpop.f32.mrb[0].mxu0
        %5584 = vmatprep.mubr.f32.mxu0 0.0
        %5585 = vmatmul.mubr.f32.gmra.mrb[0].mxu0 %v5377
        %v5586 = vpop.f32.mrb[0].mxu0
        %v5587 = vadd.f32 0.0, %v5586
        %v5588 = vpop.f32.mrb[0].mxu0
        %5589 = vmatprep.mubr.f32.mxu0 0.0
        %5590 = vmatmul.mubr.f32.gmra.mrb[0].mxu0 %v5380
        %v5591 = vpop.f32.mrb[0].mxu0
        %v5592 = vadd.f32 0.0, %v5591
        %v5593 = vpop.f32.mrb[0].mxu0
        %5594 = vmatprep.mubr.f32.mxu0 0.0
        %5595 = vmatmul.mubr.f32.gmra.mrb[0].mxu0 %v5383
        %v5596 = vpop.f32.mrb[0].mxu0
        %v5597 = vadd.f32 0.0, %v5596
        %v5598 = vpop.f32.mrb[0].mxu0
        %5599 = vmatprep.mubr.f32.mxu0 0.0
        %5600 = vmatmul.mubr.f32.gmra.mrb[0].mxu0 %v5386
        %v5601 = vpop.f32.mrb[0].mxu0
        %v5602 = vadd.f32 0.0, %v5601
        %v5603 = vpop.f32.mrb[0].mxu0
        %5604 = vmatprep.mubr.f32.mxu0 0.0
        %5605 = vmatmul.mubr.f32.gmra.mrb[0].mxu0 %v5389
        %v5606 = vpop.f32.mrb[0].mxu0
        %v5607 = vadd.f32 0.0, %v5606
        %v5608 = vpop.f32.mrb[0].mxu0
        %5609 = vmatprep.mubr.f32.mxu0 0.0
        %5610 = vmatmul.mubr.f32.gmra.mrb[0].mxu0 %v5392
        %v5611 = vpop.f32.mrb[0].mxu0
        %v5612 = vadd.f32 0.0, %v5611
        %v5613 = vpop.f32.mrb[0].mxu0
        %5614 = vmatprep.mubr.f32.mxu0 0.0
        %5615 = vmatmul.mubr.f32.gmra.mrb[0].mxu0 %v5395
        %v5616 = vpop.f32.mrb[0].mxu0
        %v5617 = vadd.f32 0.0, %v5616
        %v5618 = vpop.f32.mrb[0].mxu0
        %5619 = vmatprep.mubr.f32.mxu0 0.0
        %5620 = vmatmul.mubr.f32.gmra.mrb[0].mxu0 %v5398
        %v5621 = vpop.f32.mrb[0].mxu0
        %v5622 = vadd.f32 0.0, %v5621
        %v5623 = vpop.f32.mrb[0].mxu0
        %5624 = vdwg.mxu0
        %v5625 = vld [vmem:[%s29] sm:$0x1]
        %v5627 = vlaneseq
        %v5628 = vshrl.u32 %v5627, 7
        %v5629 = vsub.s32 0, %v5628
        %v5630 = vrot.slane %v5625, %v5629
        %v5632 = vmul.f32 %v5467, %v5630
        %v5633 = vmul.f32 %v5472, %v5630
        %v5634 = vmul.f32 %v5477, %v5630
        %v5635 = vmul.f32 %v5482, %v5630
        %v5636 = vmul.f32 %v5487, %v5630
        %v5637 = vmul.f32 %v5492, %v5630
        %v5638 = vmul.f32 %v5497, %v5630
        %v5639 = vmul.f32 %v5502, %v5630
        %v5640 = vmul.f32 %v5507, %v5630
        %v5641 = vmul.f32 %v5512, %v5630
        %v5642 = vmul.f32 %v5517, %v5630
        %v5643 = vmul.f32 %v5522, %v5630
        %v5644 = vmul.f32 %v5527, %v5630
        %v5645 = vmul.f32 %v5532, %v5630
        %v5646 = vmul.f32 %v5537, %v5630
        %v5647 = vmul.f32 %v5542, %v5630
        %v5648 = vmul.f32 %v5547, %v5630
        %v5649 = vmul.f32 %v5552, %v5630
        %v5650 = vmul.f32 %v5557, %v5630
        %v5651 = vmul.f32 %v5562, %v5630
        %v5652 = vmul.f32 %v5567, %v5630
        %v5653 = vmul.f32 %v5572, %v5630
        %v5654 = vmul.f32 %v5577, %v5630
        %v5655 = vmul.f32 %v5582, %v5630
        %v5656 = vmul.f32 %v5587, %v5630
        %v5657 = vmul.f32 %v5592, %v5630
        %v5658 = vmul.f32 %v5597, %v5630
        %v5659 = vmul.f32 %v5602, %v5630
        %v5660 = vmul.f32 %v5607, %v5630
        %v5661 = vmul.f32 %v5612, %v5630
        %v5662 = vmul.f32 %v5617, %v5630
        %v5663 = vmul.f32 %v5622, %v5630
        %v5664 = vld [vmem:[%s31] sm:$0x1]
        %v5666 = vlaneseq
        %v5667 = vshrl.u32 %v5666, 7
        %v5668 = vsub.s32 0, %v5667
        %v5669 = vrot.slane %v5664, %v5668
        %v5671 = vadd.f32 %v5632, %v5669
        %v5672 = vadd.f32 %v5633, %v5669
        %v5673 = vadd.f32 %v5634, %v5669
        %v5674 = vadd.f32 %v5635, %v5669
        %v5675 = vadd.f32 %v5636, %v5669
        %v5676 = vadd.f32 %v5637, %v5669
        %v5677 = vadd.f32 %v5638, %v5669
        %v5678 = vadd.f32 %v5639, %v5669
        %v5679 = vadd.f32 %v5640, %v5669
        %v5680 = vadd.f32 %v5641, %v5669
        %v5681 = vadd.f32 %v5642, %v5669
        %v5682 = vadd.f32 %v5643, %v5669
        %v5683 = vadd.f32 %v5644, %v5669
        %v5684 = vadd.f32 %v5645, %v5669
        %v5685 = vadd.f32 %v5646, %v5669
        %v5686 = vadd.f32 %v5647, %v5669
        %v5687 = vadd.f32 %v5648, %v5669
        %v5688 = vadd.f32 %v5649, %v5669
        %v5689 = vadd.f32 %v5650, %v5669
        %v5690 = vadd.f32 %v5651, %v5669
        %v5691 = vadd.f32 %v5652, %v5669
        %v5692 = vadd.f32 %v5653, %v5669
        %v5693 = vadd.f32 %v5654, %v5669
        %v5694 = vadd.f32 %v5655, %v5669
        %v5695 = vadd.f32 %v5656, %v5669
        %v5696 = vadd.f32 %v5657, %v5669
        %v5697 = vadd.f32 %v5658, %v5669
        %v5698 = vadd.f32 %v5659, %v5669
        %v5699 = vadd.f32 %v5660, %v5669
        %v5700 = vadd.f32 %v5661, %v5669
        %v5701 = vadd.f32 %v5662, %v5669
        %v5702 = vadd.f32 %v5663, %v5669
        %vm5703 = vcmp.ge.f32.partialorder %v5671, 0.0
        %vm5704 = vcmp.ge.f32.partialorder %v5672, 0.0
        %vm5705 = vcmp.ge.f32.partialorder %v5673, 0.0
        %vm5706 = vcmp.ge.f32.partialorder %v5674, 0.0
        %vm5707 = vcmp.ge.f32.partialorder %v5675, 0.0
        %vm5708 = vcmp.ge.f32.partialorder %v5676, 0.0
        %vm5709 = vcmp.ge.f32.partialorder %v5677, 0.0
        %vm5710 = vcmp.ge.f32.partialorder %v5678, 0.0
        %vm5711 = vcmp.ge.f32.partialorder %v5679, 0.0
        %vm5712 = vcmp.ge.f32.partialorder %v5680, 0.0
        %vm5713 = vcmp.ge.f32.partialorder %v5681, 0.0
        %vm5714 = vcmp.ge.f32.partialorder %v5682, 0.0
        %vm5715 = vcmp.ge.f32.partialorder %v5683, 0.0
        %vm5716 = vcmp.ge.f32.partialorder %v5684, 0.0
        %vm5717 = vcmp.ge.f32.partialorder %v5685, 0.0
        %vm5718 = vcmp.ge.f32.partialorder %v5686, 0.0
        %vm5719 = vcmp.ge.f32.partialorder %v5687, 0.0
        %vm5720 = vcmp.ge.f32.partialorder %v5688, 0.0
        %vm5721 = vcmp.ge.f32.partialorder %v5689, 0.0
        %vm5722 = vcmp.ge.f32.partialorder %v5690, 0.0
        %vm5723 = vcmp.ge.f32.partialorder %v5691, 0.0
        %vm5724 = vcmp.ge.f32.partialorder %v5692, 0.0
        %vm5725 = vcmp.ge.f32.partialorder %v5693, 0.0
        %vm5726 = vcmp.ge.f32.partialorder %v5694, 0.0
        %vm5727 = vcmp.ge.f32.partialorder %v5695, 0.0
        %vm5728 = vcmp.ge.f32.partialorder %v5696, 0.0
        %vm5729 = vcmp.ge.f32.partialorder %v5697, 0.0
        %vm5730 = vcmp.ge.f32.partialorder %v5698, 0.0
        %vm5731 = vcmp.ge.f32.partialorder %v5699, 0.0
        %vm5732 = vcmp.ge.f32.partialorder %v5700, 0.0
        %vm5733 = vcmp.ge.f32.partialorder %v5701, 0.0
        %vm5734 = vcmp.ge.f32.partialorder %v5702, 0.0
        %v5735 = vmul.f32 %v5671, 0.2
        %v5736 = vmul.f32 %v5672, 0.2
        %v5737 = vmul.f32 %v5673, 0.2
        %v5738 = vmul.f32 %v5674, 0.2
        %v5739 = vmul.f32 %v5675, 0.2
        %v5740 = vmul.f32 %v5676, 0.2
        %v5741 = vmul.f32 %v5677, 0.2
        %v5742 = vmul.f32 %v5678, 0.2
        %v5743 = vmul.f32 %v5679, 0.2
        %v5744 = vmul.f32 %v5680, 0.2
        %v5745 = vmul.f32 %v5681, 0.2
        %v5746 = vmul.f32 %v5682, 0.2
        %v5747 = vmul.f32 %v5683, 0.2
        %v5748 = vmul.f32 %v5684, 0.2
        %v5749 = vmul.f32 %v5685, 0.2
        %v5750 = vmul.f32 %v5686, 0.2
        %v5751 = vmul.f32 %v5687, 0.2
        %v5752 = vmul.f32 %v5688, 0.2
        %v5753 = vmul.f32 %v5689, 0.2
        %v5754 = vmul.f32 %v5690, 0.2
        %v5755 = vmul.f32 %v5691, 0.2
        %v5756 = vmul.f32 %v5692, 0.2
        %v5757 = vmul.f32 %v5693, 0.2
        %v5758 = vmul.f32 %v5694, 0.2
        %v5759 = vmul.f32 %v5695, 0.2
        %v5760 = vmul.f32 %v5696, 0.2
        %v5761 = vmul.f32 %v5697, 0.2
        %v5762 = vmul.f32 %v5698, 0.2
        %v5763 = vmul.f32 %v5699, 0.2
        %v5764 = vmul.f32 %v5700, 0.2
        %v5765 = vmul.f32 %v5701, 0.2
        %v5766 = vmul.f32 %v5702, 0.2
        %v5767 = vsel %vm5703, %v5671, %v5735
        %v5768 = vsel %vm5704, %v5672, %v5736
        %v5769 = vsel %vm5705, %v5673, %v5737
        %v5770 = vsel %vm5706, %v5674, %v5738
        %v5771 = vsel %vm5707, %v5675, %v5739
        %v5772 = vsel %vm5708, %v5676, %v5740
        %v5773 = vsel %vm5709, %v5677, %v5741
        %v5774 = vsel %vm5710, %v5678, %v5742
        %v5775 = vsel %vm5711, %v5679, %v5743
        %v5776 = vsel %vm5712, %v5680, %v5744
        %v5777 = vsel %vm5713, %v5681, %v5745
        %v5778 = vsel %vm5714, %v5682, %v5746
        %v5779 = vsel %vm5715, %v5683, %v5747
        %v5780 = vsel %vm5716, %v5684, %v5748
        %v5781 = vsel %vm5717, %v5685, %v5749
        %v5782 = vsel %vm5718, %v5686, %v5750
        %v5783 = vsel %vm5719, %v5687, %v5751
        %v5784 = vsel %vm5720, %v5688, %v5752
        %v5785 = vsel %vm5721, %v5689, %v5753
        %v5786 = vsel %vm5722, %v5690, %v5754
        %v5787 = vsel %vm5723, %v5691, %v5755
        %v5788 = vsel %vm5724, %v5692, %v5756
        %v5789 = vsel %vm5725, %v5693, %v5757
        %v5790 = vsel %vm5726, %v5694, %v5758
        %v5791 = vsel %vm5727, %v5695, %v5759
        %v5792 = vsel %vm5728, %v5696, %v5760
        %v5793 = vsel %vm5729, %v5697, %v5761
        %v5794 = vsel %vm5730, %v5698, %v5762
        %v5795 = vsel %vm5731, %v5699, %v5763
        %v5796 = vsel %vm5732, %v5700, %v5764
        %v5797 = vsel %vm5733, %v5701, %v5765
        %v5798 = vsel %vm5734, %v5702, %v5766
        %v5799 = vsel %vm2795, %v5767, 0.0
        %v5800 = vsel %vm2795, %v5768, 0.0
        %v5801 = vadd.f32 %v5799, %v5800
        %v5802 = vsel %vm2795, %v5769, 0.0
        %v5803 = vadd.f32 %v5801, %v5802
        %v5804 = vsel %vm2795, %v5770, 0.0
        %v5805 = vadd.f32 %v5803, %v5804
        %v5806 = vsel %vm2795, %v5771, 0.0
        %v5807 = vadd.f32 %v5805, %v5806
        %v5808 = vsel %vm2795, %v5772, 0.0
        %v5809 = vadd.f32 %v5807, %v5808
        %v5810 = vsel %vm2795, %v5773, 0.0
        %v5811 = vadd.f32 %v5809, %v5810
        %v5812 = vsel %vm2795, %v5774, 0.0
        %v5813 = vadd.f32 %v5811, %v5812
        %v5814 = vsel %vm2795, %v5775, 0.0
        %v5815 = vadd.f32 %v5813, %v5814
        %v5816 = vsel %vm2795, %v5776, 0.0
        %v5817 = vadd.f32 %v5815, %v5816
        %v5818 = vsel %vm2795, %v5777, 0.0
        %v5819 = vadd.f32 %v5817, %v5818
        %v5820 = vsel %vm2795, %v5778, 0.0
        %v5821 = vadd.f32 %v5819, %v5820
        %v5822 = vsel %vm2795, %v5779, 0.0
        %v5823 = vadd.f32 %v5821, %v5822
        %v5824 = vsel %vm2795, %v5780, 0.0
        %v5825 = vadd.f32 %v5823, %v5824
        %v5826 = vsel %vm2795, %v5781, 0.0
        %v5827 = vadd.f32 %v5825, %v5826
        %v5828 = vsel %vm2795, %v5782, 0.0
        %v5829 = vadd.f32 %v5827, %v5828
        %v5830 = vsel %vm2795, %v5783, 0.0
        %v5831 = vadd.f32 %v5829, %v5830
        %v5832 = vsel %vm2795, %v5784, 0.0
        %v5833 = vadd.f32 %v5831, %v5832
        %v5834 = vsel %vm2795, %v5785, 0.0
        %v5835 = vadd.f32 %v5833, %v5834
        %v5836 = vsel %vm2795, %v5786, 0.0
        %v5837 = vadd.f32 %v5835, %v5836
        %v5838 = vsel %vm2795, %v5787, 0.0
        %v5839 = vadd.f32 %v5837, %v5838
        %v5840 = vsel %vm2795, %v5788, 0.0
        %v5841 = vadd.f32 %v5839, %v5840
        %v5842 = vsel %vm2795, %v5789, 0.0
        %v5843 = vadd.f32 %v5841, %v5842
        %v5844 = vsel %vm2795, %v5790, 0.0
        %v5845 = vadd.f32 %v5843, %v5844
        %v5846 = vsel %vm2795, %v5791, 0.0
        %v5847 = vadd.f32 %v5845, %v5846
        %v5848 = vsel %vm2795, %v5792, 0.0
        %v5849 = vadd.f32 %v5847, %v5848
        %v5850 = vsel %vm2795, %v5793, 0.0
        %v5851 = vadd.f32 %v5849, %v5850
        %v5852 = vsel %vm2795, %v5794, 0.0
        %v5853 = vadd.f32 %v5851, %v5852
        %v5854 = vsel %vm2795, %v5795, 0.0
        %v5855 = vadd.f32 %v5853, %v5854
        %v5856 = vsel %vm2795, %v5796, 0.0
        %v5857 = vadd.f32 %v5855, %v5856
        %v5858 = vsel %vm2795, %v5797, 0.0
        %v5859 = vadd.f32 %v5857, %v5858
        %v5860 = vsel %vm2795, %v5798, 0.0
        %v5861 = vadd.f32 %v5859, %v5860
        %v5862 = vrot.slane %v5861, 4
        %v5863 = vadd.f32 %v5861, %v5862
        %v5864 = vrot.slane %v5863, 2
        %v5865 = vadd.f32 %v5863, %v5864
        %v5866 = vrot.slane %v5865, 1
        %v5867 = vadd.f32 %v5865, %v5866
        %v5868 = vrcp.pop 256.0
        %v5869 = vmul.f32 %v5867, %v5868
        %v5870 = vld [vmem:[%s33] sm:$0xff]
        %v5871 = vld [vmem:[%s33 + $0x8] sm:$0xff]
        %v5872 = vld [vmem:[%s33 + $0x10] sm:$0xff]
        %v5873 = vld [vmem:[%s33 + $0x18] sm:$0xff]
        %v5875 = vsel %vm2795, %v5869, 0
        %5877 = vmatprep.subr.mxu0 0.0
        %5878 = vmatpush1.msra.mxu0 %v5870
        %5879 = vmatprep.subr.mxu0 0.0
        %5880 = vmatpush1.msra.mxu0 %v5871
        %5881 = vmatprep.subr.mxu0 0.0
        %5882 = vmatpush1.msra.mxu0 %v5872
        %5883 = vmatprep.subr.mxu0 0.0
        %5884 = vmatpush1.msra.mxu0 %v5873
        %5885 = vmatprep.subr.mxu0 0.0
        %5886 = vmatpush1.msra.mxu0 0.0
        %5887 = vmatprep.subr.mxu0 0.0
        %5888 = vmatpush1.msra.mxu0 0.0
        %5889 = vmatprep.subr.mxu0 0.0
        %5890 = vmatpush1.msra.mxu0 0.0
        %5891 = vmatprep.subr.mxu0 0.0
        %5892 = vmatpush1.msra.mxu0 0.0
        %5893 = vmatprep.subr.mxu0 0.0
        %5894 = vmatpush1.msra.mxu0 0.0
        %5895 = vmatprep.subr.mxu0 0.0
        %5896 = vmatpush1.msra.mxu0 0.0
        %5897 = vmatprep.subr.mxu0 0.0
        %5898 = vmatpush1.msra.mxu0 0.0
        %5899 = vmatprep.subr.mxu0 0.0
        %5900 = vmatpush1.msra.mxu0 0.0
        %5901 = vmatprep.subr.mxu0 0.0
        %5902 = vmatpush1.msra.mxu0 0.0
        %5903 = vmatprep.subr.mxu0 0.0
        %5904 = vmatpush1.msra.mxu0 0.0
        %5905 = vmatprep.subr.mxu0 0.0
        %5906 = vmatpush1.msra.mxu0 0.0
        %5907 = vmatprep.subr.mxu0 0.0
        %5908 = vmatpush1.msra.mxu0 0.0
        %5909 = vmatprep.subr.mxu0 0.0
        %5910 = vmatpush1.msra.mxu0 0.0
        %5911 = vmatprep.subr.mxu0 0.0
        %5912 = vmatpush1.msra.mxu0 0.0
        %5913 = vmatprep.subr.mxu0 0.0
        %5914 = vmatpush1.msra.mxu0 0.0
        %5915 = vmatprep.subr.mxu0 0.0
        %5916 = vmatpush1.msra.mxu0 0.0
        %5917 = vmatprep.subr.mxu0 0.0
        %5918 = vmatpush1.msra.mxu0 0.0
        %5919 = vmatprep.subr.mxu0 0.0
        %5920 = vmatpush1.msra.mxu0 0.0
        %5921 = vmatprep.subr.mxu0 0.0
        %5922 = vmatpush1.msra.mxu0 0.0
        %5923 = vmatprep.subr.mxu0 0.0
        %5924 = vmatpush1.msra.mxu0 0.0
        %5925 = vmatprep.subr.mxu0 0.0
        %5926 = vmatpush1.msra.mxu0 0.0
        %5927 = vmatprep.subr.mxu0 0.0
        %5928 = vmatpush1.msra.mxu0 0.0
        %5929 = vmatprep.subr.mxu0 0.0
        %5930 = vmatpush1.msra.mxu0 0.0
        %5931 = vmatprep.subr.mxu0 0.0
        %5932 = vmatpush1.msra.mxu0 0.0
        %5933 = vmatprep.subr.mxu0 0.0
        %5934 = vmatpush1.msra.mxu0 0.0
        %5935 = vmatprep.subr.mxu0 0.0
        %5936 = vmatpush1.msra.mxu0 0.0
        %5937 = vmatprep.subr.mxu0 0.0
        %5938 = vmatpush1.msra.mxu0 0.0
        %5939 = vmatprep.subr.mxu0 0.0
        %5940 = vmatpush1.msra.mxu0 0.0
        %5941 = vmatprep.mubr.f32.mxu0 0.0
        %5942 = vmatmul.mubr.f32.gmra.mrb[0].mxu0 %v5875
        %v5943 = vpop.f32.mrb[0].mxu0
        %v5944 = vadd.f32 0.0, %v5943
        %v5945 = vpop.f32.mrb[0].mxu0
        %5946 = vdwg.mxu0
        %v5947 = vmax.f32 %v5944, 0.0
        %v5948 = vld [vmem:[%s35] sm:$0x3]
        %vm5949 = vcmask 15360
        %v5951 = vsel %vm5949, %v5947, 0
        %vm5953 = vcmask 1041408
        %v5955 = vsel %vm5953, %v5948, 0
        %5957 = vmatprep.subr.mxu0 0.0
        %5958 = vmatpush1.msra.mxu0 %v5955
        %5959 = vmatprep.subr.mxu0 0.0
        %5960 = vmatpush1.msra.mxu0 0.0
        %5961 = vmatprep.subr.mxu0 0.0
        %5962 = vmatpush1.msra.mxu0 0.0
        %5963 = vmatprep.subr.mxu0 0.0
        %5964 = vmatpush1.msra.mxu0 0.0
        %5965 = vmatprep.subr.mxu0 0.0
        %5966 = vmatpush1.msra.mxu0 0.0
        %5967 = vmatprep.subr.mxu0 0.0
        %5968 = vmatpush1.msra.mxu0 0.0
        %5969 = vmatprep.subr.mxu0 0.0
        %5970 = vmatpush1.msra.mxu0 0.0
        %5971 = vmatprep.subr.mxu0 0.0
        %5972 = vmatpush1.msra.mxu0 0.0
        %5973 = vmatprep.subr.mxu0 0.0
        %5974 = vmatpush1.msra.mxu0 0.0
        %5975 = vmatprep.subr.mxu0 0.0
        %5976 = vmatpush1.msra.mxu0 0.0
        %5977 = vmatprep.subr.mxu0 0.0
        %5978 = vmatpush1.msra.mxu0 0.0
        %5979 = vmatprep.subr.mxu0 0.0
        %5980 = vmatpush1.msra.mxu0 0.0
        %5981 = vmatprep.subr.mxu0 0.0
        %5982 = vmatpush1.msra.mxu0 0.0
        %5983 = vmatprep.subr.mxu0 0.0
        %5984 = vmatpush1.msra.mxu0 0.0
        %5985 = vmatprep.subr.mxu0 0.0
        %5986 = vmatpush1.msra.mxu0 0.0
        %5987 = vmatprep.subr.mxu0 0.0
        %5988 = vmatpush1.msra.mxu0 0.0
        %5989 = vmatprep.subr.mxu0 0.0
        %5990 = vmatpush1.msra.mxu0 0.0
        %5991 = vmatprep.subr.mxu0 0.0
        %5992 = vmatpush1.msra.mxu0 0.0
        %5993 = vmatprep.subr.mxu0 0.0
        %5994 = vmatpush1.msra.mxu0 0.0
        %5995 = vmatprep.subr.mxu0 0.0
        %5996 = vmatpush1.msra.mxu0 0.0
        %5997 = vmatprep.subr.mxu0 0.0
        %5998 = vmatpush1.msra.mxu0 0.0
        %5999 = vmatprep.subr.mxu0 0.0
        %6000 = vmatpush1.msra.mxu0 0.0
        %6001 = vmatprep.subr.mxu0 0.0
        %6002 = vmatpush1.msra.mxu0 0.0
        %6003 = vmatprep.subr.mxu0 0.0
        %6004 = vmatpush1.msra.mxu0 0.0
        %6005 = vmatprep.subr.mxu0 0.0
        %6006 = vmatpush1.msra.mxu0 0.0
        %6007 = vmatprep.subr.mxu0 0.0
        %6008 = vmatpush1.msra.mxu0 0.0
        %6009 = vmatprep.subr.mxu0 0.0
        %6010 = vmatpush1.msra.mxu0 0.0
        %6011 = vmatprep.subr.mxu0 0.0
        %6012 = vmatpush1.msra.mxu0 0.0
        %6013 = vmatprep.subr.mxu0 0.0
        %6014 = vmatpush1.msra.mxu0 0.0
        %6015 = vmatprep.subr.mxu0 0.0
        %6016 = vmatpush1.msra.mxu0 0.0
        %6017 = vmatprep.subr.mxu0 0.0
        %6018 = vmatpush1.msra.mxu0 0.0
        %6019 = vmatprep.subr.mxu0 0.0
        %6020 = vmatpush1.msra.mxu0 0.0
        %6021 = vmatprep.mubr.f32.mxu0 0.0
        %6022 = vmatmul.mubr.f32.gmra.mrb[0].mxu0 %v5951
        %v6023 = vpop.f32.mrb[0].mxu0
        %v6024 = vadd.f32 0.0, %v6023
        %v6025 = vpop.f32.mrb[0].mxu0
        %6026 = vdwg.mxu0
        %v6027 = vxor.u32 %v6024, 2147483648
        %v6028 = vmul.f32 %v6027, 1.442695
        %v6029 = vpow.pop %v6028
        %v6030 = vadd.f32 %v6029, 1.0
        %v6031 = vrcp.pop %v6030
        %v6032 = vmul.f32 1.0, %v6031
        %v6033 = vlaneseq
        %v6034 = vshrl.u32 %v6033, 7
        %v6035 = vsub.s32 0, %v6034
        %v6036 = vrot.slane %v6032, %v6035
        %v6037 = vmul.f32 %v5767, %v6036
        %v6038 = vmul.f32 %v5768, %v6036
        %v6039 = vmul.f32 %v5769, %v6036
        %v6040 = vmul.f32 %v5770, %v6036
        %v6041 = vmul.f32 %v5771, %v6036
        %v6042 = vmul.f32 %v5772, %v6036
        %v6043 = vmul.f32 %v5773, %v6036
        %v6044 = vmul.f32 %v5774, %v6036
        %v6045 = vmul.f32 %v5775, %v6036
        %v6046 = vmul.f32 %v5776, %v6036
        %v6047 = vmul.f32 %v5777, %v6036
        %v6048 = vmul.f32 %v5778, %v6036
        %v6049 = vmul.f32 %v5779, %v6036
        %v6050 = vmul.f32 %v5780, %v6036
        %v6051 = vmul.f32 %v5781, %v6036
        %v6052 = vmul.f32 %v5782, %v6036
        %v6053 = vmul.f32 %v5783, %v6036
        %v6054 = vmul.f32 %v5784, %v6036
        %v6055 = vmul.f32 %v5785, %v6036
        %v6056 = vmul.f32 %v5786, %v6036
        %v6057 = vmul.f32 %v5787, %v6036
        %v6058 = vmul.f32 %v5788, %v6036
        %v6059 = vmul.f32 %v5789, %v6036
        %v6060 = vmul.f32 %v5790, %v6036
        %v6061 = vmul.f32 %v5791, %v6036
        %v6062 = vmul.f32 %v5792, %v6036
        %v6063 = vmul.f32 %v5793, %v6036
        %v6064 = vmul.f32 %v5794, %v6036
        %v6065 = vmul.f32 %v5795, %v6036
        %v6066 = vmul.f32 %v5796, %v6036
        %v6067 = vmul.f32 %v5797, %v6036
        %v6068 = vmul.f32 %v5798, %v6036
        %v6069 = vld [vmem:[%s3] sm:$0xff]
        %v6071 = vcombine.high %v6069, %v6069
        %6073 = vmatprep.subr.mxu0 0.0
        %6074 = vmatpush1.msra.mxu0 %v1265
        %6075 = vmatprep.subr.mxu0 0.0
        %6076 = vmatpush1.msra.mxu0 %v1266
        %6077 = vmatprep.subr.mxu0 0.0
        %6078 = vmatpush1.msra.mxu0 %v1267
        %6079 = vmatprep.subr.mxu0 0.0
        %6080 = vmatpush1.msra.mxu0 %v1268
        %6081 = vmatprep.subr.mxu0 0.0
        %6082 = vmatpush1.msra.mxu0 %v1269
        %6083 = vmatprep.subr.mxu0 0.0
        %6084 = vmatpush1.msra.mxu0 %v1270
        %6085 = vmatprep.subr.mxu0 0.0
        %6086 = vmatpush1.msra.mxu0 %v1271
        %6087 = vmatprep.subr.mxu0 0.0
        %6088 = vmatpush1.msra.mxu0 %v1272
        %6089 = vmatprep.subr.mxu0 0.0
        %6090 = vmatpush1.msra.mxu0 %v1273
        %6091 = vmatprep.subr.mxu0 0.0
        %6092 = vmatpush1.msra.mxu0 %v1274
        %6093 = vmatprep.subr.mxu0 0.0
        %6094 = vmatpush1.msra.mxu0 %v1275
        %6095 = vmatprep.subr.mxu0 0.0
        %6096 = vmatpush1.msra.mxu0 %v1276
        %6097 = vmatprep.subr.mxu0 0.0
        %6098 = vmatpush1.msra.mxu0 %v1277
        %6099 = vmatprep.subr.mxu0 0.0
        %6100 = vmatpush1.msra.mxu0 %v1278
        %6101 = vmatprep.subr.mxu0 0.0
        %6102 = vmatpush1.msra.mxu0 %v1279
        %6103 = vmatprep.subr.mxu0 0.0
        %6104 = vmatpush1.msra.mxu0 %v1280
        %6105 = vmatprep.subr.mxu0 0.0
        %6106 = vmatpush1.msra.mxu0 %v1281
        %6107 = vmatprep.subr.mxu0 0.0
        %6108 = vmatpush1.msra.mxu0 %v1282
        %6109 = vmatprep.subr.mxu0 0.0
        %6110 = vmatpush1.msra.mxu0 %v1283
        %6111 = vmatprep.subr.mxu0 0.0
        %6112 = vmatpush1.msra.mxu0 %v1284
        %6113 = vmatprep.subr.mxu0 0.0
        %6114 = vmatpush1.msra.mxu0 %v1285
        %6115 = vmatprep.subr.mxu0 0.0
        %6116 = vmatpush1.msra.mxu0 %v1286
        %6117 = vmatprep.subr.mxu0 0.0
        %6118 = vmatpush1.msra.mxu0 %v1287
        %6119 = vmatprep.subr.mxu0 0.0
        %6120 = vmatpush1.msra.mxu0 %v1288
        %6121 = vmatprep.subr.mxu0 0.0
        %6122 = vmatpush1.msra.mxu0 %v1289
        %6123 = vmatprep.subr.mxu0 0.0
        %6124 = vmatpush1.msra.mxu0 %v1290
        %6125 = vmatprep.subr.mxu0 0.0
        %6126 = vmatpush1.msra.mxu0 %v1291
        %6127 = vmatprep.subr.mxu0 0.0
        %6128 = vmatpush1.msra.mxu0 %v1292
        %6129 = vmatprep.subr.mxu0 0.0
        %6130 = vmatpush1.msra.mxu0 %v1293
        %6131 = vmatprep.subr.mxu0 0.0
        %6132 = vmatpush1.msra.mxu0 %v1294
        %6133 = vmatprep.subr.mxu0 0.0
        %6134 = vmatpush1.msra.mxu0 %v1295
        %6135 = vmatprep.subr.mxu0 0.0
        %6136 = vmatpush1.msra.mxu0 %v1296
        %6137 = vmatprep.mubr.f32.mxu0 %v6071
        %6138 = vmatmul.mubr.f32.gmra.mrb[0].mxu0 %v6069
        %v6139 = vpop.f32.mrb[0].mxu0
        %v6140 = vadd.f32 0.0, %v6139
        %v6141 = vpop.f32.mrb[0].mxu0
        %6142 = vdwg.mxu0
        %v6143 = vld [vmem:[%s37] sm:$0xff]
        %v6144 = vld [vmem:[%s37 + $0x8] sm:$0xff]
        %v6145 = vld [vmem:[%s39] sm:$0x1]
        %v6147 = vlaneseq
        %v6148 = vshrl.u32 %v6147, 7
        %v6149 = vsub.s32 0, %v6148
        %v6150 = vrot.slane %v6145, %v6149
        %v6153 = vsel %vm1297, %v6140, 0
        %6155 = vmatprep.subr.mxu0 0.0
        %6156 = vmatpush1.msra.mxu0 %v6143
        %6157 = vmatprep.subr.mxu0 0.0
        %6158 = vmatpush1.msra.mxu0 %v6144
        %6159 = vmatprep.subr.mxu0 0.0
        %6160 = vmatpush1.msra.mxu0 0.0
        %6161 = vmatprep.subr.mxu0 0.0
        %6162 = vmatpush1.msra.mxu0 0.0
        %6163 = vmatprep.subr.mxu0 0.0
        %6164 = vmatpush1.msra.mxu0 0.0
        %6165 = vmatprep.subr.mxu0 0.0
        %6166 = vmatpush1.msra.mxu0 0.0
        %6167 = vmatprep.subr.mxu0 0.0
        %6168 = vmatpush1.msra.mxu0 0.0
        %6169 = vmatprep.subr.mxu0 0.0
        %6170 = vmatpush1.msra.mxu0 0.0
        %6171 = vmatprep.subr.mxu0 0.0
        %6172 = vmatpush1.msra.mxu0 0.0
        %6173 = vmatprep.subr.mxu0 0.0
        %6174 = vmatpush1.msra.mxu0 0.0
        %6175 = vmatprep.subr.mxu0 0.0
        %6176 = vmatpush1.msra.mxu0 0.0
        %6177 = vmatprep.subr.mxu0 0.0
        %6178 = vmatpush1.msra.mxu0 0.0
        %6179 = vmatprep.subr.mxu0 0.0
        %6180 = vmatpush1.msra.mxu0 0.0
        %6181 = vmatprep.subr.mxu0 0.0
        %6182 = vmatpush1.msra.mxu0 0.0
        %6183 = vmatprep.subr.mxu0 0.0
        %6184 = vmatpush1.msra.mxu0 0.0
        %6185 = vmatprep.subr.mxu0 0.0
        %6186 = vmatpush1.msra.mxu0 0.0
        %6187 = vmatprep.subr.mxu0 0.0
        %6188 = vmatpush1.msra.mxu0 0.0
        %6189 = vmatprep.subr.mxu0 0.0
        %6190 = vmatpush1.msra.mxu0 0.0
        %6191 = vmatprep.subr.mxu0 0.0
        %6192 = vmatpush1.msra.mxu0 0.0
        %6193 = vmatprep.subr.mxu0 0.0
        %6194 = vmatpush1.msra.mxu0 0.0
        %6195 = vmatprep.subr.mxu0 0.0
        %6196 = vmatpush1.msra.mxu0 0.0
        %6197 = vmatprep.subr.mxu0 0.0
        %6198 = vmatpush1.msra.mxu0 0.0
        %6199 = vmatprep.subr.mxu0 0.0
        %6200 = vmatpush1.msra.mxu0 0.0
        %6201 = vmatprep.subr.mxu0 0.0
        %6202 = vmatpush1.msra.mxu0 0.0
        %6203 = vmatprep.subr.mxu0 0.0
        %6204 = vmatpush1.msra.mxu0 0.0
        %6205 = vmatprep.subr.mxu0 0.0
        %6206 = vmatpush1.msra.mxu0 0.0
        %6207 = vmatprep.subr.mxu0 0.0
        %6208 = vmatpush1.msra.mxu0 0.0
        %6209 = vmatprep.subr.mxu0 0.0
        %6210 = vmatpush1.msra.mxu0 0.0
        %6211 = vmatprep.subr.mxu0 0.0
        %6212 = vmatpush1.msra.mxu0 0.0
        %6213 = vmatprep.subr.mxu0 0.0
        %6214 = vmatpush1.msra.mxu0 0.0
        %6215 = vmatprep.subr.mxu0 0.0
        %6216 = vmatpush1.msra.mxu0 0.0
        %6217 = vmatprep.subr.mxu0 0.0
        %6218 = vmatpush1.msra.mxu0 0.0
        %6219 = vmatprep.mubr.f32.mxu0 0.0
        %6220 = vmatmul.mubr.f32.gmra.mrb[0].mxu0 %v6153
        %v6221 = vpop.f32.mrb[0].mxu0
        %v6222 = vadd.f32 %v6150, %v6221
        %v6223 = vpop.f32.mrb[0].mxu0
        %6224 = vdwg.mxu0
        %v6225 = vld [vmem:[%s41] sm:$0x1]
        %v6227 = vlaneseq
        %v6228 = vshrl.u32 %v6227, 7
        %v6229 = vsub.s32 0, %v6228
        %v6230 = vrot.slane %v6225, %v6229
        %v6232 = vmul.f32 %v6222, %v6230
        %v6233 = vld [vmem:[%s43] sm:$0x1]
        %v6235 = vlaneseq
        %v6236 = vshrl.u32 %v6235, 7
        %v6237 = vsub.s32 0, %v6236
        %v6238 = vrot.slane %v6233, %v6237
        %v6240 = vadd.f32 %v6232, %v6238
        %vm6241 = vcmp.ge.f32.partialorder %v6240, 0.0
        %v6242 = vmul.f32 %v6240, 0.2
        %v6243 = vsel %vm6241, %v6240, %v6242
        %v6244 = vld [vmem:[%s45] sm:$0x1]
        %v6245 = vld [vmem:[%s7] sm:$0xf]
        %vm6246 = vcmask 31744
        %v6248 = vsel %vm6246, %v6245, 0
        %vm6250 = vcmask 1043456
        %v6252 = vsel %vm6250, %v6243, 0
        %6254 = vmatprep.subr.mxu0 0.0
        %6255 = vmatpush1.msra.mxu0 %v6252
        %6256 = vmatprep.subr.mxu0 0.0
        %6257 = vmatpush1.msra.mxu0 0.0
        %6258 = vmatprep.subr.mxu0 0.0
        %6259 = vmatpush1.msra.mxu0 0.0
        %6260 = vmatprep.subr.mxu0 0.0
        %6261 = vmatpush1.msra.mxu0 0.0
        %6262 = vmatprep.subr.mxu0 0.0
        %6263 = vmatpush1.msra.mxu0 0.0
        %6264 = vmatprep.subr.mxu0 0.0
        %6265 = vmatpush1.msra.mxu0 0.0
        %6266 = vmatprep.subr.mxu0 0.0
        %6267 = vmatpush1.msra.mxu0 0.0
        %6268 = vmatprep.subr.mxu0 0.0
        %6269 = vmatpush1.msra.mxu0 0.0
        %6270 = vmatprep.subr.mxu0 0.0
        %6271 = vmatpush1.msra.mxu0 0.0
        %6272 = vmatprep.subr.mxu0 0.0
        %6273 = vmatpush1.msra.mxu0 0.0
        %6274 = vmatprep.subr.mxu0 0.0
        %6275 = vmatpush1.msra.mxu0 0.0
        %6276 = vmatprep.subr.mxu0 0.0
        %6277 = vmatpush1.msra.mxu0 0.0
        %6278 = vmatprep.subr.mxu0 0.0
        %6279 = vmatpush1.msra.mxu0 0.0
        %6280 = vmatprep.subr.mxu0 0.0
        %6281 = vmatpush1.msra.mxu0 0.0
        %6282 = vmatprep.subr.mxu0 0.0
        %6283 = vmatpush1.msra.mxu0 0.0
        %6284 = vmatprep.subr.mxu0 0.0
        %6285 = vmatpush1.msra.mxu0 0.0
        %6286 = vmatprep.subr.mxu0 0.0
        %6287 = vmatpush1.msra.mxu0 0.0
        %6288 = vmatprep.subr.mxu0 0.0
        %6289 = vmatpush1.msra.mxu0 0.0
        %6290 = vmatprep.subr.mxu0 0.0
        %6291 = vmatpush1.msra.mxu0 0.0
        %6292 = vmatprep.subr.mxu0 0.0
        %6293 = vmatpush1.msra.mxu0 0.0
        %6294 = vmatprep.subr.mxu0 0.0
        %6295 = vmatpush1.msra.mxu0 0.0
        %6296 = vmatprep.subr.mxu0 0.0
        %6297 = vmatpush1.msra.mxu0 0.0
        %6298 = vmatprep.subr.mxu0 0.0
        %6299 = vmatpush1.msra.mxu0 0.0
        %6300 = vmatprep.subr.mxu0 0.0
        %6301 = vmatpush1.msra.mxu0 0.0
        %6302 = vmatprep.subr.mxu0 0.0
        %6303 = vmatpush1.msra.mxu0 0.0
        %6304 = vmatprep.subr.mxu0 0.0
        %6305 = vmatpush1.msra.mxu0 0.0
        %6306 = vmatprep.subr.mxu0 0.0
        %6307 = vmatpush1.msra.mxu0 0.0
        %6308 = vmatprep.subr.mxu0 0.0
        %6309 = vmatpush1.msra.mxu0 0.0
        %6310 = vmatprep.subr.mxu0 0.0
        %6311 = vmatpush1.msra.mxu0 0.0
        %6312 = vmatprep.subr.mxu0 0.0
        %6313 = vmatpush1.msra.mxu0 0.0
        %6314 = vmatprep.subr.mxu0 0.0
        %6315 = vmatpush1.msra.mxu0 0.0
        %6316 = vmatprep.subr.mxu0 0.0
        %6317 = vmatpush1.msra.mxu0 0.0
        %6318 = vmatprep.mubr.f32.mxu0 0.0
        %6319 = vmatmul.mubr.f32.gmra.mrb[0].mxu0 %v6248
        %v6320 = vpop.f32.mrb[0].mxu0
        %v6321 = vadd.f32 0.0, %v6320
        %v6322 = vpop.f32.mrb[0].mxu0
        %6323 = vdwg.mxu0
        %v6324 = vlaneseq
        %v6325 = vshrl.u32 %v6324, 7
        %v6326 = vsub.s32 0, %v6325
        %v6327 = vrot.slane %v6244, %v6326
        %v6328 = vmul.f32 %v6321, %v6327
        %v6329 = vadd.f32 %v6328, 0.0
        %v6330 = vld [vmem:[%s45 + $0x1] sm:$0x1]
        %s6331 = scalar_lea.vmem %s7, 4
        %v6332 = vld [vmem:[%s6331] sm:$0xf]
        %v6334 = vsel %vm6246, %v6332, 0
        %6336 = vmatprep.subr.mxu0 0.0
        %6337 = vmatpush1.msra.mxu0 %v6252
        %6338 = vmatprep.subr.mxu0 0.0
        %6339 = vmatpush1.msra.mxu0 0.0
        %6340 = vmatprep.subr.mxu0 0.0
        %6341 = vmatpush1.msra.mxu0 0.0
        %6342 = vmatprep.subr.mxu0 0.0
        %6343 = vmatpush1.msra.mxu0 0.0
        %6344 = vmatprep.subr.mxu0 0.0
        %6345 = vmatpush1.msra.mxu0 0.0
        %6346 = vmatprep.subr.mxu0 0.0
        %6347 = vmatpush1.msra.mxu0 0.0
        %6348 = vmatprep.subr.mxu0 0.0
        %6349 = vmatpush1.msra.mxu0 0.0
        %6350 = vmatprep.subr.mxu0 0.0
        %6351 = vmatpush1.msra.mxu0 0.0
        %6352 = vmatprep.subr.mxu0 0.0
        %6353 = vmatpush1.msra.mxu0 0.0
        %6354 = vmatprep.subr.mxu0 0.0
        %6355 = vmatpush1.msra.mxu0 0.0
        %6356 = vmatprep.subr.mxu0 0.0
        %6357 = vmatpush1.msra.mxu0 0.0
        %6358 = vmatprep.subr.mxu0 0.0
        %6359 = vmatpush1.msra.mxu0 0.0
        %6360 = vmatprep.subr.mxu0 0.0
        %6361 = vmatpush1.msra.mxu0 0.0
        %6362 = vmatprep.subr.mxu0 0.0
        %6363 = vmatpush1.msra.mxu0 0.0
        %6364 = vmatprep.subr.mxu0 0.0
        %6365 = vmatpush1.msra.mxu0 0.0
        %6366 = vmatprep.subr.mxu0 0.0
        %6367 = vmatpush1.msra.mxu0 0.0
        %6368 = vmatprep.subr.mxu0 0.0
        %6369 = vmatpush1.msra.mxu0 0.0
        %6370 = vmatprep.subr.mxu0 0.0
        %6371 = vmatpush1.msra.mxu0 0.0
        %6372 = vmatprep.subr.mxu0 0.0
        %6373 = vmatpush1.msra.mxu0 0.0
        %6374 = vmatprep.subr.mxu0 0.0
        %6375 = vmatpush1.msra.mxu0 0.0
        %6376 = vmatprep.subr.mxu0 0.0
        %6377 = vmatpush1.msra.mxu0 0.0
        %6378 = vmatprep.subr.mxu0 0.0
        %6379 = vmatpush1.msra.mxu0 0.0
        %6380 = vmatprep.subr.mxu0 0.0
        %6381 = vmatpush1.msra.mxu0 0.0
        %6382 = vmatprep.subr.mxu0 0.0
        %6383 = vmatpush1.msra.mxu0 0.0
        %6384 = vmatprep.subr.mxu0 0.0
        %6385 = vmatpush1.msra.mxu0 0.0
        %6386 = vmatprep.subr.mxu0 0.0
        %6387 = vmatpush1.msra.mxu0 0.0
        %6388 = vmatprep.subr.mxu0 0.0
        %6389 = vmatpush1.msra.mxu0 0.0
        %6390 = vmatprep.subr.mxu0 0.0
        %6391 = vmatpush1.msra.mxu0 0.0
        %6392 = vmatprep.subr.mxu0 0.0
        %6393 = vmatpush1.msra.mxu0 0.0
        %6394 = vmatprep.subr.mxu0 0.0
        %6395 = vmatpush1.msra.mxu0 0.0
        %6396 = vmatprep.subr.mxu0 0.0
        %6397 = vmatpush1.msra.mxu0 0.0
        %6398 = vmatprep.subr.mxu0 0.0
        %6399 = vmatpush1.msra.mxu0 0.0
        %6400 = vmatprep.mubr.f32.mxu0 0.0
        %6401 = vmatmul.mubr.f32.gmra.mrb[0].mxu0 %v6334
        %v6402 = vpop.f32.mrb[0].mxu0
        %v6403 = vadd.f32 0.0, %v6402
        %v6404 = vpop.f32.mrb[0].mxu0
        %6405 = vdwg.mxu0
        %v6406 = vlaneseq
        %v6407 = vshrl.u32 %v6406, 7
        %v6408 = vsub.s32 0, %v6407
        %v6409 = vrot.slane %v6330, %v6408
        %v6410 = vmul.f32 %v6403, %v6409
        %v6411 = vadd.f32 %v6329, %v6410
        %v6412 = vld [vmem:[%s45 + $0x2] sm:$0x1]
        %s6413 = scalar_lea.vmem %s7, 8
        %v6414 = vld [vmem:[%s6413] sm:$0xf]
        %v6416 = vsel %vm6246, %v6414, 0
        %6418 = vmatprep.subr.mxu0 0.0
        %6419 = vmatpush1.msra.mxu0 %v6252
        %6420 = vmatprep.subr.mxu0 0.0
        %6421 = vmatpush1.msra.mxu0 0.0
        %6422 = vmatprep.subr.mxu0 0.0
        %6423 = vmatpush1.msra.mxu0 0.0
        %6424 = vmatprep.subr.mxu0 0.0
        %6425 = vmatpush1.msra.mxu0 0.0
        %6426 = vmatprep.subr.mxu0 0.0
        %6427 = vmatpush1.msra.mxu0 0.0
        %6428 = vmatprep.subr.mxu0 0.0
        %6429 = vmatpush1.msra.mxu0 0.0
        %6430 = vmatprep.subr.mxu0 0.0
        %6431 = vmatpush1.msra.mxu0 0.0
        %6432 = vmatprep.subr.mxu0 0.0
        %6433 = vmatpush1.msra.mxu0 0.0
        %6434 = vmatprep.subr.mxu0 0.0
        %6435 = vmatpush1.msra.mxu0 0.0
        %6436 = vmatprep.subr.mxu0 0.0
        %6437 = vmatpush1.msra.mxu0 0.0
        %6438 = vmatprep.subr.mxu0 0.0
        %6439 = vmatpush1.msra.mxu0 0.0
        %6440 = vmatprep.subr.mxu0 0.0
        %6441 = vmatpush1.msra.mxu0 0.0
        %6442 = vmatprep.subr.mxu0 0.0
        %6443 = vmatpush1.msra.mxu0 0.0
        %6444 = vmatprep.subr.mxu0 0.0
        %6445 = vmatpush1.msra.mxu0 0.0
        %6446 = vmatprep.subr.mxu0 0.0
        %6447 = vmatpush1.msra.mxu0 0.0
        %6448 = vmatprep.subr.mxu0 0.0
        %6449 = vmatpush1.msra.mxu0 0.0
        %6450 = vmatprep.subr.mxu0 0.0
        %6451 = vmatpush1.msra.mxu0 0.0
        %6452 = vmatprep.subr.mxu0 0.0
        %6453 = vmatpush1.msra.mxu0 0.0
        %6454 = vmatprep.subr.mxu0 0.0
        %6455 = vmatpush1.msra.mxu0 0.0
        %6456 = vmatprep.subr.mxu0 0.0
        %6457 = vmatpush1.msra.mxu0 0.0
        %6458 = vmatprep.subr.mxu0 0.0
        %6459 = vmatpush1.msra.mxu0 0.0
        %6460 = vmatprep.subr.mxu0 0.0
        %6461 = vmatpush1.msra.mxu0 0.0
        %6462 = vmatprep.subr.mxu0 0.0
        %6463 = vmatpush1.msra.mxu0 0.0
        %6464 = vmatprep.subr.mxu0 0.0
        %6465 = vmatpush1.msra.mxu0 0.0
        %6466 = vmatprep.subr.mxu0 0.0
        %6467 = vmatpush1.msra.mxu0 0.0
        %6468 = vmatprep.subr.mxu0 0.0
        %6469 = vmatpush1.msra.mxu0 0.0
        %6470 = vmatprep.subr.mxu0 0.0
        %6471 = vmatpush1.msra.mxu0 0.0
        %6472 = vmatprep.subr.mxu0 0.0
        %6473 = vmatpush1.msra.mxu0 0.0
        %6474 = vmatprep.subr.mxu0 0.0
        %6475 = vmatpush1.msra.mxu0 0.0
        %6476 = vmatprep.subr.mxu0 0.0
        %6477 = vmatpush1.msra.mxu0 0.0
        %6478 = vmatprep.subr.mxu0 0.0
        %6479 = vmatpush1.msra.mxu0 0.0
        %6480 = vmatprep.subr.mxu0 0.0
        %6481 = vmatpush1.msra.mxu0 0.0
        %6482 = vmatprep.mubr.f32.mxu0 0.0
        %6483 = vmatmul.mubr.f32.gmra.mrb[0].mxu0 %v6416
        %v6484 = vpop.f32.mrb[0].mxu0
        %v6485 = vadd.f32 0.0, %v6484
        %v6486 = vpop.f32.mrb[0].mxu0
        %6487 = vdwg.mxu0
        %v6488 = vlaneseq
        %v6489 = vshrl.u32 %v6488, 7
        %v6490 = vsub.s32 0, %v6489
        %v6491 = vrot.slane %v6412, %v6490
        %v6492 = vmul.f32 %v6485, %v6491
        %v6493 = vadd.f32 %v6411, %v6492
        %s6494 = scalar_lea.vmem %s45, 4
        %v6495 = vld [vmem:[%s6494] sm:$0x1]
        %s6496 = scalar_lea.vmem %s7, 12
        %v6497 = vld [vmem:[%s6496] sm:$0xf]
        %v6499 = vsel %vm6246, %v6497, 0
        %6501 = vmatprep.subr.mxu0 0.0
        %6502 = vmatpush1.msra.mxu0 %v6252
        %6503 = vmatprep.subr.mxu0 0.0
        %6504 = vmatpush1.msra.mxu0 0.0
        %6505 = vmatprep.subr.mxu0 0.0
        %6506 = vmatpush1.msra.mxu0 0.0
        %6507 = vmatprep.subr.mxu0 0.0
        %6508 = vmatpush1.msra.mxu0 0.0
        %6509 = vmatprep.subr.mxu0 0.0
        %6510 = vmatpush1.msra.mxu0 0.0
        %6511 = vmatprep.subr.mxu0 0.0
        %6512 = vmatpush1.msra.mxu0 0.0
        %6513 = vmatprep.subr.mxu0 0.0
        %6514 = vmatpush1.msra.mxu0 0.0
        %6515 = vmatprep.subr.mxu0 0.0
        %6516 = vmatpush1.msra.mxu0 0.0
        %6517 = vmatprep.subr.mxu0 0.0
        %6518 = vmatpush1.msra.mxu0 0.0
        %6519 = vmatprep.subr.mxu0 0.0
        %6520 = vmatpush1.msra.mxu0 0.0
        %6521 = vmatprep.subr.mxu0 0.0
        %6522 = vmatpush1.msra.mxu0 0.0
        %6523 = vmatprep.subr.mxu0 0.0
        %6524 = vmatpush1.msra.mxu0 0.0
        %6525 = vmatprep.subr.mxu0 0.0
        %6526 = vmatpush1.msra.mxu0 0.0
        %6527 = vmatprep.subr.mxu0 0.0
        %6528 = vmatpush1.msra.mxu0 0.0
        %6529 = vmatprep.subr.mxu0 0.0
        %6530 = vmatpush1.msra.mxu0 0.0
        %6531 = vmatprep.subr.mxu0 0.0
        %6532 = vmatpush1.msra.mxu0 0.0
        %6533 = vmatprep.subr.mxu0 0.0
        %6534 = vmatpush1.msra.mxu0 0.0
        %6535 = vmatprep.subr.mxu0 0.0
        %6536 = vmatpush1.msra.mxu0 0.0
        %6537 = vmatprep.subr.mxu0 0.0
        %6538 = vmatpush1.msra.mxu0 0.0
        %6539 = vmatprep.subr.mxu0 0.0
        %6540 = vmatpush1.msra.mxu0 0.0
        %6541 = vmatprep.subr.mxu0 0.0
        %6542 = vmatpush1.msra.mxu0 0.0
        %6543 = vmatprep.subr.mxu0 0.0
        %6544 = vmatpush1.msra.mxu0 0.0
        %6545 = vmatprep.subr.mxu0 0.0
        %6546 = vmatpush1.msra.mxu0 0.0
        %6547 = vmatprep.subr.mxu0 0.0
        %6548 = vmatpush1.msra.mxu0 0.0
        %6549 = vmatprep.subr.mxu0 0.0
        %6550 = vmatpush1.msra.mxu0 0.0
        %6551 = vmatprep.subr.mxu0 0.0
        %6552 = vmatpush1.msra.mxu0 0.0
        %6553 = vmatprep.subr.mxu0 0.0
        %6554 = vmatpush1.msra.mxu0 0.0
        %6555 = vmatprep.subr.mxu0 0.0
        %6556 = vmatpush1.msra.mxu0 0.0
        %6557 = vmatprep.subr.mxu0 0.0
        %6558 = vmatpush1.msra.mxu0 0.0
        %6559 = vmatprep.subr.mxu0 0.0
        %6560 = vmatpush1.msra.mxu0 0.0
        %6561 = vmatprep.subr.mxu0 0.0
        %6562 = vmatpush1.msra.mxu0 0.0
        %6563 = vmatprep.subr.mxu0 0.0
        %6564 = vmatpush1.msra.mxu0 0.0
        %6565 = vmatprep.mubr.f32.mxu0 0.0
        %6566 = vmatmul.mubr.f32.gmra.mrb[0].mxu0 %v6499
        %v6567 = vpop.f32.mrb[0].mxu0
        %v6568 = vadd.f32 0.0, %v6567
        %v6569 = vpop.f32.mrb[0].mxu0
        %6570 = vdwg.mxu0
        %v6571 = vlaneseq
        %v6572 = vshrl.u32 %v6571, 7
        %v6573 = vsub.s32 0, %v6572
        %v6574 = vrot.slane %v6495, %v6573
        %v6575 = vmul.f32 %v6568, %v6574
        %v6576 = vadd.f32 %v6493, %v6575
        %v6577 = vld [vmem:[%s6494 + $0x1] sm:$0x1]
        %s6578 = scalar_lea.vmem %s7, 16
        %v6579 = vld [vmem:[%s6578] sm:$0xf]
        %v6581 = vsel %vm6246, %v6579, 0
        %6583 = vmatprep.subr.mxu0 0.0
        %6584 = vmatpush1.msra.mxu0 %v6252
        %6585 = vmatprep.subr.mxu0 0.0
        %6586 = vmatpush1.msra.mxu0 0.0
        %6587 = vmatprep.subr.mxu0 0.0
        %6588 = vmatpush1.msra.mxu0 0.0
        %6589 = vmatprep.subr.mxu0 0.0
        %6590 = vmatpush1.msra.mxu0 0.0
        %6591 = vmatprep.subr.mxu0 0.0
        %6592 = vmatpush1.msra.mxu0 0.0
        %6593 = vmatprep.subr.mxu0 0.0
        %6594 = vmatpush1.msra.mxu0 0.0
        %6595 = vmatprep.subr.mxu0 0.0
        %6596 = vmatpush1.msra.mxu0 0.0
        %6597 = vmatprep.subr.mxu0 0.0
        %6598 = vmatpush1.msra.mxu0 0.0
        %6599 = vmatprep.subr.mxu0 0.0
        %6600 = vmatpush1.msra.mxu0 0.0
        %6601 = vmatprep.subr.mxu0 0.0
        %6602 = vmatpush1.msra.mxu0 0.0
        %6603 = vmatprep.subr.mxu0 0.0
        %6604 = vmatpush1.msra.mxu0 0.0
        %6605 = vmatprep.subr.mxu0 0.0
        %6606 = vmatpush1.msra.mxu0 0.0
        %6607 = vmatprep.subr.mxu0 0.0
        %6608 = vmatpush1.msra.mxu0 0.0
        %6609 = vmatprep.subr.mxu0 0.0
        %6610 = vmatpush1.msra.mxu0 0.0
        %6611 = vmatprep.subr.mxu0 0.0
        %6612 = vmatpush1.msra.mxu0 0.0
        %6613 = vmatprep.subr.mxu0 0.0
        %6614 = vmatpush1.msra.mxu0 0.0
        %6615 = vmatprep.subr.mxu0 0.0
        %6616 = vmatpush1.msra.mxu0 0.0
        %6617 = vmatprep.subr.mxu0 0.0
        %6618 = vmatpush1.msra.mxu0 0.0
        %6619 = vmatprep.subr.mxu0 0.0
        %6620 = vmatpush1.msra.mxu0 0.0
        %6621 = vmatprep.subr.mxu0 0.0
        %6622 = vmatpush1.msra.mxu0 0.0
        %6623 = vmatprep.subr.mxu0 0.0
        %6624 = vmatpush1.msra.mxu0 0.0
        %6625 = vmatprep.subr.mxu0 0.0
        %6626 = vmatpush1.msra.mxu0 0.0
        %6627 = vmatprep.subr.mxu0 0.0
        %6628 = vmatpush1.msra.mxu0 0.0
        %6629 = vmatprep.subr.mxu0 0.0
        %6630 = vmatpush1.msra.mxu0 0.0
        %6631 = vmatprep.subr.mxu0 0.0
        %6632 = vmatpush1.msra.mxu0 0.0
        %6633 = vmatprep.subr.mxu0 0.0
        %6634 = vmatpush1.msra.mxu0 0.0
        %6635 = vmatprep.subr.mxu0 0.0
        %6636 = vmatpush1.msra.mxu0 0.0
        %6637 = vmatprep.subr.mxu0 0.0
        %6638 = vmatpush1.msra.mxu0 0.0
        %6639 = vmatprep.subr.mxu0 0.0
        %6640 = vmatpush1.msra.mxu0 0.0
        %6641 = vmatprep.subr.mxu0 0.0
        %6642 = vmatpush1.msra.mxu0 0.0
        %6643 = vmatprep.subr.mxu0 0.0
        %6644 = vmatpush1.msra.mxu0 0.0
        %6645 = vmatprep.subr.mxu0 0.0
        %6646 = vmatpush1.msra.mxu0 0.0
        %6647 = vmatprep.mubr.f32.mxu0 0.0
        %6648 = vmatmul.mubr.f32.gmra.mrb[0].mxu0 %v6581
        %v6649 = vpop.f32.mrb[0].mxu0
        %v6650 = vadd.f32 0.0, %v6649
        %v6651 = vpop.f32.mrb[0].mxu0
        %6652 = vdwg.mxu0
        %v6653 = vlaneseq
        %v6654 = vshrl.u32 %v6653, 7
        %v6655 = vsub.s32 0, %v6654
        %v6656 = vrot.slane %v6577, %v6655
        %v6657 = vmul.f32 %v6650, %v6656
        %v6658 = vadd.f32 %v6576, %v6657
        %v6659 = vld [vmem:[%s6494 + $0x2] sm:$0x1]
        %s6660 = scalar_lea.vmem %s7, 20
        %v6661 = vld [vmem:[%s6660] sm:$0xf]
        %v6663 = vsel %vm6246, %v6661, 0
        %6665 = vmatprep.subr.mxu0 0.0
        %6666 = vmatpush1.msra.mxu0 %v6252
        %6667 = vmatprep.subr.mxu0 0.0
        %6668 = vmatpush1.msra.mxu0 0.0
        %6669 = vmatprep.subr.mxu0 0.0
        %6670 = vmatpush1.msra.mxu0 0.0
        %6671 = vmatprep.subr.mxu0 0.0
        %6672 = vmatpush1.msra.mxu0 0.0
        %6673 = vmatprep.subr.mxu0 0.0
        %6674 = vmatpush1.msra.mxu0 0.0
        %6675 = vmatprep.subr.mxu0 0.0
        %6676 = vmatpush1.msra.mxu0 0.0
        %6677 = vmatprep.subr.mxu0 0.0
        %6678 = vmatpush1.msra.mxu0 0.0
        %6679 = vmatprep.subr.mxu0 0.0
        %6680 = vmatpush1.msra.mxu0 0.0
        %6681 = vmatprep.subr.mxu0 0.0
        %6682 = vmatpush1.msra.mxu0 0.0
        %6683 = vmatprep.subr.mxu0 0.0
        %6684 = vmatpush1.msra.mxu0 0.0
        %6685 = vmatprep.subr.mxu0 0.0
        %6686 = vmatpush1.msra.mxu0 0.0
        %6687 = vmatprep.subr.mxu0 0.0
        %6688 = vmatpush1.msra.mxu0 0.0
        %6689 = vmatprep.subr.mxu0 0.0
        %6690 = vmatpush1.msra.mxu0 0.0
        %6691 = vmatprep.subr.mxu0 0.0
        %6692 = vmatpush1.msra.mxu0 0.0
        %6693 = vmatprep.subr.mxu0 0.0
        %6694 = vmatpush1.msra.mxu0 0.0
        %6695 = vmatprep.subr.mxu0 0.0
        %6696 = vmatpush1.msra.mxu0 0.0
        %6697 = vmatprep.subr.mxu0 0.0
        %6698 = vmatpush1.msra.mxu0 0.0
        %6699 = vmatprep.subr.mxu0 0.0
        %6700 = vmatpush1.msra.mxu0 0.0
        %6701 = vmatprep.subr.mxu0 0.0
        %6702 = vmatpush1.msra.mxu0 0.0
        %6703 = vmatprep.subr.mxu0 0.0
        %6704 = vmatpush1.msra.mxu0 0.0
        %6705 = vmatprep.subr.mxu0 0.0
        %6706 = vmatpush1.msra.mxu0 0.0
        %6707 = vmatprep.subr.mxu0 0.0
        %6708 = vmatpush1.msra.mxu0 0.0
        %6709 = vmatprep.subr.mxu0 0.0
        %6710 = vmatpush1.msra.mxu0 0.0
        %6711 = vmatprep.subr.mxu0 0.0
        %6712 = vmatpush1.msra.mxu0 0.0
        %6713 = vmatprep.subr.mxu0 0.0
        %6714 = vmatpush1.msra.mxu0 0.0
        %6715 = vmatprep.subr.mxu0 0.0
        %6716 = vmatpush1.msra.mxu0 0.0
        %6717 = vmatprep.subr.mxu0 0.0
        %6718 = vmatpush1.msra.mxu0 0.0
        %6719 = vmatprep.subr.mxu0 0.0
        %6720 = vmatpush1.msra.mxu0 0.0
        %6721 = vmatprep.subr.mxu0 0.0
        %6722 = vmatpush1.msra.mxu0 0.0
        %6723 = vmatprep.subr.mxu0 0.0
        %6724 = vmatpush1.msra.mxu0 0.0
        %6725 = vmatprep.subr.mxu0 0.0
        %6726 = vmatpush1.msra.mxu0 0.0
        %6727 = vmatprep.subr.mxu0 0.0
        %6728 = vmatpush1.msra.mxu0 0.0
        %6729 = vmatprep.mubr.f32.mxu0 0.0
        %6730 = vmatmul.mubr.f32.gmra.mrb[0].mxu0 %v6663
        %v6731 = vpop.f32.mrb[0].mxu0
        %v6732 = vadd.f32 0.0, %v6731
        %v6733 = vpop.f32.mrb[0].mxu0
        %6734 = vdwg.mxu0
        %v6735 = vlaneseq
        %v6736 = vshrl.u32 %v6735, 7
        %v6737 = vsub.s32 0, %v6736
        %v6738 = vrot.slane %v6659, %v6737
        %v6739 = vmul.f32 %v6732, %v6738
        %v6740 = vadd.f32 %v6658, %v6739
        %s6741 = scalar_lea.vmem %s45, 8
        %v6742 = vld [vmem:[%s6741] sm:$0x1]
        %s6743 = scalar_lea.vmem %s7, 24
        %v6744 = vld [vmem:[%s6743] sm:$0xf]
        %v6746 = vsel %vm6246, %v6744, 0
        %6748 = vmatprep.subr.mxu0 0.0
        %6749 = vmatpush1.msra.mxu0 %v6252
        %6750 = vmatprep.subr.mxu0 0.0
        %6751 = vmatpush1.msra.mxu0 0.0
        %6752 = vmatprep.subr.mxu0 0.0
        %6753 = vmatpush1.msra.mxu0 0.0
        %6754 = vmatprep.subr.mxu0 0.0
        %6755 = vmatpush1.msra.mxu0 0.0
        %6756 = vmatprep.subr.mxu0 0.0
        %6757 = vmatpush1.msra.mxu0 0.0
        %6758 = vmatprep.subr.mxu0 0.0
        %6759 = vmatpush1.msra.mxu0 0.0
        %6760 = vmatprep.subr.mxu0 0.0
        %6761 = vmatpush1.msra.mxu0 0.0
        %6762 = vmatprep.subr.mxu0 0.0
        %6763 = vmatpush1.msra.mxu0 0.0
        %6764 = vmatprep.subr.mxu0 0.0
        %6765 = vmatpush1.msra.mxu0 0.0
        %6766 = vmatprep.subr.mxu0 0.0
        %6767 = vmatpush1.msra.mxu0 0.0
        %6768 = vmatprep.subr.mxu0 0.0
        %6769 = vmatpush1.msra.mxu0 0.0
        %6770 = vmatprep.subr.mxu0 0.0
        %6771 = vmatpush1.msra.mxu0 0.0
        %6772 = vmatprep.subr.mxu0 0.0
        %6773 = vmatpush1.msra.mxu0 0.0
        %6774 = vmatprep.subr.mxu0 0.0
        %6775 = vmatpush1.msra.mxu0 0.0
        %6776 = vmatprep.subr.mxu0 0.0
        %6777 = vmatpush1.msra.mxu0 0.0
        %6778 = vmatprep.subr.mxu0 0.0
        %6779 = vmatpush1.msra.mxu0 0.0
        %6780 = vmatprep.subr.mxu0 0.0
        %6781 = vmatpush1.msra.mxu0 0.0
        %6782 = vmatprep.subr.mxu0 0.0
        %6783 = vmatpush1.msra.mxu0 0.0
        %6784 = vmatprep.subr.mxu0 0.0
        %6785 = vmatpush1.msra.mxu0 0.0
        %6786 = vmatprep.subr.mxu0 0.0
        %6787 = vmatpush1.msra.mxu0 0.0
        %6788 = vmatprep.subr.mxu0 0.0
        %6789 = vmatpush1.msra.mxu0 0.0
        %6790 = vmatprep.subr.mxu0 0.0
        %6791 = vmatpush1.msra.mxu0 0.0
        %6792 = vmatprep.subr.mxu0 0.0
        %6793 = vmatpush1.msra.mxu0 0.0
        %6794 = vmatprep.subr.mxu0 0.0
        %6795 = vmatpush1.msra.mxu0 0.0
        %6796 = vmatprep.subr.mxu0 0.0
        %6797 = vmatpush1.msra.mxu0 0.0
        %6798 = vmatprep.subr.mxu0 0.0
        %6799 = vmatpush1.msra.mxu0 0.0
        %6800 = vmatprep.subr.mxu0 0.0
        %6801 = vmatpush1.msra.mxu0 0.0
        %6802 = vmatprep.subr.mxu0 0.0
        %6803 = vmatpush1.msra.mxu0 0.0
        %6804 = vmatprep.subr.mxu0 0.0
        %6805 = vmatpush1.msra.mxu0 0.0
        %6806 = vmatprep.subr.mxu0 0.0
        %6807 = vmatpush1.msra.mxu0 0.0
        %6808 = vmatprep.subr.mxu0 0.0
        %6809 = vmatpush1.msra.mxu0 0.0
        %6810 = vmatprep.subr.mxu0 0.0
        %6811 = vmatpush1.msra.mxu0 0.0
        %6812 = vmatprep.mubr.f32.mxu0 0.0
        %6813 = vmatmul.mubr.f32.gmra.mrb[0].mxu0 %v6746
        %v6814 = vpop.f32.mrb[0].mxu0
        %v6815 = vadd.f32 0.0, %v6814
        %v6816 = vpop.f32.mrb[0].mxu0
        %6817 = vdwg.mxu0
        %v6818 = vlaneseq
        %v6819 = vshrl.u32 %v6818, 7
        %v6820 = vsub.s32 0, %v6819
        %v6821 = vrot.slane %v6742, %v6820
        %v6822 = vmul.f32 %v6815, %v6821
        %v6823 = vadd.f32 %v6740, %v6822
        %v6824 = vld [vmem:[%s6741 + $0x1] sm:$0x1]
        %s6825 = scalar_lea.vmem %s7, 28
        %v6826 = vld [vmem:[%s6825] sm:$0xf]
        %v6828 = vsel %vm6246, %v6826, 0
        %6830 = vmatprep.subr.mxu0 0.0
        %6831 = vmatpush1.msra.mxu0 %v6252
        %6832 = vmatprep.subr.mxu0 0.0
        %6833 = vmatpush1.msra.mxu0 0.0
        %6834 = vmatprep.subr.mxu0 0.0
        %6835 = vmatpush1.msra.mxu0 0.0
        %6836 = vmatprep.subr.mxu0 0.0
        %6837 = vmatpush1.msra.mxu0 0.0
        %6838 = vmatprep.subr.mxu0 0.0
        %6839 = vmatpush1.msra.mxu0 0.0
        %6840 = vmatprep.subr.mxu0 0.0
        %6841 = vmatpush1.msra.mxu0 0.0
        %6842 = vmatprep.subr.mxu0 0.0
        %6843 = vmatpush1.msra.mxu0 0.0
        %6844 = vmatprep.subr.mxu0 0.0
        %6845 = vmatpush1.msra.mxu0 0.0
        %6846 = vmatprep.subr.mxu0 0.0
        %6847 = vmatpush1.msra.mxu0 0.0
        %6848 = vmatprep.subr.mxu0 0.0
        %6849 = vmatpush1.msra.mxu0 0.0
        %6850 = vmatprep.subr.mxu0 0.0
        %6851 = vmatpush1.msra.mxu0 0.0
        %6852 = vmatprep.subr.mxu0 0.0
        %6853 = vmatpush1.msra.mxu0 0.0
        %6854 = vmatprep.subr.mxu0 0.0
        %6855 = vmatpush1.msra.mxu0 0.0
        %6856 = vmatprep.subr.mxu0 0.0
        %6857 = vmatpush1.msra.mxu0 0.0
        %6858 = vmatprep.subr.mxu0 0.0
        %6859 = vmatpush1.msra.mxu0 0.0
        %6860 = vmatprep.subr.mxu0 0.0
        %6861 = vmatpush1.msra.mxu0 0.0
        %6862 = vmatprep.subr.mxu0 0.0
        %6863 = vmatpush1.msra.mxu0 0.0
        %6864 = vmatprep.subr.mxu0 0.0
        %6865 = vmatpush1.msra.mxu0 0.0
        %6866 = vmatprep.subr.mxu0 0.0
        %6867 = vmatpush1.msra.mxu0 0.0
        %6868 = vmatprep.subr.mxu0 0.0
        %6869 = vmatpush1.msra.mxu0 0.0
        %6870 = vmatprep.subr.mxu0 0.0
        %6871 = vmatpush1.msra.mxu0 0.0
        %6872 = vmatprep.subr.mxu0 0.0
        %6873 = vmatpush1.msra.mxu0 0.0
        %6874 = vmatprep.subr.mxu0 0.0
        %6875 = vmatpush1.msra.mxu0 0.0
        %6876 = vmatprep.subr.mxu0 0.0
        %6877 = vmatpush1.msra.mxu0 0.0
        %6878 = vmatprep.subr.mxu0 0.0
        %6879 = vmatpush1.msra.mxu0 0.0
        %6880 = vmatprep.subr.mxu0 0.0
        %6881 = vmatpush1.msra.mxu0 0.0
        %6882 = vmatprep.subr.mxu0 0.0
        %6883 = vmatpush1.msra.mxu0 0.0
        %6884 = vmatprep.subr.mxu0 0.0
        %6885 = vmatpush1.msra.mxu0 0.0
        %6886 = vmatprep.subr.mxu0 0.0
        %6887 = vmatpush1.msra.mxu0 0.0
        %6888 = vmatprep.subr.mxu0 0.0
        %6889 = vmatpush1.msra.mxu0 0.0
        %6890 = vmatprep.subr.mxu0 0.0
        %6891 = vmatpush1.msra.mxu0 0.0
        %6892 = vmatprep.subr.mxu0 0.0
        %6893 = vmatpush1.msra.mxu0 0.0
        %6894 = vmatprep.mubr.f32.mxu0 0.0
        %6895 = vmatmul.mubr.f32.gmra.mrb[0].mxu0 %v6828
        %v6896 = vpop.f32.mrb[0].mxu0
        %v6897 = vadd.f32 0.0, %v6896
        %v6898 = vpop.f32.mrb[0].mxu0
        %6899 = vdwg.mxu0
        %v6900 = vlaneseq
        %v6901 = vshrl.u32 %v6900, 7
        %v6902 = vsub.s32 0, %v6901
        %v6903 = vrot.slane %v6824, %v6902
        %v6904 = vmul.f32 %v6897, %v6903
        %v6905 = vadd.f32 %v6823, %v6904
        %v6906 = vld [vmem:[%s6741 + $0x2] sm:$0x1]
        %s6907 = scalar_lea.vmem %s7, 32
        %v6908 = vld [vmem:[%s6907] sm:$0xf]
        %v6910 = vsel %vm6246, %v6908, 0
        %6912 = vmatprep.subr.mxu0 0.0
        %6913 = vmatpush1.msra.mxu0 %v6252
        %6914 = vmatprep.subr.mxu0 0.0
        %6915 = vmatpush1.msra.mxu0 0.0
        %6916 = vmatprep.subr.mxu0 0.0
        %6917 = vmatpush1.msra.mxu0 0.0
        %6918 = vmatprep.subr.mxu0 0.0
        %6919 = vmatpush1.msra.mxu0 0.0
        %6920 = vmatprep.subr.mxu0 0.0
        %6921 = vmatpush1.msra.mxu0 0.0
        %6922 = vmatprep.subr.mxu0 0.0
        %6923 = vmatpush1.msra.mxu0 0.0
        %6924 = vmatprep.subr.mxu0 0.0
        %6925 = vmatpush1.msra.mxu0 0.0
        %6926 = vmatprep.subr.mxu0 0.0
        %6927 = vmatpush1.msra.mxu0 0.0
        %6928 = vmatprep.subr.mxu0 0.0
        %6929 = vmatpush1.msra.mxu0 0.0
        %6930 = vmatprep.subr.mxu0 0.0
        %6931 = vmatpush1.msra.mxu0 0.0
        %6932 = vmatprep.subr.mxu0 0.0
        %6933 = vmatpush1.msra.mxu0 0.0
        %6934 = vmatprep.subr.mxu0 0.0
        %6935 = vmatpush1.msra.mxu0 0.0
        %6936 = vmatprep.subr.mxu0 0.0
        %6937 = vmatpush1.msra.mxu0 0.0
        %6938 = vmatprep.subr.mxu0 0.0
        %6939 = vmatpush1.msra.mxu0 0.0
        %6940 = vmatprep.subr.mxu0 0.0
        %6941 = vmatpush1.msra.mxu0 0.0
        %6942 = vmatprep.subr.mxu0 0.0
        %6943 = vmatpush1.msra.mxu0 0.0
        %6944 = vmatprep.subr.mxu0 0.0
        %6945 = vmatpush1.msra.mxu0 0.0
        %6946 = vmatprep.subr.mxu0 0.0
        %6947 = vmatpush1.msra.mxu0 0.0
        %6948 = vmatprep.subr.mxu0 0.0
        %6949 = vmatpush1.msra.mxu0 0.0
        %6950 = vmatprep.subr.mxu0 0.0
        %6951 = vmatpush1.msra.mxu0 0.0
        %6952 = vmatprep.subr.mxu0 0.0
        %6953 = vmatpush1.msra.mxu0 0.0
        %6954 = vmatprep.subr.mxu0 0.0
        %6955 = vmatpush1.msra.mxu0 0.0
        %6956 = vmatprep.subr.mxu0 0.0
        %6957 = vmatpush1.msra.mxu0 0.0
        %6958 = vmatprep.subr.mxu0 0.0
        %6959 = vmatpush1.msra.mxu0 0.0
        %6960 = vmatprep.subr.mxu0 0.0
        %6961 = vmatpush1.msra.mxu0 0.0
        %6962 = vmatprep.subr.mxu0 0.0
        %6963 = vmatpush1.msra.mxu0 0.0
        %6964 = vmatprep.subr.mxu0 0.0
        %6965 = vmatpush1.msra.mxu0 0.0
        %6966 = vmatprep.subr.mxu0 0.0
        %6967 = vmatpush1.msra.mxu0 0.0
        %6968 = vmatprep.subr.mxu0 0.0
        %6969 = vmatpush1.msra.mxu0 0.0
        %6970 = vmatprep.subr.mxu0 0.0
        %6971 = vmatpush1.msra.mxu0 0.0
        %6972 = vmatprep.subr.mxu0 0.0
        %6973 = vmatpush1.msra.mxu0 0.0
        %6974 = vmatprep.subr.mxu0 0.0
        %6975 = vmatpush1.msra.mxu0 0.0
        %6976 = vmatprep.mubr.f32.mxu0 0.0
        %6977 = vmatmul.mubr.f32.gmra.mrb[0].mxu0 %v6910
        %v6978 = vpop.f32.mrb[0].mxu0
        %v6979 = vadd.f32 0.0, %v6978
        %v6980 = vpop.f32.mrb[0].mxu0
        %6981 = vdwg.mxu0
        %v6982 = vlaneseq
        %v6983 = vshrl.u32 %v6982, 7
        %v6984 = vsub.s32 0, %v6983
        %v6985 = vrot.slane %v6906, %v6984
        %v6986 = vmul.f32 %v6979, %v6985
        %v6987 = vadd.f32 %v6905, %v6986
        %v6988 = vld [vmem:[%s47] sm:$0xff]
        %v6989 = vld [vmem:[%s47 + $0x8] sm:$0xff]
        %v6990 = vld [vmem:[%s47 + $0x10] sm:$0xff]
        %v6991 = vld [vmem:[%s47 + $0x18] sm:$0xff]
        %v6993 = vsel %vm2795, %v6987, 0
        %6995 = vmatprep.subr.mxu0 0.0
        %6996 = vmatpush1.msra.mxu0 %v6988
        %6997 = vmatprep.subr.mxu0 0.0
        %6998 = vmatpush1.msra.mxu0 %v6989
        %6999 = vmatprep.subr.mxu0 0.0
        %7000 = vmatpush1.msra.mxu0 %v6990
        %7001 = vmatprep.subr.mxu0 0.0
        %7002 = vmatpush1.msra.mxu0 %v6991
        %7003 = vmatprep.subr.mxu0 0.0
        %7004 = vmatpush1.msra.mxu0 0.0
        %7005 = vmatprep.subr.mxu0 0.0
        %7006 = vmatpush1.msra.mxu0 0.0
        %7007 = vmatprep.subr.mxu0 0.0
        %7008 = vmatpush1.msra.mxu0 0.0
        %7009 = vmatprep.subr.mxu0 0.0
        %7010 = vmatpush1.msra.mxu0 0.0
        %7011 = vmatprep.subr.mxu0 0.0
        %7012 = vmatpush1.msra.mxu0 0.0
        %7013 = vmatprep.subr.mxu0 0.0
        %7014 = vmatpush1.msra.mxu0 0.0
        %7015 = vmatprep.subr.mxu0 0.0
        %7016 = vmatpush1.msra.mxu0 0.0
        %7017 = vmatprep.subr.mxu0 0.0
        %7018 = vmatpush1.msra.mxu0 0.0
        %7019 = vmatprep.subr.mxu0 0.0
        %7020 = vmatpush1.msra.mxu0 0.0
        %7021 = vmatprep.subr.mxu0 0.0
        %7022 = vmatpush1.msra.mxu0 0.0
        %7023 = vmatprep.subr.mxu0 0.0
        %7024 = vmatpush1.msra.mxu0 0.0
        %7025 = vmatprep.subr.mxu0 0.0
        %7026 = vmatpush1.msra.mxu0 0.0
        %7027 = vmatprep.subr.mxu0 0.0
        %7028 = vmatpush1.msra.mxu0 0.0
        %7029 = vmatprep.subr.mxu0 0.0
        %7030 = vmatpush1.msra.mxu0 0.0
        %7031 = vmatprep.subr.mxu0 0.0
        %7032 = vmatpush1.msra.mxu0 0.0
        %7033 = vmatprep.subr.mxu0 0.0
        %7034 = vmatpush1.msra.mxu0 0.0
        %7035 = vmatprep.subr.mxu0 0.0
        %7036 = vmatpush1.msra.mxu0 0.0
        %7037 = vmatprep.subr.mxu0 0.0
        %7038 = vmatpush1.msra.mxu0 0.0
        %7039 = vmatprep.subr.mxu0 0.0
        %7040 = vmatpush1.msra.mxu0 0.0
        %7041 = vmatprep.subr.mxu0 0.0
        %7042 = vmatpush1.msra.mxu0 0.0
        %7043 = vmatprep.subr.mxu0 0.0
        %7044 = vmatpush1.msra.mxu0 0.0
        %7045 = vmatprep.subr.mxu0 0.0
        %7046 = vmatpush1.msra.mxu0 0.0
        %7047 = vmatprep.subr.mxu0 0.0
        %7048 = vmatpush1.msra.mxu0 0.0
        %7049 = vmatprep.subr.mxu0 0.0
        %7050 = vmatpush1.msra.mxu0 0.0
        %7051 = vmatprep.subr.mxu0 0.0
        %7052 = vmatpush1.msra.mxu0 0.0
        %7053 = vmatprep.subr.mxu0 0.0
        %7054 = vmatpush1.msra.mxu0 0.0
        %7055 = vmatprep.subr.mxu0 0.0
        %7056 = vmatpush1.msra.mxu0 0.0
        %7057 = vmatprep.subr.mxu0 0.0
        %7058 = vmatpush1.msra.mxu0 0.0
        %7059 = vmatprep.mubr.f32.mxu0 0.0
        %7060 = vmatmul.mubr.f32.gmra.mrb[0].mxu0 %v6993
        %v7061 = vpop.f32.mrb[0].mxu0
        %v7062 = vadd.f32 0.0, %v7061
        %v7063 = vpop.f32.mrb[0].mxu0
        %7064 = vdwg.mxu0
        %v7065 = vld [vmem:[%s49] sm:$0x1]
        %v7067 = vlaneseq
        %v7068 = vshrl.u32 %v7067, 7
        %v7069 = vsub.s32 0, %v7068
        %v7070 = vrot.slane %v7065, %v7069
        %v7072 = vmul.f32 %v7062, %v7070
        %v7073 = vld [vmem:[%s51] sm:$0x1]
        %v7075 = vlaneseq
        %v7076 = vshrl.u32 %v7075, 7
        %v7077 = vsub.s32 0, %v7076
        %v7078 = vrot.slane %v7073, %v7077
        %v7080 = vadd.f32 %v7072, %v7078
        %vm7081 = vcmp.ge.f32.partialorder %v7080, 0.0
        %v7082 = vmul.f32 %v7080, 0.2
        %v7083 = vsel %vm7081, %v7080, %v7082
        %v7084 = vld [vmem:[%s53] sm:$0xff]
        %v7085 = vld [vmem:[%s53 + $0x8] sm:$0xff]
        %v7086 = vld [vmem:[%s53 + $0x10] sm:$0xff]
        %v7087 = vld [vmem:[%s53 + $0x18] sm:$0xff]
        %v7088 = vld [vmem:[%s55] sm:$0x1]
        %v7090 = vlaneseq
        %v7091 = vshrl.u32 %v7090, 7
        %v7092 = vsub.s32 0, %v7091
        %v7093 = vrot.slane %v7088, %v7092
        %v7096 = vsel %vm2795, %v7083, 0
        %7098 = vmatprep.subr.mxu0 0.0
        %7099 = vmatpush1.msra.mxu0 %v7084
        %7100 = vmatprep.subr.mxu0 0.0
        %7101 = vmatpush1.msra.mxu0 %v7085
        %7102 = vmatprep.subr.mxu0 0.0
        %7103 = vmatpush1.msra.mxu0 %v7086
        %7104 = vmatprep.subr.mxu0 0.0
        %7105 = vmatpush1.msra.mxu0 %v7087
        %7106 = vmatprep.subr.mxu0 0.0
        %7107 = vmatpush1.msra.mxu0 0.0
        %7108 = vmatprep.subr.mxu0 0.0
        %7109 = vmatpush1.msra.mxu0 0.0
        %7110 = vmatprep.subr.mxu0 0.0
        %7111 = vmatpush1.msra.mxu0 0.0
        %7112 = vmatprep.subr.mxu0 0.0
        %7113 = vmatpush1.msra.mxu0 0.0
        %7114 = vmatprep.subr.mxu0 0.0
        %7115 = vmatpush1.msra.mxu0 0.0
        %7116 = vmatprep.subr.mxu0 0.0
        %7117 = vmatpush1.msra.mxu0 0.0
        %7118 = vmatprep.subr.mxu0 0.0
        %7119 = vmatpush1.msra.mxu0 0.0
        %7120 = vmatprep.subr.mxu0 0.0
        %7121 = vmatpush1.msra.mxu0 0.0
        %7122 = vmatprep.subr.mxu0 0.0
        %7123 = vmatpush1.msra.mxu0 0.0
        %7124 = vmatprep.subr.mxu0 0.0
        %7125 = vmatpush1.msra.mxu0 0.0
        %7126 = vmatprep.subr.mxu0 0.0
        %7127 = vmatpush1.msra.mxu0 0.0
        %7128 = vmatprep.subr.mxu0 0.0
        %7129 = vmatpush1.msra.mxu0 0.0
        %7130 = vmatprep.subr.mxu0 0.0
        %7131 = vmatpush1.msra.mxu0 0.0
        %7132 = vmatprep.subr.mxu0 0.0
        %7133 = vmatpush1.msra.mxu0 0.0
        %7134 = vmatprep.subr.mxu0 0.0
        %7135 = vmatpush1.msra.mxu0 0.0
        %7136 = vmatprep.subr.mxu0 0.0
        %7137 = vmatpush1.msra.mxu0 0.0
        %7138 = vmatprep.subr.mxu0 0.0
        %7139 = vmatpush1.msra.mxu0 0.0
        %7140 = vmatprep.subr.mxu0 0.0
        %7141 = vmatpush1.msra.mxu0 0.0
        %7142 = vmatprep.subr.mxu0 0.0
        %7143 = vmatpush1.msra.mxu0 0.0
        %7144 = vmatprep.subr.mxu0 0.0
        %7145 = vmatpush1.msra.mxu0 0.0
        %7146 = vmatprep.subr.mxu0 0.0
        %7147 = vmatpush1.msra.mxu0 0.0
        %7148 = vmatprep.subr.mxu0 0.0
        %7149 = vmatpush1.msra.mxu0 0.0
        %7150 = vmatprep.subr.mxu0 0.0
        %7151 = vmatpush1.msra.mxu0 0.0
        %7152 = vmatprep.subr.mxu0 0.0
        %7153 = vmatpush1.msra.mxu0 0.0
        %7154 = vmatprep.subr.mxu0 0.0
        %7155 = vmatpush1.msra.mxu0 0.0
        %7156 = vmatprep.subr.mxu0 0.0
        %7157 = vmatpush1.msra.mxu0 0.0
        %7158 = vmatprep.subr.mxu0 0.0
        %7159 = vmatpush1.msra.mxu0 0.0
        %7160 = vmatprep.subr.mxu0 0.0
        %7161 = vmatpush1.msra.mxu0 0.0
        %7162 = vmatprep.mubr.f32.mxu0 0.0
        %7163 = vmatmul.mubr.f32.gmra.mrb[0].mxu0 %v7096
        %v7164 = vpop.f32.mrb[0].mxu0
        %v7165 = vadd.f32 %v7093, %v7164
        %v7166 = vpop.f32.mrb[0].mxu0
        %7167 = vdwg.mxu0
        %v7168 = vld [vmem:[%s57] sm:$0x1]
        %v7170 = vlaneseq
        %v7171 = vshrl.u32 %v7170, 7
        %v7172 = vsub.s32 0, %v7171
        %v7173 = vrot.slane %v7168, %v7172
        %v7175 = vmul.f32 %v7165, %v7173
        %v7176 = vld [vmem:[%s59] sm:$0x1]
        %v7178 = vlaneseq
        %v7179 = vshrl.u32 %v7178, 7
        %v7180 = vsub.s32 0, %v7179
        %v7181 = vrot.slane %v7176, %v7180
        %v7183 = vadd.f32 %v7175, %v7181
        %vm7184 = vcmp.ge.f32.partialorder %v7183, 0.0
        %v7185 = vmul.f32 %v7183, 0.2
        %v7186 = vsel %vm7184, %v7183, %v7185
        %vm7187 = vcmask 125952
        %v7188 = vsel %vm7187, %v7186, 0.0
        %v7189 = vrot.slane %v7188, 4
        %v7190 = vadd.f32 %v7188, %v7189
        %v7191 = vrot.slane %v7190, 2
        %v7192 = vadd.f32 %v7190, %v7191
        %v7193 = vrot.slane %v7192, 1
        %v7194 = vadd.f32 %v7192, %v7193
        %v7195 = vrcp.pop 4.0
        %v7196 = vmul.f32 %v7194, %v7195
        %v7197 = vld [vmem:[%s61] sm:$0xff]
        %v7198 = vld [vmem:[%s61 + $0x8] sm:$0xff]
        %v7200 = vsel %vm1297, %v7196, 0
        %7202 = vmatprep.subr.mxu0 0.0
        %7203 = vmatpush1.msra.mxu0 %v7197
        %7204 = vmatprep.subr.mxu0 0.0
        %7205 = vmatpush1.msra.mxu0 %v7198
        %7206 = vmatprep.subr.mxu0 0.0
        %7207 = vmatpush1.msra.mxu0 0.0
        %7208 = vmatprep.subr.mxu0 0.0
        %7209 = vmatpush1.msra.mxu0 0.0
        %7210 = vmatprep.subr.mxu0 0.0
        %7211 = vmatpush1.msra.mxu0 0.0
        %7212 = vmatprep.subr.mxu0 0.0
        %7213 = vmatpush1.msra.mxu0 0.0
        %7214 = vmatprep.subr.mxu0 0.0
        %7215 = vmatpush1.msra.mxu0 0.0
        %7216 = vmatprep.subr.mxu0 0.0
        %7217 = vmatpush1.msra.mxu0 0.0
        %7218 = vmatprep.subr.mxu0 0.0
        %7219 = vmatpush1.msra.mxu0 0.0
        %7220 = vmatprep.subr.mxu0 0.0
        %7221 = vmatpush1.msra.mxu0 0.0
        %7222 = vmatprep.subr.mxu0 0.0
        %7223 = vmatpush1.msra.mxu0 0.0
        %7224 = vmatprep.subr.mxu0 0.0
        %7225 = vmatpush1.msra.mxu0 0.0
        %7226 = vmatprep.subr.mxu0 0.0
        %7227 = vmatpush1.msra.mxu0 0.0
        %7228 = vmatprep.subr.mxu0 0.0
        %7229 = vmatpush1.msra.mxu0 0.0
        %7230 = vmatprep.subr.mxu0 0.0
        %7231 = vmatpush1.msra.mxu0 0.0
        %7232 = vmatprep.subr.mxu0 0.0
        %7233 = vmatpush1.msra.mxu0 0.0
        %7234 = vmatprep.subr.mxu0 0.0
        %7235 = vmatpush1.msra.mxu0 0.0
        %7236 = vmatprep.subr.mxu0 0.0
        %7237 = vmatpush1.msra.mxu0 0.0
        %7238 = vmatprep.subr.mxu0 0.0
        %7239 = vmatpush1.msra.mxu0 0.0
        %7240 = vmatprep.subr.mxu0 0.0
        %7241 = vmatpush1.msra.mxu0 0.0
        %7242 = vmatprep.subr.mxu0 0.0
        %7243 = vmatpush1.msra.mxu0 0.0
        %7244 = vmatprep.subr.mxu0 0.0
        %7245 = vmatpush1.msra.mxu0 0.0
        %7246 = vmatprep.subr.mxu0 0.0
        %7247 = vmatpush1.msra.mxu0 0.0
        %7248 = vmatprep.subr.mxu0 0.0
        %7249 = vmatpush1.msra.mxu0 0.0
        %7250 = vmatprep.subr.mxu0 0.0
        %7251 = vmatpush1.msra.mxu0 0.0
        %7252 = vmatprep.subr.mxu0 0.0
        %7253 = vmatpush1.msra.mxu0 0.0
        %7254 = vmatprep.subr.mxu0 0.0
        %7255 = vmatpush1.msra.mxu0 0.0
        %7256 = vmatprep.subr.mxu0 0.0
        %7257 = vmatpush1.msra.mxu0 0.0
        %7258 = vmatprep.subr.mxu0 0.0
        %7259 = vmatpush1.msra.mxu0 0.0
        %7260 = vmatprep.subr.mxu0 0.0
        %7261 = vmatpush1.msra.mxu0 0.0
        %7262 = vmatprep.subr.mxu0 0.0
        %7263 = vmatpush1.msra.mxu0 0.0
        %7264 = vmatprep.subr.mxu0 0.0
        %7265 = vmatpush1.msra.mxu0 0.0
        %7266 = vmatprep.mubr.f32.mxu0 0.0
        %7267 = vmatmul.mubr.f32.gmra.mrb[0].mxu0 %v7200
        %v7268 = vpop.f32.mrb[0].mxu0
        %v7269 = vadd.f32 0.0, %v7268
        %v7270 = vpop.f32.mrb[0].mxu0
        %7271 = vdwg.mxu0
        %v7272 = vmax.f32 %v7269, 0.0
        %v7273 = vld [vmem:[%s63] sm:$0x1]
        %vm7274 = vcmask 7168
        %v7276 = vsel %vm7274, %v7272, 0
        %vm7278 = vcmask 1040384
        %v7280 = vsel %vm7278, %v7273, 0
        %7282 = vmatprep.subr.mxu0 0.0
        %7283 = vmatpush1.msra.mxu0 %v7280
        %7284 = vmatprep.subr.mxu0 0.0
        %7285 = vmatpush1.msra.mxu0 0.0
        %7286 = vmatprep.subr.mxu0 0.0
        %7287 = vmatpush1.msra.mxu0 0.0
        %7288 = vmatprep.subr.mxu0 0.0
        %7289 = vmatpush1.msra.mxu0 0.0
        %7290 = vmatprep.subr.mxu0 0.0
        %7291 = vmatpush1.msra.mxu0 0.0
        %7292 = vmatprep.subr.mxu0 0.0
        %7293 = vmatpush1.msra.mxu0 0.0
        %7294 = vmatprep.subr.mxu0 0.0
        %7295 = vmatpush1.msra.mxu0 0.0
        %7296 = vmatprep.subr.mxu0 0.0
        %7297 = vmatpush1.msra.mxu0 0.0
        %7298 = vmatprep.subr.mxu0 0.0
        %7299 = vmatpush1.msra.mxu0 0.0
        %7300 = vmatprep.subr.mxu0 0.0
        %7301 = vmatpush1.msra.mxu0 0.0
        %7302 = vmatprep.subr.mxu0 0.0
        %7303 = vmatpush1.msra.mxu0 0.0
        %7304 = vmatprep.subr.mxu0 0.0
        %7305 = vmatpush1.msra.mxu0 0.0
        %7306 = vmatprep.subr.mxu0 0.0
        %7307 = vmatpush1.msra.mxu0 0.0
        %7308 = vmatprep.subr.mxu0 0.0
        %7309 = vmatpush1.msra.mxu0 0.0
        %7310 = vmatprep.subr.mxu0 0.0
        %7311 = vmatpush1.msra.mxu0 0.0
        %7312 = vmatprep.subr.mxu0 0.0
        %7313 = vmatpush1.msra.mxu0 0.0
        %7314 = vmatprep.subr.mxu0 0.0
        %7315 = vmatpush1.msra.mxu0 0.0
        %7316 = vmatprep.subr.mxu0 0.0
        %7317 = vmatpush1.msra.mxu0 0.0
        %7318 = vmatprep.subr.mxu0 0.0
        %7319 = vmatpush1.msra.mxu0 0.0
        %7320 = vmatprep.subr.mxu0 0.0
        %7321 = vmatpush1.msra.mxu0 0.0
        %7322 = vmatprep.subr.mxu0 0.0
        %7323 = vmatpush1.msra.mxu0 0.0
        %7324 = vmatprep.subr.mxu0 0.0
        %7325 = vmatpush1.msra.mxu0 0.0
        %7326 = vmatprep.subr.mxu0 0.0
        %7327 = vmatpush1.msra.mxu0 0.0
        %7328 = vmatprep.subr.mxu0 0.0
        %7329 = vmatpush1.msra.mxu0 0.0
        %7330 = vmatprep.subr.mxu0 0.0
        %7331 = vmatpush1.msra.mxu0 0.0
        %7332 = vmatprep.subr.mxu0 0.0
        %7333 = vmatpush1.msra.mxu0 0.0
        %7334 = vmatprep.subr.mxu0 0.0
        %7335 = vmatpush1.msra.mxu0 0.0
        %7336 = vmatprep.subr.mxu0 0.0
        %7337 = vmatpush1.msra.mxu0 0.0
        %7338 = vmatprep.subr.mxu0 0.0
        %7339 = vmatpush1.msra.mxu0 0.0
        %7340 = vmatprep.subr.mxu0 0.0
        %7341 = vmatpush1.msra.mxu0 0.0
        %7342 = vmatprep.subr.mxu0 0.0
        %7343 = vmatpush1.msra.mxu0 0.0
        %7344 = vmatprep.subr.mxu0 0.0
        %7345 = vmatpush1.msra.mxu0 0.0
        %7346 = vmatprep.mubr.f32.mxu0 0.0
        %7347 = vmatmul.mubr.f32.gmra.mrb[0].mxu0 %v7276
        %v7348 = vpop.f32.mrb[0].mxu0
        %v7349 = vadd.f32 0.0, %v7348
        %v7350 = vpop.f32.mrb[0].mxu0
        %7351 = vdwg.mxu0
        %v7352 = vxor.u32 %v7349, 2147483648
        %v7353 = vmul.f32 %v7352, 1.442695
        %v7354 = vpow.pop %v7353
        %v7355 = vadd.f32 %v7354, 1.0
        %v7356 = vrcp.pop %v7355
        %v7357 = vmul.f32 1.0, %v7356
        %v7358 = vlaneseq
        %v7359 = vshrl.u32 %v7358, 7
        %v7360 = vsub.s32 0, %v7359
        %v7361 = vrot.slane %v7357, %v7360
        %v7362 = vmul.f32 %v7186, %v7361
        %v7363 = vld [vmem:[%s5] sm:$0xff]
        %v7364 = vld [vmem:[%s5 + $0x8] sm:$0xff]
        %v7365 = vld [vmem:[%s5 + $0x10] sm:$0xff]
        %v7366 = vld [vmem:[%s5 + $0x18] sm:$0xff]
        %v7367 = vld [vmem:[%s5 + $0x20] sm:$0xff]
        %v7368 = vld [vmem:[%s5 + $0x28] sm:$0xff]
        %v7369 = vld [vmem:[%s5 + $0x30] sm:$0xff]
        %v7370 = vld [vmem:[%s5 + $0x38] sm:$0xff]
        %v7371 = vld [vmem:[%s5 + $0x40] sm:$0xff]
        %v7372 = vld [vmem:[%s5 + $0x48] sm:$0xff]
        %v7373 = vld [vmem:[%s5 + $0x50] sm:$0xff]
        %v7374 = vld [vmem:[%s5 + $0x58] sm:$0xff]
        %v7375 = vld [vmem:[%s5 + $0x60] sm:$0xff]
        %v7376 = vld [vmem:[%s5 + $0x68] sm:$0xff]
        %v7377 = vld [vmem:[%s5 + $0x70] sm:$0xff]
        %v7378 = vld [vmem:[%s5 + $0x78] sm:$0xff]
        %v7379 = vld [vmem:[%s5 + $0x80] sm:$0xff]
        %v7380 = vld [vmem:[%s5 + $0x88] sm:$0xff]
        %v7381 = vld [vmem:[%s5 + $0x90] sm:$0xff]
        %v7382 = vld [vmem:[%s5 + $0x98] sm:$0xff]
        %v7383 = vld [vmem:[%s5 + $0xa0] sm:$0xff]
        %v7384 = vld [vmem:[%s5 + $0xa8] sm:$0xff]
        %v7385 = vld [vmem:[%s5 + $0xb0] sm:$0xff]
        %v7386 = vld [vmem:[%s5 + $0xb8] sm:$0xff]
        %v7387 = vld [vmem:[%s5 + $0xc0] sm:$0xff]
        %v7388 = vld [vmem:[%s5 + $0xc8] sm:$0xff]
        %v7389 = vld [vmem:[%s5 + $0xd0] sm:$0xff]
        %v7390 = vld [vmem:[%s5 + $0xd8] sm:$0xff]
        %v7391 = vld [vmem:[%s5 + $0xe0] sm:$0xff]
        %v7392 = vld [vmem:[%s5 + $0xe8] sm:$0xff]
        %v7393 = vld [vmem:[%s5 + $0xf0] sm:$0xff]
        %v7394 = vld [vmem:[%s5 + $0xf8] sm:$0xff]
        %v7396 = vsel %vm6246, %v7363, 0
        %v7399 = vsel %vm6246, %v7364, 0
        %v7402 = vsel %vm6246, %v7365, 0
        %v7405 = vsel %vm6246, %v7366, 0
        %v7408 = vsel %vm6246, %v7367, 0
        %v7411 = vsel %vm6246, %v7368, 0
        %v7414 = vsel %vm6246, %v7369, 0
        %v7417 = vsel %vm6246, %v7370, 0
        %v7420 = vsel %vm6246, %v7371, 0
        %v7423 = vsel %vm6246, %v7372, 0
        %v7426 = vsel %vm6246, %v7373, 0
        %v7429 = vsel %vm6246, %v7374, 0
        %v7432 = vsel %vm6246, %v7375, 0
        %v7435 = vsel %vm6246, %v7376, 0
        %v7438 = vsel %vm6246, %v7377, 0
        %v7441 = vsel %vm6246, %v7378, 0
        %v7444 = vsel %vm6246, %v7379, 0
        %v7447 = vsel %vm6246, %v7380, 0
        %v7450 = vsel %vm6246, %v7381, 0
        %v7453 = vsel %vm6246, %v7382, 0
        %v7456 = vsel %vm6246, %v7383, 0
        %v7459 = vsel %vm6246, %v7384, 0
        %v7462 = vsel %vm6246, %v7385, 0
        %v7465 = vsel %vm6246, %v7386, 0
        %v7468 = vsel %vm6246, %v7387, 0
        %v7471 = vsel %vm6246, %v7388, 0
        %v7474 = vsel %vm6246, %v7389, 0
        %v7477 = vsel %vm6246, %v7390, 0
        %v7480 = vsel %vm6246, %v7391, 0
        %v7483 = vsel %vm6246, %v7392, 0
        %v7486 = vsel %vm6246, %v7393, 0
        %v7489 = vsel %vm6246, %v7394, 0
        %v7492 = vsel %vm6250, %v7362, 0
        %7494 = vmatprep.subr.mxu0 0.0
        %7495 = vmatpush1.msra.mxu0 %v7492
        %7496 = vmatprep.subr.mxu0 0.0
        %7497 = vmatpush1.msra.mxu0 0.0
        %7498 = vmatprep.subr.mxu0 0.0
        %7499 = vmatpush1.msra.mxu0 0.0
        %7500 = vmatprep.subr.mxu0 0.0
        %7501 = vmatpush1.msra.mxu0 0.0
        %7502 = vmatprep.subr.mxu0 0.0
        %7503 = vmatpush1.msra.mxu0 0.0
        %7504 = vmatprep.subr.mxu0 0.0
        %7505 = vmatpush1.msra.mxu0 0.0
        %7506 = vmatprep.subr.mxu0 0.0
        %7507 = vmatpush1.msra.mxu0 0.0
        %7508 = vmatprep.subr.mxu0 0.0
        %7509 = vmatpush1.msra.mxu0 0.0
        %7510 = vmatprep.subr.mxu0 0.0
        %7511 = vmatpush1.msra.mxu0 0.0
        %7512 = vmatprep.subr.mxu0 0.0
        %7513 = vmatpush1.msra.mxu0 0.0
        %7514 = vmatprep.subr.mxu0 0.0
        %7515 = vmatpush1.msra.mxu0 0.0
        %7516 = vmatprep.subr.mxu0 0.0
        %7517 = vmatpush1.msra.mxu0 0.0
        %7518 = vmatprep.subr.mxu0 0.0
        %7519 = vmatpush1.msra.mxu0 0.0
        %7520 = vmatprep.subr.mxu0 0.0
        %7521 = vmatpush1.msra.mxu0 0.0
        %7522 = vmatprep.subr.mxu0 0.0
        %7523 = vmatpush1.msra.mxu0 0.0
        %7524 = vmatprep.subr.mxu0 0.0
        %7525 = vmatpush1.msra.mxu0 0.0
        %7526 = vmatprep.subr.mxu0 0.0
        %7527 = vmatpush1.msra.mxu0 0.0
        %7528 = vmatprep.subr.mxu0 0.0
        %7529 = vmatpush1.msra.mxu0 0.0
        %7530 = vmatprep.subr.mxu0 0.0
        %7531 = vmatpush1.msra.mxu0 0.0
        %7532 = vmatprep.subr.mxu0 0.0
        %7533 = vmatpush1.msra.mxu0 0.0
        %7534 = vmatprep.subr.mxu0 0.0
        %7535 = vmatpush1.msra.mxu0 0.0
        %7536 = vmatprep.subr.mxu0 0.0
        %7537 = vmatpush1.msra.mxu0 0.0
        %7538 = vmatprep.subr.mxu0 0.0
        %7539 = vmatpush1.msra.mxu0 0.0
        %7540 = vmatprep.subr.mxu0 0.0
        %7541 = vmatpush1.msra.mxu0 0.0
        %7542 = vmatprep.subr.mxu0 0.0
        %7543 = vmatpush1.msra.mxu0 0.0
        %7544 = vmatprep.subr.mxu0 0.0
        %7545 = vmatpush1.msra.mxu0 0.0
        %7546 = vmatprep.subr.mxu0 0.0
        %7547 = vmatpush1.msra.mxu0 0.0
        %7548 = vmatprep.subr.mxu0 0.0
        %7549 = vmatpush1.msra.mxu0 0.0
        %7550 = vmatprep.subr.mxu0 0.0
        %7551 = vmatpush1.msra.mxu0 0.0
        %7552 = vmatprep.subr.mxu0 0.0
        %7553 = vmatpush1.msra.mxu0 0.0
        %7554 = vmatprep.subr.mxu0 0.0
        %7555 = vmatpush1.msra.mxu0 0.0
        %7556 = vmatprep.subr.mxu0 0.0
        %7557 = vmatpush1.msra.mxu0 0.0
        %7558 = vmatprep.mubr.f32.mxu0 0.0
        %7559 = vmatmul.mubr.f32.gmra.mrb[0].mxu0 %v7396
        %v7560 = vpop.f32.mrb[0].mxu0
        %v7561 = vadd.f32 0.0, %v7560
        %v7562 = vpop.f32.mrb[0].mxu0
        %7563 = vmatprep.mubr.f32.mxu0 0.0
        %7564 = vmatmul.mubr.f32.gmra.mrb[0].mxu0 %v7399
        %v7565 = vpop.f32.mrb[0].mxu0
        %v7566 = vadd.f32 0.0, %v7565
        %v7567 = vpop.f32.mrb[0].mxu0
        %7568 = vmatprep.mubr.f32.mxu0 0.0
        %7569 = vmatmul.mubr.f32.gmra.mrb[0].mxu0 %v7402
        %v7570 = vpop.f32.mrb[0].mxu0
        %v7571 = vadd.f32 0.0, %v7570
        %v7572 = vpop.f32.mrb[0].mxu0
        %7573 = vmatprep.mubr.f32.mxu0 0.0
        %7574 = vmatmul.mubr.f32.gmra.mrb[0].mxu0 %v7405
        %v7575 = vpop.f32.mrb[0].mxu0
        %v7576 = vadd.f32 0.0, %v7575
        %v7577 = vpop.f32.mrb[0].mxu0
        %7578 = vmatprep.mubr.f32.mxu0 0.0
        %7579 = vmatmul.mubr.f32.gmra.mrb[0].mxu0 %v7408
        %v7580 = vpop.f32.mrb[0].mxu0
        %v7581 = vadd.f32 0.0, %v7580
        %v7582 = vpop.f32.mrb[0].mxu0
        %7583 = vmatprep.mubr.f32.mxu0 0.0
        %7584 = vmatmul.mubr.f32.gmra.mrb[0].mxu0 %v7411
        %v7585 = vpop.f32.mrb[0].mxu0
        %v7586 = vadd.f32 0.0, %v7585
        %v7587 = vpop.f32.mrb[0].mxu0
        %7588 = vmatprep.mubr.f32.mxu0 0.0
        %7589 = vmatmul.mubr.f32.gmra.mrb[0].mxu0 %v7414
        %v7590 = vpop.f32.mrb[0].mxu0
        %v7591 = vadd.f32 0.0, %v7590
        %v7592 = vpop.f32.mrb[0].mxu0
        %7593 = vmatprep.mubr.f32.mxu0 0.0
        %7594 = vmatmul.mubr.f32.gmra.mrb[0].mxu0 %v7417
        %v7595 = vpop.f32.mrb[0].mxu0
        %v7596 = vadd.f32 0.0, %v7595
        %v7597 = vpop.f32.mrb[0].mxu0
        %7598 = vmatprep.mubr.f32.mxu0 0.0
        %7599 = vmatmul.mubr.f32.gmra.mrb[0].mxu0 %v7420
        %v7600 = vpop.f32.mrb[0].mxu0
        %v7601 = vadd.f32 0.0, %v7600
        %v7602 = vpop.f32.mrb[0].mxu0
        %7603 = vmatprep.mubr.f32.mxu0 0.0
        %7604 = vmatmul.mubr.f32.gmra.mrb[0].mxu0 %v7423
        %v7605 = vpop.f32.mrb[0].mxu0
        %v7606 = vadd.f32 0.0, %v7605
        %v7607 = vpop.f32.mrb[0].mxu0
        %7608 = vmatprep.mubr.f32.mxu0 0.0
        %7609 = vmatmul.mubr.f32.gmra.mrb[0].mxu0 %v7426
        %v7610 = vpop.f32.mrb[0].mxu0
        %v7611 = vadd.f32 0.0, %v7610
        %v7612 = vpop.f32.mrb[0].mxu0
        %7613 = vmatprep.mubr.f32.mxu0 0.0
        %7614 = vmatmul.mubr.f32.gmra.mrb[0].mxu0 %v7429
        %v7615 = vpop.f32.mrb[0].mxu0
        %v7616 = vadd.f32 0.0, %v7615
        %v7617 = vpop.f32.mrb[0].mxu0
        %7618 = vmatprep.mubr.f32.mxu0 0.0
        %7619 = vmatmul.mubr.f32.gmra.mrb[0].mxu0 %v7432
        %v7620 = vpop.f32.mrb[0].mxu0
        %v7621 = vadd.f32 0.0, %v7620
        %v7622 = vpop.f32.mrb[0].mxu0
        %7623 = vmatprep.mubr.f32.mxu0 0.0
        %7624 = vmatmul.mubr.f32.gmra.mrb[0].mxu0 %v7435
        %v7625 = vpop.f32.mrb[0].mxu0
        %v7626 = vadd.f32 0.0, %v7625
        %v7627 = vpop.f32.mrb[0].mxu0
        %7628 = vmatprep.mubr.f32.mxu0 0.0
        %7629 = vmatmul.mubr.f32.gmra.mrb[0].mxu0 %v7438
        %v7630 = vpop.f32.mrb[0].mxu0
        %v7631 = vadd.f32 0.0, %v7630
        %v7632 = vpop.f32.mrb[0].mxu0
        %7633 = vmatprep.mubr.f32.mxu0 0.0
        %7634 = vmatmul.mubr.f32.gmra.mrb[0].mxu0 %v7441
        %v7635 = vpop.f32.mrb[0].mxu0
        %v7636 = vadd.f32 0.0, %v7635
        %v7637 = vpop.f32.mrb[0].mxu0
        %7638 = vmatprep.mubr.f32.mxu0 0.0
        %7639 = vmatmul.mubr.f32.gmra.mrb[0].mxu0 %v7444
        %v7640 = vpop.f32.mrb[0].mxu0
        %v7641 = vadd.f32 0.0, %v7640
        %v7642 = vpop.f32.mrb[0].mxu0
        %7643 = vmatprep.mubr.f32.mxu0 0.0
        %7644 = vmatmul.mubr.f32.gmra.mrb[0].mxu0 %v7447
        %v7645 = vpop.f32.mrb[0].mxu0
        %v7646 = vadd.f32 0.0, %v7645
        %v7647 = vpop.f32.mrb[0].mxu0
        %7648 = vmatprep.mubr.f32.mxu0 0.0
        %7649 = vmatmul.mubr.f32.gmra.mrb[0].mxu0 %v7450
        %v7650 = vpop.f32.mrb[0].mxu0
        %v7651 = vadd.f32 0.0, %v7650
        %v7652 = vpop.f32.mrb[0].mxu0
        %7653 = vmatprep.mubr.f32.mxu0 0.0
        %7654 = vmatmul.mubr.f32.gmra.mrb[0].mxu0 %v7453
        %v7655 = vpop.f32.mrb[0].mxu0
        %v7656 = vadd.f32 0.0, %v7655
        %v7657 = vpop.f32.mrb[0].mxu0
        %7658 = vmatprep.mubr.f32.mxu0 0.0
        %7659 = vmatmul.mubr.f32.gmra.mrb[0].mxu0 %v7456
        %v7660 = vpop.f32.mrb[0].mxu0
        %v7661 = vadd.f32 0.0, %v7660
        %v7662 = vpop.f32.mrb[0].mxu0
        %7663 = vmatprep.mubr.f32.mxu0 0.0
        %7664 = vmatmul.mubr.f32.gmra.mrb[0].mxu0 %v7459
        %v7665 = vpop.f32.mrb[0].mxu0
        %v7666 = vadd.f32 0.0, %v7665
        %v7667 = vpop.f32.mrb[0].mxu0
        %7668 = vmatprep.mubr.f32.mxu0 0.0
        %7669 = vmatmul.mubr.f32.gmra.mrb[0].mxu0 %v7462
        %v7670 = vpop.f32.mrb[0].mxu0
        %v7671 = vadd.f32 0.0, %v7670
        %v7672 = vpop.f32.mrb[0].mxu0
        %7673 = vmatprep.mubr.f32.mxu0 0.0
        %7674 = vmatmul.mubr.f32.gmra.mrb[0].mxu0 %v7465
        %v7675 = vpop.f32.mrb[0].mxu0
        %v7676 = vadd.f32 0.0, %v7675
        %v7677 = vpop.f32.mrb[0].mxu0
        %7678 = vmatprep.mubr.f32.mxu0 0.0
        %7679 = vmatmul.mubr.f32.gmra.mrb[0].mxu0 %v7468
        %v7680 = vpop.f32.mrb[0].mxu0
        %v7681 = vadd.f32 0.0, %v7680
        %v7682 = vpop.f32.mrb[0].mxu0
        %7683 = vmatprep.mubr.f32.mxu0 0.0
        %7684 = vmatmul.mubr.f32.gmra.mrb[0].mxu0 %v7471
        %v7685 = vpop.f32.mrb[0].mxu0
        %v7686 = vadd.f32 0.0, %v7685
        %v7687 = vpop.f32.mrb[0].mxu0
        %7688 = vmatprep.mubr.f32.mxu0 0.0
        %7689 = vmatmul.mubr.f32.gmra.mrb[0].mxu0 %v7474
        %v7690 = vpop.f32.mrb[0].mxu0
        %v7691 = vadd.f32 0.0, %v7690
        %v7692 = vpop.f32.mrb[0].mxu0
        %7693 = vmatprep.mubr.f32.mxu0 0.0
        %7694 = vmatmul.mubr.f32.gmra.mrb[0].mxu0 %v7477
        %v7695 = vpop.f32.mrb[0].mxu0
        %v7696 = vadd.f32 0.0, %v7695
        %v7697 = vpop.f32.mrb[0].mxu0
        %7698 = vmatprep.mubr.f32.mxu0 0.0
        %7699 = vmatmul.mubr.f32.gmra.mrb[0].mxu0 %v7480
        %v7700 = vpop.f32.mrb[0].mxu0
        %v7701 = vadd.f32 0.0, %v7700
        %v7702 = vpop.f32.mrb[0].mxu0
        %7703 = vmatprep.mubr.f32.mxu0 0.0
        %7704 = vmatmul.mubr.f32.gmra.mrb[0].mxu0 %v7483
        %v7705 = vpop.f32.mrb[0].mxu0
        %v7706 = vadd.f32 0.0, %v7705
        %v7707 = vpop.f32.mrb[0].mxu0
        %7708 = vmatprep.mubr.f32.mxu0 0.0
        %7709 = vmatmul.mubr.f32.gmra.mrb[0].mxu0 %v7486
        %v7710 = vpop.f32.mrb[0].mxu0
        %v7711 = vadd.f32 0.0, %v7710
        %v7712 = vpop.f32.mrb[0].mxu0
        %7713 = vmatprep.mubr.f32.mxu0 0.0
        %7714 = vmatmul.mubr.f32.gmra.mrb[0].mxu0 %v7489
        %v7715 = vpop.f32.mrb[0].mxu0
        %v7716 = vadd.f32 0.0, %v7715
        %v7717 = vpop.f32.mrb[0].mxu0
        %7718 = vdwg.mxu0
        %v7719 = vld [vmem:[%s65] sm:$0xff]
        %v7720 = vld [vmem:[%s65 + $0x8] sm:$0xff]
        %v7721 = vld [vmem:[%s65 + $0x10] sm:$0xff]
        %v7722 = vld [vmem:[%s65 + $0x18] sm:$0xff]
        %v7723 = vld [vmem:[%s67] sm:$0xff]
        %v7724 = vld [vmem:[%s67 + $0x8] sm:$0xff]
        %v7726 = vsel %vm1297, %v7561, 0
        %v7729 = vsel %vm1297, %v7566, 0
        %v7732 = vsel %vm1297, %v7571, 0
        %v7735 = vsel %vm1297, %v7576, 0
        %v7738 = vsel %vm1297, %v7581, 0
        %v7741 = vsel %vm1297, %v7586, 0
        %v7744 = vsel %vm1297, %v7591, 0
        %v7747 = vsel %vm1297, %v7596, 0
        %v7750 = vsel %vm1297, %v7601, 0
        %v7753 = vsel %vm1297, %v7606, 0
        %v7756 = vsel %vm1297, %v7611, 0
        %v7759 = vsel %vm1297, %v7616, 0
        %v7762 = vsel %vm1297, %v7621, 0
        %v7765 = vsel %vm1297, %v7626, 0
        %v7768 = vsel %vm1297, %v7631, 0
        %v7771 = vsel %vm1297, %v7636, 0
        %v7774 = vsel %vm1297, %v7641, 0
        %v7777 = vsel %vm1297, %v7646, 0
        %v7780 = vsel %vm1297, %v7651, 0
        %v7783 = vsel %vm1297, %v7656, 0
        %v7786 = vsel %vm1297, %v7661, 0
        %v7789 = vsel %vm1297, %v7666, 0
        %v7792 = vsel %vm1297, %v7671, 0
        %v7795 = vsel %vm1297, %v7676, 0
        %v7798 = vsel %vm1297, %v7681, 0
        %v7801 = vsel %vm1297, %v7686, 0
        %v7804 = vsel %vm1297, %v7691, 0
        %v7807 = vsel %vm1297, %v7696, 0
        %v7810 = vsel %vm1297, %v7701, 0
        %v7813 = vsel %vm1297, %v7706, 0
        %v7816 = vsel %vm1297, %v7711, 0
        %v7819 = vsel %vm1297, %v7716, 0
        %7821 = vmatprep.subr.mxu0 0.0
        %7822 = vmatpush1.msra.mxu0 %v7723
        %7823 = vmatprep.subr.mxu0 0.0
        %7824 = vmatpush1.msra.mxu0 %v7724
        %7825 = vmatprep.subr.mxu0 0.0
        %7826 = vmatpush1.msra.mxu0 0.0
        %7827 = vmatprep.subr.mxu0 0.0
        %7828 = vmatpush1.msra.mxu0 0.0
        %7829 = vmatprep.subr.mxu0 0.0
        %7830 = vmatpush1.msra.mxu0 0.0
        %7831 = vmatprep.subr.mxu0 0.0
        %7832 = vmatpush1.msra.mxu0 0.0
        %7833 = vmatprep.subr.mxu0 0.0
        %7834 = vmatpush1.msra.mxu0 0.0
        %7835 = vmatprep.subr.mxu0 0.0
        %7836 = vmatpush1.msra.mxu0 0.0
        %7837 = vmatprep.subr.mxu0 0.0
        %7838 = vmatpush1.msra.mxu0 0.0
        %7839 = vmatprep.subr.mxu0 0.0
        %7840 = vmatpush1.msra.mxu0 0.0
        %7841 = vmatprep.subr.mxu0 0.0
        %7842 = vmatpush1.msra.mxu0 0.0
        %7843 = vmatprep.subr.mxu0 0.0
        %7844 = vmatpush1.msra.mxu0 0.0
        %7845 = vmatprep.subr.mxu0 0.0
        %7846 = vmatpush1.msra.mxu0 0.0
        %7847 = vmatprep.subr.mxu0 0.0
        %7848 = vmatpush1.msra.mxu0 0.0
        %7849 = vmatprep.subr.mxu0 0.0
        %7850 = vmatpush1.msra.mxu0 0.0
        %7851 = vmatprep.subr.mxu0 0.0
        %7852 = vmatpush1.msra.mxu0 0.0
        %7853 = vmatprep.subr.mxu0 0.0
        %7854 = vmatpush1.msra.mxu0 0.0
        %7855 = vmatprep.subr.mxu0 0.0
        %7856 = vmatpush1.msra.mxu0 0.0
        %7857 = vmatprep.subr.mxu0 0.0
        %7858 = vmatpush1.msra.mxu0 0.0
        %7859 = vmatprep.subr.mxu0 0.0
        %7860 = vmatpush1.msra.mxu0 0.0
        %7861 = vmatprep.subr.mxu0 0.0
        %7862 = vmatpush1.msra.mxu0 0.0
        %7863 = vmatprep.subr.mxu0 0.0
        %7864 = vmatpush1.msra.mxu0 0.0
        %7865 = vmatprep.subr.mxu0 0.0
        %7866 = vmatpush1.msra.mxu0 0.0
        %7867 = vmatprep.subr.mxu0 0.0
        %7868 = vmatpush1.msra.mxu0 0.0
        %7869 = vmatprep.subr.mxu0 0.0
        %7870 = vmatpush1.msra.mxu0 0.0
        %7871 = vmatprep.subr.mxu0 0.0
        %7872 = vmatpush1.msra.mxu0 0.0
        %7873 = vmatprep.subr.mxu0 0.0
        %7874 = vmatpush1.msra.mxu0 0.0
        %7875 = vmatprep.subr.mxu0 0.0
        %7876 = vmatpush1.msra.mxu0 0.0
        %7877 = vmatprep.subr.mxu0 0.0
        %7878 = vmatpush1.msra.mxu0 0.0
        %7879 = vmatprep.subr.mxu0 0.0
        %7880 = vmatpush1.msra.mxu0 0.0
        %7881 = vmatprep.subr.mxu0 0.0
        %7882 = vmatpush1.msra.mxu0 0.0
        %7883 = vmatprep.subr.mxu0 0.0
        %7884 = vmatpush1.msra.mxu0 0.0
        %7885 = vmatprep.mubr.f32.mxu0 0.0
        %7886 = vmatmul.mubr.f32.gmra.mrb[0].mxu0 %v7726
        %v7887 = vpop.f32.mrb[0].mxu0
        %v7888 = vadd.f32 0.0, %v7887
        %v7889 = vpop.f32.mrb[0].mxu0
        %7890 = vmatprep.mubr.f32.mxu0 0.0
        %7891 = vmatmul.mubr.f32.gmra.mrb[0].mxu0 %v7729
        %v7892 = vpop.f32.mrb[0].mxu0
        %v7893 = vadd.f32 0.0, %v7892
        %v7894 = vpop.f32.mrb[0].mxu0
        %7895 = vmatprep.mubr.f32.mxu0 0.0
        %7896 = vmatmul.mubr.f32.gmra.mrb[0].mxu0 %v7732
        %v7897 = vpop.f32.mrb[0].mxu0
        %v7898 = vadd.f32 0.0, %v7897
        %v7899 = vpop.f32.mrb[0].mxu0
        %7900 = vmatprep.mubr.f32.mxu0 0.0
        %7901 = vmatmul.mubr.f32.gmra.mrb[0].mxu0 %v7735
        %v7902 = vpop.f32.mrb[0].mxu0
        %v7903 = vadd.f32 0.0, %v7902
        %v7904 = vpop.f32.mrb[0].mxu0
        %7905 = vmatprep.mubr.f32.mxu0 0.0
        %7906 = vmatmul.mubr.f32.gmra.mrb[0].mxu0 %v7738
        %v7907 = vpop.f32.mrb[0].mxu0
        %v7908 = vadd.f32 0.0, %v7907
        %v7909 = vpop.f32.mrb[0].mxu0
        %7910 = vmatprep.mubr.f32.mxu0 0.0
        %7911 = vmatmul.mubr.f32.gmra.mrb[0].mxu0 %v7741
        %v7912 = vpop.f32.mrb[0].mxu0
        %v7913 = vadd.f32 0.0, %v7912
        %v7914 = vpop.f32.mrb[0].mxu0
        %7915 = vmatprep.mubr.f32.mxu0 0.0
        %7916 = vmatmul.mubr.f32.gmra.mrb[0].mxu0 %v7744
        %v7917 = vpop.f32.mrb[0].mxu0
        %v7918 = vadd.f32 0.0, %v7917
        %v7919 = vpop.f32.mrb[0].mxu0
        %7920 = vmatprep.mubr.f32.mxu0 0.0
        %7921 = vmatmul.mubr.f32.gmra.mrb[0].mxu0 %v7747
        %v7922 = vpop.f32.mrb[0].mxu0
        %v7923 = vadd.f32 0.0, %v7922
        %v7924 = vpop.f32.mrb[0].mxu0
        %7925 = vmatprep.mubr.f32.mxu0 0.0
        %7926 = vmatmul.mubr.f32.gmra.mrb[0].mxu0 %v7750
        %v7927 = vpop.f32.mrb[0].mxu0
        %v7928 = vadd.f32 0.0, %v7927
        %v7929 = vpop.f32.mrb[0].mxu0
        %7930 = vmatprep.mubr.f32.mxu0 0.0
        %7931 = vmatmul.mubr.f32.gmra.mrb[0].mxu0 %v7753
        %v7932 = vpop.f32.mrb[0].mxu0
        %v7933 = vadd.f32 0.0, %v7932
        %v7934 = vpop.f32.mrb[0].mxu0
        %7935 = vmatprep.mubr.f32.mxu0 0.0
        %7936 = vmatmul.mubr.f32.gmra.mrb[0].mxu0 %v7756
        %v7937 = vpop.f32.mrb[0].mxu0
        %v7938 = vadd.f32 0.0, %v7937
        %v7939 = vpop.f32.mrb[0].mxu0
        %7940 = vmatprep.mubr.f32.mxu0 0.0
        %7941 = vmatmul.mubr.f32.gmra.mrb[0].mxu0 %v7759
        %v7942 = vpop.f32.mrb[0].mxu0
        %v7943 = vadd.f32 0.0, %v7942
        %v7944 = vpop.f32.mrb[0].mxu0
        %7945 = vmatprep.mubr.f32.mxu0 0.0
        %7946 = vmatmul.mubr.f32.gmra.mrb[0].mxu0 %v7762
        %v7947 = vpop.f32.mrb[0].mxu0
        %v7948 = vadd.f32 0.0, %v7947
        %v7949 = vpop.f32.mrb[0].mxu0
        %7950 = vmatprep.mubr.f32.mxu0 0.0
        %7951 = vmatmul.mubr.f32.gmra.mrb[0].mxu0 %v7765
        %v7952 = vpop.f32.mrb[0].mxu0
        %v7953 = vadd.f32 0.0, %v7952
        %v7954 = vpop.f32.mrb[0].mxu0
        %7955 = vmatprep.mubr.f32.mxu0 0.0
        %7956 = vmatmul.mubr.f32.gmra.mrb[0].mxu0 %v7768
        %v7957 = vpop.f32.mrb[0].mxu0
        %v7958 = vadd.f32 0.0, %v7957
        %v7959 = vpop.f32.mrb[0].mxu0
        %7960 = vmatprep.mubr.f32.mxu0 0.0
        %7961 = vmatmul.mubr.f32.gmra.mrb[0].mxu0 %v7771
        %v7962 = vpop.f32.mrb[0].mxu0
        %v7963 = vadd.f32 0.0, %v7962
        %v7964 = vpop.f32.mrb[0].mxu0
        %7965 = vmatprep.mubr.f32.mxu0 0.0
        %7966 = vmatmul.mubr.f32.gmra.mrb[0].mxu0 %v7774
        %v7967 = vpop.f32.mrb[0].mxu0
        %v7968 = vadd.f32 0.0, %v7967
        %v7969 = vpop.f32.mrb[0].mxu0
        %7970 = vmatprep.mubr.f32.mxu0 0.0
        %7971 = vmatmul.mubr.f32.gmra.mrb[0].mxu0 %v7777
        %v7972 = vpop.f32.mrb[0].mxu0
        %v7973 = vadd.f32 0.0, %v7972
        %v7974 = vpop.f32.mrb[0].mxu0
        %7975 = vmatprep.mubr.f32.mxu0 0.0
        %7976 = vmatmul.mubr.f32.gmra.mrb[0].mxu0 %v7780
        %v7977 = vpop.f32.mrb[0].mxu0
        %v7978 = vadd.f32 0.0, %v7977
        %v7979 = vpop.f32.mrb[0].mxu0
        %7980 = vmatprep.mubr.f32.mxu0 0.0
        %7981 = vmatmul.mubr.f32.gmra.mrb[0].mxu0 %v7783
        %v7982 = vpop.f32.mrb[0].mxu0
        %v7983 = vadd.f32 0.0, %v7982
        %v7984 = vpop.f32.mrb[0].mxu0
        %7985 = vmatprep.mubr.f32.mxu0 0.0
        %7986 = vmatmul.mubr.f32.gmra.mrb[0].mxu0 %v7786
        %v7987 = vpop.f32.mrb[0].mxu0
        %v7988 = vadd.f32 0.0, %v7987
        %v7989 = vpop.f32.mrb[0].mxu0
        %7990 = vmatprep.mubr.f32.mxu0 0.0
        %7991 = vmatmul.mubr.f32.gmra.mrb[0].mxu0 %v7789
        %v7992 = vpop.f32.mrb[0].mxu0
        %v7993 = vadd.f32 0.0, %v7992
        %v7994 = vpop.f32.mrb[0].mxu0
        %7995 = vmatprep.mubr.f32.mxu0 0.0
        %7996 = vmatmul.mubr.f32.gmra.mrb[0].mxu0 %v7792
        %v7997 = vpop.f32.mrb[0].mxu0
        %v7998 = vadd.f32 0.0, %v7997
        %v7999 = vpop.f32.mrb[0].mxu0
        %8000 = vmatprep.mubr.f32.mxu0 0.0
        %8001 = vmatmul.mubr.f32.gmra.mrb[0].mxu0 %v7795
        %v8002 = vpop.f32.mrb[0].mxu0
        %v8003 = vadd.f32 0.0, %v8002
        %v8004 = vpop.f32.mrb[0].mxu0
        %8005 = vmatprep.mubr.f32.mxu0 0.0
        %8006 = vmatmul.mubr.f32.gmra.mrb[0].mxu0 %v7798
        %v8007 = vpop.f32.mrb[0].mxu0
        %v8008 = vadd.f32 0.0, %v8007
        %v8009 = vpop.f32.mrb[0].mxu0
        %8010 = vmatprep.mubr.f32.mxu0 0.0
        %8011 = vmatmul.mubr.f32.gmra.mrb[0].mxu0 %v7801
        %v8012 = vpop.f32.mrb[0].mxu0
        %v8013 = vadd.f32 0.0, %v8012
        %v8014 = vpop.f32.mrb[0].mxu0
        %8015 = vmatprep.mubr.f32.mxu0 0.0
        %8016 = vmatmul.mubr.f32.gmra.mrb[0].mxu0 %v7804
        %v8017 = vpop.f32.mrb[0].mxu0
        %v8018 = vadd.f32 0.0, %v8017
        %v8019 = vpop.f32.mrb[0].mxu0
        %8020 = vmatprep.mubr.f32.mxu0 0.0
        %8021 = vmatmul.mubr.f32.gmra.mrb[0].mxu0 %v7807
        %v8022 = vpop.f32.mrb[0].mxu0
        %v8023 = vadd.f32 0.0, %v8022
        %v8024 = vpop.f32.mrb[0].mxu0
        %8025 = vmatprep.mubr.f32.mxu0 0.0
        %8026 = vmatmul.mubr.f32.gmra.mrb[0].mxu0 %v7810
        %v8027 = vpop.f32.mrb[0].mxu0
        %v8028 = vadd.f32 0.0, %v8027
        %v8029 = vpop.f32.mrb[0].mxu0
        %8030 = vmatprep.mubr.f32.mxu0 0.0
        %8031 = vmatmul.mubr.f32.gmra.mrb[0].mxu0 %v7813
        %v8032 = vpop.f32.mrb[0].mxu0
        %v8033 = vadd.f32 0.0, %v8032
        %v8034 = vpop.f32.mrb[0].mxu0
        %8035 = vmatprep.mubr.f32.mxu0 0.0
        %8036 = vmatmul.mubr.f32.gmra.mrb[0].mxu0 %v7816
        %v8037 = vpop.f32.mrb[0].mxu0
        %v8038 = vadd.f32 0.0, %v8037
        %v8039 = vpop.f32.mrb[0].mxu0
        %8040 = vmatprep.mubr.f32.mxu0 0.0
        %8041 = vmatmul.mubr.f32.gmra.mrb[0].mxu0 %v7819
        %v8042 = vpop.f32.mrb[0].mxu0
        %v8043 = vadd.f32 0.0, %v8042
        %v8044 = vpop.f32.mrb[0].mxu0
        %8045 = vdwg.mxu0
        %v8047 = vsel %vm2795, %v6037, 0
        %v8050 = vsel %vm2795, %v6038, 0
        %v8053 = vsel %vm2795, %v6039, 0
        %v8056 = vsel %vm2795, %v6040, 0
        %v8059 = vsel %vm2795, %v6041, 0
        %v8062 = vsel %vm2795, %v6042, 0
        %v8065 = vsel %vm2795, %v6043, 0
        %v8068 = vsel %vm2795, %v6044, 0
        %v8071 = vsel %vm2795, %v6045, 0
        %v8074 = vsel %vm2795, %v6046, 0
        %v8077 = vsel %vm2795, %v6047, 0
        %v8080 = vsel %vm2795, %v6048, 0
        %v8083 = vsel %vm2795, %v6049, 0
        %v8086 = vsel %vm2795, %v6050, 0
        %v8089 = vsel %vm2795, %v6051, 0
        %v8092 = vsel %vm2795, %v6052, 0
        %v8095 = vsel %vm2795, %v6053, 0
        %v8098 = vsel %vm2795, %v6054, 0
        %v8101 = vsel %vm2795, %v6055, 0
        %v8104 = vsel %vm2795, %v6056, 0
        %v8107 = vsel %vm2795, %v6057, 0
        %v8110 = vsel %vm2795, %v6058, 0
        %v8113 = vsel %vm2795, %v6059, 0
        %v8116 = vsel %vm2795, %v6060, 0
        %v8119 = vsel %vm2795, %v6061, 0
        %v8122 = vsel %vm2795, %v6062, 0
        %v8125 = vsel %vm2795, %v6063, 0
        %v8128 = vsel %vm2795, %v6064, 0
        %v8131 = vsel %vm2795, %v6065, 0
        %v8134 = vsel %vm2795, %v6066, 0
        %v8137 = vsel %vm2795, %v6067, 0
        %v8140 = vsel %vm2795, %v6068, 0
        %8142 = vmatprep.subr.mxu0 0.0
        %8143 = vmatpush1.msra.mxu0 %v7719
        %8144 = vmatprep.subr.mxu0 0.0
        %8145 = vmatpush1.msra.mxu0 %v7720
        %8146 = vmatprep.subr.mxu0 0.0
        %8147 = vmatpush1.msra.mxu0 %v7721
        %8148 = vmatprep.subr.mxu0 0.0
        %8149 = vmatpush1.msra.mxu0 %v7722
        %8150 = vmatprep.subr.mxu0 0.0
        %8151 = vmatpush1.msra.mxu0 0.0
        %8152 = vmatprep.subr.mxu0 0.0
        %8153 = vmatpush1.msra.mxu0 0.0
        %8154 = vmatprep.subr.mxu0 0.0
        %8155 = vmatpush1.msra.mxu0 0.0
        %8156 = vmatprep.subr.mxu0 0.0
        %8157 = vmatpush1.msra.mxu0 0.0
        %8158 = vmatprep.subr.mxu0 0.0
        %8159 = vmatpush1.msra.mxu0 0.0
        %8160 = vmatprep.subr.mxu0 0.0
        %8161 = vmatpush1.msra.mxu0 0.0
        %8162 = vmatprep.subr.mxu0 0.0
        %8163 = vmatpush1.msra.mxu0 0.0
        %8164 = vmatprep.subr.mxu0 0.0
        %8165 = vmatpush1.msra.mxu0 0.0
        %8166 = vmatprep.subr.mxu0 0.0
        %8167 = vmatpush1.msra.mxu0 0.0
        %8168 = vmatprep.subr.mxu0 0.0
        %8169 = vmatpush1.msra.mxu0 0.0
        %8170 = vmatprep.subr.mxu0 0.0
        %8171 = vmatpush1.msra.mxu0 0.0
        %8172 = vmatprep.subr.mxu0 0.0
        %8173 = vmatpush1.msra.mxu0 0.0
        %8174 = vmatprep.subr.mxu0 0.0
        %8175 = vmatpush1.msra.mxu0 0.0
        %8176 = vmatprep.subr.mxu0 0.0
        %8177 = vmatpush1.msra.mxu0 0.0
        %8178 = vmatprep.subr.mxu0 0.0
        %8179 = vmatpush1.msra.mxu0 0.0
        %8180 = vmatprep.subr.mxu0 0.0
        %8181 = vmatpush1.msra.mxu0 0.0
        %8182 = vmatprep.subr.mxu0 0.0
        %8183 = vmatpush1.msra.mxu0 0.0
        %8184 = vmatprep.subr.mxu0 0.0
        %8185 = vmatpush1.msra.mxu0 0.0
        %8186 = vmatprep.subr.mxu0 0.0
        %8187 = vmatpush1.msra.mxu0 0.0
        %8188 = vmatprep.subr.mxu0 0.0
        %8189 = vmatpush1.msra.mxu0 0.0
        %8190 = vmatprep.subr.mxu0 0.0
        %8191 = vmatpush1.msra.mxu0 0.0
        %8192 = vmatprep.subr.mxu0 0.0
        %8193 = vmatpush1.msra.mxu0 0.0
        %8194 = vmatprep.subr.mxu0 0.0
        %8195 = vmatpush1.msra.mxu0 0.0
        %8196 = vmatprep.subr.mxu0 0.0
        %8197 = vmatpush1.msra.mxu0 0.0
        %8198 = vmatprep.subr.mxu0 0.0
        %8199 = vmatpush1.msra.mxu0 0.0
        %8200 = vmatprep.subr.mxu0 0.0
        %8201 = vmatpush1.msra.mxu0 0.0
        %8202 = vmatprep.subr.mxu0 0.0
        %8203 = vmatpush1.msra.mxu0 0.0
        %8204 = vmatprep.subr.mxu0 0.0
        %8205 = vmatpush1.msra.mxu0 0.0
        %8206 = vmatprep.mubr.f32.mxu0 0.0
        %8207 = vmatmul.mubr.f32.gmra.mrb[0].mxu0 %v8047
        %v8208 = vpop.f32.mrb[0].mxu0
        %v8209 = vadd.f32 %v7888, %v8208
        %v8210 = vpop.f32.mrb[0].mxu0
        %8211 = vmatprep.mubr.f32.mxu0 0.0
        %8212 = vmatmul.mubr.f32.gmra.mrb[0].mxu0 %v8050
        %v8213 = vpop.f32.mrb[0].mxu0
        %v8214 = vadd.f32 %v7893, %v8213
        %v8215 = vpop.f32.mrb[0].mxu0
        %8216 = vmatprep.mubr.f32.mxu0 0.0
        %8217 = vmatmul.mubr.f32.gmra.mrb[0].mxu0 %v8053
        %v8218 = vpop.f32.mrb[0].mxu0
        %v8219 = vadd.f32 %v7898, %v8218
        %v8220 = vpop.f32.mrb[0].mxu0
        %8221 = vmatprep.mubr.f32.mxu0 0.0
        %8222 = vmatmul.mubr.f32.gmra.mrb[0].mxu0 %v8056
        %v8223 = vpop.f32.mrb[0].mxu0
        %v8224 = vadd.f32 %v7903, %v8223
        %v8225 = vpop.f32.mrb[0].mxu0
        %8226 = vmatprep.mubr.f32.mxu0 0.0
        %8227 = vmatmul.mubr.f32.gmra.mrb[0].mxu0 %v8059
        %v8228 = vpop.f32.mrb[0].mxu0
        %v8229 = vadd.f32 %v7908, %v8228
        %v8230 = vpop.f32.mrb[0].mxu0
        %8231 = vmatprep.mubr.f32.mxu0 0.0
        %8232 = vmatmul.mubr.f32.gmra.mrb[0].mxu0 %v8062
        %v8233 = vpop.f32.mrb[0].mxu0
        %v8234 = vadd.f32 %v7913, %v8233
        %v8235 = vpop.f32.mrb[0].mxu0
        %8236 = vmatprep.mubr.f32.mxu0 0.0
        %8237 = vmatmul.mubr.f32.gmra.mrb[0].mxu0 %v8065
        %v8238 = vpop.f32.mrb[0].mxu0
        %v8239 = vadd.f32 %v7918, %v8238
        %v8240 = vpop.f32.mrb[0].mxu0
        %8241 = vmatprep.mubr.f32.mxu0 0.0
        %8242 = vmatmul.mubr.f32.gmra.mrb[0].mxu0 %v8068
        %v8243 = vpop.f32.mrb[0].mxu0
        %v8244 = vadd.f32 %v7923, %v8243
        %v8245 = vpop.f32.mrb[0].mxu0
        %8246 = vmatprep.mubr.f32.mxu0 0.0
        %8247 = vmatmul.mubr.f32.gmra.mrb[0].mxu0 %v8071
        %v8248 = vpop.f32.mrb[0].mxu0
        %v8249 = vadd.f32 %v7928, %v8248
        %v8250 = vpop.f32.mrb[0].mxu0
        %8251 = vmatprep.mubr.f32.mxu0 0.0
        %8252 = vmatmul.mubr.f32.gmra.mrb[0].mxu0 %v8074
        %v8253 = vpop.f32.mrb[0].mxu0
        %v8254 = vadd.f32 %v7933, %v8253
        %v8255 = vpop.f32.mrb[0].mxu0
        %8256 = vmatprep.mubr.f32.mxu0 0.0
        %8257 = vmatmul.mubr.f32.gmra.mrb[0].mxu0 %v8077
        %v8258 = vpop.f32.mrb[0].mxu0
        %v8259 = vadd.f32 %v7938, %v8258
        %v8260 = vpop.f32.mrb[0].mxu0
        %8261 = vmatprep.mubr.f32.mxu0 0.0
        %8262 = vmatmul.mubr.f32.gmra.mrb[0].mxu0 %v8080
        %v8263 = vpop.f32.mrb[0].mxu0
        %v8264 = vadd.f32 %v7943, %v8263
        %v8265 = vpop.f32.mrb[0].mxu0
        %8266 = vmatprep.mubr.f32.mxu0 0.0
        %8267 = vmatmul.mubr.f32.gmra.mrb[0].mxu0 %v8083
        %v8268 = vpop.f32.mrb[0].mxu0
        %v8269 = vadd.f32 %v7948, %v8268
        %v8270 = vpop.f32.mrb[0].mxu0
        %8271 = vmatprep.mubr.f32.mxu0 0.0
        %8272 = vmatmul.mubr.f32.gmra.mrb[0].mxu0 %v8086
        %v8273 = vpop.f32.mrb[0].mxu0
        %v8274 = vadd.f32 %v7953, %v8273
        %v8275 = vpop.f32.mrb[0].mxu0
        %8276 = vmatprep.mubr.f32.mxu0 0.0
        %8277 = vmatmul.mubr.f32.gmra.mrb[0].mxu0 %v8089
        %v8278 = vpop.f32.mrb[0].mxu0
        %v8279 = vadd.f32 %v7958, %v8278
        %v8280 = vpop.f32.mrb[0].mxu0
        %8281 = vmatprep.mubr.f32.mxu0 0.0
        %8282 = vmatmul.mubr.f32.gmra.mrb[0].mxu0 %v8092
        %v8283 = vpop.f32.mrb[0].mxu0
        %v8284 = vadd.f32 %v7963, %v8283
        %v8285 = vpop.f32.mrb[0].mxu0
        %8286 = vmatprep.mubr.f32.mxu0 0.0
        %8287 = vmatmul.mubr.f32.gmra.mrb[0].mxu0 %v8095
        %v8288 = vpop.f32.mrb[0].mxu0
        %v8289 = vadd.f32 %v7968, %v8288
        %v8290 = vpop.f32.mrb[0].mxu0
        %8291 = vmatprep.mubr.f32.mxu0 0.0
        %8292 = vmatmul.mubr.f32.gmra.mrb[0].mxu0 %v8098
        %v8293 = vpop.f32.mrb[0].mxu0
        %v8294 = vadd.f32 %v7973, %v8293
        %v8295 = vpop.f32.mrb[0].mxu0
        %8296 = vmatprep.mubr.f32.mxu0 0.0
        %8297 = vmatmul.mubr.f32.gmra.mrb[0].mxu0 %v8101
        %v8298 = vpop.f32.mrb[0].mxu0
        %v8299 = vadd.f32 %v7978, %v8298
        %v8300 = vpop.f32.mrb[0].mxu0
        %8301 = vmatprep.mubr.f32.mxu0 0.0
        %8302 = vmatmul.mubr.f32.gmra.mrb[0].mxu0 %v8104
        %v8303 = vpop.f32.mrb[0].mxu0
        %v8304 = vadd.f32 %v7983, %v8303
        %v8305 = vpop.f32.mrb[0].mxu0
        %8306 = vmatprep.mubr.f32.mxu0 0.0
        %8307 = vmatmul.mubr.f32.gmra.mrb[0].mxu0 %v8107
        %v8308 = vpop.f32.mrb[0].mxu0
        %v8309 = vadd.f32 %v7988, %v8308
        %v8310 = vpop.f32.mrb[0].mxu0
        %8311 = vmatprep.mubr.f32.mxu0 0.0
        %8312 = vmatmul.mubr.f32.gmra.mrb[0].mxu0 %v8110
        %v8313 = vpop.f32.mrb[0].mxu0
        %v8314 = vadd.f32 %v7993, %v8313
        %v8315 = vpop.f32.mrb[0].mxu0
        %8316 = vmatprep.mubr.f32.mxu0 0.0
        %8317 = vmatmul.mubr.f32.gmra.mrb[0].mxu0 %v8113
        %v8318 = vpop.f32.mrb[0].mxu0
        %v8319 = vadd.f32 %v7998, %v8318
        %v8320 = vpop.f32.mrb[0].mxu0
        %8321 = vmatprep.mubr.f32.mxu0 0.0
        %8322 = vmatmul.mubr.f32.gmra.mrb[0].mxu0 %v8116
        %v8323 = vpop.f32.mrb[0].mxu0
        %v8324 = vadd.f32 %v8003, %v8323
        %v8325 = vpop.f32.mrb[0].mxu0
        %8326 = vmatprep.mubr.f32.mxu0 0.0
        %8327 = vmatmul.mubr.f32.gmra.mrb[0].mxu0 %v8119
        %v8328 = vpop.f32.mrb[0].mxu0
        %v8329 = vadd.f32 %v8008, %v8328
        %v8330 = vpop.f32.mrb[0].mxu0
        %8331 = vmatprep.mubr.f32.mxu0 0.0
        %8332 = vmatmul.mubr.f32.gmra.mrb[0].mxu0 %v8122
        %v8333 = vpop.f32.mrb[0].mxu0
        %v8334 = vadd.f32 %v8013, %v8333
        %v8335 = vpop.f32.mrb[0].mxu0
        %8336 = vmatprep.mubr.f32.mxu0 0.0
        %8337 = vmatmul.mubr.f32.gmra.mrb[0].mxu0 %v8125
        %v8338 = vpop.f32.mrb[0].mxu0
        %v8339 = vadd.f32 %v8018, %v8338
        %v8340 = vpop.f32.mrb[0].mxu0
        %8341 = vmatprep.mubr.f32.mxu0 0.0
        %8342 = vmatmul.mubr.f32.gmra.mrb[0].mxu0 %v8128
        %v8343 = vpop.f32.mrb[0].mxu0
        %v8344 = vadd.f32 %v8023, %v8343
        %v8345 = vpop.f32.mrb[0].mxu0
        %8346 = vmatprep.mubr.f32.mxu0 0.0
        %8347 = vmatmul.mubr.f32.gmra.mrb[0].mxu0 %v8131
        %v8348 = vpop.f32.mrb[0].mxu0
        %v8349 = vadd.f32 %v8028, %v8348
        %v8350 = vpop.f32.mrb[0].mxu0
        %8351 = vmatprep.mubr.f32.mxu0 0.0
        %8352 = vmatmul.mubr.f32.gmra.mrb[0].mxu0 %v8134
        %v8353 = vpop.f32.mrb[0].mxu0
        %v8354 = vadd.f32 %v8033, %v8353
        %v8355 = vpop.f32.mrb[0].mxu0
        %8356 = vmatprep.mubr.f32.mxu0 0.0
        %8357 = vmatmul.mubr.f32.gmra.mrb[0].mxu0 %v8137
        %v8358 = vpop.f32.mrb[0].mxu0
        %v8359 = vadd.f32 %v8038, %v8358
        %v8360 = vpop.f32.mrb[0].mxu0
        %8361 = vmatprep.mubr.f32.mxu0 0.0
        %8362 = vmatmul.mubr.f32.gmra.mrb[0].mxu0 %v8140
        %v8363 = vpop.f32.mrb[0].mxu0
        %v8364 = vadd.f32 %v8043, %v8363
        %v8365 = vpop.f32.mrb[0].mxu0
        %8366 = vdwg.mxu0
        %v8367 = vld [vmem:[%s69] sm:$0x1]
        %v8369 = vlaneseq
        %v8370 = vshrl.u32 %v8369, 7
        %v8371 = vsub.s32 0, %v8370
        %v8372 = vrot.slane %v8367, %v8371
        %v8374 = vadd.f32 %v8209, %v8372
        %v8375 = vadd.f32 %v8214, %v8372
        %v8376 = vadd.f32 %v8219, %v8372
        %v8377 = vadd.f32 %v8224, %v8372
        %v8378 = vadd.f32 %v8229, %v8372
        %v8379 = vadd.f32 %v8234, %v8372
        %v8380 = vadd.f32 %v8239, %v8372
        %v8381 = vadd.f32 %v8244, %v8372
        %v8382 = vadd.f32 %v8249, %v8372
        %v8383 = vadd.f32 %v8254, %v8372
        %v8384 = vadd.f32 %v8259, %v8372
        %v8385 = vadd.f32 %v8264, %v8372
        %v8386 = vadd.f32 %v8269, %v8372
        %v8387 = vadd.f32 %v8274, %v8372
        %v8388 = vadd.f32 %v8279, %v8372
        %v8389 = vadd.f32 %v8284, %v8372
        %v8390 = vadd.f32 %v8289, %v8372
        %v8391 = vadd.f32 %v8294, %v8372
        %v8392 = vadd.f32 %v8299, %v8372
        %v8393 = vadd.f32 %v8304, %v8372
        %v8394 = vadd.f32 %v8309, %v8372
        %v8395 = vadd.f32 %v8314, %v8372
        %v8396 = vadd.f32 %v8319, %v8372
        %v8397 = vadd.f32 %v8324, %v8372
        %v8398 = vadd.f32 %v8329, %v8372
        %v8399 = vadd.f32 %v8334, %v8372
        %v8400 = vadd.f32 %v8339, %v8372
        %v8401 = vadd.f32 %v8344, %v8372
        %v8402 = vadd.f32 %v8349, %v8372
        %v8403 = vadd.f32 %v8354, %v8372
        %v8404 = vadd.f32 %v8359, %v8372
        %v8405 = vadd.f32 %v8364, %v8372
        %v8406 = vld [vmem:[%s71] sm:$0x1]
        %v8408 = vlaneseq
        %v8409 = vshrl.u32 %v8408, 7
        %v8410 = vsub.s32 0, %v8409
        %v8411 = vrot.slane %v8406, %v8410
        %v8413 = vmul.f32 %v8374, %v8411
        %v8414 = vmul.f32 %v8375, %v8411
        %v8415 = vmul.f32 %v8376, %v8411
        %v8416 = vmul.f32 %v8377, %v8411
        %v8417 = vmul.f32 %v8378, %v8411
        %v8418 = vmul.f32 %v8379, %v8411
        %v8419 = vmul.f32 %v8380, %v8411
        %v8420 = vmul.f32 %v8381, %v8411
        %v8421 = vmul.f32 %v8382, %v8411
        %v8422 = vmul.f32 %v8383, %v8411
        %v8423 = vmul.f32 %v8384, %v8411
        %v8424 = vmul.f32 %v8385, %v8411
        %v8425 = vmul.f32 %v8386, %v8411
        %v8426 = vmul.f32 %v8387, %v8411
        %v8427 = vmul.f32 %v8388, %v8411
        %v8428 = vmul.f32 %v8389, %v8411
        %v8429 = vmul.f32 %v8390, %v8411
        %v8430 = vmul.f32 %v8391, %v8411
        %v8431 = vmul.f32 %v8392, %v8411
        %v8432 = vmul.f32 %v8393, %v8411
        %v8433 = vmul.f32 %v8394, %v8411
        %v8434 = vmul.f32 %v8395, %v8411
        %v8435 = vmul.f32 %v8396, %v8411
        %v8436 = vmul.f32 %v8397, %v8411
        %v8437 = vmul.f32 %v8398, %v8411
        %v8438 = vmul.f32 %v8399, %v8411
        %v8439 = vmul.f32 %v8400, %v8411
        %v8440 = vmul.f32 %v8401, %v8411
        %v8441 = vmul.f32 %v8402, %v8411
        %v8442 = vmul.f32 %v8403, %v8411
        %v8443 = vmul.f32 %v8404, %v8411
        %v8444 = vmul.f32 %v8405, %v8411
        %v8445 = vld [vmem:[%s73] sm:$0x1]
        %v8447 = vlaneseq
        %v8448 = vshrl.u32 %v8447, 7
        %v8449 = vsub.s32 0, %v8448
        %v8450 = vrot.slane %v8445, %v8449
        %v8452 = vadd.f32 %v8413, %v8450
        %v8453 = vadd.f32 %v8414, %v8450
        %v8454 = vadd.f32 %v8415, %v8450
        %v8455 = vadd.f32 %v8416, %v8450
        %v8456 = vadd.f32 %v8417, %v8450
        %v8457 = vadd.f32 %v8418, %v8450
        %v8458 = vadd.f32 %v8419, %v8450
        %v8459 = vadd.f32 %v8420, %v8450
        %v8460 = vadd.f32 %v8421, %v8450
        %v8461 = vadd.f32 %v8422, %v8450
        %v8462 = vadd.f32 %v8423, %v8450
        %v8463 = vadd.f32 %v8424, %v8450
        %v8464 = vadd.f32 %v8425, %v8450
        %v8465 = vadd.f32 %v8426, %v8450
        %v8466 = vadd.f32 %v8427, %v8450
        %v8467 = vadd.f32 %v8428, %v8450
        %v8468 = vadd.f32 %v8429, %v8450
        %v8469 = vadd.f32 %v8430, %v8450
        %v8470 = vadd.f32 %v8431, %v8450
        %v8471 = vadd.f32 %v8432, %v8450
        %v8472 = vadd.f32 %v8433, %v8450
        %v8473 = vadd.f32 %v8434, %v8450
        %v8474 = vadd.f32 %v8435, %v8450
        %v8475 = vadd.f32 %v8436, %v8450
        %v8476 = vadd.f32 %v8437, %v8450
        %v8477 = vadd.f32 %v8438, %v8450
        %v8478 = vadd.f32 %v8439, %v8450
        %v8479 = vadd.f32 %v8440, %v8450
        %v8480 = vadd.f32 %v8441, %v8450
        %v8481 = vadd.f32 %v8442, %v8450
        %v8482 = vadd.f32 %v8443, %v8450
        %v8483 = vadd.f32 %v8444, %v8450
        %vm8484 = vcmp.ge.f32.partialorder %v8452, 0.0
        %vm8485 = vcmp.ge.f32.partialorder %v8453, 0.0
        %vm8486 = vcmp.ge.f32.partialorder %v8454, 0.0
        %vm8487 = vcmp.ge.f32.partialorder %v8455, 0.0
        %vm8488 = vcmp.ge.f32.partialorder %v8456, 0.0
        %vm8489 = vcmp.ge.f32.partialorder %v8457, 0.0
        %vm8490 = vcmp.ge.f32.partialorder %v8458, 0.0
        %vm8491 = vcmp.ge.f32.partialorder %v8459, 0.0
        %vm8492 = vcmp.ge.f32.partialorder %v8460, 0.0
        %vm8493 = vcmp.ge.f32.partialorder %v8461, 0.0
        %vm8494 = vcmp.ge.f32.partialorder %v8462, 0.0
        %vm8495 = vcmp.ge.f32.partialorder %v8463, 0.0
        %vm8496 = vcmp.ge.f32.partialorder %v8464, 0.0
        %vm8497 = vcmp.ge.f32.partialorder %v8465, 0.0
        %vm8498 = vcmp.ge.f32.partialorder %v8466, 0.0
        %vm8499 = vcmp.ge.f32.partialorder %v8467, 0.0
        %vm8500 = vcmp.ge.f32.partialorder %v8468, 0.0
        %vm8501 = vcmp.ge.f32.partialorder %v8469, 0.0
        %vm8502 = vcmp.ge.f32.partialorder %v8470, 0.0
        %vm8503 = vcmp.ge.f32.partialorder %v8471, 0.0
        %vm8504 = vcmp.ge.f32.partialorder %v8472, 0.0
        %vm8505 = vcmp.ge.f32.partialorder %v8473, 0.0
        %vm8506 = vcmp.ge.f32.partialorder %v8474, 0.0
        %vm8507 = vcmp.ge.f32.partialorder %v8475, 0.0
        %vm8508 = vcmp.ge.f32.partialorder %v8476, 0.0
        %vm8509 = vcmp.ge.f32.partialorder %v8477, 0.0
        %vm8510 = vcmp.ge.f32.partialorder %v8478, 0.0
        %vm8511 = vcmp.ge.f32.partialorder %v8479, 0.0
        %vm8512 = vcmp.ge.f32.partialorder %v8480, 0.0
        %vm8513 = vcmp.ge.f32.partialorder %v8481, 0.0
        %vm8514 = vcmp.ge.f32.partialorder %v8482, 0.0
        %vm8515 = vcmp.ge.f32.partialorder %v8483, 0.0
        %v8516 = vmul.f32 %v8452, 0.2
        %v8517 = vmul.f32 %v8453, 0.2
        %v8518 = vmul.f32 %v8454, 0.2
        %v8519 = vmul.f32 %v8455, 0.2
        %v8520 = vmul.f32 %v8456, 0.2
        %v8521 = vmul.f32 %v8457, 0.2
        %v8522 = vmul.f32 %v8458, 0.2
        %v8523 = vmul.f32 %v8459, 0.2
        %v8524 = vmul.f32 %v8460, 0.2
        %v8525 = vmul.f32 %v8461, 0.2
        %v8526 = vmul.f32 %v8462, 0.2
        %v8527 = vmul.f32 %v8463, 0.2
        %v8528 = vmul.f32 %v8464, 0.2
        %v8529 = vmul.f32 %v8465, 0.2
        %v8530 = vmul.f32 %v8466, 0.2
        %v8531 = vmul.f32 %v8467, 0.2
        %v8532 = vmul.f32 %v8468, 0.2
        %v8533 = vmul.f32 %v8469, 0.2
        %v8534 = vmul.f32 %v8470, 0.2
        %v8535 = vmul.f32 %v8471, 0.2
        %v8536 = vmul.f32 %v8472, 0.2
        %v8537 = vmul.f32 %v8473, 0.2
        %v8538 = vmul.f32 %v8474, 0.2
        %v8539 = vmul.f32 %v8475, 0.2
        %v8540 = vmul.f32 %v8476, 0.2
        %v8541 = vmul.f32 %v8477, 0.2
        %v8542 = vmul.f32 %v8478, 0.2
        %v8543 = vmul.f32 %v8479, 0.2
        %v8544 = vmul.f32 %v8480, 0.2
        %v8545 = vmul.f32 %v8481, 0.2
        %v8546 = vmul.f32 %v8482, 0.2
        %v8547 = vmul.f32 %v8483, 0.2
        %v8548 = vsel %vm8484, %v8452, %v8516
        %v8549 = vsel %vm8485, %v8453, %v8517
        %v8550 = vsel %vm8486, %v8454, %v8518
        %v8551 = vsel %vm8487, %v8455, %v8519
        %v8552 = vsel %vm8488, %v8456, %v8520
        %v8553 = vsel %vm8489, %v8457, %v8521
        %v8554 = vsel %vm8490, %v8458, %v8522
        %v8555 = vsel %vm8491, %v8459, %v8523
        %v8556 = vsel %vm8492, %v8460, %v8524
        %v8557 = vsel %vm8493, %v8461, %v8525
        %v8558 = vsel %vm8494, %v8462, %v8526
        %v8559 = vsel %vm8495, %v8463, %v8527
        %v8560 = vsel %vm8496, %v8464, %v8528
        %v8561 = vsel %vm8497, %v8465, %v8529
        %v8562 = vsel %vm8498, %v8466, %v8530
        %v8563 = vsel %vm8499, %v8467, %v8531
        %v8564 = vsel %vm8500, %v8468, %v8532
        %v8565 = vsel %vm8501, %v8469, %v8533
        %v8566 = vsel %vm8502, %v8470, %v8534
        %v8567 = vsel %vm8503, %v8471, %v8535
        %v8568 = vsel %vm8504, %v8472, %v8536
        %v8569 = vsel %vm8505, %v8473, %v8537
        %v8570 = vsel %vm8506, %v8474, %v8538
        %v8571 = vsel %vm8507, %v8475, %v8539
        %v8572 = vsel %vm8508, %v8476, %v8540
        %v8573 = vsel %vm8509, %v8477, %v8541
        %v8574 = vsel %vm8510, %v8478, %v8542
        %v8575 = vsel %vm8511, %v8479, %v8543
        %v8576 = vsel %vm8512, %v8480, %v8544
        %v8577 = vsel %vm8513, %v8481, %v8545
        %v8578 = vsel %vm8514, %v8482, %v8546
        %v8579 = vsel %vm8515, %v8483, %v8547
        %v8580 = vsel %vm2795, %v8548, 0.0
        %v8581 = vsel %vm2795, %v8549, 0.0
        %v8582 = vadd.f32 %v8580, %v8581
        %v8583 = vsel %vm2795, %v8550, 0.0
        %v8584 = vadd.f32 %v8582, %v8583
        %v8585 = vsel %vm2795, %v8551, 0.0
        %v8586 = vadd.f32 %v8584, %v8585
        %v8587 = vsel %vm2795, %v8552, 0.0
        %v8588 = vadd.f32 %v8586, %v8587
        %v8589 = vsel %vm2795, %v8553, 0.0
        %v8590 = vadd.f32 %v8588, %v8589
        %v8591 = vsel %vm2795, %v8554, 0.0
        %v8592 = vadd.f32 %v8590, %v8591
        %v8593 = vsel %vm2795, %v8555, 0.0
        %v8594 = vadd.f32 %v8592, %v8593
        %v8595 = vsel %vm2795, %v8556, 0.0
        %v8596 = vadd.f32 %v8594, %v8595
        %v8597 = vsel %vm2795, %v8557, 0.0
        %v8598 = vadd.f32 %v8596, %v8597
        %v8599 = vsel %vm2795, %v8558, 0.0
        %v8600 = vadd.f32 %v8598, %v8599
        %v8601 = vsel %vm2795, %v8559, 0.0
        %v8602 = vadd.f32 %v8600, %v8601
        %v8603 = vsel %vm2795, %v8560, 0.0
        %v8604 = vadd.f32 %v8602, %v8603
        %v8605 = vsel %vm2795, %v8561, 0.0
        %v8606 = vadd.f32 %v8604, %v8605
        %v8607 = vsel %vm2795, %v8562, 0.0
        %v8608 = vadd.f32 %v8606, %v8607
        %v8609 = vsel %vm2795, %v8563, 0.0
        %v8610 = vadd.f32 %v8608, %v8609
        %v8611 = vsel %vm2795, %v8564, 0.0
        %v8612 = vadd.f32 %v8610, %v8611
        %v8613 = vsel %vm2795, %v8565, 0.0
        %v8614 = vadd.f32 %v8612, %v8613
        %v8615 = vsel %vm2795, %v8566, 0.0
        %v8616 = vadd.f32 %v8614, %v8615
        %v8617 = vsel %vm2795, %v8567, 0.0
        %v8618 = vadd.f32 %v8616, %v8617
        %v8619 = vsel %vm2795, %v8568, 0.0
        %v8620 = vadd.f32 %v8618, %v8619
        %v8621 = vsel %vm2795, %v8569, 0.0
        %v8622 = vadd.f32 %v8620, %v8621
        %v8623 = vsel %vm2795, %v8570, 0.0
        %v8624 = vadd.f32 %v8622, %v8623
        %v8625 = vsel %vm2795, %v8571, 0.0
        %v8626 = vadd.f32 %v8624, %v8625
        %v8627 = vsel %vm2795, %v8572, 0.0
        %v8628 = vadd.f32 %v8626, %v8627
        %v8629 = vsel %vm2795, %v8573, 0.0
        %v8630 = vadd.f32 %v8628, %v8629
        %v8631 = vsel %vm2795, %v8574, 0.0
        %v8632 = vadd.f32 %v8630, %v8631
        %v8633 = vsel %vm2795, %v8575, 0.0
        %v8634 = vadd.f32 %v8632, %v8633
        %v8635 = vsel %vm2795, %v8576, 0.0
        %v8636 = vadd.f32 %v8634, %v8635
        %v8637 = vsel %vm2795, %v8577, 0.0
        %v8638 = vadd.f32 %v8636, %v8637
        %v8639 = vsel %vm2795, %v8578, 0.0
        %v8640 = vadd.f32 %v8638, %v8639
        %v8641 = vsel %vm2795, %v8579, 0.0
        %v8642 = vadd.f32 %v8640, %v8641
        %v8643 = vrot.slane %v8642, 4
        %v8644 = vadd.f32 %v8642, %v8643
        %v8645 = vrot.slane %v8644, 2
        %v8646 = vadd.f32 %v8644, %v8645
        %v8647 = vrot.slane %v8646, 1
        %v8648 = vadd.f32 %v8646, %v8647
        %v8649 = vmul.f32 %v8648, %v5868
        %v8650 = vld [vmem:[%s75] sm:$0xff]
        %v8651 = vld [vmem:[%s75 + $0x8] sm:$0xff]
        %v8652 = vld [vmem:[%s75 + $0x10] sm:$0xff]
        %v8653 = vld [vmem:[%s75 + $0x18] sm:$0xff]
        %v8655 = vsel %vm2795, %v8649, 0
        %8657 = vmatprep.subr.mxu0 0.0
        %8658 = vmatpush1.msra.mxu0 %v8650
        %8659 = vmatprep.subr.mxu0 0.0
        %8660 = vmatpush1.msra.mxu0 %v8651
        %8661 = vmatprep.subr.mxu0 0.0
        %8662 = vmatpush1.msra.mxu0 %v8652
        %8663 = vmatprep.subr.mxu0 0.0
        %8664 = vmatpush1.msra.mxu0 %v8653
        %8665 = vmatprep.subr.mxu0 0.0
        %8666 = vmatpush1.msra.mxu0 0.0
        %8667 = vmatprep.subr.mxu0 0.0
        %8668 = vmatpush1.msra.mxu0 0.0
        %8669 = vmatprep.subr.mxu0 0.0
        %8670 = vmatpush1.msra.mxu0 0.0
        %8671 = vmatprep.subr.mxu0 0.0
        %8672 = vmatpush1.msra.mxu0 0.0
        %8673 = vmatprep.subr.mxu0 0.0
        %8674 = vmatpush1.msra.mxu0 0.0
        %8675 = vmatprep.subr.mxu0 0.0
        %8676 = vmatpush1.msra.mxu0 0.0
        %8677 = vmatprep.subr.mxu0 0.0
        %8678 = vmatpush1.msra.mxu0 0.0
        %8679 = vmatprep.subr.mxu0 0.0
        %8680 = vmatpush1.msra.mxu0 0.0
        %8681 = vmatprep.subr.mxu0 0.0
        %8682 = vmatpush1.msra.mxu0 0.0
        %8683 = vmatprep.subr.mxu0 0.0
        %8684 = vmatpush1.msra.mxu0 0.0
        %8685 = vmatprep.subr.mxu0 0.0
        %8686 = vmatpush1.msra.mxu0 0.0
        %8687 = vmatprep.subr.mxu0 0.0
        %8688 = vmatpush1.msra.mxu0 0.0
        %8689 = vmatprep.subr.mxu0 0.0
        %8690 = vmatpush1.msra.mxu0 0.0
        %8691 = vmatprep.subr.mxu0 0.0
        %8692 = vmatpush1.msra.mxu0 0.0
        %8693 = vmatprep.subr.mxu0 0.0
        %8694 = vmatpush1.msra.mxu0 0.0
        %8695 = vmatprep.subr.mxu0 0.0
        %8696 = vmatpush1.msra.mxu0 0.0
        %8697 = vmatprep.subr.mxu0 0.0
        %8698 = vmatpush1.msra.mxu0 0.0
        %8699 = vmatprep.subr.mxu0 0.0
        %8700 = vmatpush1.msra.mxu0 0.0
        %8701 = vmatprep.subr.mxu0 0.0
        %8702 = vmatpush1.msra.mxu0 0.0
        %8703 = vmatprep.subr.mxu0 0.0
        %8704 = vmatpush1.msra.mxu0 0.0
        %8705 = vmatprep.subr.mxu0 0.0
        %8706 = vmatpush1.msra.mxu0 0.0
        %8707 = vmatprep.subr.mxu0 0.0
        %8708 = vmatpush1.msra.mxu0 0.0
        %8709 = vmatprep.subr.mxu0 0.0
        %8710 = vmatpush1.msra.mxu0 0.0
        %8711 = vmatprep.subr.mxu0 0.0
        %8712 = vmatpush1.msra.mxu0 0.0
        %8713 = vmatprep.subr.mxu0 0.0
        %8714 = vmatpush1.msra.mxu0 0.0
        %8715 = vmatprep.subr.mxu0 0.0
        %8716 = vmatpush1.msra.mxu0 0.0
        %8717 = vmatprep.subr.mxu0 0.0
        %8718 = vmatpush1.msra.mxu0 0.0
        %8719 = vmatprep.subr.mxu0 0.0
        %8720 = vmatpush1.msra.mxu0 0.0
        %8721 = vmatprep.mubr.f32.mxu0 0.0
        %8722 = vmatmul.mubr.f32.gmra.mrb[0].mxu0 %v8655
        %v8723 = vpop.f32.mrb[0].mxu0
        %v8724 = vadd.f32 0.0, %v8723
        %v8725 = vpop.f32.mrb[0].mxu0
        %8726 = vdwg.mxu0
        %v8727 = vmax.f32 %v8724, 0.0
        %v8728 = vld [vmem:[%s77] sm:$0x3]
        %v8730 = vsel %vm5949, %v8727, 0
        %v8733 = vsel %vm5953, %v8728, 0
        %8735 = vmatprep.subr.mxu0 0.0
        %8736 = vmatpush1.msra.mxu0 %v8733
        %8737 = vmatprep.subr.mxu0 0.0
        %8738 = vmatpush1.msra.mxu0 0.0
        %8739 = vmatprep.subr.mxu0 0.0
        %8740 = vmatpush1.msra.mxu0 0.0
        %8741 = vmatprep.subr.mxu0 0.0
        %8742 = vmatpush1.msra.mxu0 0.0
        %8743 = vmatprep.subr.mxu0 0.0
        %8744 = vmatpush1.msra.mxu0 0.0
        %8745 = vmatprep.subr.mxu0 0.0
        %8746 = vmatpush1.msra.mxu0 0.0
        %8747 = vmatprep.subr.mxu0 0.0
        %8748 = vmatpush1.msra.mxu0 0.0
        %8749 = vmatprep.subr.mxu0 0.0
        %8750 = vmatpush1.msra.mxu0 0.0
        %8751 = vmatprep.subr.mxu0 0.0
        %8752 = vmatpush1.msra.mxu0 0.0
        %8753 = vmatprep.subr.mxu0 0.0
        %8754 = vmatpush1.msra.mxu0 0.0
        %8755 = vmatprep.subr.mxu0 0.0
        %8756 = vmatpush1.msra.mxu0 0.0
        %8757 = vmatprep.subr.mxu0 0.0
        %8758 = vmatpush1.msra.mxu0 0.0
        %8759 = vmatprep.subr.mxu0 0.0
        %8760 = vmatpush1.msra.mxu0 0.0
        %8761 = vmatprep.subr.mxu0 0.0
        %8762 = vmatpush1.msra.mxu0 0.0
        %8763 = vmatprep.subr.mxu0 0.0
        %8764 = vmatpush1.msra.mxu0 0.0
        %8765 = vmatprep.subr.mxu0 0.0
        %8766 = vmatpush1.msra.mxu0 0.0
        %8767 = vmatprep.subr.mxu0 0.0
        %8768 = vmatpush1.msra.mxu0 0.0
        %8769 = vmatprep.subr.mxu0 0.0
        %8770 = vmatpush1.msra.mxu0 0.0
        %8771 = vmatprep.subr.mxu0 0.0
        %8772 = vmatpush1.msra.mxu0 0.0
        %8773 = vmatprep.subr.mxu0 0.0
        %8774 = vmatpush1.msra.mxu0 0.0
        %8775 = vmatprep.subr.mxu0 0.0
        %8776 = vmatpush1.msra.mxu0 0.0
        %8777 = vmatprep.subr.mxu0 0.0
        %8778 = vmatpush1.msra.mxu0 0.0
        %8779 = vmatprep.subr.mxu0 0.0
        %8780 = vmatpush1.msra.mxu0 0.0
        %8781 = vmatprep.subr.mxu0 0.0
        %8782 = vmatpush1.msra.mxu0 0.0
        %8783 = vmatprep.subr.mxu0 0.0
        %8784 = vmatpush1.msra.mxu0 0.0
        %8785 = vmatprep.subr.mxu0 0.0
        %8786 = vmatpush1.msra.mxu0 0.0
        %8787 = vmatprep.subr.mxu0 0.0
        %8788 = vmatpush1.msra.mxu0 0.0
        %8789 = vmatprep.subr.mxu0 0.0
        %8790 = vmatpush1.msra.mxu0 0.0
        %8791 = vmatprep.subr.mxu0 0.0
        %8792 = vmatpush1.msra.mxu0 0.0
        %8793 = vmatprep.subr.mxu0 0.0
        %8794 = vmatpush1.msra.mxu0 0.0
        %8795 = vmatprep.subr.mxu0 0.0
        %8796 = vmatpush1.msra.mxu0 0.0
        %8797 = vmatprep.subr.mxu0 0.0
        %8798 = vmatpush1.msra.mxu0 0.0
        %8799 = vmatprep.mubr.f32.mxu0 0.0
        %8800 = vmatmul.mubr.f32.gmra.mrb[0].mxu0 %v8730
        %v8801 = vpop.f32.mrb[0].mxu0
        %v8802 = vadd.f32 0.0, %v8801
        %v8803 = vpop.f32.mrb[0].mxu0
        %8804 = vdwg.mxu0
        %v8805 = vxor.u32 %v8802, 2147483648
        %v8806 = vmul.f32 %v8805, 1.442695
        %v8807 = vpow.pop %v8806
        %v8808 = vadd.f32 %v8807, 1.0
        %v8809 = vrcp.pop %v8808
        %v8810 = vmul.f32 1.0, %v8809
        %v8811 = vlaneseq
        %v8812 = vshrl.u32 %v8811, 7
        %v8813 = vsub.s32 0, %v8812
        %v8814 = vrot.slane %v8810, %v8813
        %v8815 = vmul.f32 %v8548, %v8814
        %v8816 = vmul.f32 %v8549, %v8814
        %v8817 = vmul.f32 %v8550, %v8814
        %v8818 = vmul.f32 %v8551, %v8814
        %v8819 = vmul.f32 %v8552, %v8814
        %v8820 = vmul.f32 %v8553, %v8814
        %v8821 = vmul.f32 %v8554, %v8814
        %v8822 = vmul.f32 %v8555, %v8814
        %v8823 = vmul.f32 %v8556, %v8814
        %v8824 = vmul.f32 %v8557, %v8814
        %v8825 = vmul.f32 %v8558, %v8814
        %v8826 = vmul.f32 %v8559, %v8814
        %v8827 = vmul.f32 %v8560, %v8814
        %v8828 = vmul.f32 %v8561, %v8814
        %v8829 = vmul.f32 %v8562, %v8814
        %v8830 = vmul.f32 %v8563, %v8814
        %v8831 = vmul.f32 %v8564, %v8814
        %v8832 = vmul.f32 %v8565, %v8814
        %v8833 = vmul.f32 %v8566, %v8814
        %v8834 = vmul.f32 %v8567, %v8814
        %v8835 = vmul.f32 %v8568, %v8814
        %v8836 = vmul.f32 %v8569, %v8814
        %v8837 = vmul.f32 %v8570, %v8814
        %v8838 = vmul.f32 %v8571, %v8814
        %v8839 = vmul.f32 %v8572, %v8814
        %v8840 = vmul.f32 %v8573, %v8814
        %v8841 = vmul.f32 %v8574, %v8814
        %v8842 = vmul.f32 %v8575, %v8814
        %v8843 = vmul.f32 %v8576, %v8814
        %v8844 = vmul.f32 %v8577, %v8814
        %v8845 = vmul.f32 %v8578, %v8814
        %v8846 = vmul.f32 %v8579, %v8814
        %v8847 = vld [vmem:[%s79] sm:$0xff]
        %v8848 = vld [vmem:[%s79 + $0x8] sm:$0xff]
        %v8850 = vsel %vm1297, %v1265, 0
        %v8853 = vsel %vm1297, %v1266, 0
        %v8856 = vsel %vm1297, %v1267, 0
        %v8859 = vsel %vm1297, %v1268, 0
        %v8862 = vsel %vm1297, %v1269, 0
        %v8865 = vsel %vm1297, %v1270, 0
        %v8868 = vsel %vm1297, %v1271, 0
        %v8871 = vsel %vm1297, %v1272, 0
        %v8874 = vsel %vm1297, %v1273, 0
        %v8877 = vsel %vm1297, %v1274, 0
        %v8880 = vsel %vm1297, %v1275, 0
        %v8883 = vsel %vm1297, %v1276, 0
        %v8886 = vsel %vm1297, %v1277, 0
        %v8889 = vsel %vm1297, %v1278, 0
        %v8892 = vsel %vm1297, %v1279, 0
        %v8895 = vsel %vm1297, %v1280, 0
        %v8898 = vsel %vm1297, %v1281, 0
        %v8901 = vsel %vm1297, %v1282, 0
        %v8904 = vsel %vm1297, %v1283, 0
        %v8907 = vsel %vm1297, %v1284, 0
        %v8910 = vsel %vm1297, %v1285, 0
        %v8913 = vsel %vm1297, %v1286, 0
        %v8916 = vsel %vm1297, %v1287, 0
        %v8919 = vsel %vm1297, %v1288, 0
        %v8922 = vsel %vm1297, %v1289, 0
        %v8925 = vsel %vm1297, %v1290, 0
        %v8928 = vsel %vm1297, %v1291, 0
        %v8931 = vsel %vm1297, %v1292, 0
        %v8934 = vsel %vm1297, %v1293, 0
        %v8937 = vsel %vm1297, %v1294, 0
        %v8940 = vsel %vm1297, %v1295, 0
        %v8943 = vsel %vm1297, %v1296, 0
        %8945 = vmatprep.subr.mxu0 0.0
        %8946 = vmatpush1.msra.mxu0 %v8847
        %8947 = vmatprep.subr.mxu0 0.0
        %8948 = vmatpush1.msra.mxu0 %v8848
        %8949 = vmatprep.subr.mxu0 0.0
        %8950 = vmatpush1.msra.mxu0 0.0
        %8951 = vmatprep.subr.mxu0 0.0
        %8952 = vmatpush1.msra.mxu0 0.0
        %8953 = vmatprep.subr.mxu0 0.0
        %8954 = vmatpush1.msra.mxu0 0.0
        %8955 = vmatprep.subr.mxu0 0.0
        %8956 = vmatpush1.msra.mxu0 0.0
        %8957 = vmatprep.subr.mxu0 0.0
        %8958 = vmatpush1.msra.mxu0 0.0
        %8959 = vmatprep.subr.mxu0 0.0
        %8960 = vmatpush1.msra.mxu0 0.0
        %8961 = vmatprep.subr.mxu0 0.0
        %8962 = vmatpush1.msra.mxu0 0.0
        %8963 = vmatprep.subr.mxu0 0.0
        %8964 = vmatpush1.msra.mxu0 0.0
        %8965 = vmatprep.subr.mxu0 0.0
        %8966 = vmatpush1.msra.mxu0 0.0
        %8967 = vmatprep.subr.mxu0 0.0
        %8968 = vmatpush1.msra.mxu0 0.0
        %8969 = vmatprep.subr.mxu0 0.0
        %8970 = vmatpush1.msra.mxu0 0.0
        %8971 = vmatprep.subr.mxu0 0.0
        %8972 = vmatpush1.msra.mxu0 0.0
        %8973 = vmatprep.subr.mxu0 0.0
        %8974 = vmatpush1.msra.mxu0 0.0
        %8975 = vmatprep.subr.mxu0 0.0
        %8976 = vmatpush1.msra.mxu0 0.0
        %8977 = vmatprep.subr.mxu0 0.0
        %8978 = vmatpush1.msra.mxu0 0.0
        %8979 = vmatprep.subr.mxu0 0.0
        %8980 = vmatpush1.msra.mxu0 0.0
        %8981 = vmatprep.subr.mxu0 0.0
        %8982 = vmatpush1.msra.mxu0 0.0
        %8983 = vmatprep.subr.mxu0 0.0
        %8984 = vmatpush1.msra.mxu0 0.0
        %8985 = vmatprep.subr.mxu0 0.0
        %8986 = vmatpush1.msra.mxu0 0.0
        %8987 = vmatprep.subr.mxu0 0.0
        %8988 = vmatpush1.msra.mxu0 0.0
        %8989 = vmatprep.subr.mxu0 0.0
        %8990 = vmatpush1.msra.mxu0 0.0
        %8991 = vmatprep.subr.mxu0 0.0
        %8992 = vmatpush1.msra.mxu0 0.0
        %8993 = vmatprep.subr.mxu0 0.0
        %8994 = vmatpush1.msra.mxu0 0.0
        %8995 = vmatprep.subr.mxu0 0.0
        %8996 = vmatpush1.msra.mxu0 0.0
        %8997 = vmatprep.subr.mxu0 0.0
        %8998 = vmatpush1.msra.mxu0 0.0
        %8999 = vmatprep.subr.mxu0 0.0
        %9000 = vmatpush1.msra.mxu0 0.0
        %9001 = vmatprep.subr.mxu0 0.0
        %9002 = vmatpush1.msra.mxu0 0.0
        %9003 = vmatprep.subr.mxu0 0.0
        %9004 = vmatpush1.msra.mxu0 0.0
        %9005 = vmatprep.subr.mxu0 0.0
        %9006 = vmatpush1.msra.mxu0 0.0
        %9007 = vmatprep.subr.mxu0 0.0
        %9008 = vmatpush1.msra.mxu0 0.0
        %9009 = vmatprep.mubr.f32.mxu0 0.0
        %9010 = vmatmul.mubr.f32.gmra.mrb[0].mxu0 %v8850
        %v9011 = vpop.f32.mrb[0].mxu0
        %v9012 = vadd.f32 0.0, %v9011
        %v9013 = vpop.f32.mrb[0].mxu0
        %9014 = vmatprep.mubr.f32.mxu0 0.0
        %9015 = vmatmul.mubr.f32.gmra.mrb[0].mxu0 %v8853
        %v9016 = vpop.f32.mrb[0].mxu0
        %v9017 = vadd.f32 0.0, %v9016
        %v9018 = vpop.f32.mrb[0].mxu0
        %9019 = vmatprep.mubr.f32.mxu0 0.0
        %9020 = vmatmul.mubr.f32.gmra.mrb[0].mxu0 %v8856
        %v9021 = vpop.f32.mrb[0].mxu0
        %v9022 = vadd.f32 0.0, %v9021
        %v9023 = vpop.f32.mrb[0].mxu0
        %9024 = vmatprep.mubr.f32.mxu0 0.0
        %9025 = vmatmul.mubr.f32.gmra.mrb[0].mxu0 %v8859
        %v9026 = vpop.f32.mrb[0].mxu0
        %v9027 = vadd.f32 0.0, %v9026
        %v9028 = vpop.f32.mrb[0].mxu0
        %9029 = vmatprep.mubr.f32.mxu0 0.0
        %9030 = vmatmul.mubr.f32.gmra.mrb[0].mxu0 %v8862
        %v9031 = vpop.f32.mrb[0].mxu0
        %v9032 = vadd.f32 0.0, %v9031
        %v9033 = vpop.f32.mrb[0].mxu0
        %9034 = vmatprep.mubr.f32.mxu0 0.0
        %9035 = vmatmul.mubr.f32.gmra.mrb[0].mxu0 %v8865
        %v9036 = vpop.f32.mrb[0].mxu0
        %v9037 = vadd.f32 0.0, %v9036
        %v9038 = vpop.f32.mrb[0].mxu0
        %9039 = vmatprep.mubr.f32.mxu0 0.0
        %9040 = vmatmul.mubr.f32.gmra.mrb[0].mxu0 %v8868
        %v9041 = vpop.f32.mrb[0].mxu0
        %v9042 = vadd.f32 0.0, %v9041
        %v9043 = vpop.f32.mrb[0].mxu0
        %9044 = vmatprep.mubr.f32.mxu0 0.0
        %9045 = vmatmul.mubr.f32.gmra.mrb[0].mxu0 %v8871
        %v9046 = vpop.f32.mrb[0].mxu0
        %v9047 = vadd.f32 0.0, %v9046
        %v9048 = vpop.f32.mrb[0].mxu0
        %9049 = vmatprep.mubr.f32.mxu0 0.0
        %9050 = vmatmul.mubr.f32.gmra.mrb[0].mxu0 %v8874
        %v9051 = vpop.f32.mrb[0].mxu0
        %v9052 = vadd.f32 0.0, %v9051
        %v9053 = vpop.f32.mrb[0].mxu0
        %9054 = vmatprep.mubr.f32.mxu0 0.0
        %9055 = vmatmul.mubr.f32.gmra.mrb[0].mxu0 %v8877
        %v9056 = vpop.f32.mrb[0].mxu0
        %v9057 = vadd.f32 0.0, %v9056
        %v9058 = vpop.f32.mrb[0].mxu0
        %9059 = vmatprep.mubr.f32.mxu0 0.0
        %9060 = vmatmul.mubr.f32.gmra.mrb[0].mxu0 %v8880
        %v9061 = vpop.f32.mrb[0].mxu0
        %v9062 = vadd.f32 0.0, %v9061
        %v9063 = vpop.f32.mrb[0].mxu0
        %9064 = vmatprep.mubr.f32.mxu0 0.0
        %9065 = vmatmul.mubr.f32.gmra.mrb[0].mxu0 %v8883
        %v9066 = vpop.f32.mrb[0].mxu0
        %v9067 = vadd.f32 0.0, %v9066
        %v9068 = vpop.f32.mrb[0].mxu0
        %9069 = vmatprep.mubr.f32.mxu0 0.0
        %9070 = vmatmul.mubr.f32.gmra.mrb[0].mxu0 %v8886
        %v9071 = vpop.f32.mrb[0].mxu0
        %v9072 = vadd.f32 0.0, %v9071
        %v9073 = vpop.f32.mrb[0].mxu0
        %9074 = vmatprep.mubr.f32.mxu0 0.0
        %9075 = vmatmul.mubr.f32.gmra.mrb[0].mxu0 %v8889
        %v9076 = vpop.f32.mrb[0].mxu0
        %v9077 = vadd.f32 0.0, %v9076
        %v9078 = vpop.f32.mrb[0].mxu0
        %9079 = vmatprep.mubr.f32.mxu0 0.0
        %9080 = vmatmul.mubr.f32.gmra.mrb[0].mxu0 %v8892
        %v9081 = vpop.f32.mrb[0].mxu0
        %v9082 = vadd.f32 0.0, %v9081
        %v9083 = vpop.f32.mrb[0].mxu0
        %9084 = vmatprep.mubr.f32.mxu0 0.0
        %9085 = vmatmul.mubr.f32.gmra.mrb[0].mxu0 %v8895
        %v9086 = vpop.f32.mrb[0].mxu0
        %v9087 = vadd.f32 0.0, %v9086
        %v9088 = vpop.f32.mrb[0].mxu0
        %9089 = vmatprep.mubr.f32.mxu0 0.0
        %9090 = vmatmul.mubr.f32.gmra.mrb[0].mxu0 %v8898
        %v9091 = vpop.f32.mrb[0].mxu0
        %v9092 = vadd.f32 0.0, %v9091
        %v9093 = vpop.f32.mrb[0].mxu0
        %9094 = vmatprep.mubr.f32.mxu0 0.0
        %9095 = vmatmul.mubr.f32.gmra.mrb[0].mxu0 %v8901
        %v9096 = vpop.f32.mrb[0].mxu0
        %v9097 = vadd.f32 0.0, %v9096
        %v9098 = vpop.f32.mrb[0].mxu0
        %9099 = vmatprep.mubr.f32.mxu0 0.0
        %9100 = vmatmul.mubr.f32.gmra.mrb[0].mxu0 %v8904
        %v9101 = vpop.f32.mrb[0].mxu0
        %v9102 = vadd.f32 0.0, %v9101
        %v9103 = vpop.f32.mrb[0].mxu0
        %9104 = vmatprep.mubr.f32.mxu0 0.0
        %9105 = vmatmul.mubr.f32.gmra.mrb[0].mxu0 %v8907
        %v9106 = vpop.f32.mrb[0].mxu0
        %v9107 = vadd.f32 0.0, %v9106
        %v9108 = vpop.f32.mrb[0].mxu0
        %9109 = vmatprep.mubr.f32.mxu0 0.0
        %9110 = vmatmul.mubr.f32.gmra.mrb[0].mxu0 %v8910
        %v9111 = vpop.f32.mrb[0].mxu0
        %v9112 = vadd.f32 0.0, %v9111
        %v9113 = vpop.f32.mrb[0].mxu0
        %9114 = vmatprep.mubr.f32.mxu0 0.0
        %9115 = vmatmul.mubr.f32.gmra.mrb[0].mxu0 %v8913
        %v9116 = vpop.f32.mrb[0].mxu0
        %v9117 = vadd.f32 0.0, %v9116
        %v9118 = vpop.f32.mrb[0].mxu0
        %9119 = vmatprep.mubr.f32.mxu0 0.0
        %9120 = vmatmul.mubr.f32.gmra.mrb[0].mxu0 %v8916
        %v9121 = vpop.f32.mrb[0].mxu0
        %v9122 = vadd.f32 0.0, %v9121
        %v9123 = vpop.f32.mrb[0].mxu0
        %9124 = vmatprep.mubr.f32.mxu0 0.0
        %9125 = vmatmul.mubr.f32.gmra.mrb[0].mxu0 %v8919
        %v9126 = vpop.f32.mrb[0].mxu0
        %v9127 = vadd.f32 0.0, %v9126
        %v9128 = vpop.f32.mrb[0].mxu0
        %9129 = vmatprep.mubr.f32.mxu0 0.0
        %9130 = vmatmul.mubr.f32.gmra.mrb[0].mxu0 %v8922
        %v9131 = vpop.f32.mrb[0].mxu0
        %v9132 = vadd.f32 0.0, %v9131
        %v9133 = vpop.f32.mrb[0].mxu0
        %9134 = vmatprep.mubr.f32.mxu0 0.0
        %9135 = vmatmul.mubr.f32.gmra.mrb[0].mxu0 %v8925
        %v9136 = vpop.f32.mrb[0].mxu0
        %v9137 = vadd.f32 0.0, %v9136
        %v9138 = vpop.f32.mrb[0].mxu0
        %9139 = vmatprep.mubr.f32.mxu0 0.0
        %9140 = vmatmul.mubr.f32.gmra.mrb[0].mxu0 %v8928
        %v9141 = vpop.f32.mrb[0].mxu0
        %v9142 = vadd.f32 0.0, %v9141
        %v9143 = vpop.f32.mrb[0].mxu0
        %9144 = vmatprep.mubr.f32.mxu0 0.0
        %9145 = vmatmul.mubr.f32.gmra.mrb[0].mxu0 %v8931
        %v9146 = vpop.f32.mrb[0].mxu0
        %v9147 = vadd.f32 0.0, %v9146
        %v9148 = vpop.f32.mrb[0].mxu0
        %9149 = vmatprep.mubr.f32.mxu0 0.0
        %9150 = vmatmul.mubr.f32.gmra.mrb[0].mxu0 %v8934
        %v9151 = vpop.f32.mrb[0].mxu0
        %v9152 = vadd.f32 0.0, %v9151
        %v9153 = vpop.f32.mrb[0].mxu0
        %9154 = vmatprep.mubr.f32.mxu0 0.0
        %9155 = vmatmul.mubr.f32.gmra.mrb[0].mxu0 %v8937
        %v9156 = vpop.f32.mrb[0].mxu0
        %v9157 = vadd.f32 0.0, %v9156
        %v9158 = vpop.f32.mrb[0].mxu0
        %9159 = vmatprep.mubr.f32.mxu0 0.0
        %9160 = vmatmul.mubr.f32.gmra.mrb[0].mxu0 %v8940
        %v9161 = vpop.f32.mrb[0].mxu0
        %v9162 = vadd.f32 0.0, %v9161
        %v9163 = vpop.f32.mrb[0].mxu0
        %9164 = vmatprep.mubr.f32.mxu0 0.0
        %9165 = vmatmul.mubr.f32.gmra.mrb[0].mxu0 %v8943
        %v9166 = vpop.f32.mrb[0].mxu0
        %v9167 = vadd.f32 0.0, %v9166
        %v9168 = vpop.f32.mrb[0].mxu0
        %9169 = vdwg.mxu0
        %v9170 = vld [vmem:[%s81] sm:$0x1]
        %v9172 = vlaneseq
        %v9173 = vshrl.u32 %v9172, 7
        %v9174 = vsub.s32 0, %v9173
        %v9175 = vrot.slane %v9170, %v9174
        %v9177 = vmul.f32 %v9012, %v9175
        %v9178 = vmul.f32 %v9017, %v9175
        %v9179 = vmul.f32 %v9022, %v9175
        %v9180 = vmul.f32 %v9027, %v9175
        %v9181 = vmul.f32 %v9032, %v9175
        %v9182 = vmul.f32 %v9037, %v9175
        %v9183 = vmul.f32 %v9042, %v9175
        %v9184 = vmul.f32 %v9047, %v9175
        %v9185 = vmul.f32 %v9052, %v9175
        %v9186 = vmul.f32 %v9057, %v9175
        %v9187 = vmul.f32 %v9062, %v9175
        %v9188 = vmul.f32 %v9067, %v9175
        %v9189 = vmul.f32 %v9072, %v9175
        %v9190 = vmul.f32 %v9077, %v9175
        %v9191 = vmul.f32 %v9082, %v9175
        %v9192 = vmul.f32 %v9087, %v9175
        %v9193 = vmul.f32 %v9092, %v9175
        %v9194 = vmul.f32 %v9097, %v9175
        %v9195 = vmul.f32 %v9102, %v9175
        %v9196 = vmul.f32 %v9107, %v9175
        %v9197 = vmul.f32 %v9112, %v9175
        %v9198 = vmul.f32 %v9117, %v9175
        %v9199 = vmul.f32 %v9122, %v9175
        %v9200 = vmul.f32 %v9127, %v9175
        %v9201 = vmul.f32 %v9132, %v9175
        %v9202 = vmul.f32 %v9137, %v9175
        %v9203 = vmul.f32 %v9142, %v9175
        %v9204 = vmul.f32 %v9147, %v9175
        %v9205 = vmul.f32 %v9152, %v9175
        %v9206 = vmul.f32 %v9157, %v9175
        %v9207 = vmul.f32 %v9162, %v9175
        %v9208 = vmul.f32 %v9167, %v9175
        %v9209 = vld [vmem:[%s83] sm:$0x1]
        %v9211 = vlaneseq
        %v9212 = vshrl.u32 %v9211, 7
        %v9213 = vsub.s32 0, %v9212
        %v9214 = vrot.slane %v9209, %v9213
        %v9216 = vadd.f32 %v9177, %v9214
        %v9217 = vadd.f32 %v9178, %v9214
        %v9218 = vadd.f32 %v9179, %v9214
        %v9219 = vadd.f32 %v9180, %v9214
        %v9220 = vadd.f32 %v9181, %v9214
        %v9221 = vadd.f32 %v9182, %v9214
        %v9222 = vadd.f32 %v9183, %v9214
        %v9223 = vadd.f32 %v9184, %v9214
        %v9224 = vadd.f32 %v9185, %v9214
        %v9225 = vadd.f32 %v9186, %v9214
        %v9226 = vadd.f32 %v9187, %v9214
        %v9227 = vadd.f32 %v9188, %v9214
        %v9228 = vadd.f32 %v9189, %v9214
        %v9229 = vadd.f32 %v9190, %v9214
        %v9230 = vadd.f32 %v9191, %v9214
        %v9231 = vadd.f32 %v9192, %v9214
        %v9232 = vadd.f32 %v9193, %v9214
        %v9233 = vadd.f32 %v9194, %v9214
        %v9234 = vadd.f32 %v9195, %v9214
        %v9235 = vadd.f32 %v9196, %v9214
        %v9236 = vadd.f32 %v9197, %v9214
        %v9237 = vadd.f32 %v9198, %v9214
        %v9238 = vadd.f32 %v9199, %v9214
        %v9239 = vadd.f32 %v9200, %v9214
        %v9240 = vadd.f32 %v9201, %v9214
        %v9241 = vadd.f32 %v9202, %v9214
        %v9242 = vadd.f32 %v9203, %v9214
        %v9243 = vadd.f32 %v9204, %v9214
        %v9244 = vadd.f32 %v9205, %v9214
        %v9245 = vadd.f32 %v9206, %v9214
        %v9246 = vadd.f32 %v9207, %v9214
        %v9247 = vadd.f32 %v9208, %v9214
        %v9248 = vadd.f32 %v8815, %v9216
        %v9249 = vadd.f32 %v8816, %v9217
        %v9250 = vadd.f32 %v8817, %v9218
        %v9251 = vadd.f32 %v8818, %v9219
        %v9252 = vadd.f32 %v8819, %v9220
        %v9253 = vadd.f32 %v8820, %v9221
        %v9254 = vadd.f32 %v8821, %v9222
        %v9255 = vadd.f32 %v8822, %v9223
        %v9256 = vadd.f32 %v8823, %v9224
        %v9257 = vadd.f32 %v8824, %v9225
        %v9258 = vadd.f32 %v8825, %v9226
        %v9259 = vadd.f32 %v8826, %v9227
        %v9260 = vadd.f32 %v8827, %v9228
        %v9261 = vadd.f32 %v8828, %v9229
        %v9262 = vadd.f32 %v8829, %v9230
        %v9263 = vadd.f32 %v8830, %v9231
        %v9264 = vadd.f32 %v8831, %v9232
        %v9265 = vadd.f32 %v8832, %v9233
        %v9266 = vadd.f32 %v8833, %v9234
        %v9267 = vadd.f32 %v8834, %v9235
        %v9268 = vadd.f32 %v8835, %v9236
        %v9269 = vadd.f32 %v8836, %v9237
        %v9270 = vadd.f32 %v8837, %v9238
        %v9271 = vadd.f32 %v8838, %v9239
        %v9272 = vadd.f32 %v8839, %v9240
        %v9273 = vadd.f32 %v8840, %v9241
        %v9274 = vadd.f32 %v8841, %v9242
        %v9275 = vadd.f32 %v8842, %v9243
        %v9276 = vadd.f32 %v8843, %v9244
        %v9277 = vadd.f32 %v8844, %v9245
        %v9278 = vadd.f32 %v8845, %v9246
        %v9279 = vadd.f32 %v8846, %v9247
        %9280 = vst.msk [vmem:[%s1259] sm:$0xff] %vm2795, %v9248
        %9281 = vst.msk [vmem:[%s1259 + $0x8] sm:$0xff] %vm2795, %v9249
        %9282 = vst.msk [vmem:[%s1259 + $0x10] sm:$0xff] %vm2795, %v9250
        %9283 = vst.msk [vmem:[%s1259 + $0x18] sm:$0xff] %vm2795, %v9251
        %9284 = vst.msk [vmem:[%s1259 + $0x20] sm:$0xff] %vm2795, %v9252
        %9285 = vst.msk [vmem:[%s1259 + $0x28] sm:$0xff] %vm2795, %v9253
        %9286 = vst.msk [vmem:[%s1259 + $0x30] sm:$0xff] %vm2795, %v9254
        %9287 = vst.msk [vmem:[%s1259 + $0x38] sm:$0xff] %vm2795, %v9255
        %9288 = vst.msk [vmem:[%s1259 + $0x40] sm:$0xff] %vm2795, %v9256
        %9289 = vst.msk [vmem:[%s1259 + $0x48] sm:$0xff] %vm2795, %v9257
        %9290 = vst.msk [vmem:[%s1259 + $0x50] sm:$0xff] %vm2795, %v9258
        %9291 = vst.msk [vmem:[%s1259 + $0x58] sm:$0xff] %vm2795, %v9259
        %9292 = vst.msk [vmem:[%s1259 + $0x60] sm:$0xff] %vm2795, %v9260
        %9293 = vst.msk [vmem:[%s1259 + $0x68] sm:$0xff] %vm2795, %v9261
        %9294 = vst.msk [vmem:[%s1259 + $0x70] sm:$0xff] %vm2795, %v9262
        %9295 = vst.msk [vmem:[%s1259 + $0x78] sm:$0xff] %vm2795, %v9263
        %9296 = vst.msk [vmem:[%s1259 + $0x80] sm:$0xff] %vm2795, %v9264
        %9297 = vst.msk [vmem:[%s1259 + $0x88] sm:$0xff] %vm2795, %v9265
        %9298 = vst.msk [vmem:[%s1259 + $0x90] sm:$0xff] %vm2795, %v9266
        %9299 = vst.msk [vmem:[%s1259 + $0x98] sm:$0xff] %vm2795, %v9267
        %9300 = vst.msk [vmem:[%s1259 + $0xa0] sm:$0xff] %vm2795, %v9268
        %9301 = vst.msk [vmem:[%s1259 + $0xa8] sm:$0xff] %vm2795, %v9269
        %9302 = vst.msk [vmem:[%s1259 + $0xb0] sm:$0xff] %vm2795, %v9270
        %9303 = vst.msk [vmem:[%s1259 + $0xb8] sm:$0xff] %vm2795, %v9271
        %9304 = vst.msk [vmem:[%s1259 + $0xc0] sm:$0xff] %vm2795, %v9272
        %9305 = vst.msk [vmem:[%s1259 + $0xc8] sm:$0xff] %vm2795, %v9273
        %9306 = vst.msk [vmem:[%s1259 + $0xd0] sm:$0xff] %vm2795, %v9274
        %9307 = vst.msk [vmem:[%s1259 + $0xd8] sm:$0xff] %vm2795, %v9275
        %9308 = vst.msk [vmem:[%s1259 + $0xe0] sm:$0xff] %vm2795, %v9276
        %9309 = vst.msk [vmem:[%s1259 + $0xe8] sm:$0xff] %vm2795, %v9277
        %9310 = vst.msk [vmem:[%s1259 + $0xf0] sm:$0xff] %vm2795, %v9278
        %9311 = vst.msk [vmem:[%s1259 + $0xf8] sm:$0xff] %vm2795, %v9279
        %s9312 = sand.u32 %s994, 1
        %s9313 = scalar_lea.sflag [#allocation6], %s9312
        %s9314 = sand.u32 %s994, 1
        %s9315 = smul.addr %s9314, 256
        %s9316 = scalar_lea.vmem [#allocation5], %s9315
        // Predicated region
        $region189: #{_lambda_.1} parent=187 // pred_check
          %p9317 = pneg %p1004
        $region190: #{_lambda_.1} parent=187 // pred_check_branch
          %9319 = sbr.rel (%p9317) target = $region192
        $region191: #{_lambda_.1} parent=187 // pred_region
          %s9321 = ssub.s32 4096, 4096
          %9322 = vsyncadd %s9313, %s9321
          %s9323 = smul.addr %s99, 32
          %s9324 = smul.addr %s9323, 128
          %s9325 = scalar_lea.hbm %s85, %s9324
          %s9326 = sshll.u32 %s9316, 4
          %s9327 = int_to_ptr.vmem [resolvable:$true] %s9326
          %9332 = dma.vmem_to_hbm [thread:$0]  %s9327, 4096, %s9325, %s9313, 128, 128, 8
        $region192: #{_lambda_.1} parent=187 // pred_fallthru
          _
      $region188: #{_lambda_.1} parent=5 // pred_fallthru
        _
      %p9333 = scmp.le.s32.totalorder 2, %s94
      // Predicated region
      $region193: #{_lambda_.1} parent=5 // pred_check
        %p9334 = pneg %p9333
      $region194: #{_lambda_.1} parent=5 // pred_check_branch
        %9336 = sbr.rel (%p9334) target = $region196
      $region195: #{_lambda_.1} parent=5 // pred_region
        %s9337 = ssub.s32 %s94, 2
        // Predicated region
        $region197: #{_lambda_.1} parent=195 // pred_check
          %p9338 = pneg %p1010
        $region198: #{_lambda_.1} parent=195 // pred_check_branch
          %9340 = sbr.rel (%p9338) target = $region200
        $region199: #{_lambda_.1} parent=195 // pred_region
          %s9341 = sand.u32 %s995, 1
          %s9342 = scalar_lea.sflag [#allocation6], %s9341
          %s9343 = sand.u32 %s995, 1
          %s9344 = smul.addr %s9343, 256
          %s9345 = scalar_lea.vmem [#allocation5], %s9344
          %9346 = dma.done %s9342, 4096
        $region200: #{_lambda_.1} parent=195 // pred_fallthru
          _
      $region196: #{_lambda_.1} parent=5 // pred_fallthru
        _
    $region6: #{_lambda_.1} parent=1 // loop_footer
      %s98 = sadd.s32 1, %s94
    $region7: #{_lambda_.1} parent=1 // loop_footer_branch
      %93 = sbr.rel target = $region3
    $region8: #{_lambda_.1} parent=1 // loop_exit
      _
    %9347 = vsyncpa [#allocation6], 1
    %s9348 = scalar_lea.sflag [#allocation6], 1
    %9349 = vsyncpa %s9348, 1

</llo_original>
